<compile_context>
chip_gen: v7x
topology: tpu7x:2x2x1
jax: 0.10.0
libtpu: 0.0.40
codegen_flags: <defaults>
</compile_context>

<pallas_src>
import math
import functools

import jax
import jax.numpy as jnp
from jax.experimental import pallas as pl
from jax.experimental.pallas import tpu as pltpu


_EPS = 1e-5
_MIB = 1024 * 1024


@functools.lru_cache(maxsize=None)
def _vmem_limit_bytes():
    """Per-generation scoped VMEM budget (leave headroom below physical)."""
    try:
        cap = pltpu.get_tpu_info().vmem_capacity_bytes
    except Exception:
        cap = 64 * _MIB                       # conservative fallback (v7x-sized)
    return int(min(cap - 8 * _MIB, 100 * _MIB))


def _cparams(*semantics):
    return pltpu.CompilerParams(dimension_semantics=semantics,
                                vmem_limit_bytes=_vmem_limit_bytes())


def _const_spec(a):
    """Grid-invariant (weight/bias) input: constant index_map + single-buffered
    so the pipeline does not allocate a useless second VMEM copy."""
    nd = a.ndim
    return pl.BlockSpec(a.shape, lambda i, nd=nd: (0,) * nd,
                        pipeline_mode=pl.Buffered(1))


def _ln(v, g, b):
    """LayerNorm over the last dim. v:[M,D], g/b:[1,D]."""
    m = jnp.mean(v, axis=-1, keepdims=True)
    var = jnp.mean((v - m) ** 2, axis=-1, keepdims=True)
    return (v - m) * jax.lax.rsqrt(var + _EPS) * g + b


# ----------------------------------------------------------------------------
# Kernel 1: input embedding  (one grid step per batch element)
# ----------------------------------------------------------------------------
def _embed_kernel(x_ref, w_ref, b_ref, o_ref):
    x = x_ref[0]                                               # [L, F] f32
    y = jnp.dot(x.astype(jnp.bfloat16), w_ref[...],
                preferred_element_type=jnp.float32) + b_ref[...]
    o_ref[0] = y


def embed(x, w, b):
    B, L, F = x.shape
    D = w.shape[1]
    return pl.pallas_call(
        _embed_kernel,
        out_shape=jax.ShapeDtypeStruct((B, L, D), jnp.float32),
        grid=(B,),
        in_specs=[
            pl.BlockSpec((1, L, F), lambda i: (i, 0, 0)),
            _const_spec(w),
            _const_spec(b),
        ],
        out_specs=pl.BlockSpec((1, L, D), lambda i: (i, 0, 0)),
        compiler_params=_cparams("parallel"),
    )(x, w, b)


# ----------------------------------------------------------------------------
# Kernel 2: one fully fused Conformer encoder layer (grid over batch)
# ----------------------------------------------------------------------------
def _layer_kernel(x_ref,
                  lng_ref, lnb_ref,
                  f1w1_ref, f1b1_ref, f1w2_ref, f1b2_ref,
                  wqkv_ref, bqkv_ref, wo_ref, bo_ref,
                  wa_ref, ba_ref, wb_ref, bb_ref,
                  dww_ref, dwb_ref, pw2w_ref, pw2b_ref,
                  f2w1_ref, f2b1_ref, f2w2_ref, f2b2_ref,
                  encg_ref, encb_ref,
                  o_ref,
                  *, heads, conv_k, apply_enc_norm):
    bf16 = jnp.bfloat16
    f32 = jnp.float32

    x = x_ref[0]                                   # [L, D] f32
    L, D = x.shape
    lng = lng_ref[...]                             # [5, D] (ln1..ln4, lnf)
    lnb = lnb_ref[...]

    # ---- half-step feed-forward 1:  x += 0.5 * W2(SiLU(W1(LN(x)))) ----
    # TODO(synk): for long L, chunk these FFN matmuls over L (fori_loop) to cap
    #             the [L, 4D] f32 intermediate's VMEM footprint.
    h = _ln(x, lng[0:1, :], lnb[0:1, :])
    h1 = jnp.dot(h.astype(bf16), f1w1_ref[...],
                 preferred_element_type=f32) + f1b1_ref[...]
    h1 = h1 * jax.nn.sigmoid(h1)                   # SiLU in f32
    h2 = jnp.dot(h1.astype(bf16), f1w2_ref[...],
                 preferred_element_type=f32) + f1b2_ref[...]
    x = x + 0.5 * h2

    # ---- multi-head self-attention (fused QKV matmul; bf16 MXU, f32 acc) ----
    # TODO(synk): for long L, block the query dim (flash-style online softmax)
    #             so [L, L] score/prob matrices never fully materialize.
    h = _ln(x, lng[1:2, :], lnb[1:2, :])
    qkv = jnp.dot(h.astype(bf16), wqkv_ref[...],
                  preferred_element_type=f32) + bqkv_ref[...]  # [L, 3D]
    dk = D // heads
    scale = 1.0 / math.sqrt(dk)
    head_outs = []
    for hd in range(heads):
        q = qkv[:, hd * dk:(hd + 1) * dk].astype(bf16)
        k = qkv[:, D + hd * dk:D + (hd + 1) * dk].astype(bf16)
        v = qkv[:, 2 * D + hd * dk:2 * D + (hd + 1) * dk]
        s = jax.lax.dot_general(q, k, (((1,), (1,)), ((), ())),
                                preferred_element_type=f32) * scale   # [L, L]
        s = s - jnp.max(s, axis=-1, keepdims=True)
        p = jnp.exp(s)
        p = p * pl.reciprocal(jnp.sum(p, axis=-1, keepdims=True), approx=True)
        head_outs.append(jnp.dot(p.astype(bf16), v.astype(bf16),
                                 preferred_element_type=f32))         # [L, dk]
    attn = jnp.concatenate(head_outs, axis=-1)                        # [L, D]
    # single full-K output projection (one MXU push instead of `heads` small ones)
    x = x + jnp.dot(attn.astype(bf16), wo_ref[...],
                    preferred_element_type=f32) + bo_ref[...]

    # ---- convolution module: GLU -> depthwise conv -> SiLU -> pointwise ----
    # TODO(synk): BatchNorm (eval mode, fresh running stats) folds to identity.
    h = _ln(x, lng[2:3, :], lnb[2:3, :])
    a = jnp.dot(h.astype(bf16), wa_ref[...],
                preferred_element_type=f32) + ba_ref[...]
    g = jnp.dot(h.astype(bf16), wb_ref[...],
                preferred_element_type=f32) + bb_ref[...]
    gated = a * jax.nn.sigmoid(g)                                      # GLU, [L, D]

    # Depthwise conv along L with zero padding: XLU roll + VPU FMA per tap.
    pad = conv_k // 2
    row = jax.lax.broadcasted_iota(jnp.int32, (L, 1), 0)               # [L, 1]
    dw_w = dww_ref[...]                                                # [K, D]
    acc = jnp.zeros((L, D), f32)
    for kk in range(conv_k):
        off = kk - pad                          # tap reads gated[l + off]
        if off == 0:
            shifted = gated
        else:
            shifted = pltpu.roll(gated, shift=(-off) % L, axis=0)
            valid = jnp.logical_and(row + off >= 0, row + off < L)
            shifted = jnp.where(valid, shifted, 0.0)                   # zero-pad edges
        acc = acc + shifted * dw_w[kk:kk + 1, :]
    acc = acc + dwb_ref[...]
    acc = acc * jax.nn.sigmoid(acc)                                    # SiLU
    x = x + jnp.dot(acc.astype(bf16), pw2w_ref[...],
                    preferred_element_type=f32) + pw2b_ref[...]

    # ---- half-step feed-forward 2 + per-layer final LayerNorm ----
    h = _ln(x, lng[3:4, :], lnb[3:4, :])
    h1 = jnp.dot(h.astype(bf16), f2w1_ref[...],
                 preferred_element_type=f32) + f2b1_ref[...]
    h1 = h1 * jax.nn.sigmoid(h1)
    h2 = jnp.dot(h1.astype(bf16), f2w2_ref[...],
                 preferred_element_type=f32) + f2b2_ref[...]
    x = x + 0.5 * h2
    y = _ln(x, lng[4:5, :], lnb[4:5, :])

    if apply_enc_norm:   # encoder-final LayerNorm fused into the last layer
        y = _ln(y, encg_ref[...], encb_ref[...])

    o_ref[0] = y


def conformer_layer(x, lp, enc_g, enc_b, *, heads, conv_k, apply_enc_norm):
    B, L, D = x.shape
    weights = [lp["ln_g"], lp["ln_b"],
               lp["ff1_w1"], lp["ff1_b1"], lp["ff1_w2"], lp["ff1_b2"],
               lp["wqkv"], lp["bqkv"], lp["wo"], lp["bo"],
               lp["glu_wa"], lp["glu_ba"], lp["glu_wb"], lp["glu_bb"],
               lp["dw_w"], lp["dw_b"], lp["pw2_w"], lp["pw2_b"],
               lp["ff2_w1"], lp["ff2_b1"], lp["ff2_w2"], lp["ff2_b2"],
               enc_g, enc_b]
    in_specs = [pl.BlockSpec((1, L, D), lambda i: (i, 0, 0))]
    in_specs += [_const_spec(w) for w in weights]
    return pl.pallas_call(
        functools.partial(_layer_kernel, heads=heads, conv_k=conv_k,
                          apply_enc_norm=apply_enc_norm),
        out_shape=jax.ShapeDtypeStruct((B, L, D), jnp.float32),
        grid=(B,),
        in_specs=in_specs,
        out_specs=pl.BlockSpec((1, L, D), lambda i: (i, 0, 0)),
        compiler_params=_cparams("parallel"),
    )(x, *weights)


# ----------------------------------------------------------------------------
# Kernel 3: fused output MLP + ordinal head
# ----------------------------------------------------------------------------
def _head_kernel(x_ref, w1_ref, b1_ref, w2_ref, b2_ref, w3_ref, b3_ref, t_ref,
                 o_ref, *, classes):
    bf16 = jnp.bfloat16
    f32 = jnp.float32
    x = x_ref[...]                                             # [B, L*D]
    # TODO(synk): for realistic L*D, K-tile out1_w over a grid axis with an f32
    #             accumulator instead of holding the full weight in VMEM.
    h1 = jnp.dot(x.astype(bf16), w1_ref[...],
                 preferred_element_type=f32) + b1_ref[...]
    h1 = jnp.maximum(h1, 0.0)
    h2 = jnp.dot(h1.astype(bf16), w2_ref[...],
                 preferred_element_type=f32) + b2_ref[...]
    h2 = jnp.maximum(h2, 0.0)
    logit = jnp.dot(h2.astype(bf16), w3_ref[...],
                    preferred_element_type=f32) + b3_ref[...]  # [B, 1]
    s = jax.nn.sigmoid(t_ref[...] - logit)                     # [B, C-1]
    first = s[:, 0:1]
    last = 1.0 - s[:, classes - 2:classes - 1]
    if classes > 2:
        out = jnp.concatenate([first, s[:, 1:] - s[:, :-1], last], axis=-1)
    else:
        out = jnp.concatenate([first, last], axis=-1)
    o_ref[...] = out                                           # single store


def ordinal_head(flat, p, classes):
    B, _ = flat.shape
    weights = [p["out1_w"], p["out1_b"], p["out2_w"], p["out2_b"],
               p["out3_w"], p["out3_b"], p["thresholds"]]
    in_specs = [pl.BlockSpec(flat.shape, lambda i: (0, 0))]
    in_specs += [_const_spec(w) for w in weights]
    return pl.pallas_call(
        functools.partial(_head_kernel, classes=classes),
        out_shape=jax.ShapeDtypeStruct((B, classes), jnp.float32),
        grid=(1,),
        in_specs=in_specs,
        out_specs=pl.BlockSpec((B, classes), lambda i: (0, 0)),
        compiler_params=_cparams("arbitrary"),
    )(flat, *weights)


# ----------------------------------------------------------------------------
# Parameter initialization (deterministic, synthetic; matmul weights in bf16)
# ----------------------------------------------------------------------------
def _uniform_linear(key, fan_in, fan_out):
    kw, kb = jax.random.split(key)
    bound = 1.0 / math.sqrt(fan_in)
    w = jax.random.uniform(kw, (fan_in, fan_out), jnp.float32, -bound, bound)
    b = jax.random.uniform(kb, (fan_out,), jnp.float32, -bound, bound)
    return w, b


def _he_linear(key, fan_in, fan_out):
    kw, _ = jax.random.split(key)
    w = jax.random.normal(kw, (fan_in, fan_out), jnp.float32) * math.sqrt(2.0 / fan_in)
    return w, jnp.zeros((fan_out,), jnp.float32)


def _init_layer(key, d_model, d_ff, conv_k):
    ks = jax.random.split(key, 9)
    lp = {}
    lp["ln_g"] = jnp.ones((5, d_model), jnp.float32)      # ln1..ln4, lnf
    lp["ln_b"] = jnp.zeros((5, d_model), jnp.float32)

    w, b = _uniform_linear(ks[0], d_model, d_ff)
    lp["ff1_w1"], lp["ff1_b1"] = w.astype(jnp.bfloat16), b.reshape(1, -1)
    w, b = _uniform_linear(ks[1], d_ff, d_model)
    lp["ff1_w2"], lp["ff1_b2"] = w.astype(jnp.bfloat16), b.reshape(1, -1)

    w, b = _uniform_linear(ks[2], d_model, 3 * d_model)   # fused QKV projection
    lp["wqkv"], lp["bqkv"] = w.astype(jnp.bfloat16), b.reshape(1, -1)
    w, b = _uniform_linear(ks[3], d_model, d_model)       # output projection (bf16)
    lp["wo"], lp["bo"] = w.astype(jnp.bfloat16), b.reshape(1, -1)

    # pointwise-1 feeding GLU, pre-split (D not a multiple of 128 here; keep
    # lane-aligned split by splitting the weight instead of the result).
    w, b = _uniform_linear(ks[4], d_model, 2 * d_model)
    lp["glu_wa"] = w[:, :d_model].astype(jnp.bfloat16)
    lp["glu_wb"] = w[:, d_model:].astype(jnp.bfloat16)
    lp["glu_ba"] = b[:d_model].reshape(1, -1)
    lp["glu_bb"] = b[d_model:].reshape(1, -1)

    lp["dw_w"] = (jax.random.normal(ks[5], (conv_k, d_model), jnp.float32)
                  / math.sqrt(conv_k))
    lp["dw_b"] = jnp.zeros((1, d_model), jnp.float32)
    w, b = _uniform_linear(ks[6], d_model, d_model)
    lp["pw2_w"], lp["pw2_b"] = w.astype(jnp.bfloat16), b.reshape(1, -1)

    w, b = _uniform_linear(ks[7], d_model, d_ff)
    lp["ff2_w1"], lp["ff2_b1"] = w.astype(jnp.bfloat16), b.reshape(1, -1)
    w, b = _uniform_linear(ks[8], d_ff, d_model)
    lp["ff2_w2"], lp["ff2_b2"] = w.astype(jnp.bfloat16), b.reshape(1, -1)
    return lp


def init_params(key, d_model, n, heads, features_count, length, classes, conv_k=3):
    d_ff = 4 * d_model
    d4 = d_model // 4
    hid2 = math.floor(math.sqrt(d4 * length * classes))
    keys = jax.random.split(key, n + 4)
    p = {}
    w, b = _uniform_linear(keys[0], features_count, d_model)
    p["embed_w"], p["embed_b"] = w.astype(jnp.bfloat16), b.reshape(1, -1)
    p["norm_g"] = jnp.ones((1, d_model), jnp.float32)     # encoder-final LayerNorm
    p["norm_b"] = jnp.zeros((1, d_model), jnp.float32)
    p["layers"] = [_init_layer(keys[1 + i], d_model, d_ff, conv_k) for i in range(n)]

    w, b = _he_linear(keys[n + 1], d_model * length, d4 * length)
    p["out1_w"], p["out1_b"] = w.astype(jnp.bfloat16), b.reshape(1, -1)
    w, b = _he_linear(keys[n + 2], d4 * length, hid2)
    p["out2_w"], p["out2_b"] = w.astype(jnp.bfloat16), b.reshape(1, -1)
    p["out3_w"] = jnp.zeros((hid2, 1), jnp.bfloat16)       # zero-init per reference
    p["out3_b"] = jnp.zeros((1, 1), jnp.float32)

    step = 1.0 / classes
    t = (jnp.arange(1, classes, dtype=jnp.float32) * step - 0.5) * 2.0 * classes
    p["thresholds"] = t.reshape(1, classes - 1)
    return p


# ----------------------------------------------------------------------------
# Forward pass
# ----------------------------------------------------------------------------
def conformer_ordinal_forward(x, p, *, n, heads, classes, conv_k=3):
    B, L, _ = x.shape
    h = embed(x, p["embed_w"], p["embed_b"])        # [B, L, D]; dropout = identity (eval)
    for i in range(n):
        h = conformer_layer(h, p["layers"][i], p["norm_g"], p["norm_b"],
                            heads=heads, conv_k=conv_k,
                            apply_enc_norm=(i == n - 1))
    D = h.shape[-1]
    flat = h.reshape(B, L * D)                      # torch: x.view(B, -1)
    return ordinal_head(flat, p, classes)           # [B, classes]


# ----------------------------------------------------------------------------
if __name__ == "__main__":
    B, L, F = 2, 8, 12
    d_model, n, heads, classes = 32, 2, 4, 5

    key = jax.random.PRNGKey(0)
    kx, kp = jax.random.split(key)
    x = jax.random.normal(kx, (B, L, F), jnp.float32)
    params = init_params(kp, d_model, n, heads, F, L, classes)

    fwd = jax.jit(functools.partial(conformer_ordinal_forward,
                                    n=n, heads=heads, classes=classes))
    out = jax.block_until_ready(fwd(x, params))

    assert out.shape == (B, classes)
    assert bool(jnp.all(jnp.isfinite(out)))
    print("KERNEL_OK")
</pallas_src>

<mosaic_0001>
module attributes {stable_mosaic.version = 11 : i64} {
  func.func @_embed_kernel(%arg0: i32, %arg1: memref<1x8x12xf32, #tpu.memory_space<vmem>>, %arg2: memref<12x32xbf16, #tpu.memory_space<vmem>>, %arg3: memref<1x32xf32, #tpu.memory_space<vmem>>, %arg4: memref<1x8x32xf32, #tpu.memory_space<vmem>>) attributes {dimension_semantics = [#tpu.dimension_semantics<parallel>], iteration_bounds = array<i64: 2>, scalar_prefetch = 0 : i64, scratch_operands = 0 : i64, tpu.core_type = #tpu.core_type<tc>, window_params = [{transform_indices = @transform_0, window_bounds = array<i64: 1, 8, 12>}, {pipeline_mode = #tpu.pipeline_mode<synchronous>, transform_indices = @transform_1, window_bounds = array<i64: 12, 32>}, {pipeline_mode = #tpu.pipeline_mode<synchronous>, transform_indices = @transform_2, window_bounds = array<i64: 1, 32>}, {transform_indices = @transform_3, window_bounds = array<i64: 1, 8, 32>}]} {
    %c0 = arith.constant 0 : index
    %c0_0 = arith.constant 0 : index
    %c0_1 = arith.constant 0 : index
    %0 = vector.load %arg1[%c0, %c0_0, %c0_1] : memref<1x8x12xf32, #tpu.memory_space<vmem>>, vector<1x8x12xf32>
    %1 = vector.shape_cast %0 : vector<1x8x12xf32> to vector<8x12xf32>
    %2 = arith.truncf %1 : vector<8x12xf32> to vector<8x12xbf16>
    %c0_2 = arith.constant 0 : index
    %c0_3 = arith.constant 0 : index
    %3 = vector.load %arg2[%c0_2, %c0_3] : memref<12x32xbf16, #tpu.memory_space<vmem>>, vector<12x32xbf16>
    %cst = arith.constant dense<0.000000e+00> : vector<8x32xf32>
    %4 = tpu.matmul %2, %3, %cst {dimension_numbers = #tpu.dot_dimension_numbers<[1], [0], [0], [1], [0, 0, 1, 1], [], []>} : vector<8x12xbf16>, vector<12x32xbf16>, vector<8x32xf32> -> vector<8x32xf32>
    %c0_4 = arith.constant 0 : index
    %c0_5 = arith.constant 0 : index
    %5 = vector.load %arg3[%c0_4, %c0_5] : memref<1x32xf32, #tpu.memory_space<vmem>>, vector<1x32xf32>
    %6 = vector.broadcast %5 : vector<1x32xf32> to vector<8x32xf32>
    %7 = arith.addf %4, %6 : vector<8x32xf32>
    %c0_6 = arith.constant 0 : index
    %c0_7 = arith.constant 0 : index
    %c0_8 = arith.constant 0 : index
    %8 = vector.load %arg4[%c0_6, %c0_7, %c0_8] : memref<1x8x32xf32, #tpu.memory_space<vmem>>, vector<1x8x32xf32>
    %9 = vector.shape_cast %8 : vector<1x8x32xf32> to vector<8x32xf32>
    %10 = vector.shape_cast %7 : vector<8x32xf32> to vector<1x8x32xf32>
    tpu.vector_store %arg4[%c0_6, %c0_7, %c0_8], %10 {strides = array<i32>} : memref<1x8x32xf32, #tpu.memory_space<vmem>>, vector<1x8x32xf32>,
    return
  }
  func.func @transform_0(%arg0: i32) -> (i32, i32, i32) {
    %c0_i32 = arith.constant 0 : i32
    %c0_i32_0 = arith.constant 0 : i32
    %c0_i32_1 = arith.constant 0 : i32
    return %arg0, %c0_i32, %c0_i32_0 : i32, i32, i32
  }
  func.func @transform_1(%arg0: i32) -> (i32, i32) {
    %c0_i32 = arith.constant 0 : i32
    %c0_i32_0 = arith.constant 0 : i32
    %c0_i32_1 = arith.constant 0 : i32
    return %c0_i32, %c0_i32_0 : i32, i32
  }
  func.func @transform_2(%arg0: i32) -> (i32, i32) {
    %c0_i32 = arith.constant 0 : i32
    %c0_i32_0 = arith.constant 0 : i32
    %c0_i32_1 = arith.constant 0 : i32
    return %c0_i32, %c0_i32_0 : i32, i32
  }
  func.func @transform_3(%arg0: i32) -> (i32, i32, i32) {
    %c0_i32 = arith.constant 0 : i32
    %c0_i32_0 = arith.constant 0 : i32
    %c0_i32_1 = arith.constant 0 : i32
    return %arg0, %c0_i32, %c0_i32_0 : i32, i32, i32
  }
}

module attributes {stable_mosaic.version = 11 : i64} {
  func.func @_layer_kernel(%arg0: i32, %arg1: memref<1x8x32xf32, #tpu.memory_space<vmem>>, %arg2: memref<5x32xf32, #tpu.memory_space<vmem>>, %arg3: memref<5x32xf32, #tpu.memory_space<vmem>>, %arg4: memref<32x128xbf16, #tpu.memory_space<vmem>>, %arg5: memref<1x128xf32, #tpu.memory_space<vmem>>, %arg6: memref<128x32xbf16, #tpu.memory_space<vmem>>, %arg7: memref<1x32xf32, #tpu.memory_space<vmem>>, %arg8: memref<32x96xbf16, #tpu.memory_space<vmem>>, %arg9: memref<1x96xf32, #tpu.memory_space<vmem>>, %arg10: memref<32x32xbf16, #tpu.memory_space<vmem>>, %arg11: memref<1x32xf32, #tpu.memory_space<vmem>>, %arg12: memref<32x32xbf16, #tpu.memory_space<vmem>>, %arg13: memref<1x32xf32, #tpu.memory_space<vmem>>, %arg14: memref<32x32xbf16, #tpu.memory_space<vmem>>, %arg15: memref<1x32xf32, #tpu.memory_space<vmem>>, %arg16: memref<3x32xf32, #tpu.memory_space<vmem>>, %arg17: memref<1x32xf32, #tpu.memory_space<vmem>>, %arg18: memref<32x32xbf16, #tpu.memory_space<vmem>>, %arg19: memref<1x32xf32, #tpu.memory_space<vmem>>, %arg20: memref<32x128xbf16, #tpu.memory_space<vmem>>, %arg21: memref<1x128xf32, #tpu.memory_space<vmem>>, %arg22: memref<128x32xbf16, #tpu.memory_space<vmem>>, %arg23: memref<1x32xf32, #tpu.memory_space<vmem>>, %arg24: memref<1x32xf32, #tpu.memory_space<vmem>>, %arg25: memref<1x32xf32, #tpu.memory_space<vmem>>, %arg26: memref<1x8x32xf32, #tpu.memory_space<vmem>>) attributes {dimension_semantics = [#tpu.dimension_semantics<parallel>], iteration_bounds = array<i64: 2>, scalar_prefetch = 0 : i64, scratch_operands = 0 : i64, tpu.core_type = #tpu.core_type<tc>, window_params = [{transform_indices = @transform_0, window_bounds = array<i64: 1, 8, 32>}, {pipeline_mode = #tpu.pipeline_mode<synchronous>, transform_indices = @transform_1, window_bounds = array<i64: 5, 32>}, {pipeline_mode = #tpu.pipeline_mode<synchronous>, transform_indices = @transform_2, window_bounds = array<i64: 5, 32>}, {pipeline_mode = #tpu.pipeline_mode<synchronous>, transform_indices = @transform_3, window_bounds = array<i64: 32, 128>}, {pipeline_mode = #tpu.pipeline_mode<synchronous>, transform_indices = @transform_4, window_bounds = array<i64: 1, 128>}, {pipeline_mode = #tpu.pipeline_mode<synchronous>, transform_indices = @transform_5, window_bounds = array<i64: 128, 32>}, {pipeline_mode = #tpu.pipeline_mode<synchronous>, transform_indices = @transform_6, window_bounds = array<i64: 1, 32>}, {pipeline_mode = #tpu.pipeline_mode<synchronous>, transform_indices = @transform_7, window_bounds = array<i64: 32, 96>}, {pipeline_mode = #tpu.pipeline_mode<synchronous>, transform_indices = @transform_8, window_bounds = array<i64: 1, 96>}, {pipeline_mode = #tpu.pipeline_mode<synchronous>, transform_indices = @transform_9, window_bounds = array<i64: 32, 32>}, {pipeline_mode = #tpu.pipeline_mode<synchronous>, transform_indices = @transform_10, window_bounds = array<i64: 1, 32>}, {pipeline_mode = #tpu.pipeline_mode<synchronous>, transform_indices = @transform_11, window_bounds = array<i64: 32, 32>}, {pipeline_mode = #tpu.pipeline_mode<synchronous>, transform_indices = @transform_12, window_bounds = array<i64: 1, 32>}, {pipeline_mode = #tpu.pipeline_mode<synchronous>, transform_indices = @transform_13, window_bounds = array<i64: 32, 32>}, {pipeline_mode = #tpu.pipeline_mode<synchronous>, transform_indices = @transform_14, window_bounds = array<i64: 1, 32>}, {pipeline_mode = #tpu.pipeline_mode<synchronous>, transform_indices = @transform_15, window_bounds = array<i64: 3, 32>}, {pipeline_mode = #tpu.pipeline_mode<synchronous>, transform_indices = @transform_16, window_bounds = array<i64: 1, 32>}, {pipeline_mode = #tpu.pipeline_mode<synchronous>, transform_indices = @transform_17, window_bounds = array<i64: 32, 32>}, {pipeline_mode = #tpu.pipeline_mode<synchronous>, transform_indices = @transform_18, window_bounds = array<i64: 1, 32>}, {pipeline_mode = #tpu.pipeline_mode<synchronous>, transform_indices = @transform_19, window_bounds = array<i64: 32, 128>}, {pipeline_mode = #tpu.pipeline_mode<synchronous>, transform_indices = @transform_20, window_bounds = array<i64: 1, 128>}, {pipeline_mode = #tpu.pipeline_mode<synchronous>, transform_indices = @transform_21, window_bounds = array<i64: 128, 32>}, {pipeline_mode = #tpu.pipeline_mode<synchronous>, transform_indices = @transform_22, window_bounds = array<i64: 1, 32>}, {pipeline_mode = #tpu.pipeline_mode<synchronous>, transform_indices = @transform_23, window_bounds = array<i64: 1, 32>}, {pipeline_mode = #tpu.pipeline_mode<synchronous>, transform_indices = @transform_24, window_bounds = array<i64: 1, 32>}, {transform_indices = @transform_25, window_bounds = array<i64: 1, 8, 32>}]} {
    %c0 = arith.constant 0 : index
    %c0_0 = arith.constant 0 : index
    %c0_1 = arith.constant 0 : index
    %0 = vector.load %arg1[%c0, %c0_0, %c0_1] : memref<1x8x32xf32, #tpu.memory_space<vmem>>, vector<1x8x32xf32>
    %1 = vector.shape_cast %0 : vector<1x8x32xf32> to vector<8x32xf32>
    %c0_2 = arith.constant 0 : index
    %c0_3 = arith.constant 0 : index
    %2 = vector.load %arg2[%c0_2, %c0_3] : memref<5x32xf32, #tpu.memory_space<vmem>>, vector<5x32xf32>
    %c0_4 = arith.constant 0 : index
    %c0_5 = arith.constant 0 : index
    %3 = vector.load %arg3[%c0_4, %c0_5] : memref<5x32xf32, #tpu.memory_space<vmem>>, vector<5x32xf32>
    %4 = vector.extract_strided_slice %2 {offsets = [0, 0], sizes = [1, 32], strides = [1, 1]} : vector<5x32xf32> to vector<1x32xf32>
    %5 = vector.extract_strided_slice %3 {offsets = [0, 0], sizes = [1, 32], strides = [1, 1]} : vector<5x32xf32> to vector<1x32xf32>
    %cst = arith.constant dense<0.000000e+00> : vector<8xf32>
    %6 = vector.multi_reduction <add>, %1, %cst [1] : vector<8x32xf32> to vector<8xf32>
    %7 = vector.shape_cast %6 : vector<8xf32> to vector<8x1xf32>
    %cst_6 = arith.constant 3.200000e+01 : f32
    %8 = vector.broadcast %cst_6 : f32 to vector<8x1xf32>
    %9 = arith.divf %7, %8 : vector<8x1xf32>
    %10 = vector.broadcast %9 : vector<8x1xf32> to vector<8x32xf32>
    %11 = arith.subf %1, %10 : vector<8x32xf32>
    %12 = arith.mulf %11, %11 : vector<8x32xf32>
    %cst_7 = arith.constant dense<0.000000e+00> : vector<8xf32>
    %13 = vector.multi_reduction <add>, %12, %cst_7 [1] : vector<8x32xf32> to vector<8xf32>
    %14 = vector.shape_cast %13 : vector<8xf32> to vector<8x1xf32>
    %cst_8 = arith.constant 3.200000e+01 : f32
    %15 = vector.broadcast %cst_8 : f32 to vector<8x1xf32>
    %16 = arith.divf %14, %15 : vector<8x1xf32>
    %17 = vector.broadcast %9 : vector<8x1xf32> to vector<8x32xf32>
    %18 = arith.subf %1, %17 : vector<8x32xf32>
    %cst_9 = arith.constant 9.99999974E-6 : f32
    %19 = vector.broadcast %cst_9 : f32 to vector<8x1xf32>
    %20 = arith.addf %16, %19 : vector<8x1xf32>
    %21 = math.rsqrt %20 : vector<8x1xf32>
    %22 = vector.broadcast %21 : vector<8x1xf32> to vector<8x32xf32>
    %23 = arith.mulf %18, %22 : vector<8x32xf32>
    %24 = vector.broadcast %4 : vector<1x32xf32> to vector<8x32xf32>
    %25 = arith.mulf %23, %24 : vector<8x32xf32>
    %26 = vector.broadcast %5 : vector<1x32xf32> to vector<8x32xf32>
    %27 = arith.addf %25, %26 : vector<8x32xf32>
    %28 = arith.truncf %27 : vector<8x32xf32> to vector<8x32xbf16>
    %c0_10 = arith.constant 0 : index
    %c0_11 = arith.constant 0 : index
    %29 = vector.load %arg4[%c0_10, %c0_11] : memref<32x128xbf16, #tpu.memory_space<vmem>>, vector<32x128xbf16>
    %cst_12 = arith.constant dense<0.000000e+00> : vector<8x128xf32>
    %30 = tpu.matmul %28, %29, %cst_12 {dimension_numbers = #tpu.dot_dimension_numbers<[1], [0], [0], [1], [0, 0, 1, 1], [], []>} : vector<8x32xbf16>, vector<32x128xbf16>, vector<8x128xf32> -> vector<8x128xf32>
    %c0_13 = arith.constant 0 : index
    %c0_14 = arith.constant 0 : index
    %31 = vector.load %arg5[%c0_13, %c0_14] : memref<1x128xf32, #tpu.memory_space<vmem>>, vector<1x128xf32>
    %32 = vector.broadcast %31 : vector<1x128xf32> to vector<8x128xf32>
    %33 = arith.addf %30, %32 : vector<8x128xf32>
    %34 = arith.negf %33 : vector<8x128xf32>
    %35 = math.exp %34 : vector<8x128xf32>
    %cst_15 = arith.constant 1.000000e+00 : f32
    %36 = vector.broadcast %cst_15 : f32 to vector<8x128xf32>
    %37 = arith.addf %36, %35 : vector<8x128xf32>
    %38 = arith.divf %36, %37 : vector<8x128xf32>
    %39 = arith.mulf %33, %38 : vector<8x128xf32>
    %40 = arith.truncf %39 : vector<8x128xf32> to vector<8x128xbf16>
    %c0_16 = arith.constant 0 : index
    %c0_17 = arith.constant 0 : index
    %41 = vector.load %arg6[%c0_16, %c0_17] : memref<128x32xbf16, #tpu.memory_space<vmem>>, vector<128x32xbf16>
    %cst_18 = arith.constant dense<0.000000e+00> : vector<8x32xf32>
    %42 = tpu.matmul %40, %41, %cst_18 {dimension_numbers = #tpu.dot_dimension_numbers<[1], [0], [0], [1], [0, 0, 1, 1], [], []>} : vector<8x128xbf16>, vector<128x32xbf16>, vector<8x32xf32> -> vector<8x32xf32>
    %c0_19 = arith.constant 0 : index
    %c0_20 = arith.constant 0 : index
    %43 = vector.load %arg7[%c0_19, %c0_20] : memref<1x32xf32, #tpu.memory_space<vmem>>, vector<1x32xf32>
    %44 = vector.broadcast %43 : vector<1x32xf32> to vector<8x32xf32>
    %45 = arith.addf %42, %44 : vector<8x32xf32>
    %cst_21 = arith.constant 5.000000e-01 : f32
    %46 = vector.broadcast %cst_21 : f32 to vector<8x32xf32>
    %47 = arith.mulf %46, %45 : vector<8x32xf32>
    %48 = arith.addf %1, %47 : vector<8x32xf32>
    %49 = vector.extract_strided_slice %2 {offsets = [1, 0], sizes = [1, 32], strides = [1, 1]} : vector<5x32xf32> to vector<1x32xf32>
    %50 = vector.extract_strided_slice %3 {offsets = [1, 0], sizes = [1, 32], strides = [1, 1]} : vector<5x32xf32> to vector<1x32xf32>
    %cst_22 = arith.constant dense<0.000000e+00> : vector<8xf32>
    %51 = vector.multi_reduction <add>, %48, %cst_22 [1] : vector<8x32xf32> to vector<8xf32>
    %52 = vector.shape_cast %51 : vector<8xf32> to vector<8x1xf32>
    %cst_23 = arith.constant 3.200000e+01 : f32
    %53 = vector.broadcast %cst_23 : f32 to vector<8x1xf32>
    %54 = arith.divf %52, %53 : vector<8x1xf32>
    %55 = vector.broadcast %54 : vector<8x1xf32> to vector<8x32xf32>
    %56 = arith.subf %48, %55 : vector<8x32xf32>
    %57 = arith.mulf %56, %56 : vector<8x32xf32>
    %cst_24 = arith.constant dense<0.000000e+00> : vector<8xf32>
    %58 = vector.multi_reduction <add>, %57, %cst_24 [1] : vector<8x32xf32> to vector<8xf32>
    %59 = vector.shape_cast %58 : vector<8xf32> to vector<8x1xf32>
    %cst_25 = arith.constant 3.200000e+01 : f32
    %60 = vector.broadcast %cst_25 : f32 to vector<8x1xf32>
    %61 = arith.divf %59, %60 : vector<8x1xf32>
    %62 = vector.broadcast %54 : vector<8x1xf32> to vector<8x32xf32>
    %63 = arith.subf %48, %62 : vector<8x32xf32>
    %cst_26 = arith.constant 9.99999974E-6 : f32
    %64 = vector.broadcast %cst_26 : f32 to vector<8x1xf32>
    %65 = arith.addf %61, %64 : vector<8x1xf32>
    %66 = math.rsqrt %65 : vector<8x1xf32>
    %67 = vector.broadcast %66 : vector<8x1xf32> to vector<8x32xf32>
    %68 = arith.mulf %63, %67 : vector<8x32xf32>
    %69 = vector.broadcast %49 : vector<1x32xf32> to vector<8x32xf32>
    %70 = arith.mulf %68, %69 : vector<8x32xf32>
    %71 = vector.broadcast %50 : vector<1x32xf32> to vector<8x32xf32>
    %72 = arith.addf %70, %71 : vector<8x32xf32>
    %73 = arith.truncf %72 : vector<8x32xf32> to vector<8x32xbf16>
    %c0_27 = arith.constant 0 : index
    %c0_28 = arith.constant 0 : index
    %74 = vector.load %arg8[%c0_27, %c0_28] : memref<32x96xbf16, #tpu.memory_space<vmem>>, vector<32x96xbf16>
    %cst_29 = arith.constant dense<0.000000e+00> : vector<8x96xf32>
    %75 = tpu.matmul %73, %74, %cst_29 {dimension_numbers = #tpu.dot_dimension_numbers<[1], [0], [0], [1], [0, 0, 1, 1], [], []>} : vector<8x32xbf16>, vector<32x96xbf16>, vector<8x96xf32> -> vector<8x96xf32>
    %c0_30 = arith.constant 0 : index
    %c0_31 = arith.constant 0 : index
    %76 = vector.load %arg9[%c0_30, %c0_31] : memref<1x96xf32, #tpu.memory_space<vmem>>, vector<1x96xf32>
    %77 = vector.broadcast %76 : vector<1x96xf32> to vector<8x96xf32>
    %78 = arith.addf %75, %77 : vector<8x96xf32>
    %79 = vector.extract_strided_slice %78 {offsets = [0, 0], sizes = [8, 8], strides = [1, 1]} : vector<8x96xf32> to vector<8x8xf32>
    %80 = arith.truncf %79 : vector<8x8xf32> to vector<8x8xbf16>
    %81 = vector.extract_strided_slice %78 {offsets = [0, 32], sizes = [8, 8], strides = [1, 1]} : vector<8x96xf32> to vector<8x8xf32>
    %82 = arith.truncf %81 : vector<8x8xf32> to vector<8x8xbf16>
    %83 = vector.extract_strided_slice %78 {offsets = [0, 64], sizes = [8, 8], strides = [1, 1]} : vector<8x96xf32> to vector<8x8xf32>
    %cst_32 = arith.constant dense<0.000000e+00> : vector<8x8xf32>
    %84 = tpu.matmul %80, %82, %cst_32 {dimension_numbers = #tpu.dot_dimension_numbers<[1], [1], [0], [0], [0, 0, 1, 0], [], []>} : vector<8x8xbf16>, vector<8x8xbf16>, vector<8x8xf32> -> vector<8x8xf32>
    %cst_33 = arith.constant 0.353553385 : f32
    %85 = vector.broadcast %cst_33 : f32 to vector<8x8xf32>
    %86 = arith.mulf %84, %85 : vector<8x8xf32>
    %cst_34 = arith.constant dense<0xFF800000> : vector<8xf32>
    %87 = vector.multi_reduction <maximumf>, %86, %cst_34 [1] : vector<8x8xf32> to vector<8xf32>
    %88 = vector.shape_cast %87 : vector<8xf32> to vector<8x1xf32>
    %89 = vector.broadcast %88 : vector<8x1xf32> to vector<8x8xf32>
    %90 = arith.subf %86, %89 : vector<8x8xf32>
    %91 = math.exp %90 : vector<8x8xf32>
    %cst_35 = arith.constant dense<0.000000e+00> : vector<8xf32>
    %92 = vector.multi_reduction <add>, %91, %cst_35 [1] : vector<8x8xf32> to vector<8xf32>
    %93 = vector.shape_cast %92 : vector<8xf32> to vector<8x1xf32>
    %94 = tpu.reciprocal %93 {approx = true} : vector<8x1xf32> -> vector<8x1xf32>
    %95 = vector.broadcast %94 : vector<8x1xf32> to vector<8x8xf32>
    %96 = arith.mulf %91, %95 : vector<8x8xf32>
    %97 = arith.truncf %96 : vector<8x8xf32> to vector<8x8xbf16>
    %98 = arith.truncf %83 : vector<8x8xf32> to vector<8x8xbf16>
    %cst_36 = arith.constant dense<0.000000e+00> : vector<8x8xf32>
    %99 = tpu.matmul %97, %98, %cst_36 {dimension_numbers = #tpu.dot_dimension_numbers<[1], [0], [0], [1], [0, 0, 1, 1], [], []>} : vector<8x8xbf16>, vector<8x8xbf16>, vector<8x8xf32> -> vector<8x8xf32>
    %100 = vector.extract_strided_slice %78 {offsets = [0, 8], sizes = [8, 8], strides = [1, 1]} : vector<8x96xf32> to vector<8x8xf32>
    %101 = arith.truncf %100 : vector<8x8xf32> to vector<8x8xbf16>
    %102 = vector.extract_strided_slice %78 {offsets = [0, 40], sizes = [8, 8], strides = [1, 1]} : vector<8x96xf32> to vector<8x8xf32>
    %103 = arith.truncf %102 : vector<8x8xf32> to vector<8x8xbf16>
    %104 = vector.extract_strided_slice %78 {offsets = [0, 72], sizes = [8, 8], strides = [1, 1]} : vector<8x96xf32> to vector<8x8xf32>
    %cst_37 = arith.constant dense<0.000000e+00> : vector<8x8xf32>
    %105 = tpu.matmul %101, %103, %cst_37 {dimension_numbers = #tpu.dot_dimension_numbers<[1], [1], [0], [0], [0, 0, 1, 0], [], []>} : vector<8x8xbf16>, vector<8x8xbf16>, vector<8x8xf32> -> vector<8x8xf32>
    %cst_38 = arith.constant 0.353553385 : f32
    %106 = vector.broadcast %cst_38 : f32 to vector<8x8xf32>
    %107 = arith.mulf %105, %106 : vector<8x8xf32>
    %cst_39 = arith.constant dense<0xFF800000> : vector<8xf32>
    %108 = vector.multi_reduction <maximumf>, %107, %cst_39 [1] : vector<8x8xf32> to vector<8xf32>
    %109 = vector.shape_cast %108 : vector<8xf32> to vector<8x1xf32>
    %110 = vector.broadcast %109 : vector<8x1xf32> to vector<8x8xf32>
    %111 = arith.subf %107, %110 : vector<8x8xf32>
    %112 = math.exp %111 : vector<8x8xf32>
    %cst_40 = arith.constant dense<0.000000e+00> : vector<8xf32>
    %113 = vector.multi_reduction <add>, %112, %cst_40 [1] : vector<8x8xf32> to vector<8xf32>
    %114 = vector.shape_cast %113 : vector<8xf32> to vector<8x1xf32>
    %115 = tpu.reciprocal %114 {approx = true} : vector<8x1xf32> -> vector<8x1xf32>
    %116 = vector.broadcast %115 : vector<8x1xf32> to vector<8x8xf32>
    %117 = arith.mulf %112, %116 : vector<8x8xf32>
    %118 = arith.truncf %117 : vector<8x8xf32> to vector<8x8xbf16>
    %119 = arith.truncf %104 : vector<8x8xf32> to vector<8x8xbf16>
    %cst_41 = arith.constant dense<0.000000e+00> : vector<8x8xf32>
    %120 = tpu.matmul %118, %119, %cst_41 {dimension_numbers = #tpu.dot_dimension_numbers<[1], [0], [0], [1], [0, 0, 1, 1], [], []>} : vector<8x8xbf16>, vector<8x8xbf16>, vector<8x8xf32> -> vector<8x8xf32>
    %121 = vector.extract_strided_slice %78 {offsets = [0, 16], sizes = [8, 8], strides = [1, 1]} : vector<8x96xf32> to vector<8x8xf32>
    %122 = arith.truncf %121 : vector<8x8xf32> to vector<8x8xbf16>
    %123 = vector.extract_strided_slice %78 {offsets = [0, 48], sizes = [8, 8], strides = [1, 1]} : vector<8x96xf32> to vector<8x8xf32>
    %124 = arith.truncf %123 : vector<8x8xf32> to vector<8x8xbf16>
    %125 = vector.extract_strided_slice %78 {offsets = [0, 80], sizes = [8, 8], strides = [1, 1]} : vector<8x96xf32> to vector<8x8xf32>
    %cst_42 = arith.constant dense<0.000000e+00> : vector<8x8xf32>
    %126 = tpu.matmul %122, %124, %cst_42 {dimension_numbers = #tpu.dot_dimension_numbers<[1], [1], [0], [0], [0, 0, 1, 0], [], []>} : vector<8x8xbf16>, vector<8x8xbf16>, vector<8x8xf32> -> vector<8x8xf32>
    %cst_43 = arith.constant 0.353553385 : f32
    %127 = vector.broadcast %cst_43 : f32 to vector<8x8xf32>
    %128 = arith.mulf %126, %127 : vector<8x8xf32>
    %cst_44 = arith.constant dense<0xFF800000> : vector<8xf32>
    %129 = vector.multi_reduction <maximumf>, %128, %cst_44 [1] : vector<8x8xf32> to vector<8xf32>
    %130 = vector.shape_cast %129 : vector<8xf32> to vector<8x1xf32>
    %131 = vector.broadcast %130 : vector<8x1xf32> to vector<8x8xf32>
    %132 = arith.subf %128, %131 : vector<8x8xf32>
    %133 = math.exp %132 : vector<8x8xf32>
    %cst_45 = arith.constant dense<0.000000e+00> : vector<8xf32>
    %134 = vector.multi_reduction <add>, %133, %cst_45 [1] : vector<8x8xf32> to vector<8xf32>
    %135 = vector.shape_cast %134 : vector<8xf32> to vector<8x1xf32>
    %136 = tpu.reciprocal %135 {approx = true} : vector<8x1xf32> -> vector<8x1xf32>
    %137 = vector.broadcast %136 : vector<8x1xf32> to vector<8x8xf32>
    %138 = arith.mulf %133, %137 : vector<8x8xf32>
    %139 = arith.truncf %138 : vector<8x8xf32> to vector<8x8xbf16>
    %140 = arith.truncf %125 : vector<8x8xf32> to vector<8x8xbf16>
    %cst_46 = arith.constant dense<0.000000e+00> : vector<8x8xf32>
    %141 = tpu.matmul %139, %140, %cst_46 {dimension_numbers = #tpu.dot_dimension_numbers<[1], [0], [0], [1], [0, 0, 1, 1], [], []>} : vector<8x8xbf16>, vector<8x8xbf16>, vector<8x8xf32> -> vector<8x8xf32>
    %142 = vector.extract_strided_slice %78 {offsets = [0, 24], sizes = [8, 8], strides = [1, 1]} : vector<8x96xf32> to vector<8x8xf32>
    %143 = arith.truncf %142 : vector<8x8xf32> to vector<8x8xbf16>
    %144 = vector.extract_strided_slice %78 {offsets = [0, 56], sizes = [8, 8], strides = [1, 1]} : vector<8x96xf32> to vector<8x8xf32>
    %145 = arith.truncf %144 : vector<8x8xf32> to vector<8x8xbf16>
    %146 = vector.extract_strided_slice %78 {offsets = [0, 88], sizes = [8, 8], strides = [1, 1]} : vector<8x96xf32> to vector<8x8xf32>
    %cst_47 = arith.constant dense<0.000000e+00> : vector<8x8xf32>
    %147 = tpu.matmul %143, %145, %cst_47 {dimension_numbers = #tpu.dot_dimension_numbers<[1], [1], [0], [0], [0, 0, 1, 0], [], []>} : vector<8x8xbf16>, vector<8x8xbf16>, vector<8x8xf32> -> vector<8x8xf32>
    %cst_48 = arith.constant 0.353553385 : f32
    %148 = vector.broadcast %cst_48 : f32 to vector<8x8xf32>
    %149 = arith.mulf %147, %148 : vector<8x8xf32>
    %cst_49 = arith.constant dense<0xFF800000> : vector<8xf32>
    %150 = vector.multi_reduction <maximumf>, %149, %cst_49 [1] : vector<8x8xf32> to vector<8xf32>
    %151 = vector.shape_cast %150 : vector<8xf32> to vector<8x1xf32>
    %152 = vector.broadcast %151 : vector<8x1xf32> to vector<8x8xf32>
    %153 = arith.subf %149, %152 : vector<8x8xf32>
    %154 = math.exp %153 : vector<8x8xf32>
    %cst_50 = arith.constant dense<0.000000e+00> : vector<8xf32>
    %155 = vector.multi_reduction <add>, %154, %cst_50 [1] : vector<8x8xf32> to vector<8xf32>
    %156 = vector.shape_cast %155 : vector<8xf32> to vector<8x1xf32>
    %157 = tpu.reciprocal %156 {approx = true} : vector<8x1xf32> -> vector<8x1xf32>
    %158 = vector.broadcast %157 : vector<8x1xf32> to vector<8x8xf32>
    %159 = arith.mulf %154, %158 : vector<8x8xf32>
    %160 = arith.truncf %159 : vector<8x8xf32> to vector<8x8xbf16>
    %161 = arith.truncf %146 : vector<8x8xf32> to vector<8x8xbf16>
    %cst_51 = arith.constant dense<0.000000e+00> : vector<8x8xf32>
    %162 = tpu.matmul %160, %161, %cst_51 {dimension_numbers = #tpu.dot_dimension_numbers<[1], [0], [0], [1], [0, 0, 1, 1], [], []>} : vector<8x8xbf16>, vector<8x8xbf16>, vector<8x8xf32> -> vector<8x8xf32>
    %163 = tpu.concatenate %99, %120, %141, %162 in 1 : vector<8x8xf32>, vector<8x8xf32>, vector<8x8xf32>, vector<8x8xf32> -> vector<8x32xf32>
    %164 = arith.truncf %163 : vector<8x32xf32> to vector<8x32xbf16>
    %c0_52 = arith.constant 0 : index
    %c0_53 = arith.constant 0 : index
    %165 = vector.load %arg10[%c0_52, %c0_53] : memref<32x32xbf16, #tpu.memory_space<vmem>>, vector<32x32xbf16>
    %cst_54 = arith.constant dense<0.000000e+00> : vector<8x32xf32>
    %166 = tpu.matmul %164, %165, %cst_54 {dimension_numbers = #tpu.dot_dimension_numbers<[1], [0], [0], [1], [0, 0, 1, 1], [], []>} : vector<8x32xbf16>, vector<32x32xbf16>, vector<8x32xf32> -> vector<8x32xf32>
    %167 = arith.addf %48, %166 : vector<8x32xf32>
    %c0_55 = arith.constant 0 : index
    %c0_56 = arith.constant 0 : index
    %168 = vector.load %arg11[%c0_55, %c0_56] : memref<1x32xf32, #tpu.memory_space<vmem>>, vector<1x32xf32>
    %169 = vector.broadcast %168 : vector<1x32xf32> to vector<8x32xf32>
    %170 = arith.addf %167, %169 : vector<8x32xf32>
    %171 = vector.extract_strided_slice %2 {offsets = [2, 0], sizes = [1, 32], strides = [1, 1]} : vector<5x32xf32> to vector<1x32xf32>
    %172 = vector.extract_strided_slice %3 {offsets = [2, 0], sizes = [1, 32], strides = [1, 1]} : vector<5x32xf32> to vector<1x32xf32>
    %cst_57 = arith.constant dense<0.000000e+00> : vector<8xf32>
    %173 = vector.multi_reduction <add>, %170, %cst_57 [1] : vector<8x32xf32> to vector<8xf32>
    %174 = vector.shape_cast %173 : vector<8xf32> to vector<8x1xf32>
    %cst_58 = arith.constant 3.200000e+01 : f32
    %175 = vector.broadcast %cst_58 : f32 to vector<8x1xf32>
    %176 = arith.divf %174, %175 : vector<8x1xf32>
    %177 = vector.broadcast %176 : vector<8x1xf32> to vector<8x32xf32>
    %178 = arith.subf %170, %177 : vector<8x32xf32>
    %179 = arith.mulf %178, %178 : vector<8x32xf32>
    %cst_59 = arith.constant dense<0.000000e+00> : vector<8xf32>
    %180 = vector.multi_reduction <add>, %179, %cst_59 [1] : vector<8x32xf32> to vector<8xf32>
    %181 = vector.shape_cast %180 : vector<8xf32> to vector<8x1xf32>
    %cst_60 = arith.constant 3.200000e+01 : f32
    %182 = vector.broadcast %cst_60 : f32 to vector<8x1xf32>
    %183 = arith.divf %181, %182 : vector<8x1xf32>
    %184 = vector.broadcast %176 : vector<8x1xf32> to vector<8x32xf32>
    %185 = arith.subf %170, %184 : vector<8x32xf32>
    %cst_61 = arith.constant 9.99999974E-6 : f32
    %186 = vector.broadcast %cst_61 : f32 to vector<8x1xf32>
    %187 = arith.addf %183, %186 : vector<8x1xf32>
    %188 = math.rsqrt %187 : vector<8x1xf32>
    %189 = vector.broadcast %188 : vector<8x1xf32> to vector<8x32xf32>
    %190 = arith.mulf %185, %189 : vector<8x32xf32>
    %191 = vector.broadcast %171 : vector<1x32xf32> to vector<8x32xf32>
    %192 = arith.mulf %190, %191 : vector<8x32xf32>
    %193 = vector.broadcast %172 : vector<1x32xf32> to vector<8x32xf32>
    %194 = arith.addf %192, %193 : vector<8x32xf32>
    %195 = arith.truncf %194 : vector<8x32xf32> to vector<8x32xbf16>
    %c0_62 = arith.constant 0 : index
    %c0_63 = arith.constant 0 : index
    %196 = vector.load %arg12[%c0_62, %c0_63] : memref<32x32xbf16, #tpu.memory_space<vmem>>, vector<32x32xbf16>
    %cst_64 = arith.constant dense<0.000000e+00> : vector<8x32xf32>
    %197 = tpu.matmul %195, %196, %cst_64 {dimension_numbers = #tpu.dot_dimension_numbers<[1], [0], [0], [1], [0, 0, 1, 1], [], []>} : vector<8x32xbf16>, vector<32x32xbf16>, vector<8x32xf32> -> vector<8x32xf32>
    %c0_65 = arith.constant 0 : index
    %c0_66 = arith.constant 0 : index
    %198 = vector.load %arg13[%c0_65, %c0_66] : memref<1x32xf32, #tpu.memory_space<vmem>>, vector<1x32xf32>
    %199 = vector.broadcast %198 : vector<1x32xf32> to vector<8x32xf32>
    %200 = arith.addf %197, %199 : vector<8x32xf32>
    %201 = arith.truncf %194 : vector<8x32xf32> to vector<8x32xbf16>
    %c0_67 = arith.constant 0 : index
    %c0_68 = arith.constant 0 : index
    %202 = vector.load %arg14[%c0_67, %c0_68] : memref<32x32xbf16, #tpu.memory_space<vmem>>, vector<32x32xbf16>
    %cst_69 = arith.constant dense<0.000000e+00> : vector<8x32xf32>
    %203 = tpu.matmul %201, %202, %cst_69 {dimension_numbers = #tpu.dot_dimension_numbers<[1], [0], [0], [1], [0, 0, 1, 1], [], []>} : vector<8x32xbf16>, vector<32x32xbf16>, vector<8x32xf32> -> vector<8x32xf32>
    %c0_70 = arith.constant 0 : index
    %c0_71 = arith.constant 0 : index
    %204 = vector.load %arg15[%c0_70, %c0_71] : memref<1x32xf32, #tpu.memory_space<vmem>>, vector<1x32xf32>
    %205 = vector.broadcast %204 : vector<1x32xf32> to vector<8x32xf32>
    %206 = arith.addf %203, %205 : vector<8x32xf32>
    %207 = arith.negf %206 : vector<8x32xf32>
    %208 = math.exp %207 : vector<8x32xf32>
    %cst_72 = arith.constant 1.000000e+00 : f32
    %209 = vector.broadcast %cst_72 : f32 to vector<8x32xf32>
    %210 = arith.addf %209, %208 : vector<8x32xf32>
    %211 = arith.divf %209, %210 : vector<8x32xf32>
    %212 = arith.mulf %200, %211 : vector<8x32xf32>
    %213 = tpu.iota {dimensions = array<i32: 0>} : vector<8x1xi32>
    %c0_73 = arith.constant 0 : index
    %c0_74 = arith.constant 0 : index
    %214 = vector.load %arg16[%c0_73, %c0_74] : memref<3x32xf32, #tpu.memory_space<vmem>>, vector<3x32xf32>
    %cst_75 = arith.constant 0.000000e+00 : f32
    %215 = vector.broadcast %cst_75 : f32 to vector<8x32xf32>
    %c1_i32 = arith.constant 1 : i32
    %216 = tpu.dynamic_rotate %212 by %c1_i32 dim 0 : vector<8x32xf32>, i32 -> vector<8x32xf32>
    %c-1_i32 = arith.constant -1 : i32
    %217 = vector.broadcast %c-1_i32 : i32 to vector<8x1xi32>
    %218 = arith.addi %213, %217 : vector<8x1xi32>
    %c0_i32 = arith.constant 0 : i32
    %219 = vector.broadcast %c0_i32 : i32 to vector<8x1xi32>
    %220 = arith.cmpi sge, %218, %219 : vector<8x1xi32>
    %c-1_i32_76 = arith.constant -1 : i32
    %221 = vector.broadcast %c-1_i32_76 : i32 to vector<8x1xi32>
    %222 = arith.addi %213, %221 : vector<8x1xi32>
    %c8_i32 = arith.constant 8 : i32
    %223 = vector.broadcast %c8_i32 : i32 to vector<8x1xi32>
    %224 = arith.cmpi slt, %222, %223 : vector<8x1xi32>
    %225 = arith.andi %220, %224 : vector<8x1xi1>
    %cst_77 = arith.constant 0.000000e+00 : f32
    %226 = vector.shape_cast %225 : vector<8x1xi1> to vector<8x1xi1>
    %227 = vector.broadcast %226 : vector<8x1xi1> to vector<8x32xi1>
    %228 = vector.broadcast %cst_77 : f32 to vector<8x32xf32>
    %229 = arith.select %227, %216, %228 : vector<8x32xi1>, vector<8x32xf32>
    %230 = vector.extract_strided_slice %214 {offsets = [0, 0], sizes = [1, 32], strides = [1, 1]} : vector<3x32xf32> to vector<1x32xf32>
    %231 = vector.broadcast %230 : vector<1x32xf32> to vector<8x32xf32>
    %232 = arith.mulf %229, %231 : vector<8x32xf32>
    %233 = arith.addf %215, %232 : vector<8x32xf32>
    %234 = vector.extract_strided_slice %214 {offsets = [1, 0], sizes = [1, 32], strides = [1, 1]} : vector<3x32xf32> to vector<1x32xf32>
    %235 = vector.broadcast %234 : vector<1x32xf32> to vector<8x32xf32>
    %236 = arith.mulf %212, %235 : vector<8x32xf32>
    %237 = arith.addf %233, %236 : vector<8x32xf32>
    %c7_i32 = arith.constant 7 : i32
    %238 = tpu.dynamic_rotate %212 by %c7_i32 dim 0 : vector<8x32xf32>, i32 -> vector<8x32xf32>
    %c1_i32_78 = arith.constant 1 : i32
    %239 = vector.broadcast %c1_i32_78 : i32 to vector<8x1xi32>
    %240 = arith.addi %213, %239 : vector<8x1xi32>
    %c0_i32_79 = arith.constant 0 : i32
    %241 = vector.broadcast %c0_i32_79 : i32 to vector<8x1xi32>
    %242 = arith.cmpi sge, %240, %241 : vector<8x1xi32>
    %c1_i32_80 = arith.constant 1 : i32
    %243 = vector.broadcast %c1_i32_80 : i32 to vector<8x1xi32>
    %244 = arith.addi %213, %243 : vector<8x1xi32>
    %c8_i32_81 = arith.constant 8 : i32
    %245 = vector.broadcast %c8_i32_81 : i32 to vector<8x1xi32>
    %246 = arith.cmpi slt, %244, %245 : vector<8x1xi32>
    %247 = arith.andi %242, %246 : vector<8x1xi1>
    %cst_82 = arith.constant 0.000000e+00 : f32
    %248 = vector.shape_cast %247 : vector<8x1xi1> to vector<8x1xi1>
    %249 = vector.broadcast %248 : vector<8x1xi1> to vector<8x32xi1>
    %250 = vector.broadcast %cst_82 : f32 to vector<8x32xf32>
    %251 = arith.select %249, %238, %250 : vector<8x32xi1>, vector<8x32xf32>
    %252 = vector.extract_strided_slice %214 {offsets = [2, 0], sizes = [1, 32], strides = [1, 1]} : vector<3x32xf32> to vector<1x32xf32>
    %253 = vector.broadcast %252 : vector<1x32xf32> to vector<8x32xf32>
    %254 = arith.mulf %251, %253 : vector<8x32xf32>
    %255 = arith.addf %237, %254 : vector<8x32xf32>
    %c0_83 = arith.constant 0 : index
    %c0_84 = arith.constant 0 : index
    %256 = vector.load %arg17[%c0_83, %c0_84] : memref<1x32xf32, #tpu.memory_space<vmem>>, vector<1x32xf32>
    %257 = vector.broadcast %256 : vector<1x32xf32> to vector<8x32xf32>
    %258 = arith.addf %255, %257 : vector<8x32xf32>
    %259 = arith.negf %258 : vector<8x32xf32>
    %260 = math.exp %259 : vector<8x32xf32>
    %cst_85 = arith.constant 1.000000e+00 : f32
    %261 = vector.broadcast %cst_85 : f32 to vector<8x32xf32>
    %262 = arith.addf %261, %260 : vector<8x32xf32>
    %263 = arith.divf %261, %262 : vector<8x32xf32>
    %264 = arith.mulf %258, %263 : vector<8x32xf32>
    %265 = arith.truncf %264 : vector<8x32xf32> to vector<8x32xbf16>
    %c0_86 = arith.constant 0 : index
    %c0_87 = arith.constant 0 : index
    %266 = vector.load %arg18[%c0_86, %c0_87] : memref<32x32xbf16, #tpu.memory_space<vmem>>, vector<32x32xbf16>
    %cst_88 = arith.constant dense<0.000000e+00> : vector<8x32xf32>
    %267 = tpu.matmul %265, %266, %cst_88 {dimension_numbers = #tpu.dot_dimension_numbers<[1], [0], [0], [1], [0, 0, 1, 1], [], []>} : vector<8x32xbf16>, vector<32x32xbf16>, vector<8x32xf32> -> vector<8x32xf32>
    %268 = arith.addf %170, %267 : vector<8x32xf32>
    %c0_89 = arith.constant 0 : index
    %c0_90 = arith.constant 0 : index
    %269 = vector.load %arg19[%c0_89, %c0_90] : memref<1x32xf32, #tpu.memory_space<vmem>>, vector<1x32xf32>
    %270 = vector.broadcast %269 : vector<1x32xf32> to vector<8x32xf32>
    %271 = arith.addf %268, %270 : vector<8x32xf32>
    %272 = vector.extract_strided_slice %2 {offsets = [3, 0], sizes = [1, 32], strides = [1, 1]} : vector<5x32xf32> to vector<1x32xf32>
    %273 = vector.extract_strided_slice %3 {offsets = [3, 0], sizes = [1, 32], strides = [1, 1]} : vector<5x32xf32> to vector<1x32xf32>
    %cst_91 = arith.constant dense<0.000000e+00> : vector<8xf32>
    %274 = vector.multi_reduction <add>, %271, %cst_91 [1] : vector<8x32xf32> to vector<8xf32>
    %275 = vector.shape_cast %274 : vector<8xf32> to vector<8x1xf32>
    %cst_92 = arith.constant 3.200000e+01 : f32
    %276 = vector.broadcast %cst_92 : f32 to vector<8x1xf32>
    %277 = arith.divf %275, %276 : vector<8x1xf32>
    %278 = vector.broadcast %277 : vector<8x1xf32> to vector<8x32xf32>
    %279 = arith.subf %271, %278 : vector<8x32xf32>
    %280 = arith.mulf %279, %279 : vector<8x32xf32>
    %cst_93 = arith.constant dense<0.000000e+00> : vector<8xf32>
    %281 = vector.multi_reduction <add>, %280, %cst_93 [1] : vector<8x32xf32> to vector<8xf32>
    %282 = vector.shape_cast %281 : vector<8xf32> to vector<8x1xf32>
    %cst_94 = arith.constant 3.200000e+01 : f32
    %283 = vector.broadcast %cst_94 : f32 to vector<8x1xf32>
    %284 = arith.divf %282, %283 : vector<8x1xf32>
    %285 = vector.broadcast %277 : vector<8x1xf32> to vector<8x32xf32>
    %286 = arith.subf %271, %285 : vector<8x32xf32>
    %cst_95 = arith.constant 9.99999974E-6 : f32
    %287 = vector.broadcast %cst_95 : f32 to vector<8x1xf32>
    %288 = arith.addf %284, %287 : vector<8x1xf32>
    %289 = math.rsqrt %288 : vector<8x1xf32>
    %290 = vector.broadcast %289 : vector<8x1xf32> to vector<8x32xf32>
    %291 = arith.mulf %286, %290 : vector<8x32xf32>
    %292 = vector.broadcast %272 : vector<1x32xf32> to vector<8x32xf32>
    %293 = arith.mulf %291, %292 : vector<8x32xf32>
    %294 = vector.broadcast %273 : vector<1x32xf32> to vector<8x32xf32>
    %295 = arith.addf %293, %294 : vector<8x32xf32>
    %296 = arith.truncf %295 : vector<8x32xf32> to vector<8x32xbf16>
    %c0_96 = arith.constant 0 : index
    %c0_97 = arith.constant 0 : index
    %297 = vector.load %arg20[%c0_96, %c0_97] : memref<32x128xbf16, #tpu.memory_space<vmem>>, vector<32x128xbf16>
    %cst_98 = arith.constant dense<0.000000e+00> : vector<8x128xf32>
    %298 = tpu.matmul %296, %297, %cst_98 {dimension_numbers = #tpu.dot_dimension_numbers<[1], [0], [0], [1], [0, 0, 1, 1], [], []>} : vector<8x32xbf16>, vector<32x128xbf16>, vector<8x128xf32> -> vector<8x128xf32>
    %c0_99 = arith.constant 0 : index
    %c0_100 = arith.constant 0 : index
    %299 = vector.load %arg21[%c0_99, %c0_100] : memref<1x128xf32, #tpu.memory_space<vmem>>, vector<1x128xf32>
    %300 = vector.broadcast %299 : vector<1x128xf32> to vector<8x128xf32>
    %301 = arith.addf %298, %300 : vector<8x128xf32>
    %302 = arith.negf %301 : vector<8x128xf32>
    %303 = math.exp %302 : vector<8x128xf32>
    %cst_101 = arith.constant 1.000000e+00 : f32
    %304 = vector.broadcast %cst_101 : f32 to vector<8x128xf32>
    %305 = arith.addf %304, %303 : vector<8x128xf32>
    %306 = arith.divf %304, %305 : vector<8x128xf32>
    %307 = arith.mulf %301, %306 : vector<8x128xf32>
    %308 = arith.truncf %307 : vector<8x128xf32> to vector<8x128xbf16>
    %c0_102 = arith.constant 0 : index
    %c0_103 = arith.constant 0 : index
    %309 = vector.load %arg22[%c0_102, %c0_103] : memref<128x32xbf16, #tpu.memory_space<vmem>>, vector<128x32xbf16>
    %cst_104 = arith.constant dense<0.000000e+00> : vector<8x32xf32>
    %310 = tpu.matmul %308, %309, %cst_104 {dimension_numbers = #tpu.dot_dimension_numbers<[1], [0], [0], [1], [0, 0, 1, 1], [], []>} : vector<8x128xbf16>, vector<128x32xbf16>, vector<8x32xf32> -> vector<8x32xf32>
    %c0_105 = arith.constant 0 : index
    %c0_106 = arith.constant 0 : index
    %311 = vector.load %arg23[%c0_105, %c0_106] : memref<1x32xf32, #tpu.memory_space<vmem>>, vector<1x32xf32>
    %312 = vector.broadcast %311 : vector<1x32xf32> to vector<8x32xf32>
    %313 = arith.addf %310, %312 : vector<8x32xf32>
    %cst_107 = arith.constant 5.000000e-01 : f32
    %314 = vector.broadcast %cst_107 : f32 to vector<8x32xf32>
    %315 = arith.mulf %314, %313 : vector<8x32xf32>
    %316 = arith.addf %271, %315 : vector<8x32xf32>
    %317 = vector.extract_strided_slice %2 {offsets = [4, 0], sizes = [1, 32], strides = [1, 1]} : vector<5x32xf32> to vector<1x32xf32>
    %318 = vector.extract_strided_slice %3 {offsets = [4, 0], sizes = [1, 32], strides = [1, 1]} : vector<5x32xf32> to vector<1x32xf32>
    %cst_108 = arith.constant dense<0.000000e+00> : vector<8xf32>
    %319 = vector.multi_reduction <add>, %316, %cst_108 [1] : vector<8x32xf32> to vector<8xf32>
    %320 = vector.shape_cast %319 : vector<8xf32> to vector<8x1xf32>
    %cst_109 = arith.constant 3.200000e+01 : f32
    %321 = vector.broadcast %cst_109 : f32 to vector<8x1xf32>
    %322 = arith.divf %320, %321 : vector<8x1xf32>
    %323 = vector.broadcast %322 : vector<8x1xf32> to vector<8x32xf32>
    %324 = arith.subf %316, %323 : vector<8x32xf32>
    %325 = arith.mulf %324, %324 : vector<8x32xf32>
    %cst_110 = arith.constant dense<0.000000e+00> : vector<8xf32>
    %326 = vector.multi_reduction <add>, %325, %cst_110 [1] : vector<8x32xf32> to vector<8xf32>
    %327 = vector.shape_cast %326 : vector<8xf32> to vector<8x1xf32>
    %cst_111 = arith.constant 3.200000e+01 : f32
    %328 = vector.broadcast %cst_111 : f32 to vector<8x1xf32>
    %329 = arith.divf %327, %328 : vector<8x1xf32>
    %330 = vector.broadcast %322 : vector<8x1xf32> to vector<8x32xf32>
    %331 = arith.subf %316, %330 : vector<8x32xf32>
    %cst_112 = arith.constant 9.99999974E-6 : f32
    %332 = vector.broadcast %cst_112 : f32 to vector<8x1xf32>
    %333 = arith.addf %329, %332 : vector<8x1xf32>
    %334 = math.rsqrt %333 : vector<8x1xf32>
    %335 = vector.broadcast %334 : vector<8x1xf32> to vector<8x32xf32>
    %336 = arith.mulf %331, %335 : vector<8x32xf32>
    %337 = vector.broadcast %317 : vector<1x32xf32> to vector<8x32xf32>
    %338 = arith.mulf %336, %337 : vector<8x32xf32>
    %339 = vector.broadcast %318 : vector<1x32xf32> to vector<8x32xf32>
    %340 = arith.addf %338, %339 : vector<8x32xf32>
    %c0_113 = arith.constant 0 : index
    %c0_114 = arith.constant 0 : index
    %341 = vector.load %arg24[%c0_113, %c0_114] : memref<1x32xf32, #tpu.memory_space<vmem>>, vector<1x32xf32>
    %c0_115 = arith.constant 0 : index
    %c0_116 = arith.constant 0 : index
    %342 = vector.load %arg25[%c0_115, %c0_116] : memref<1x32xf32, #tpu.memory_space<vmem>>, vector<1x32xf32>
    %cst_117 = arith.constant dense<0.000000e+00> : vector<8xf32>
    %343 = vector.multi_reduction <add>, %340, %cst_117 [1] : vector<8x32xf32> to vector<8xf32>
    %344 = vector.shape_cast %343 : vector<8xf32> to vector<8x1xf32>
    %cst_118 = arith.constant 3.200000e+01 : f32
    %345 = vector.broadcast %cst_118 : f32 to vector<8x1xf32>
    %346 = arith.divf %344, %345 : vector<8x1xf32>
    %347 = vector.broadcast %346 : vector<8x1xf32> to vector<8x32xf32>
    %348 = arith.subf %340, %347 : vector<8x32xf32>
    %349 = arith.mulf %348, %348 : vector<8x32xf32>
    %cst_119 = arith.constant dense<0.000000e+00> : vector<8xf32>
    %350 = vector.multi_reduction <add>, %349, %cst_119 [1] : vector<8x32xf32> to vector<8xf32>
    %351 = vector.shape_cast %350 : vector<8xf32> to vector<8x1xf32>
    %cst_120 = arith.constant 3.200000e+01 : f32
    %352 = vector.broadcast %cst_120 : f32 to vector<8x1xf32>
    %353 = arith.divf %351, %352 : vector<8x1xf32>
    %354 = vector.broadcast %346 : vector<8x1xf32> to vector<8x32xf32>
    %355 = arith.subf %340, %354 : vector<8x32xf32>
    %cst_121 = arith.constant 9.99999974E-6 : f32
    %356 = vector.broadcast %cst_121 : f32 to vector<8x1xf32>
    %357 = arith.addf %353, %356 : vector<8x1xf32>
    %358 = math.rsqrt %357 : vector<8x1xf32>
    %359 = vector.broadcast %358 : vector<8x1xf32> to vector<8x32xf32>
    %360 = arith.mulf %355, %359 : vector<8x32xf32>
    %361 = vector.broadcast %341 : vector<1x32xf32> to vector<8x32xf32>
    %362 = arith.mulf %360, %361 : vector<8x32xf32>
    %363 = vector.broadcast %342 : vector<1x32xf32> to vector<8x32xf32>
    %364 = arith.addf %362, %363 : vector<8x32xf32>
    %c0_122 = arith.constant 0 : index
    %c0_123 = arith.constant 0 : index
    %c0_124 = arith.constant 0 : index
    %365 = vector.load %arg26[%c0_122, %c0_123, %c0_124] : memref<1x8x32xf32, #tpu.memory_space<vmem>>, vector<1x8x32xf32>
    %366 = vector.shape_cast %365 : vector<1x8x32xf32> to vector<8x32xf32>
    %367 = vector.shape_cast %364 : vector<8x32xf32> to vector<1x8x32xf32>
    tpu.vector_store %arg26[%c0_122, %c0_123, %c0_124], %367 {strides = array<i32>} : memref<1x8x32xf32, #tpu.memory_space<vmem>>, vector<1x8x32xf32>,
    return
  }
  func.func @transform_0(%arg0: i32) -> (i32, i32, i32) {
    %c0_i32 = arith.constant 0 : i32
    %c0_i32_0 = arith.constant 0 : i32
    %c0_i32_1 = arith.constant 0 : i32
    return %arg0, %c0_i32, %c0_i32_0 : i32, i32, i32
  }
  func.func @transform_1(%arg0: i32) -> (i32, i32) {
    %c0_i32 = arith.constant 0 : i32
    %c0_i32_0 = arith.constant 0 : i32
    %c0_i32_1 = arith.constant 0 : i32
    return %c0_i32, %c0_i32_0 : i32, i32
  }
  func.func @transform_2(%arg0: i32) -> (i32, i32) {
    %c0_i32 = arith.constant 0 : i32
    %c0_i32_0 = arith.constant 0 : i32
    %c0_i32_1 = arith.constant 0 : i32
    return %c0_i32, %c0_i32_0 : i32, i32
  }
  func.func @transform_3(%arg0: i32) -> (i32, i32) {
    %c0_i32 = arith.constant 0 : i32
    %c0_i32_0 = arith.constant 0 : i32
    %c0_i32_1 = arith.constant 0 : i32
    return %c0_i32, %c0_i32_0 : i32, i32
  }
  func.func @transform_4(%arg0: i32) -> (i32, i32) {
    %c0_i32 = arith.constant 0 : i32
    %c0_i32_0 = arith.constant 0 : i32
    %c0_i32_1 = arith.constant 0 : i32
    return %c0_i32, %c0_i32_0 : i32, i32
  }
  func.func @transform_5(%arg0: i32) -> (i32, i32) {
    %c0_i32 = arith.constant 0 : i32
    %c0_i32_0 = arith.constant 0 : i32
    %c0_i32_1 = arith.constant 0 : i32
    return %c0_i32, %c0_i32_0 : i32, i32
  }
  func.func @transform_6(%arg0: i32) -> (i32, i32) {
    %c0_i32 = arith.constant 0 : i32
    %c0_i32_0 = arith.constant 0 : i32
    %c0_i32_1 = arith.constant 0 : i32
    return %c0_i32, %c0_i32_0 : i32, i32
  }
  func.func @transform_7(%arg0: i32) -> (i32, i32) {
    %c0_i32 = arith.constant 0 : i32
    %c0_i32_0 = arith.constant 0 : i32
    %c0_i32_1 = arith.constant 0 : i32
    return %c0_i32, %c0_i32_0 : i32, i32
  }
  func.func @transform_8(%arg0: i32) -> (i32, i32) {
    %c0_i32 = arith.constant 0 : i32
    %c0_i32_0 = arith.constant 0 : i32
    %c0_i32_1 = arith.constant 0 : i32
    return %c0_i32, %c0_i32_0 : i32, i32
  }
  func.func @transform_9(%arg0: i32) -> (i32, i32) {
    %c0_i32 = arith.constant 0 : i32
    %c0_i32_0 = arith.constant 0 : i32
    %c0_i32_1 = arith.constant 0 : i32
    return %c0_i32, %c0_i32_0 : i32, i32
  }
  func.func @transform_10(%arg0: i32) -> (i32, i32) {
    %c0_i32 = arith.constant 0 : i32
    %c0_i32_0 = arith.constant 0 : i32
    %c0_i32_1 = arith.constant 0 : i32
    return %c0_i32, %c0_i32_0 : i32, i32
  }
  func.func @transform_11(%arg0: i32) -> (i32, i32) {
    %c0_i32 = arith.constant 0 : i32
    %c0_i32_0 = arith.constant 0 : i32
    %c0_i32_1 = arith.constant 0 : i32
    return %c0_i32, %c0_i32_0 : i32, i32
  }
  func.func @transform_12(%arg0: i32) -> (i32, i32) {
    %c0_i32 = arith.constant 0 : i32
    %c0_i32_0 = arith.constant 0 : i32
    %c0_i32_1 = arith.constant 0 : i32
    return %c0_i32, %c0_i32_0 : i32, i32
  }
  func.func @transform_13(%arg0: i32) -> (i32, i32) {
    %c0_i32 = arith.constant 0 : i32
    %c0_i32_0 = arith.constant 0 : i32
    %c0_i32_1 = arith.constant 0 : i32
    return %c0_i32, %c0_i32_0 : i32, i32
  }
  func.func @transform_14(%arg0: i32) -> (i32, i32) {
    %c0_i32 = arith.constant 0 : i32
    %c0_i32_0 = arith.constant 0 : i32
    %c0_i32_1 = arith.constant 0 : i32
    return %c0_i32, %c0_i32_0 : i32, i32
  }
  func.func @transform_15(%arg0: i32) -> (i32, i32) {
    %c0_i32 = arith.constant 0 : i32
    %c0_i32_0 = arith.constant 0 : i32
    %c0_i32_1 = arith.constant 0 : i32
    return %c0_i32, %c0_i32_0 : i32, i32
  }
  func.func @transform_16(%arg0: i32) -> (i32, i32) {
    %c0_i32 = arith.constant 0 : i32
    %c0_i32_0 = arith.constant 0 : i32
    %c0_i32_1 = arith.constant 0 : i32
    return %c0_i32, %c0_i32_0 : i32, i32
  }
  func.func @transform_17(%arg0: i32) -> (i32, i32) {
    %c0_i32 = arith.constant 0 : i32
    %c0_i32_0 = arith.constant 0 : i32
    %c0_i32_1 = arith.constant 0 : i32
    return %c0_i32, %c0_i32_0 : i32, i32
  }
  func.func @transform_18(%arg0: i32) -> (i32, i32) {
    %c0_i32 = arith.constant 0 : i32
    %c0_i32_0 = arith.constant 0 : i32
    %c0_i32_1 = arith.constant 0 : i32
    return %c0_i32, %c0_i32_0 : i32, i32
  }
  func.func @transform_19(%arg0: i32) -> (i32, i32) {
    %c0_i32 = arith.constant 0 : i32
    %c0_i32_0 = arith.constant 0 : i32
    %c0_i32_1 = arith.constant 0 : i32
    return %c0_i32, %c0_i32_0 : i32, i32
  }
  func.func @transform_20(%arg0: i32) -> (i32, i32) {
    %c0_i32 = arith.constant 0 : i32
    %c0_i32_0 = arith.constant 0 : i32
    %c0_i32_1 = arith.constant 0 : i32
    return %c0_i32, %c0_i32_0 : i32, i32
  }
  func.func @transform_21(%arg0: i32) -> (i32, i32) {
    %c0_i32 = arith.constant 0 : i32
    %c0_i32_0 = arith.constant 0 : i32
    %c0_i32_1 = arith.constant 0 : i32
    return %c0_i32, %c0_i32_0 : i32, i32
  }
  func.func @transform_22(%arg0: i32) -> (i32, i32) {
    %c0_i32 = arith.constant 0 : i32
    %c0_i32_0 = arith.constant 0 : i32
    %c0_i32_1 = arith.constant 0 : i32
    return %c0_i32, %c0_i32_0 : i32, i32
  }
  func.func @transform_23(%arg0: i32) -> (i32, i32) {
    %c0_i32 = arith.constant 0 : i32
    %c0_i32_0 = arith.constant 0 : i32
    %c0_i32_1 = arith.constant 0 : i32
    return %c0_i32, %c0_i32_0 : i32, i32
  }
  func.func @transform_24(%arg0: i32) -> (i32, i32) {
    %c0_i32 = arith.constant 0 : i32
    %c0_i32_0 = arith.constant 0 : i32
    %c0_i32_1 = arith.constant 0 : i32
    return %c0_i32, %c0_i32_0 : i32, i32
  }
  func.func @transform_25(%arg0: i32) -> (i32, i32, i32) {
    %c0_i32 = arith.constant 0 : i32
    %c0_i32_0 = arith.constant 0 : i32
    %c0_i32_1 = arith.constant 0 : i32
    return %arg0, %c0_i32, %c0_i32_0 : i32, i32, i32
  }
}

module attributes {stable_mosaic.version = 11 : i64} {
  func.func @_layer_kernel(%arg0: i32, %arg1: memref<1x8x32xf32, #tpu.memory_space<vmem>>, %arg2: memref<5x32xf32, #tpu.memory_space<vmem>>, %arg3: memref<5x32xf32, #tpu.memory_space<vmem>>, %arg4: memref<32x128xbf16, #tpu.memory_space<vmem>>, %arg5: memref<1x128xf32, #tpu.memory_space<vmem>>, %arg6: memref<128x32xbf16, #tpu.memory_space<vmem>>, %arg7: memref<1x32xf32, #tpu.memory_space<vmem>>, %arg8: memref<32x96xbf16, #tpu.memory_space<vmem>>, %arg9: memref<1x96xf32, #tpu.memory_space<vmem>>, %arg10: memref<32x32xbf16, #tpu.memory_space<vmem>>, %arg11: memref<1x32xf32, #tpu.memory_space<vmem>>, %arg12: memref<32x32xbf16, #tpu.memory_space<vmem>>, %arg13: memref<1x32xf32, #tpu.memory_space<vmem>>, %arg14: memref<32x32xbf16, #tpu.memory_space<vmem>>, %arg15: memref<1x32xf32, #tpu.memory_space<vmem>>, %arg16: memref<3x32xf32, #tpu.memory_space<vmem>>, %arg17: memref<1x32xf32, #tpu.memory_space<vmem>>, %arg18: memref<32x32xbf16, #tpu.memory_space<vmem>>, %arg19: memref<1x32xf32, #tpu.memory_space<vmem>>, %arg20: memref<32x128xbf16, #tpu.memory_space<vmem>>, %arg21: memref<1x128xf32, #tpu.memory_space<vmem>>, %arg22: memref<128x32xbf16, #tpu.memory_space<vmem>>, %arg23: memref<1x32xf32, #tpu.memory_space<vmem>>, %arg24: memref<1x32xf32, #tpu.memory_space<vmem>>, %arg25: memref<1x32xf32, #tpu.memory_space<vmem>>, %arg26: memref<1x8x32xf32, #tpu.memory_space<vmem>>) attributes {dimension_semantics = [#tpu.dimension_semantics<parallel>], iteration_bounds = array<i64: 2>, scalar_prefetch = 0 : i64, scratch_operands = 0 : i64, tpu.core_type = #tpu.core_type<tc>, window_params = [{transform_indices = @transform_0, window_bounds = array<i64: 1, 8, 32>}, {pipeline_mode = #tpu.pipeline_mode<synchronous>, transform_indices = @transform_1, window_bounds = array<i64: 5, 32>}, {pipeline_mode = #tpu.pipeline_mode<synchronous>, transform_indices = @transform_2, window_bounds = array<i64: 5, 32>}, {pipeline_mode = #tpu.pipeline_mode<synchronous>, transform_indices = @transform_3, window_bounds = array<i64: 32, 128>}, {pipeline_mode = #tpu.pipeline_mode<synchronous>, transform_indices = @transform_4, window_bounds = array<i64: 1, 128>}, {pipeline_mode = #tpu.pipeline_mode<synchronous>, transform_indices = @transform_5, window_bounds = array<i64: 128, 32>}, {pipeline_mode = #tpu.pipeline_mode<synchronous>, transform_indices = @transform_6, window_bounds = array<i64: 1, 32>}, {pipeline_mode = #tpu.pipeline_mode<synchronous>, transform_indices = @transform_7, window_bounds = array<i64: 32, 96>}, {pipeline_mode = #tpu.pipeline_mode<synchronous>, transform_indices = @transform_8, window_bounds = array<i64: 1, 96>}, {pipeline_mode = #tpu.pipeline_mode<synchronous>, transform_indices = @transform_9, window_bounds = array<i64: 32, 32>}, {pipeline_mode = #tpu.pipeline_mode<synchronous>, transform_indices = @transform_10, window_bounds = array<i64: 1, 32>}, {pipeline_mode = #tpu.pipeline_mode<synchronous>, transform_indices = @transform_11, window_bounds = array<i64: 32, 32>}, {pipeline_mode = #tpu.pipeline_mode<synchronous>, transform_indices = @transform_12, window_bounds = array<i64: 1, 32>}, {pipeline_mode = #tpu.pipeline_mode<synchronous>, transform_indices = @transform_13, window_bounds = array<i64: 32, 32>}, {pipeline_mode = #tpu.pipeline_mode<synchronous>, transform_indices = @transform_14, window_bounds = array<i64: 1, 32>}, {pipeline_mode = #tpu.pipeline_mode<synchronous>, transform_indices = @transform_15, window_bounds = array<i64: 3, 32>}, {pipeline_mode = #tpu.pipeline_mode<synchronous>, transform_indices = @transform_16, window_bounds = array<i64: 1, 32>}, {pipeline_mode = #tpu.pipeline_mode<synchronous>, transform_indices = @transform_17, window_bounds = array<i64: 32, 32>}, {pipeline_mode = #tpu.pipeline_mode<synchronous>, transform_indices = @transform_18, window_bounds = array<i64: 1, 32>}, {pipeline_mode = #tpu.pipeline_mode<synchronous>, transform_indices = @transform_19, window_bounds = array<i64: 32, 128>}, {pipeline_mode = #tpu.pipeline_mode<synchronous>, transform_indices = @transform_20, window_bounds = array<i64: 1, 128>}, {pipeline_mode = #tpu.pipeline_mode<synchronous>, transform_indices = @transform_21, window_bounds = array<i64: 128, 32>}, {pipeline_mode = #tpu.pipeline_mode<synchronous>, transform_indices = @transform_22, window_bounds = array<i64: 1, 32>}, {pipeline_mode = #tpu.pipeline_mode<synchronous>, transform_indices = @transform_23, window_bounds = array<i64: 1, 32>}, {pipeline_mode = #tpu.pipeline_mode<synchronous>, transform_indices = @transform_24, window_bounds = array<i64: 1, 32>}, {transform_indices = @transform_25, window_bounds = array<i64: 1, 8, 32>}]} {
    %c0 = arith.constant 0 : index
    %c0_0 = arith.constant 0 : index
    %c0_1 = arith.constant 0 : index
    %0 = vector.load %arg1[%c0, %c0_0, %c0_1] : memref<1x8x32xf32, #tpu.memory_space<vmem>>, vector<1x8x32xf32>
    %1 = vector.shape_cast %0 : vector<1x8x32xf32> to vector<8x32xf32>
    %c0_2 = arith.constant 0 : index
    %c0_3 = arith.constant 0 : index
    %2 = vector.load %arg2[%c0_2, %c0_3] : memref<5x32xf32, #tpu.memory_space<vmem>>, vector<5x32xf32>
    %c0_4 = arith.constant 0 : index
    %c0_5 = arith.constant 0 : index
    %3 = vector.load %arg3[%c0_4, %c0_5] : memref<5x32xf32, #tpu.memory_space<vmem>>, vector<5x32xf32>
    %4 = vector.extract_strided_slice %2 {offsets = [0, 0], sizes = [1, 32], strides = [1, 1]} : vector<5x32xf32> to vector<1x32xf32>
    %5 = vector.extract_strided_slice %3 {offsets = [0, 0], sizes = [1, 32], strides = [1, 1]} : vector<5x32xf32> to vector<1x32xf32>
    %cst = arith.constant dense<0.000000e+00> : vector<8xf32>
    %6 = vector.multi_reduction <add>, %1, %cst [1] : vector<8x32xf32> to vector<8xf32>
    %7 = vector.shape_cast %6 : vector<8xf32> to vector<8x1xf32>
    %cst_6 = arith.constant 3.200000e+01 : f32
    %8 = vector.broadcast %cst_6 : f32 to vector<8x1xf32>
    %9 = arith.divf %7, %8 : vector<8x1xf32>
    %10 = vector.broadcast %9 : vector<8x1xf32> to vector<8x32xf32>
    %11 = arith.subf %1, %10 : vector<8x32xf32>
    %12 = arith.mulf %11, %11 : vector<8x32xf32>
    %cst_7 = arith.constant dense<0.000000e+00> : vector<8xf32>
    %13 = vector.multi_reduction <add>, %12, %cst_7 [1] : vector<8x32xf32> to vector<8xf32>
    %14 = vector.shape_cast %13 : vector<8xf32> to vector<8x1xf32>
    %cst_8 = arith.constant 3.200000e+01 : f32
    %15 = vector.broadcast %cst_8 : f32 to vector<8x1xf32>
    %16 = arith.divf %14, %15 : vector<8x1xf32>
    %17 = vector.broadcast %9 : vector<8x1xf32> to vector<8x32xf32>
    %18 = arith.subf %1, %17 : vector<8x32xf32>
    %cst_9 = arith.constant 9.99999974E-6 : f32
    %19 = vector.broadcast %cst_9 : f32 to vector<8x1xf32>
    %20 = arith.addf %16, %19 : vector<8x1xf32>
    %21 = math.rsqrt %20 : vector<8x1xf32>
    %22 = vector.broadcast %21 : vector<8x1xf32> to vector<8x32xf32>
    %23 = arith.mulf %18, %22 : vector<8x32xf32>
    %24 = vector.broadcast %4 : vector<1x32xf32> to vector<8x32xf32>
    %25 = arith.mulf %23, %24 : vector<8x32xf32>
    %26 = vector.broadcast %5 : vector<1x32xf32> to vector<8x32xf32>
    %27 = arith.addf %25, %26 : vector<8x32xf32>
    %28 = arith.truncf %27 : vector<8x32xf32> to vector<8x32xbf16>
    %c0_10 = arith.constant 0 : index
    %c0_11 = arith.constant 0 : index
    %29 = vector.load %arg4[%c0_10, %c0_11] : memref<32x128xbf16, #tpu.memory_space<vmem>>, vector<32x128xbf16>
    %cst_12 = arith.constant dense<0.000000e+00> : vector<8x128xf32>
    %30 = tpu.matmul %28, %29, %cst_12 {dimension_numbers = #tpu.dot_dimension_numbers<[1], [0], [0], [1], [0, 0, 1, 1], [], []>} : vector<8x32xbf16>, vector<32x128xbf16>, vector<8x128xf32> -> vector<8x128xf32>
    %c0_13 = arith.constant 0 : index
    %c0_14 = arith.constant 0 : index
    %31 = vector.load %arg5[%c0_13, %c0_14] : memref<1x128xf32, #tpu.memory_space<vmem>>, vector<1x128xf32>
    %32 = vector.broadcast %31 : vector<1x128xf32> to vector<8x128xf32>
    %33 = arith.addf %30, %32 : vector<8x128xf32>
    %34 = arith.negf %33 : vector<8x128xf32>
    %35 = math.exp %34 : vector<8x128xf32>
    %cst_15 = arith.constant 1.000000e+00 : f32
    %36 = vector.broadcast %cst_15 : f32 to vector<8x128xf32>
    %37 = arith.addf %36, %35 : vector<8x128xf32>
    %38 = arith.divf %36, %37 : vector<8x128xf32>
    %39 = arith.mulf %33, %38 : vector<8x128xf32>
    %40 = arith.truncf %39 : vector<8x128xf32> to vector<8x128xbf16>
    %c0_16 = arith.constant 0 : index
    %c0_17 = arith.constant 0 : index
    %41 = vector.load %arg6[%c0_16, %c0_17] : memref<128x32xbf16, #tpu.memory_space<vmem>>, vector<128x32xbf16>
    %cst_18 = arith.constant dense<0.000000e+00> : vector<8x32xf32>
    %42 = tpu.matmul %40, %41, %cst_18 {dimension_numbers = #tpu.dot_dimension_numbers<[1], [0], [0], [1], [0, 0, 1, 1], [], []>} : vector<8x128xbf16>, vector<128x32xbf16>, vector<8x32xf32> -> vector<8x32xf32>
    %c0_19 = arith.constant 0 : index
    %c0_20 = arith.constant 0 : index
    %43 = vector.load %arg7[%c0_19, %c0_20] : memref<1x32xf32, #tpu.memory_space<vmem>>, vector<1x32xf32>
    %44 = vector.broadcast %43 : vector<1x32xf32> to vector<8x32xf32>
    %45 = arith.addf %42, %44 : vector<8x32xf32>
    %cst_21 = arith.constant 5.000000e-01 : f32
    %46 = vector.broadcast %cst_21 : f32 to vector<8x32xf32>
    %47 = arith.mulf %46, %45 : vector<8x32xf32>
    %48 = arith.addf %1, %47 : vector<8x32xf32>
    %49 = vector.extract_strided_slice %2 {offsets = [1, 0], sizes = [1, 32], strides = [1, 1]} : vector<5x32xf32> to vector<1x32xf32>
    %50 = vector.extract_strided_slice %3 {offsets = [1, 0], sizes = [1, 32], strides = [1, 1]} : vector<5x32xf32> to vector<1x32xf32>
    %cst_22 = arith.constant dense<0.000000e+00> : vector<8xf32>
    %51 = vector.multi_reduction <add>, %48, %cst_22 [1] : vector<8x32xf32> to vector<8xf32>
    %52 = vector.shape_cast %51 : vector<8xf32> to vector<8x1xf32>
    %cst_23 = arith.constant 3.200000e+01 : f32
    %53 = vector.broadcast %cst_23 : f32 to vector<8x1xf32>
    %54 = arith.divf %52, %53 : vector<8x1xf32>
    %55 = vector.broadcast %54 : vector<8x1xf32> to vector<8x32xf32>
    %56 = arith.subf %48, %55 : vector<8x32xf32>
    %57 = arith.mulf %56, %56 : vector<8x32xf32>
    %cst_24 = arith.constant dense<0.000000e+00> : vector<8xf32>
    %58 = vector.multi_reduction <add>, %57, %cst_24 [1] : vector<8x32xf32> to vector<8xf32>
    %59 = vector.shape_cast %58 : vector<8xf32> to vector<8x1xf32>
    %cst_25 = arith.constant 3.200000e+01 : f32
    %60 = vector.broadcast %cst_25 : f32 to vector<8x1xf32>
    %61 = arith.divf %59, %60 : vector<8x1xf32>
    %62 = vector.broadcast %54 : vector<8x1xf32> to vector<8x32xf32>
    %63 = arith.subf %48, %62 : vector<8x32xf32>
    %cst_26 = arith.constant 9.99999974E-6 : f32
    %64 = vector.broadcast %cst_26 : f32 to vector<8x1xf32>
    %65 = arith.addf %61, %64 : vector<8x1xf32>
    %66 = math.rsqrt %65 : vector<8x1xf32>
    %67 = vector.broadcast %66 : vector<8x1xf32> to vector<8x32xf32>
    %68 = arith.mulf %63, %67 : vector<8x32xf32>
    %69 = vector.broadcast %49 : vector<1x32xf32> to vector<8x32xf32>
    %70 = arith.mulf %68, %69 : vector<8x32xf32>
    %71 = vector.broadcast %50 : vector<1x32xf32> to vector<8x32xf32>
    %72 = arith.addf %70, %71 : vector<8x32xf32>
    %73 = arith.truncf %72 : vector<8x32xf32> to vector<8x32xbf16>
    %c0_27 = arith.constant 0 : index
    %c0_28 = arith.constant 0 : index
    %74 = vector.load %arg8[%c0_27, %c0_28] : memref<32x96xbf16, #tpu.memory_space<vmem>>, vector<32x96xbf16>
    %cst_29 = arith.constant dense<0.000000e+00> : vector<8x96xf32>
    %75 = tpu.matmul %73, %74, %cst_29 {dimension_numbers = #tpu.dot_dimension_numbers<[1], [0], [0], [1], [0, 0, 1, 1], [], []>} : vector<8x32xbf16>, vector<32x96xbf16>, vector<8x96xf32> -> vector<8x96xf32>
    %c0_30 = arith.constant 0 : index
    %c0_31 = arith.constant 0 : index
    %76 = vector.load %arg9[%c0_30, %c0_31] : memref<1x96xf32, #tpu.memory_space<vmem>>, vector<1x96xf32>
    %77 = vector.broadcast %76 : vector<1x96xf32> to vector<8x96xf32>
    %78 = arith.addf %75, %77 : vector<8x96xf32>
    %79 = vector.extract_strided_slice %78 {offsets = [0, 0], sizes = [8, 8], strides = [1, 1]} : vector<8x96xf32> to vector<8x8xf32>
    %80 = arith.truncf %79 : vector<8x8xf32> to vector<8x8xbf16>
    %81 = vector.extract_strided_slice %78 {offsets = [0, 32], sizes = [8, 8], strides = [1, 1]} : vector<8x96xf32> to vector<8x8xf32>
    %82 = arith.truncf %81 : vector<8x8xf32> to vector<8x8xbf16>
    %83 = vector.extract_strided_slice %78 {offsets = [0, 64], sizes = [8, 8], strides = [1, 1]} : vector<8x96xf32> to vector<8x8xf32>
    %cst_32 = arith.constant dense<0.000000e+00> : vector<8x8xf32>
    %84 = tpu.matmul %80, %82, %cst_32 {dimension_numbers = #tpu.dot_dimension_numbers<[1], [1], [0], [0], [0, 0, 1, 0], [], []>} : vector<8x8xbf16>, vector<8x8xbf16>, vector<8x8xf32> -> vector<8x8xf32>
    %cst_33 = arith.constant 0.353553385 : f32
    %85 = vector.broadcast %cst_33 : f32 to vector<8x8xf32>
    %86 = arith.mulf %84, %85 : vector<8x8xf32>
    %cst_34 = arith.constant dense<0xFF800000> : vector<8xf32>
    %87 = vector.multi_reduction <maximumf>, %86, %cst_34 [1] : vector<8x8xf32> to vector<8xf32>
    %88 = vector.shape_cast %87 : vector<8xf32> to vector<8x1xf32>
    %89 = vector.broadcast %88 : vector<8x1xf32> to vector<8x8xf32>
    %90 = arith.subf %86, %89 : vector<8x8xf32>
    %91 = math.exp %90 : vector<8x8xf32>
    %cst_35 = arith.constant dense<0.000000e+00> : vector<8xf32>
    %92 = vector.multi_reduction <add>, %91, %cst_35 [1] : vector<8x8xf32> to vector<8xf32>
    %93 = vector.shape_cast %92 : vector<8xf32> to vector<8x1xf32>
    %94 = tpu.reciprocal %93 {approx = true} : vector<8x1xf32> -> vector<8x1xf32>
    %95 = vector.broadcast %94 : vector<8x1xf32> to vector<8x8xf32>
    %96 = arith.mulf %91, %95 : vector<8x8xf32>
    %97 = arith.truncf %96 : vector<8x8xf32> to vector<8x8xbf16>
    %98 = arith.truncf %83 : vector<8x8xf32> to vector<8x8xbf16>
    %cst_36 = arith.constant dense<0.000000e+00> : vector<8x8xf32>
    %99 = tpu.matmul %97, %98, %cst_36 {dimension_numbers = #tpu.dot_dimension_numbers<[1], [0], [0], [1], [0, 0, 1, 1], [], []>} : vector<8x8xbf16>, vector<8x8xbf16>, vector<8x8xf32> -> vector<8x8xf32>
    %100 = vector.extract_strided_slice %78 {offsets = [0, 8], sizes = [8, 8], strides = [1, 1]} : vector<8x96xf32> to vector<8x8xf32>
    %101 = arith.truncf %100 : vector<8x8xf32> to vector<8x8xbf16>
    %102 = vector.extract_strided_slice %78 {offsets = [0, 40], sizes = [8, 8], strides = [1, 1]} : vector<8x96xf32> to vector<8x8xf32>
    %103 = arith.truncf %102 : vector<8x8xf32> to vector<8x8xbf16>
    %104 = vector.extract_strided_slice %78 {offsets = [0, 72], sizes = [8, 8], strides = [1, 1]} : vector<8x96xf32> to vector<8x8xf32>
    %cst_37 = arith.constant dense<0.000000e+00> : vector<8x8xf32>
    %105 = tpu.matmul %101, %103, %cst_37 {dimension_numbers = #tpu.dot_dimension_numbers<[1], [1], [0], [0], [0, 0, 1, 0], [], []>} : vector<8x8xbf16>, vector<8x8xbf16>, vector<8x8xf32> -> vector<8x8xf32>
    %cst_38 = arith.constant 0.353553385 : f32
    %106 = vector.broadcast %cst_38 : f32 to vector<8x8xf32>
    %107 = arith.mulf %105, %106 : vector<8x8xf32>
    %cst_39 = arith.constant dense<0xFF800000> : vector<8xf32>
    %108 = vector.multi_reduction <maximumf>, %107, %cst_39 [1] : vector<8x8xf32> to vector<8xf32>
    %109 = vector.shape_cast %108 : vector<8xf32> to vector<8x1xf32>
    %110 = vector.broadcast %109 : vector<8x1xf32> to vector<8x8xf32>
    %111 = arith.subf %107, %110 : vector<8x8xf32>
    %112 = math.exp %111 : vector<8x8xf32>
    %cst_40 = arith.constant dense<0.000000e+00> : vector<8xf32>
    %113 = vector.multi_reduction <add>, %112, %cst_40 [1] : vector<8x8xf32> to vector<8xf32>
    %114 = vector.shape_cast %113 : vector<8xf32> to vector<8x1xf32>
    %115 = tpu.reciprocal %114 {approx = true} : vector<8x1xf32> -> vector<8x1xf32>
    %116 = vector.broadcast %115 : vector<8x1xf32> to vector<8x8xf32>
    %117 = arith.mulf %112, %116 : vector<8x8xf32>
    %118 = arith.truncf %117 : vector<8x8xf32> to vector<8x8xbf16>
    %119 = arith.truncf %104 : vector<8x8xf32> to vector<8x8xbf16>
    %cst_41 = arith.constant dense<0.000000e+00> : vector<8x8xf32>
    %120 = tpu.matmul %118, %119, %cst_41 {dimension_numbers = #tpu.dot_dimension_numbers<[1], [0], [0], [1], [0, 0, 1, 1], [], []>} : vector<8x8xbf16>, vector<8x8xbf16>, vector<8x8xf32> -> vector<8x8xf32>
    %121 = vector.extract_strided_slice %78 {offsets = [0, 16], sizes = [8, 8], strides = [1, 1]} : vector<8x96xf32> to vector<8x8xf32>
    %122 = arith.truncf %121 : vector<8x8xf32> to vector<8x8xbf16>
    %123 = vector.extract_strided_slice %78 {offsets = [0, 48], sizes = [8, 8], strides = [1, 1]} : vector<8x96xf32> to vector<8x8xf32>
    %124 = arith.truncf %123 : vector<8x8xf32> to vector<8x8xbf16>
    %125 = vector.extract_strided_slice %78 {offsets = [0, 80], sizes = [8, 8], strides = [1, 1]} : vector<8x96xf32> to vector<8x8xf32>
    %cst_42 = arith.constant dense<0.000000e+00> : vector<8x8xf32>
    %126 = tpu.matmul %122, %124, %cst_42 {dimension_numbers = #tpu.dot_dimension_numbers<[1], [1], [0], [0], [0, 0, 1, 0], [], []>} : vector<8x8xbf16>, vector<8x8xbf16>, vector<8x8xf32> -> vector<8x8xf32>
    %cst_43 = arith.constant 0.353553385 : f32
    %127 = vector.broadcast %cst_43 : f32 to vector<8x8xf32>
    %128 = arith.mulf %126, %127 : vector<8x8xf32>
    %cst_44 = arith.constant dense<0xFF800000> : vector<8xf32>
    %129 = vector.multi_reduction <maximumf>, %128, %cst_44 [1] : vector<8x8xf32> to vector<8xf32>
    %130 = vector.shape_cast %129 : vector<8xf32> to vector<8x1xf32>
    %131 = vector.broadcast %130 : vector<8x1xf32> to vector<8x8xf32>
    %132 = arith.subf %128, %131 : vector<8x8xf32>
    %133 = math.exp %132 : vector<8x8xf32>
    %cst_45 = arith.constant dense<0.000000e+00> : vector<8xf32>
    %134 = vector.multi_reduction <add>, %133, %cst_45 [1] : vector<8x8xf32> to vector<8xf32>
    %135 = vector.shape_cast %134 : vector<8xf32> to vector<8x1xf32>
    %136 = tpu.reciprocal %135 {approx = true} : vector<8x1xf32> -> vector<8x1xf32>
    %137 = vector.broadcast %136 : vector<8x1xf32> to vector<8x8xf32>
    %138 = arith.mulf %133, %137 : vector<8x8xf32>
    %139 = arith.truncf %138 : vector<8x8xf32> to vector<8x8xbf16>
    %140 = arith.truncf %125 : vector<8x8xf32> to vector<8x8xbf16>
    %cst_46 = arith.constant dense<0.000000e+00> : vector<8x8xf32>
    %141 = tpu.matmul %139, %140, %cst_46 {dimension_numbers = #tpu.dot_dimension_numbers<[1], [0], [0], [1], [0, 0, 1, 1], [], []>} : vector<8x8xbf16>, vector<8x8xbf16>, vector<8x8xf32> -> vector<8x8xf32>
    %142 = vector.extract_strided_slice %78 {offsets = [0, 24], sizes = [8, 8], strides = [1, 1]} : vector<8x96xf32> to vector<8x8xf32>
    %143 = arith.truncf %142 : vector<8x8xf32> to vector<8x8xbf16>
    %144 = vector.extract_strided_slice %78 {offsets = [0, 56], sizes = [8, 8], strides = [1, 1]} : vector<8x96xf32> to vector<8x8xf32>
    %145 = arith.truncf %144 : vector<8x8xf32> to vector<8x8xbf16>
    %146 = vector.extract_strided_slice %78 {offsets = [0, 88], sizes = [8, 8], strides = [1, 1]} : vector<8x96xf32> to vector<8x8xf32>
    %cst_47 = arith.constant dense<0.000000e+00> : vector<8x8xf32>
    %147 = tpu.matmul %143, %145, %cst_47 {dimension_numbers = #tpu.dot_dimension_numbers<[1], [1], [0], [0], [0, 0, 1, 0], [], []>} : vector<8x8xbf16>, vector<8x8xbf16>, vector<8x8xf32> -> vector<8x8xf32>
    %cst_48 = arith.constant 0.353553385 : f32
    %148 = vector.broadcast %cst_48 : f32 to vector<8x8xf32>
    %149 = arith.mulf %147, %148 : vector<8x8xf32>
    %cst_49 = arith.constant dense<0xFF800000> : vector<8xf32>
    %150 = vector.multi_reduction <maximumf>, %149, %cst_49 [1] : vector<8x8xf32> to vector<8xf32>
    %151 = vector.shape_cast %150 : vector<8xf32> to vector<8x1xf32>
    %152 = vector.broadcast %151 : vector<8x1xf32> to vector<8x8xf32>
    %153 = arith.subf %149, %152 : vector<8x8xf32>
    %154 = math.exp %153 : vector<8x8xf32>
    %cst_50 = arith.constant dense<0.000000e+00> : vector<8xf32>
    %155 = vector.multi_reduction <add>, %154, %cst_50 [1] : vector<8x8xf32> to vector<8xf32>
    %156 = vector.shape_cast %155 : vector<8xf32> to vector<8x1xf32>
    %157 = tpu.reciprocal %156 {approx = true} : vector<8x1xf32> -> vector<8x1xf32>
    %158 = vector.broadcast %157 : vector<8x1xf32> to vector<8x8xf32>
    %159 = arith.mulf %154, %158 : vector<8x8xf32>
    %160 = arith.truncf %159 : vector<8x8xf32> to vector<8x8xbf16>
    %161 = arith.truncf %146 : vector<8x8xf32> to vector<8x8xbf16>
    %cst_51 = arith.constant dense<0.000000e+00> : vector<8x8xf32>
    %162 = tpu.matmul %160, %161, %cst_51 {dimension_numbers = #tpu.dot_dimension_numbers<[1], [0], [0], [1], [0, 0, 1, 1], [], []>} : vector<8x8xbf16>, vector<8x8xbf16>, vector<8x8xf32> -> vector<8x8xf32>
    %163 = tpu.concatenate %99, %120, %141, %162 in 1 : vector<8x8xf32>, vector<8x8xf32>, vector<8x8xf32>, vector<8x8xf32> -> vector<8x32xf32>
    %164 = arith.truncf %163 : vector<8x32xf32> to vector<8x32xbf16>
    %c0_52 = arith.constant 0 : index
    %c0_53 = arith.constant 0 : index
    %165 = vector.load %arg10[%c0_52, %c0_53] : memref<32x32xbf16, #tpu.memory_space<vmem>>, vector<32x32xbf16>
    %cst_54 = arith.constant dense<0.000000e+00> : vector<8x32xf32>
    %166 = tpu.matmul %164, %165, %cst_54 {dimension_numbers = #tpu.dot_dimension_numbers<[1], [0], [0], [1], [0, 0, 1, 1], [], []>} : vector<8x32xbf16>, vector<32x32xbf16>, vector<8x32xf32> -> vector<8x32xf32>
    %167 = arith.addf %48, %166 : vector<8x32xf32>
    %c0_55 = arith.constant 0 : index
    %c0_56 = arith.constant 0 : index
    %168 = vector.load %arg11[%c0_55, %c0_56] : memref<1x32xf32, #tpu.memory_space<vmem>>, vector<1x32xf32>
    %169 = vector.broadcast %168 : vector<1x32xf32> to vector<8x32xf32>
    %170 = arith.addf %167, %169 : vector<8x32xf32>
    %171 = vector.extract_strided_slice %2 {offsets = [2, 0], sizes = [1, 32], strides = [1, 1]} : vector<5x32xf32> to vector<1x32xf32>
    %172 = vector.extract_strided_slice %3 {offsets = [2, 0], sizes = [1, 32], strides = [1, 1]} : vector<5x32xf32> to vector<1x32xf32>
    %cst_57 = arith.constant dense<0.000000e+00> : vector<8xf32>
    %173 = vector.multi_reduction <add>, %170, %cst_57 [1] : vector<8x32xf32> to vector<8xf32>
    %174 = vector.shape_cast %173 : vector<8xf32> to vector<8x1xf32>
    %cst_58 = arith.constant 3.200000e+01 : f32
    %175 = vector.broadcast %cst_58 : f32 to vector<8x1xf32>
    %176 = arith.divf %174, %175 : vector<8x1xf32>
    %177 = vector.broadcast %176 : vector<8x1xf32> to vector<8x32xf32>
    %178 = arith.subf %170, %177 : vector<8x32xf32>
    %179 = arith.mulf %178, %178 : vector<8x32xf32>
    %cst_59 = arith.constant dense<0.000000e+00> : vector<8xf32>
    %180 = vector.multi_reduction <add>, %179, %cst_59 [1] : vector<8x32xf32> to vector<8xf32>
    %181 = vector.shape_cast %180 : vector<8xf32> to vector<8x1xf32>
    %cst_60 = arith.constant 3.200000e+01 : f32
    %182 = vector.broadcast %cst_60 : f32 to vector<8x1xf32>
    %183 = arith.divf %181, %182 : vector<8x1xf32>
    %184 = vector.broadcast %176 : vector<8x1xf32> to vector<8x32xf32>
    %185 = arith.subf %170, %184 : vector<8x32xf32>
    %cst_61 = arith.constant 9.99999974E-6 : f32
    %186 = vector.broadcast %cst_61 : f32 to vector<8x1xf32>
    %187 = arith.addf %183, %186 : vector<8x1xf32>
    %188 = math.rsqrt %187 : vector<8x1xf32>
    %189 = vector.broadcast %188 : vector<8x1xf32> to vector<8x32xf32>
    %190 = arith.mulf %185, %189 : vector<8x32xf32>
    %191 = vector.broadcast %171 : vector<1x32xf32> to vector<8x32xf32>
    %192 = arith.mulf %190, %191 : vector<8x32xf32>
    %193 = vector.broadcast %172 : vector<1x32xf32> to vector<8x32xf32>
    %194 = arith.addf %192, %193 : vector<8x32xf32>
    %195 = arith.truncf %194 : vector<8x32xf32> to vector<8x32xbf16>
    %c0_62 = arith.constant 0 : index
    %c0_63 = arith.constant 0 : index
    %196 = vector.load %arg12[%c0_62, %c0_63] : memref<32x32xbf16, #tpu.memory_space<vmem>>, vector<32x32xbf16>
    %cst_64 = arith.constant dense<0.000000e+00> : vector<8x32xf32>
    %197 = tpu.matmul %195, %196, %cst_64 {dimension_numbers = #tpu.dot_dimension_numbers<[1], [0], [0], [1], [0, 0, 1, 1], [], []>} : vector<8x32xbf16>, vector<32x32xbf16>, vector<8x32xf32> -> vector<8x32xf32>
    %c0_65 = arith.constant 0 : index
    %c0_66 = arith.constant 0 : index
    %198 = vector.load %arg13[%c0_65, %c0_66] : memref<1x32xf32, #tpu.memory_space<vmem>>, vector<1x32xf32>
    %199 = vector.broadcast %198 : vector<1x32xf32> to vector<8x32xf32>
    %200 = arith.addf %197, %199 : vector<8x32xf32>
    %201 = arith.truncf %194 : vector<8x32xf32> to vector<8x32xbf16>
    %c0_67 = arith.constant 0 : index
    %c0_68 = arith.constant 0 : index
    %202 = vector.load %arg14[%c0_67, %c0_68] : memref<32x32xbf16, #tpu.memory_space<vmem>>, vector<32x32xbf16>
    %cst_69 = arith.constant dense<0.000000e+00> : vector<8x32xf32>
    %203 = tpu.matmul %201, %202, %cst_69 {dimension_numbers = #tpu.dot_dimension_numbers<[1], [0], [0], [1], [0, 0, 1, 1], [], []>} : vector<8x32xbf16>, vector<32x32xbf16>, vector<8x32xf32> -> vector<8x32xf32>
    %c0_70 = arith.constant 0 : index
    %c0_71 = arith.constant 0 : index
    %204 = vector.load %arg15[%c0_70, %c0_71] : memref<1x32xf32, #tpu.memory_space<vmem>>, vector<1x32xf32>
    %205 = vector.broadcast %204 : vector<1x32xf32> to vector<8x32xf32>
    %206 = arith.addf %203, %205 : vector<8x32xf32>
    %207 = arith.negf %206 : vector<8x32xf32>
    %208 = math.exp %207 : vector<8x32xf32>
    %cst_72 = arith.constant 1.000000e+00 : f32
    %209 = vector.broadcast %cst_72 : f32 to vector<8x32xf32>
    %210 = arith.addf %209, %208 : vector<8x32xf32>
    %211 = arith.divf %209, %210 : vector<8x32xf32>
    %212 = arith.mulf %200, %211 : vector<8x32xf32>
    %213 = tpu.iota {dimensions = array<i32: 0>} : vector<8x1xi32>
    %c0_73 = arith.constant 0 : index
    %c0_74 = arith.constant 0 : index
    %214 = vector.load %arg16[%c0_73, %c0_74] : memref<3x32xf32, #tpu.memory_space<vmem>>, vector<3x32xf32>
    %cst_75 = arith.constant 0.000000e+00 : f32
    %215 = vector.broadcast %cst_75 : f32 to vector<8x32xf32>
    %c1_i32 = arith.constant 1 : i32
    %216 = tpu.dynamic_rotate %212 by %c1_i32 dim 0 : vector<8x32xf32>, i32 -> vector<8x32xf32>
    %c-1_i32 = arith.constant -1 : i32
    %217 = vector.broadcast %c-1_i32 : i32 to vector<8x1xi32>
    %218 = arith.addi %213, %217 : vector<8x1xi32>
    %c0_i32 = arith.constant 0 : i32
    %219 = vector.broadcast %c0_i32 : i32 to vector<8x1xi32>
    %220 = arith.cmpi sge, %218, %219 : vector<8x1xi32>
    %c-1_i32_76 = arith.constant -1 : i32
    %221 = vector.broadcast %c-1_i32_76 : i32 to vector<8x1xi32>
    %222 = arith.addi %213, %221 : vector<8x1xi32>
    %c8_i32 = arith.constant 8 : i32
    %223 = vector.broadcast %c8_i32 : i32 to vector<8x1xi32>
    %224 = arith.cmpi slt, %222, %223 : vector<8x1xi32>
    %225 = arith.andi %220, %224 : vector<8x1xi1>
    %cst_77 = arith.constant 0.000000e+00 : f32
    %226 = vector.shape_cast %225 : vector<8x1xi1> to vector<8x1xi1>
    %227 = vector.broadcast %226 : vector<8x1xi1> to vector<8x32xi1>
    %228 = vector.broadcast %cst_77 : f32 to vector<8x32xf32>
    %229 = arith.select %227, %216, %228 : vector<8x32xi1>, vector<8x32xf32>
    %230 = vector.extract_strided_slice %214 {offsets = [0, 0], sizes = [1, 32], strides = [1, 1]} : vector<3x32xf32> to vector<1x32xf32>
    %231 = vector.broadcast %230 : vector<1x32xf32> to vector<8x32xf32>
    %232 = arith.mulf %229, %231 : vector<8x32xf32>
    %233 = arith.addf %215, %232 : vector<8x32xf32>
    %234 = vector.extract_strided_slice %214 {offsets = [1, 0], sizes = [1, 32], strides = [1, 1]} : vector<3x32xf32> to vector<1x32xf32>
    %235 = vector.broadcast %234 : vector<1x32xf32> to vector<8x32xf32>
    %236 = arith.mulf %212, %235 : vector<8x32xf32>
    %237 = arith.addf %233, %236 : vector<8x32xf32>
    %c7_i32 = arith.constant 7 : i32
    %238 = tpu.dynamic_rotate %212 by %c7_i32 dim 0 : vector<8x32xf32>, i32 -> vector<8x32xf32>
    %c1_i32_78 = arith.constant 1 : i32
    %239 = vector.broadcast %c1_i32_78 : i32 to vector<8x1xi32>
    %240 = arith.addi %213, %239 : vector<8x1xi32>
    %c0_i32_79 = arith.constant 0 : i32
    %241 = vector.broadcast %c0_i32_79 : i32 to vector<8x1xi32>
    %242 = arith.cmpi sge, %240, %241 : vector<8x1xi32>
    %c1_i32_80 = arith.constant 1 : i32
    %243 = vector.broadcast %c1_i32_80 : i32 to vector<8x1xi32>
    %244 = arith.addi %213, %243 : vector<8x1xi32>
    %c8_i32_81 = arith.constant 8 : i32
    %245 = vector.broadcast %c8_i32_81 : i32 to vector<8x1xi32>
    %246 = arith.cmpi slt, %244, %245 : vector<8x1xi32>
    %247 = arith.andi %242, %246 : vector<8x1xi1>
    %cst_82 = arith.constant 0.000000e+00 : f32
    %248 = vector.shape_cast %247 : vector<8x1xi1> to vector<8x1xi1>
    %249 = vector.broadcast %248 : vector<8x1xi1> to vector<8x32xi1>
    %250 = vector.broadcast %cst_82 : f32 to vector<8x32xf32>
    %251 = arith.select %249, %238, %250 : vector<8x32xi1>, vector<8x32xf32>
    %252 = vector.extract_strided_slice %214 {offsets = [2, 0], sizes = [1, 32], strides = [1, 1]} : vector<3x32xf32> to vector<1x32xf32>
    %253 = vector.broadcast %252 : vector<1x32xf32> to vector<8x32xf32>
    %254 = arith.mulf %251, %253 : vector<8x32xf32>
    %255 = arith.addf %237, %254 : vector<8x32xf32>
    %c0_83 = arith.constant 0 : index
    %c0_84 = arith.constant 0 : index
    %256 = vector.load %arg17[%c0_83, %c0_84] : memref<1x32xf32, #tpu.memory_space<vmem>>, vector<1x32xf32>
    %257 = vector.broadcast %256 : vector<1x32xf32> to vector<8x32xf32>
    %258 = arith.addf %255, %257 : vector<8x32xf32>
    %259 = arith.negf %258 : vector<8x32xf32>
    %260 = math.exp %259 : vector<8x32xf32>
    %cst_85 = arith.constant 1.000000e+00 : f32
    %261 = vector.broadcast %cst_85 : f32 to vector<8x32xf32>
    %262 = arith.addf %261, %260 : vector<8x32xf32>
    %263 = arith.divf %261, %262 : vector<8x32xf32>
    %264 = arith.mulf %258, %263 : vector<8x32xf32>
    %265 = arith.truncf %264 : vector<8x32xf32> to vector<8x32xbf16>
    %c0_86 = arith.constant 0 : index
    %c0_87 = arith.constant 0 : index
    %266 = vector.load %arg18[%c0_86, %c0_87] : memref<32x32xbf16, #tpu.memory_space<vmem>>, vector<32x32xbf16>
    %cst_88 = arith.constant dense<0.000000e+00> : vector<8x32xf32>
    %267 = tpu.matmul %265, %266, %cst_88 {dimension_numbers = #tpu.dot_dimension_numbers<[1], [0], [0], [1], [0, 0, 1, 1], [], []>} : vector<8x32xbf16>, vector<32x32xbf16>, vector<8x32xf32> -> vector<8x32xf32>
    %268 = arith.addf %170, %267 : vector<8x32xf32>
    %c0_89 = arith.constant 0 : index
    %c0_90 = arith.constant 0 : index
    %269 = vector.load %arg19[%c0_89, %c0_90] : memref<1x32xf32, #tpu.memory_space<vmem>>, vector<1x32xf32>
    %270 = vector.broadcast %269 : vector<1x32xf32> to vector<8x32xf32>
    %271 = arith.addf %268, %270 : vector<8x32xf32>
    %272 = vector.extract_strided_slice %2 {offsets = [3, 0], sizes = [1, 32], strides = [1, 1]} : vector<5x32xf32> to vector<1x32xf32>
    %273 = vector.extract_strided_slice %3 {offsets = [3, 0], sizes = [1, 32], strides = [1, 1]} : vector<5x32xf32> to vector<1x32xf32>
    %cst_91 = arith.constant dense<0.000000e+00> : vector<8xf32>
    %274 = vector.multi_reduction <add>, %271, %cst_91 [1] : vector<8x32xf32> to vector<8xf32>
    %275 = vector.shape_cast %274 : vector<8xf32> to vector<8x1xf32>
    %cst_92 = arith.constant 3.200000e+01 : f32
    %276 = vector.broadcast %cst_92 : f32 to vector<8x1xf32>
    %277 = arith.divf %275, %276 : vector<8x1xf32>
    %278 = vector.broadcast %277 : vector<8x1xf32> to vector<8x32xf32>
    %279 = arith.subf %271, %278 : vector<8x32xf32>
    %280 = arith.mulf %279, %279 : vector<8x32xf32>
    %cst_93 = arith.constant dense<0.000000e+00> : vector<8xf32>
    %281 = vector.multi_reduction <add>, %280, %cst_93 [1] : vector<8x32xf32> to vector<8xf32>
    %282 = vector.shape_cast %281 : vector<8xf32> to vector<8x1xf32>
    %cst_94 = arith.constant 3.200000e+01 : f32
    %283 = vector.broadcast %cst_94 : f32 to vector<8x1xf32>
    %284 = arith.divf %282, %283 : vector<8x1xf32>
    %285 = vector.broadcast %277 : vector<8x1xf32> to vector<8x32xf32>
    %286 = arith.subf %271, %285 : vector<8x32xf32>
    %cst_95 = arith.constant 9.99999974E-6 : f32
    %287 = vector.broadcast %cst_95 : f32 to vector<8x1xf32>
    %288 = arith.addf %284, %287 : vector<8x1xf32>
    %289 = math.rsqrt %288 : vector<8x1xf32>
    %290 = vector.broadcast %289 : vector<8x1xf32> to vector<8x32xf32>
    %291 = arith.mulf %286, %290 : vector<8x32xf32>
    %292 = vector.broadcast %272 : vector<1x32xf32> to vector<8x32xf32>
    %293 = arith.mulf %291, %292 : vector<8x32xf32>
    %294 = vector.broadcast %273 : vector<1x32xf32> to vector<8x32xf32>
    %295 = arith.addf %293, %294 : vector<8x32xf32>
    %296 = arith.truncf %295 : vector<8x32xf32> to vector<8x32xbf16>
    %c0_96 = arith.constant 0 : index
    %c0_97 = arith.constant 0 : index
    %297 = vector.load %arg20[%c0_96, %c0_97] : memref<32x128xbf16, #tpu.memory_space<vmem>>, vector<32x128xbf16>
    %cst_98 = arith.constant dense<0.000000e+00> : vector<8x128xf32>
    %298 = tpu.matmul %296, %297, %cst_98 {dimension_numbers = #tpu.dot_dimension_numbers<[1], [0], [0], [1], [0, 0, 1, 1], [], []>} : vector<8x32xbf16>, vector<32x128xbf16>, vector<8x128xf32> -> vector<8x128xf32>
    %c0_99 = arith.constant 0 : index
    %c0_100 = arith.constant 0 : index
    %299 = vector.load %arg21[%c0_99, %c0_100] : memref<1x128xf32, #tpu.memory_space<vmem>>, vector<1x128xf32>
    %300 = vector.broadcast %299 : vector<1x128xf32> to vector<8x128xf32>
    %301 = arith.addf %298, %300 : vector<8x128xf32>
    %302 = arith.negf %301 : vector<8x128xf32>
    %303 = math.exp %302 : vector<8x128xf32>
    %cst_101 = arith.constant 1.000000e+00 : f32
    %304 = vector.broadcast %cst_101 : f32 to vector<8x128xf32>
    %305 = arith.addf %304, %303 : vector<8x128xf32>
    %306 = arith.divf %304, %305 : vector<8x128xf32>
    %307 = arith.mulf %301, %306 : vector<8x128xf32>
    %308 = arith.truncf %307 : vector<8x128xf32> to vector<8x128xbf16>
    %c0_102 = arith.constant 0 : index
    %c0_103 = arith.constant 0 : index
    %309 = vector.load %arg22[%c0_102, %c0_103] : memref<128x32xbf16, #tpu.memory_space<vmem>>, vector<128x32xbf16>
    %cst_104 = arith.constant dense<0.000000e+00> : vector<8x32xf32>
    %310 = tpu.matmul %308, %309, %cst_104 {dimension_numbers = #tpu.dot_dimension_numbers<[1], [0], [0], [1], [0, 0, 1, 1], [], []>} : vector<8x128xbf16>, vector<128x32xbf16>, vector<8x32xf32> -> vector<8x32xf32>
    %c0_105 = arith.constant 0 : index
    %c0_106 = arith.constant 0 : index
    %311 = vector.load %arg23[%c0_105, %c0_106] : memref<1x32xf32, #tpu.memory_space<vmem>>, vector<1x32xf32>
    %312 = vector.broadcast %311 : vector<1x32xf32> to vector<8x32xf32>
    %313 = arith.addf %310, %312 : vector<8x32xf32>
    %cst_107 = arith.constant 5.000000e-01 : f32
    %314 = vector.broadcast %cst_107 : f32 to vector<8x32xf32>
    %315 = arith.mulf %314, %313 : vector<8x32xf32>
    %316 = arith.addf %271, %315 : vector<8x32xf32>
    %317 = vector.extract_strided_slice %2 {offsets = [4, 0], sizes = [1, 32], strides = [1, 1]} : vector<5x32xf32> to vector<1x32xf32>
    %318 = vector.extract_strided_slice %3 {offsets = [4, 0], sizes = [1, 32], strides = [1, 1]} : vector<5x32xf32> to vector<1x32xf32>
    %cst_108 = arith.constant dense<0.000000e+00> : vector<8xf32>
    %319 = vector.multi_reduction <add>, %316, %cst_108 [1] : vector<8x32xf32> to vector<8xf32>
    %320 = vector.shape_cast %319 : vector<8xf32> to vector<8x1xf32>
    %cst_109 = arith.constant 3.200000e+01 : f32
    %321 = vector.broadcast %cst_109 : f32 to vector<8x1xf32>
    %322 = arith.divf %320, %321 : vector<8x1xf32>
    %323 = vector.broadcast %322 : vector<8x1xf32> to vector<8x32xf32>
    %324 = arith.subf %316, %323 : vector<8x32xf32>
    %325 = arith.mulf %324, %324 : vector<8x32xf32>
    %cst_110 = arith.constant dense<0.000000e+00> : vector<8xf32>
    %326 = vector.multi_reduction <add>, %325, %cst_110 [1] : vector<8x32xf32> to vector<8xf32>
    %327 = vector.shape_cast %326 : vector<8xf32> to vector<8x1xf32>
    %cst_111 = arith.constant 3.200000e+01 : f32
    %328 = vector.broadcast %cst_111 : f32 to vector<8x1xf32>
    %329 = arith.divf %327, %328 : vector<8x1xf32>
    %330 = vector.broadcast %322 : vector<8x1xf32> to vector<8x32xf32>
    %331 = arith.subf %316, %330 : vector<8x32xf32>
    %cst_112 = arith.constant 9.99999974E-6 : f32
    %332 = vector.broadcast %cst_112 : f32 to vector<8x1xf32>
    %333 = arith.addf %329, %332 : vector<8x1xf32>
    %334 = math.rsqrt %333 : vector<8x1xf32>
    %335 = vector.broadcast %334 : vector<8x1xf32> to vector<8x32xf32>
    %336 = arith.mulf %331, %335 : vector<8x32xf32>
    %337 = vector.broadcast %317 : vector<1x32xf32> to vector<8x32xf32>
    %338 = arith.mulf %336, %337 : vector<8x32xf32>
    %339 = vector.broadcast %318 : vector<1x32xf32> to vector<8x32xf32>
    %340 = arith.addf %338, %339 : vector<8x32xf32>
    %c0_113 = arith.constant 0 : index
    %c0_114 = arith.constant 0 : index
    %c0_115 = arith.constant 0 : index
    %341 = vector.load %arg26[%c0_113, %c0_114, %c0_115] : memref<1x8x32xf32, #tpu.memory_space<vmem>>, vector<1x8x32xf32>
    %342 = vector.shape_cast %341 : vector<1x8x32xf32> to vector<8x32xf32>
    %343 = vector.shape_cast %340 : vector<8x32xf32> to vector<1x8x32xf32>
    tpu.vector_store %arg26[%c0_113, %c0_114, %c0_115], %343 {strides = array<i32>} : memref<1x8x32xf32, #tpu.memory_space<vmem>>, vector<1x8x32xf32>,
    return
  }
  func.func @transform_0(%arg0: i32) -> (i32, i32, i32) {
    %c0_i32 = arith.constant 0 : i32
    %c0_i32_0 = arith.constant 0 : i32
    %c0_i32_1 = arith.constant 0 : i32
    return %arg0, %c0_i32, %c0_i32_0 : i32, i32, i32
  }
  func.func @transform_1(%arg0: i32) -> (i32, i32) {
    %c0_i32 = arith.constant 0 : i32
    %c0_i32_0 = arith.constant 0 : i32
    %c0_i32_1 = arith.constant 0 : i32
    return %c0_i32, %c0_i32_0 : i32, i32
  }
  func.func @transform_2(%arg0: i32) -> (i32, i32) {
    %c0_i32 = arith.constant 0 : i32
    %c0_i32_0 = arith.constant 0 : i32
    %c0_i32_1 = arith.constant 0 : i32
    return %c0_i32, %c0_i32_0 : i32, i32
  }
  func.func @transform_3(%arg0: i32) -> (i32, i32) {
    %c0_i32 = arith.constant 0 : i32
    %c0_i32_0 = arith.constant 0 : i32
    %c0_i32_1 = arith.constant 0 : i32
    return %c0_i32, %c0_i32_0 : i32, i32
  }
  func.func @transform_4(%arg0: i32) -> (i32, i32) {
    %c0_i32 = arith.constant 0 : i32
    %c0_i32_0 = arith.constant 0 : i32
    %c0_i32_1 = arith.constant 0 : i32
    return %c0_i32, %c0_i32_0 : i32, i32
  }
  func.func @transform_5(%arg0: i32) -> (i32, i32) {
    %c0_i32 = arith.constant 0 : i32
    %c0_i32_0 = arith.constant 0 : i32
    %c0_i32_1 = arith.constant 0 : i32
    return %c0_i32, %c0_i32_0 : i32, i32
  }
  func.func @transform_6(%arg0: i32) -> (i32, i32) {
    %c0_i32 = arith.constant 0 : i32
    %c0_i32_0 = arith.constant 0 : i32
    %c0_i32_1 = arith.constant 0 : i32
    return %c0_i32, %c0_i32_0 : i32, i32
  }
  func.func @transform_7(%arg0: i32) -> (i32, i32) {
    %c0_i32 = arith.constant 0 : i32
    %c0_i32_0 = arith.constant 0 : i32
    %c0_i32_1 = arith.constant 0 : i32
    return %c0_i32, %c0_i32_0 : i32, i32
  }
  func.func @transform_8(%arg0: i32) -> (i32, i32) {
    %c0_i32 = arith.constant 0 : i32
    %c0_i32_0 = arith.constant 0 : i32
    %c0_i32_1 = arith.constant 0 : i32
    return %c0_i32, %c0_i32_0 : i32, i32
  }
  func.func @transform_9(%arg0: i32) -> (i32, i32) {
    %c0_i32 = arith.constant 0 : i32
    %c0_i32_0 = arith.constant 0 : i32
    %c0_i32_1 = arith.constant 0 : i32
    return %c0_i32, %c0_i32_0 : i32, i32
  }
  func.func @transform_10(%arg0: i32) -> (i32, i32) {
    %c0_i32 = arith.constant 0 : i32
    %c0_i32_0 = arith.constant 0 : i32
    %c0_i32_1 = arith.constant 0 : i32
    return %c0_i32, %c0_i32_0 : i32, i32
  }
  func.func @transform_11(%arg0: i32) -> (i32, i32) {
    %c0_i32 = arith.constant 0 : i32
    %c0_i32_0 = arith.constant 0 : i32
    %c0_i32_1 = arith.constant 0 : i32
    return %c0_i32, %c0_i32_0 : i32, i32
  }
  func.func @transform_12(%arg0: i32) -> (i32, i32) {
    %c0_i32 = arith.constant 0 : i32
    %c0_i32_0 = arith.constant 0 : i32
    %c0_i32_1 = arith.constant 0 : i32
    return %c0_i32, %c0_i32_0 : i32, i32
  }
  func.func @transform_13(%arg0: i32) -> (i32, i32) {
    %c0_i32 = arith.constant 0 : i32
    %c0_i32_0 = arith.constant 0 : i32
    %c0_i32_1 = arith.constant 0 : i32
    return %c0_i32, %c0_i32_0 : i32, i32
  }
  func.func @transform_14(%arg0: i32) -> (i32, i32) {
    %c0_i32 = arith.constant 0 : i32
    %c0_i32_0 = arith.constant 0 : i32
    %c0_i32_1 = arith.constant 0 : i32
    return %c0_i32, %c0_i32_0 : i32, i32
  }
  func.func @transform_15(%arg0: i32) -> (i32, i32) {
    %c0_i32 = arith.constant 0 : i32
    %c0_i32_0 = arith.constant 0 : i32
    %c0_i32_1 = arith.constant 0 : i32
    return %c0_i32, %c0_i32_0 : i32, i32
  }
  func.func @transform_16(%arg0: i32) -> (i32, i32) {
    %c0_i32 = arith.constant 0 : i32
    %c0_i32_0 = arith.constant 0 : i32
    %c0_i32_1 = arith.constant 0 : i32
    return %c0_i32, %c0_i32_0 : i32, i32
  }
  func.func @transform_17(%arg0: i32) -> (i32, i32) {
    %c0_i32 = arith.constant 0 : i32
    %c0_i32_0 = arith.constant 0 : i32
    %c0_i32_1 = arith.constant 0 : i32
    return %c0_i32, %c0_i32_0 : i32, i32
  }
  func.func @transform_18(%arg0: i32) -> (i32, i32) {
    %c0_i32 = arith.constant 0 : i32
    %c0_i32_0 = arith.constant 0 : i32
    %c0_i32_1 = arith.constant 0 : i32
    return %c0_i32, %c0_i32_0 : i32, i32
  }
  func.func @transform_19(%arg0: i32) -> (i32, i32) {
    %c0_i32 = arith.constant 0 : i32
    %c0_i32_0 = arith.constant 0 : i32
    %c0_i32_1 = arith.constant 0 : i32
    return %c0_i32, %c0_i32_0 : i32, i32
  }
  func.func @transform_20(%arg0: i32) -> (i32, i32) {
    %c0_i32 = arith.constant 0 : i32
    %c0_i32_0 = arith.constant 0 : i32
    %c0_i32_1 = arith.constant 0 : i32
    return %c0_i32, %c0_i32_0 : i32, i32
  }
  func.func @transform_21(%arg0: i32) -> (i32, i32) {
    %c0_i32 = arith.constant 0 : i32
    %c0_i32_0 = arith.constant 0 : i32
    %c0_i32_1 = arith.constant 0 : i32
    return %c0_i32, %c0_i32_0 : i32, i32
  }
  func.func @transform_22(%arg0: i32) -> (i32, i32) {
    %c0_i32 = arith.constant 0 : i32
    %c0_i32_0 = arith.constant 0 : i32
    %c0_i32_1 = arith.constant 0 : i32
    return %c0_i32, %c0_i32_0 : i32, i32
  }
  func.func @transform_23(%arg0: i32) -> (i32, i32) {
    %c0_i32 = arith.constant 0 : i32
    %c0_i32_0 = arith.constant 0 : i32
    %c0_i32_1 = arith.constant 0 : i32
    return %c0_i32, %c0_i32_0 : i32, i32
  }
  func.func @transform_24(%arg0: i32) -> (i32, i32) {
    %c0_i32 = arith.constant 0 : i32
    %c0_i32_0 = arith.constant 0 : i32
    %c0_i32_1 = arith.constant 0 : i32
    return %c0_i32, %c0_i32_0 : i32, i32
  }
  func.func @transform_25(%arg0: i32) -> (i32, i32, i32) {
    %c0_i32 = arith.constant 0 : i32
    %c0_i32_0 = arith.constant 0 : i32
    %c0_i32_1 = arith.constant 0 : i32
    return %arg0, %c0_i32, %c0_i32_0 : i32, i32, i32
  }
}

module attributes {stable_mosaic.version = 11 : i64} {
  func.func @_head_kernel(%arg0: i32, %arg1: memref<2x256xf32, #tpu.memory_space<vmem>>, %arg2: memref<256x64xbf16, #tpu.memory_space<vmem>>, %arg3: memref<1x64xf32, #tpu.memory_space<vmem>>, %arg4: memref<64x17xbf16, #tpu.memory_space<vmem>>, %arg5: memref<1x17xf32, #tpu.memory_space<vmem>>, %arg6: memref<17x1xbf16, #tpu.memory_space<vmem>>, %arg7: memref<1x1xf32, #tpu.memory_space<vmem>>, %arg8: memref<1x4xf32, #tpu.memory_space<vmem>>, %arg9: memref<2x5xf32, #tpu.memory_space<vmem>>) attributes {dimension_semantics = [#tpu.dimension_semantics<arbitrary>], iteration_bounds = array<i64: 1>, scalar_prefetch = 0 : i64, scratch_operands = 0 : i64, tpu.core_type = #tpu.core_type<tc>, window_params = [{pipeline_mode = #tpu.pipeline_mode<synchronous>, transform_indices = @transform_0, window_bounds = array<i64: 2, 256>}, {pipeline_mode = #tpu.pipeline_mode<synchronous>, transform_indices = @transform_1, window_bounds = array<i64: 256, 64>}, {pipeline_mode = #tpu.pipeline_mode<synchronous>, transform_indices = @transform_2, window_bounds = array<i64: 1, 64>}, {pipeline_mode = #tpu.pipeline_mode<synchronous>, transform_indices = @transform_3, window_bounds = array<i64: 64, 17>}, {pipeline_mode = #tpu.pipeline_mode<synchronous>, transform_indices = @transform_4, window_bounds = array<i64: 1, 17>}, {pipeline_mode = #tpu.pipeline_mode<synchronous>, transform_indices = @transform_5, window_bounds = array<i64: 17, 1>}, {pipeline_mode = #tpu.pipeline_mode<synchronous>, transform_indices = @transform_6, window_bounds = array<i64: 1, 1>}, {pipeline_mode = #tpu.pipeline_mode<synchronous>, transform_indices = @transform_7, window_bounds = array<i64: 1, 4>}, {pipeline_mode = #tpu.pipeline_mode<synchronous>, transform_indices = @transform_8, window_bounds = array<i64: 2, 5>}]} {
    %c0 = arith.constant 0 : index
    %c0_0 = arith.constant 0 : index
    %0 = vector.load %arg1[%c0, %c0_0] : memref<2x256xf32, #tpu.memory_space<vmem>>, vector<2x256xf32>
    %1 = arith.truncf %0 : vector<2x256xf32> to vector<2x256xbf16>
    %c0_1 = arith.constant 0 : index
    %c0_2 = arith.constant 0 : index
    %2 = vector.load %arg2[%c0_1, %c0_2] : memref<256x64xbf16, #tpu.memory_space<vmem>>, vector<256x64xbf16>
    %cst = arith.constant dense<0.000000e+00> : vector<2x64xf32>
    %3 = tpu.matmul %1, %2, %cst {dimension_numbers = #tpu.dot_dimension_numbers<[1], [0], [0], [1], [0, 0, 1, 1], [], []>} : vector<2x256xbf16>, vector<256x64xbf16>, vector<2x64xf32> -> vector<2x64xf32>
    %c0_3 = arith.constant 0 : index
    %c0_4 = arith.constant 0 : index
    %4 = vector.load %arg3[%c0_3, %c0_4] : memref<1x64xf32, #tpu.memory_space<vmem>>, vector<1x64xf32>
    %5 = vector.broadcast %4 : vector<1x64xf32> to vector<2x64xf32>
    %6 = arith.addf %3, %5 : vector<2x64xf32>
    %cst_5 = arith.constant 0.000000e+00 : f32
    %7 = vector.broadcast %cst_5 : f32 to vector<2x64xf32>
    %8 = arith.maximumf %6, %7 : vector<2x64xf32>
    %9 = arith.truncf %8 : vector<2x64xf32> to vector<2x64xbf16>
    %c0_6 = arith.constant 0 : index
    %c0_7 = arith.constant 0 : index
    %10 = vector.load %arg4[%c0_6, %c0_7] : memref<64x17xbf16, #tpu.memory_space<vmem>>, vector<64x17xbf16>
    %cst_8 = arith.constant dense<0.000000e+00> : vector<2x17xf32>
    %11 = tpu.matmul %9, %10, %cst_8 {dimension_numbers = #tpu.dot_dimension_numbers<[1], [0], [0], [1], [0, 0, 1, 1], [], []>} : vector<2x64xbf16>, vector<64x17xbf16>, vector<2x17xf32> -> vector<2x17xf32>
    %c0_9 = arith.constant 0 : index
    %c0_10 = arith.constant 0 : index
    %12 = vector.load %arg5[%c0_9, %c0_10] : memref<1x17xf32, #tpu.memory_space<vmem>>, vector<1x17xf32>
    %13 = vector.broadcast %12 : vector<1x17xf32> to vector<2x17xf32>
    %14 = arith.addf %11, %13 : vector<2x17xf32>
    %cst_11 = arith.constant 0.000000e+00 : f32
    %15 = vector.broadcast %cst_11 : f32 to vector<2x17xf32>
    %16 = arith.maximumf %14, %15 : vector<2x17xf32>
    %17 = arith.truncf %16 : vector<2x17xf32> to vector<2x17xbf16>
    %c0_12 = arith.constant 0 : index
    %c0_13 = arith.constant 0 : index
    %18 = vector.load %arg6[%c0_12, %c0_13] : memref<17x1xbf16, #tpu.memory_space<vmem>>, vector<17x1xbf16>
    %cst_14 = arith.constant dense<0.000000e+00> : vector<2x1xf32>
    %19 = tpu.matmul %17, %18, %cst_14 {dimension_numbers = #tpu.dot_dimension_numbers<[1], [0], [0], [1], [0, 0, 1, 1], [], []>} : vector<2x17xbf16>, vector<17x1xbf16>, vector<2x1xf32> -> vector<2x1xf32>
    %c0_15 = arith.constant 0 : index
    %c0_16 = arith.constant 0 : index
    %20 = vector.load %arg7[%c0_15, %c0_16] : memref<1x1xf32, #tpu.memory_space<vmem>>, vector<1x1xf32>
    %21 = vector.broadcast %20 : vector<1x1xf32> to vector<2x1xf32>
    %22 = arith.addf %19, %21 : vector<2x1xf32>
    %c0_17 = arith.constant 0 : index
    %c0_18 = arith.constant 0 : index
    %23 = vector.load %arg8[%c0_17, %c0_18] : memref<1x4xf32, #tpu.memory_space<vmem>>, vector<1x4xf32>
    %24 = vector.broadcast %23 : vector<1x4xf32> to vector<2x4xf32>
    %25 = vector.broadcast %22 : vector<2x1xf32> to vector<2x4xf32>
    %26 = arith.subf %24, %25 : vector<2x4xf32>
    %27 = arith.negf %26 : vector<2x4xf32>
    %28 = math.exp %27 : vector<2x4xf32>
    %cst_19 = arith.constant 1.000000e+00 : f32
    %29 = vector.broadcast %cst_19 : f32 to vector<2x4xf32>
    %30 = arith.addf %29, %28 : vector<2x4xf32>
    %31 = arith.divf %29, %30 : vector<2x4xf32>
    %32 = vector.extract_strided_slice %31 {offsets = [0, 0], sizes = [2, 1], strides = [1, 1]} : vector<2x4xf32> to vector<2x1xf32>
    %33 = vector.extract_strided_slice %31 {offsets = [0, 3], sizes = [2, 1], strides = [1, 1]} : vector<2x4xf32> to vector<2x1xf32>
    %cst_20 = arith.constant 1.000000e+00 : f32
    %34 = vector.broadcast %cst_20 : f32 to vector<2x1xf32>
    %35 = arith.subf %34, %33 : vector<2x1xf32>
    %36 = vector.extract_strided_slice %31 {offsets = [0, 1], sizes = [2, 3], strides = [1, 1]} : vector<2x4xf32> to vector<2x3xf32>
    %37 = vector.extract_strided_slice %31 {offsets = [0, 0], sizes = [2, 3], strides = [1, 1]} : vector<2x4xf32> to vector<2x3xf32>
    %38 = arith.subf %36, %37 : vector<2x3xf32>
    %39 = tpu.concatenate %32, %38, %35 in 1 : vector<2x1xf32>, vector<2x3xf32>, vector<2x1xf32> -> vector<2x5xf32>
    %c0_21 = arith.constant 0 : index
    %c0_22 = arith.constant 0 : index
    %40 = vector.load %arg9[%c0_21, %c0_22] : memref<2x5xf32, #tpu.memory_space<vmem>>, vector<2x5xf32>
    tpu.vector_store %arg9[%c0_21, %c0_22], %39 {strides = array<i32>} : memref<2x5xf32, #tpu.memory_space<vmem>>, vector<2x5xf32>,
    return
  }
  func.func @transform_0(%arg0: i32) -> (i32, i32) {
    %c0_i32 = arith.constant 0 : i32
    %c0_i32_0 = arith.constant 0 : i32
    %c0_i32_1 = arith.constant 0 : i32
    return %c0_i32, %c0_i32_0 : i32, i32
  }
  func.func @transform_1(%arg0: i32) -> (i32, i32) {
    %c0_i32 = arith.constant 0 : i32
    %c0_i32_0 = arith.constant 0 : i32
    %c0_i32_1 = arith.constant 0 : i32
    return %c0_i32, %c0_i32_0 : i32, i32
  }
  func.func @transform_2(%arg0: i32) -> (i32, i32) {
    %c0_i32 = arith.constant 0 : i32
    %c0_i32_0 = arith.constant 0 : i32
    %c0_i32_1 = arith.constant 0 : i32
    return %c0_i32, %c0_i32_0 : i32, i32
  }
  func.func @transform_3(%arg0: i32) -> (i32, i32) {
    %c0_i32 = arith.constant 0 : i32
    %c0_i32_0 = arith.constant 0 : i32
    %c0_i32_1 = arith.constant 0 : i32
    return %c0_i32, %c0_i32_0 : i32, i32
  }
  func.func @transform_4(%arg0: i32) -> (i32, i32) {
    %c0_i32 = arith.constant 0 : i32
    %c0_i32_0 = arith.constant 0 : i32
    %c0_i32_1 = arith.constant 0 : i32
    return %c0_i32, %c0_i32_0 : i32, i32
  }
  func.func @transform_5(%arg0: i32) -> (i32, i32) {
    %c0_i32 = arith.constant 0 : i32
    %c0_i32_0 = arith.constant 0 : i32
    %c0_i32_1 = arith.constant 0 : i32
    return %c0_i32, %c0_i32_0 : i32, i32
  }
  func.func @transform_6(%arg0: i32) -> (i32, i32) {
    %c0_i32 = arith.constant 0 : i32
    %c0_i32_0 = arith.constant 0 : i32
    %c0_i32_1 = arith.constant 0 : i32
    return %c0_i32, %c0_i32_0 : i32, i32
  }
  func.func @transform_7(%arg0: i32) -> (i32, i32) {
    %c0_i32 = arith.constant 0 : i32
    %c0_i32_0 = arith.constant 0 : i32
    %c0_i32_1 = arith.constant 0 : i32
    return %c0_i32, %c0_i32_0 : i32, i32
  }
  func.func @transform_8(%arg0: i32) -> (i32, i32) {
    %c0_i32 = arith.constant 0 : i32
    %c0_i32_0 = arith.constant 0 : i32
    %c0_i32_1 = arith.constant 0 : i32
    return %c0_i32, %c0_i32_0 : i32, i32
  }
}

</mosaic_0001>

<llo_original>
// kernel: conformer_ordinal_forward.4
$region0: #{conformer_ordinal_forward.4}
  #allocation0 [shape = 'u32[]', space=smem, size = 0x4, offset = 0x4, fixed_abs, tag = 'smem constant byte address 0x4 - core index']
  #allocation1 [shape = 'u32[144,128]{1,0:T(1,128)}', space=vmem, size = 0x12000, scoped, tag = 'internal scratch']
  %s0 = inlined_call_operand.vmem [shape: f32[2,8,12], index: 0, kind: input, shape index: {}]
  %s1 = inlined_call_operand.vmem [shape: bf16[12,32], index: 1, kind: input, shape index: {}]
  %s2 = inlined_call_operand.vmem [shape: f32[1,32], index: 2, kind: input, shape index: {}]
  %s3 = inlined_call_operand.vmem [shape: f32[2,8,32], index: 3, kind: output, shape index: {}]
  %s4 = sld [smem:[#allocation0]]
  $region45: #{conformer_ordinal_forward.4} parent=0
    _
  %s6 = ssub.s32 1, %s4
  %s7 = scalar_select 0, %s6, %s4
  loop: start=0, step=1, limit=4
  $region2: #{conformer_ordinal_forward.4} parent=0 // loop_pre_header
    _
  $region3: #{conformer_ordinal_forward.4} parent=0 // loop_header
    %s9 = sphi 0, %s13
    %p10 = scmp.ge.s32.totalorder %s9, 4
    %s19 = sphi 0, %s21
    %s22 = sphi 0, %s19
    %s23 = sphi 0, %s22
    %s39 = sphi 0, %s23
    %s43 = sphi 0, %s43
    %s45 = sphi 0, %s43
    %s46 = sphi 0, %s45
    %s60 = sphi 0, %s46
    %s64 = sphi 0, %s64
    %s66 = sphi 0, %s64
    %s67 = sphi 0, %s66
    %s81 = sphi 0, %s67
    %s87 = sphi 0, %s89
    %s90 = sphi 0, %s87
    %s91 = sphi 0, %s90
    %s107 = sphi 0, %s91
  $region4: #{conformer_ordinal_forward.4} parent=0 // loop_header_branch
    %12 = sbr.rel (%p10) target = $region8
  $region5: #{conformer_ordinal_forward.4} parent=0 // loop_body
    %s14 = ssub.s32 %s9, 1
    %s15 = ssub.s32 %s9, 2
    %s16 = sadd.s32 %s9, 1
    %s17 = ssub.s32 %s9, %s16
    %p18 = scmp.eq.s32.totalorder %s17, 0
    %s20 = sadd.s32 %s19, 1
    %s21 = scalar_select %p18, %s19, %s20
    %p24 = pneg %p18
    %p25 = scmp.eq.s32.totalorder %s9, 1
    %p26 = por %p24, %p25
    %p27 = scmp.ne.s32.totalorder %s19, %s22
    %p28 = scmp.eq.s32.totalorder %s9, 0
    %p29 = por %p27, %p28
    %p30 = scmp.ne.s32.totalorder %s19, %s22
    %p31 = scmp.eq.s32.totalorder %s14, 1
    %p32 = por %p30, %p31
    %p33 = scmp.ne.s32.totalorder %s22, %s23
    %p34 = scmp.eq.s32.totalorder %s14, 0
    %p35 = por %p33, %p34
    %p36 = scmp.ne.s32.totalorder %s22, %s23
    %p37 = scmp.eq.s32.totalorder %s15, 1
    %p38 = por %p36, %p37
    %p40 = scmp.ne.s32.totalorder %s23, %s39
    %p41 = scmp.eq.s32.totalorder %s15, 0
    %p42 = por %p40, %p41
    %s44 = sadd.s32 %s43, 1
    %p47 = scmp.eq.s32.totalorder %s9, 1
    %p48 = scmp.ne.s32.totalorder %s43, %s45
    %p49 = scmp.eq.s32.totalorder %s9, 0
    %p50 = por %p48, %p49
    %p51 = scmp.ne.s32.totalorder %s43, %s45
    %p52 = scmp.eq.s32.totalorder %s14, 1
    %p53 = por %p51, %p52
    %p54 = scmp.ne.s32.totalorder %s45, %s46
    %p55 = scmp.eq.s32.totalorder %s14, 0
    %p56 = por %p54, %p55
    %p57 = scmp.ne.s32.totalorder %s45, %s46
    %p58 = scmp.eq.s32.totalorder %s15, 1
    %p59 = por %p57, %p58
    %p61 = scmp.ne.s32.totalorder %s46, %s60
    %p62 = scmp.eq.s32.totalorder %s15, 0
    %p63 = por %p61, %p62
    %s65 = sadd.s32 %s64, 1
    %p68 = scmp.eq.s32.totalorder %s9, 1
    %p69 = scmp.ne.s32.totalorder %s64, %s66
    %p70 = scmp.eq.s32.totalorder %s9, 0
    %p71 = por %p69, %p70
    %p72 = scmp.ne.s32.totalorder %s64, %s66
    %p73 = scmp.eq.s32.totalorder %s14, 1
    %p74 = por %p72, %p73
    %p75 = scmp.ne.s32.totalorder %s66, %s67
    %p76 = scmp.eq.s32.totalorder %s14, 0
    %p77 = por %p75, %p76
    %p78 = scmp.ne.s32.totalorder %s66, %s67
    %p79 = scmp.eq.s32.totalorder %s15, 1
    %p80 = por %p78, %p79
    %p82 = scmp.ne.s32.totalorder %s67, %s81
    %p83 = scmp.eq.s32.totalorder %s15, 0
    %p84 = por %p82, %p83
    %s85 = ssub.s32 %s9, %s16
    %p86 = scmp.eq.s32.totalorder %s85, 0
    %s88 = sadd.s32 %s87, 1
    %s89 = scalar_select %p86, %s87, %s88
    %p92 = pneg %p86
    %p93 = scmp.eq.s32.totalorder %s9, 1
    %p94 = por %p92, %p93
    %p95 = scmp.ne.s32.totalorder %s87, %s90
    %p96 = scmp.eq.s32.totalorder %s9, 0
    %p97 = por %p95, %p96
    %p98 = scmp.ne.s32.totalorder %s87, %s90
    %p99 = scmp.eq.s32.totalorder %s14, 1
    %p100 = por %p98, %p99
    %p101 = scmp.ne.s32.totalorder %s90, %s91
    %p102 = scmp.eq.s32.totalorder %s14, 0
    %p103 = por %p101, %p102
    %p104 = scmp.ne.s32.totalorder %s90, %s91
    %p105 = scmp.eq.s32.totalorder %s15, 1
    %p106 = por %p104, %p105
    %p108 = scmp.ne.s32.totalorder %s91, %s107
    %p109 = scmp.eq.s32.totalorder %s15, 0
    %p110 = por %p108, %p109
    %p111 = scmp.le.s32.totalorder 1, %s9
    %p112 = scmp.lt.s32.totalorder %s9, 3
    %p113 = pnand %p111, %p112
    %p114 = pneg %p113
    // Predicated region
    $region9: #{conformer_ordinal_forward.4} parent=5 // pred_check
      _
    $region10: #{conformer_ordinal_forward.4} parent=5 // pred_check_branch
      %116 = sbr.rel (%p113) target = $region12
    $region11: #{conformer_ordinal_forward.4} parent=5 // pred_region
      %s117 = ssub.s32 %s9, 1
      // Predicated region
      $region13: #{conformer_ordinal_forward.4} parent=11 // pred_check
        %p118 = pneg %p56
      $region14: #{conformer_ordinal_forward.4} parent=11 // pred_check_branch
        %120 = sbr.rel (%p118) target = $region16
      $region15: #{conformer_ordinal_forward.4} parent=11 // pred_region
        _
      $region16: #{conformer_ordinal_forward.4} parent=11 // pred_fallthru
        _
      // Predicated region
      $region17: #{conformer_ordinal_forward.4} parent=11 // pred_check
        %p121 = pneg %p77
      $region18: #{conformer_ordinal_forward.4} parent=11 // pred_check_branch
        %123 = sbr.rel (%p121) target = $region20
      $region19: #{conformer_ordinal_forward.4} parent=11 // pred_region
        _
      $region20: #{conformer_ordinal_forward.4} parent=11 // pred_fallthru
        _
    $region12: #{conformer_ordinal_forward.4} parent=5 // pred_fallthru
      _
    %p124 = scmp.lt.s32.totalorder %s9, 2
    // Predicated region
    $region21: #{conformer_ordinal_forward.4} parent=5 // pred_check
      %p125 = pneg %p124
    $region22: #{conformer_ordinal_forward.4} parent=5 // pred_check_branch
      %127 = sbr.rel (%p125) target = $region24
    $region23: #{conformer_ordinal_forward.4} parent=5 // pred_region
      // Predicated region
      $region25: #{conformer_ordinal_forward.4} parent=23 // pred_check
        %p128 = pneg %p29
      $region26: #{conformer_ordinal_forward.4} parent=23 // pred_check_branch
        %130 = sbr.rel (%p128) target = $region28
      $region27: #{conformer_ordinal_forward.4} parent=23 // pred_region
        %p131 = scmp.lt.s32.totalorder %s9, 1
        %s132 = scalar_select %p131, %s9, 1
        %s133 = smul.addr %s132, 8
        %s134 = scalar_lea.vmem %s0, %s133
      $region28: #{conformer_ordinal_forward.4} parent=23 // pred_fallthru
        _
    $region24: #{conformer_ordinal_forward.4} parent=5 // pred_fallthru
      _
    %p135 = scmp.le.s32.totalorder 1, %s9
    %p136 = scmp.lt.s32.totalorder %s9, 3
    %p137 = pnand %p135, %p136
    %p138 = pneg %p137
    // Predicated region
    $region29: #{conformer_ordinal_forward.4} parent=5 // pred_check
      _
    $region30: #{conformer_ordinal_forward.4} parent=5 // pred_check_branch
      %140 = sbr.rel (%p137) target = $region32
    $region31: #{conformer_ordinal_forward.4} parent=5 // pred_region
      %s141 = ssub.s32 %s9, 1
      %p142 = scmp.lt.s32.totalorder %s14, 1
      %s143 = scalar_select %p142, %s14, 1
      %s144 = smul.addr %s143, 8
      %s145 = scalar_lea.vmem %s0, %s144
      %p146 = pneg %p35
      %p147 = pneg %p32
      %p148 = pneg %p56
      %p149 = pneg %p53
      %p150 = pneg %p77
      %p151 = pneg %p74
      %p152 = pneg %p103
      %p153 = pneg %p100
      %p154 = scmp.lt.s32.totalorder %s14, 1
      %s155 = scalar_select %p154, %s14, 1
      %s156 = smul.addr %s155, 8
      %s157 = scalar_lea.vmem %s3, %s156
      %p158 = scmp.lt.s32.totalorder %s14, 1
      %s159 = scalar_select %p158, %s14, 1
      %s160 = smul.addr %s159, 8
      %s161 = scalar_lea.vmem %s0, %s160
      %p162 = scmp.lt.s32.totalorder %s14, 1
      %s163 = scalar_select %p162, %s14, 1
      %s164 = smul.addr %s163, 8
      %s165 = scalar_lea.vmem %s3, %s164
      %v167 = vld [vmem:[%s161] sm:$0xff]
      %v168 = vpack.c.bf16 %v167, %v167
      %v169 = vld [vmem:[%s1] sm:$0xf]
      %v170 = vld [vmem:[%s1 + $0x4] sm:$0x3]
      %v171 = vld [vmem:[%s2] sm:$0x1]
      %v173 = vlaneseq
      %v174 = vshrl.u32 %v173, 7
      %v175 = vsub.s32 0, %v174
      %v176 = vrot.slane %v171, %v175
      %v180 = vunpack.c.l.b16 %v169
      %v181 = vunpack.c.l.b16 %v170
      %v182 = vpack.c.b16 %v181, %v180
      %vm183 = vcmask 97280
      %v185 = vsel %vm183, %v168, 0
      %vm187 = vcmask 1045504
      %v189 = vsel %vm187, %v182, 0
      %191 = vmatprep.subr.bf16.mxu0 0
      %192 = vmatpush1.bf16.msra.mxu0 %v189
      %193 = vmatprep.subr.bf16.mxu0 0
      %194 = vmatpush1.bf16.msra.mxu0 0
      %195 = vmatprep.subr.bf16.mxu0 0
      %196 = vmatpush1.bf16.msra.mxu0 0
      %197 = vmatprep.subr.bf16.mxu0 0
      %198 = vmatpush1.bf16.msra.mxu0 0
      %199 = vmatprep.subr.bf16.mxu0 0
      %200 = vmatpush1.bf16.msra.mxu0 0
      %201 = vmatprep.subr.bf16.mxu0 0
      %202 = vmatpush1.bf16.msra.mxu0 0
      %203 = vmatprep.subr.bf16.mxu0 0
      %204 = vmatpush1.bf16.msra.mxu0 0
      %205 = vmatprep.subr.bf16.mxu0 0
      %206 = vmatpush1.bf16.msra.mxu0 0
      %207 = vmatprep.subr.bf16.mxu0 0
      %208 = vmatpush1.bf16.msra.mxu0 0
      %209 = vmatprep.subr.bf16.mxu0 0
      %210 = vmatpush1.bf16.msra.mxu0 0
      %211 = vmatprep.subr.bf16.mxu0 0
      %212 = vmatpush1.bf16.msra.mxu0 0
      %213 = vmatprep.subr.bf16.mxu0 0
      %214 = vmatpush1.bf16.msra.mxu0 0
      %215 = vmatprep.subr.bf16.mxu0 0
      %216 = vmatpush1.bf16.msra.mxu0 0
      %217 = vmatprep.subr.bf16.mxu0 0
      %218 = vmatpush1.bf16.msra.mxu0 0
      %219 = vmatprep.subr.bf16.mxu0 0
      %220 = vmatpush1.bf16.msra.mxu0 0
      %221 = vmatprep.subr.bf16.mxu0 0
      %222 = vmatpush1.bf16.msra.mxu0 0
      %223 = vmatprep.mubr.bf16.mxu0 0
      %224 = vmatmul.mubr.bf16.gmra.mrb[0].mxu0 %v185
      %v225 = vpop.f32.mrb[0].mxu0
      %v226 = vadd.f32 %v176, %v225
      %v227 = vpop.f32.mrb[0].mxu0
      %v228 = vpop.f32.mrb[0].mxu0
      %v229 = vpop.f32.mrb[0].mxu0
      %230 = vdwg.mxu0
      %vm231 = vcmask 261120
      %232 = vst.msk [vmem:[%s165] sm:$0xff] %vm231, %v226
      %p233 = scmp.lt.s32.totalorder %s14, 1
      %s234 = scalar_select %p233, %s14, 1
      %s235 = smul.addr %s234, 8
      %s236 = scalar_lea.vmem %s3, %s235
      // Predicated region
      $region33: #{conformer_ordinal_forward.4} parent=31 // pred_check
        %p237 = pneg %p100
      $region34: #{conformer_ordinal_forward.4} parent=31 // pred_check_branch
        %239 = sbr.rel (%p237) target = $region36
      $region35: #{conformer_ordinal_forward.4} parent=31 // pred_region
        _
      $region36: #{conformer_ordinal_forward.4} parent=31 // pred_fallthru
        _
    $region32: #{conformer_ordinal_forward.4} parent=5 // pred_fallthru
      _
    %p240 = scmp.le.s32.totalorder 2, %s9
    // Predicated region
    $region37: #{conformer_ordinal_forward.4} parent=5 // pred_check
      %p241 = pneg %p240
    $region38: #{conformer_ordinal_forward.4} parent=5 // pred_check_branch
      %243 = sbr.rel (%p241) target = $region40
    $region39: #{conformer_ordinal_forward.4} parent=5 // pred_region
      %s244 = ssub.s32 %s9, 2
      // Predicated region
      $region41: #{conformer_ordinal_forward.4} parent=39 // pred_check
        %p245 = pneg %p106
      $region42: #{conformer_ordinal_forward.4} parent=39 // pred_check_branch
        %247 = sbr.rel (%p245) target = $region44
      $region43: #{conformer_ordinal_forward.4} parent=39 // pred_region
        %p248 = scmp.lt.s32.totalorder %s15, 1
        %s249 = scalar_select %p248, %s15, 1
        %s250 = smul.addr %s249, 8
        %s251 = scalar_lea.vmem %s3, %s250
      $region44: #{conformer_ordinal_forward.4} parent=39 // pred_fallthru
        _
    $region40: #{conformer_ordinal_forward.4} parent=5 // pred_fallthru
      _
  $region6: #{conformer_ordinal_forward.4} parent=0 // loop_footer
    %s13 = sadd.s32 1, %s9
  $region7: #{conformer_ordinal_forward.4} parent=0 // loop_footer_branch
    %8 = sbr.rel target = $region3
  $region8: #{conformer_ordinal_forward.4} parent=0 // loop_exit
    _

// kernel: conformer_ordinal_forward.6
$region0: #{conformer_ordinal_forward.6}
  #allocation0 [shape = 'u32[]', space=smem, size = 0x4, offset = 0x4, fixed_abs, tag = 'smem constant byte address 0x4 - core index']
  #allocation1 [shape = 'u32[144,128]{1,0:T(1,128)}', space=vmem, size = 0x12000, scoped, tag = 'internal scratch']
  %s0 = inlined_call_operand.vmem [shape: f32[2,8,32], index: 0, kind: input, shape index: {}]
  %s1 = inlined_call_operand.vmem [shape: f32[5,32], index: 1, kind: input, shape index: {}]
  %s2 = inlined_call_operand.vmem [shape: f32[5,32], index: 2, kind: input, shape index: {}]
  %s3 = inlined_call_operand.vmem [shape: bf16[32,128], index: 3, kind: input, shape index: {}]
  %s4 = inlined_call_operand.vmem [shape: f32[1,128], index: 4, kind: input, shape index: {}]
  %s5 = inlined_call_operand.vmem [shape: bf16[128,32], index: 5, kind: input, shape index: {}]
  %s6 = inlined_call_operand.vmem [shape: f32[1,32], index: 6, kind: input, shape index: {}]
  %s7 = inlined_call_operand.vmem [shape: bf16[32,96], index: 7, kind: input, shape index: {}]
  %s8 = inlined_call_operand.vmem [shape: f32[1,96], index: 8, kind: input, shape index: {}]
  %s9 = inlined_call_operand.vmem [shape: bf16[32,32], index: 9, kind: input, shape index: {}]
  %s10 = inlined_call_operand.vmem [shape: f32[1,32], index: 10, kind: input, shape index: {}]
  %s11 = inlined_call_operand.vmem [shape: bf16[32,32], index: 11, kind: input, shape index: {}]
  %s12 = inlined_call_operand.vmem [shape: f32[1,32], index: 12, kind: input, shape index: {}]
  %s13 = inlined_call_operand.vmem [shape: bf16[32,32], index: 13, kind: input, shape index: {}]
  %s14 = inlined_call_operand.hbm [shape: f32[1,32], index: 14, kind: input, shape index: {}]
  %s15 = inlined_call_operand.vmem [shape: f32[3,32], index: 15, kind: input, shape index: {}]
  %s16 = inlined_call_operand.hbm [shape: f32[1,32], index: 16, kind: input, shape index: {}]
  %s17 = inlined_call_operand.vmem [shape: bf16[32,32], index: 17, kind: input, shape index: {}]
  %s18 = inlined_call_operand.hbm [shape: f32[1,32], index: 18, kind: input, shape index: {}]
  %s19 = inlined_call_operand.vmem [shape: bf16[32,128], index: 19, kind: input, shape index: {}]
  %s20 = inlined_call_operand.hbm [shape: f32[1,128], index: 20, kind: input, shape index: {}]
  %s21 = inlined_call_operand.vmem [shape: bf16[128,32], index: 21, kind: input, shape index: {}]
  %s22 = inlined_call_operand.hbm [shape: f32[1,32], index: 22, kind: input, shape index: {}]
  %s23 = inlined_call_operand.vmem [shape: f32[1,32], index: 23, kind: input, shape index: {}]
  %s24 = inlined_call_operand.vmem [shape: f32[1,32], index: 24, kind: input, shape index: {}]
  %s25 = inlined_call_operand.vmem [shape: f32[2,8,32], index: 25, kind: output, shape index: {}]
  %s26 = sld [smem:[#allocation0]]
  $region153: #{conformer_ordinal_forward.6} parent=0
    _
  %s28 = ssub.s32 1, %s26
  %s29 = scalar_select 0, %s28, %s26
  $region1: #{conformer_ordinal_forward.6} parent=0
    #allocation2 [shape = 'u8[512]{0}', space=vmem, size = 0x400, scoped, tag = 'input window, operand 14, single buffered']
    #allocation3 [shape = 's32[2]{0}', space=sflag, size = 0x8, scoped, tag = 'scoped memory for conformer_ordinal_forward.6']
    #allocation4 [shape = 'u8[512]{0}', space=vmem, size = 0x400, scoped, tag = 'input window, operand 16, single buffered']
    #allocation5 [shape = 's32[1]{0}', space=sflag, size = 0x4, scoped, tag = 'scoped memory for conformer_ordinal_forward.6']
    #allocation6 [shape = 'u8[512]{0}', space=vmem, size = 0x400, scoped, tag = 'input window, operand 18, single buffered']
    #allocation7 [shape = 'u8[512]{0}', space=vmem, size = 0x400, scoped, tag = 'input window, operand 20, single buffered']
    #allocation8 [shape = 's32[1]{0}', space=sflag, size = 0x4, scoped, tag = 'scoped memory for conformer_ordinal_forward.6']
    #allocation9 [shape = 'u8[512]{0}', space=vmem, size = 0x400, scoped, tag = 'input window, operand 22, single buffered']
    %30 = vsyncpa [#allocation3], 0
    %31 = vsyncpa [#allocation5], 0
    %32 = vsyncpa [#allocation8], 0
    loop: start=0, step=1, limit=4
    $region2: #{conformer_ordinal_forward.6} parent=1 // loop_pre_header
      _
    $region3: #{conformer_ordinal_forward.6} parent=1 // loop_header
      %s34 = sphi 0, %s38
      %p35 = scmp.ge.s32.totalorder %s34, 4
      %s44 = sphi 0, %s46
      %s47 = sphi 0, %s44
      %s48 = sphi 0, %s47
      %s64 = sphi 0, %s48
      %s68 = sphi 0, %s68
      %s70 = sphi 0, %s68
      %s71 = sphi 0, %s70
      %s85 = sphi 0, %s71
      %s89 = sphi 0, %s89
      %s91 = sphi 0, %s89
      %s92 = sphi 0, %s91
      %s106 = sphi 0, %s92
      %s110 = sphi 0, %s110
      %s112 = sphi 0, %s110
      %s113 = sphi 0, %s112
      %s127 = sphi 0, %s113
      %s131 = sphi 0, %s131
      %s133 = sphi 0, %s131
      %s134 = sphi 0, %s133
      %s148 = sphi 0, %s134
      %s152 = sphi 0, %s152
      %s154 = sphi 0, %s152
      %s155 = sphi 0, %s154
      %s169 = sphi 0, %s155
      %s173 = sphi 0, %s173
      %s175 = sphi 0, %s173
      %s176 = sphi 0, %s175
      %s190 = sphi 0, %s176
      %s194 = sphi 0, %s194
      %s196 = sphi 0, %s194
      %s197 = sphi 0, %s196
      %s211 = sphi 0, %s197
      %s215 = sphi 0, %s215
      %s217 = sphi 0, %s215
      %s218 = sphi 0, %s217
      %s232 = sphi 0, %s218
      %s236 = sphi 0, %s236
      %s238 = sphi 0, %s236
      %s239 = sphi 0, %s238
      %s253 = sphi 0, %s239
      %s257 = sphi 0, %s257
      %s259 = sphi 0, %s257
      %s260 = sphi 0, %s259
      %s274 = sphi 0, %s260
      %s278 = sphi 0, %s278
      %s280 = sphi 0, %s278
      %s281 = sphi 0, %s280
      %s295 = sphi 0, %s281
      %s299 = sphi 0, %s299
      %s301 = sphi 0, %s299
      %s302 = sphi 0, %s301
      %s316 = sphi 0, %s302
      %s320 = sphi 0, %s320
      %s322 = sphi 0, %s320
      %s323 = sphi 0, %s322
      %s337 = sphi 0, %s323
      %s341 = sphi 0, %s341
      %s343 = sphi 0, %s341
      %s344 = sphi 0, %s343
      %s358 = sphi 0, %s344
      %s362 = sphi 0, %s362
      %s364 = sphi 0, %s362
      %s365 = sphi 0, %s364
      %s379 = sphi 0, %s365
      %s383 = sphi 0, %s383
      %s385 = sphi 0, %s383
      %s386 = sphi 0, %s385
      %s400 = sphi 0, %s386
      %s404 = sphi 0, %s404
      %s406 = sphi 0, %s404
      %s407 = sphi 0, %s406
      %s421 = sphi 0, %s407
      %s425 = sphi 0, %s425
      %s427 = sphi 0, %s425
      %s428 = sphi 0, %s427
      %s442 = sphi 0, %s428
      %s446 = sphi 0, %s446
      %s448 = sphi 0, %s446
      %s449 = sphi 0, %s448
      %s463 = sphi 0, %s449
      %s467 = sphi 0, %s467
      %s469 = sphi 0, %s467
      %s470 = sphi 0, %s469
      %s484 = sphi 0, %s470
      %s488 = sphi 0, %s488
      %s490 = sphi 0, %s488
      %s491 = sphi 0, %s490
      %s505 = sphi 0, %s491
      %s509 = sphi 0, %s509
      %s511 = sphi 0, %s509
      %s512 = sphi 0, %s511
      %s526 = sphi 0, %s512
      %s530 = sphi 0, %s530
      %s532 = sphi 0, %s530
      %s533 = sphi 0, %s532
      %s547 = sphi 0, %s533
      %s551 = sphi 0, %s551
      %s553 = sphi 0, %s551
      %s554 = sphi 0, %s553
      %s568 = sphi 0, %s554
      %s574 = sphi 0, %s576
      %s577 = sphi 0, %s574
      %s578 = sphi 0, %s577
      %s594 = sphi 0, %s578
    $region4: #{conformer_ordinal_forward.6} parent=1 // loop_header_branch
      %37 = sbr.rel (%p35) target = $region8
    $region5: #{conformer_ordinal_forward.6} parent=1 // loop_body
      %s39 = ssub.s32 %s34, 1
      %s40 = ssub.s32 %s34, 2
      %s41 = sadd.s32 %s34, 1
      %s42 = ssub.s32 %s34, %s41
      %p43 = scmp.eq.s32.totalorder %s42, 0
      %s45 = sadd.s32 %s44, 1
      %s46 = scalar_select %p43, %s44, %s45
      %p49 = pneg %p43
      %p50 = scmp.eq.s32.totalorder %s34, 1
      %p51 = por %p49, %p50
      %p52 = scmp.ne.s32.totalorder %s44, %s47
      %p53 = scmp.eq.s32.totalorder %s34, 0
      %p54 = por %p52, %p53
      %p55 = scmp.ne.s32.totalorder %s44, %s47
      %p56 = scmp.eq.s32.totalorder %s39, 1
      %p57 = por %p55, %p56
      %p58 = scmp.ne.s32.totalorder %s47, %s48
      %p59 = scmp.eq.s32.totalorder %s39, 0
      %p60 = por %p58, %p59
      %p61 = scmp.ne.s32.totalorder %s47, %s48
      %p62 = scmp.eq.s32.totalorder %s40, 1
      %p63 = por %p61, %p62
      %p65 = scmp.ne.s32.totalorder %s48, %s64
      %p66 = scmp.eq.s32.totalorder %s40, 0
      %p67 = por %p65, %p66
      %s69 = sadd.s32 %s68, 1
      %p72 = scmp.eq.s32.totalorder %s34, 1
      %p73 = scmp.ne.s32.totalorder %s68, %s70
      %p74 = scmp.eq.s32.totalorder %s34, 0
      %p75 = por %p73, %p74
      %p76 = scmp.ne.s32.totalorder %s68, %s70
      %p77 = scmp.eq.s32.totalorder %s39, 1
      %p78 = por %p76, %p77
      %p79 = scmp.ne.s32.totalorder %s70, %s71
      %p80 = scmp.eq.s32.totalorder %s39, 0
      %p81 = por %p79, %p80
      %p82 = scmp.ne.s32.totalorder %s70, %s71
      %p83 = scmp.eq.s32.totalorder %s40, 1
      %p84 = por %p82, %p83
      %p86 = scmp.ne.s32.totalorder %s71, %s85
      %p87 = scmp.eq.s32.totalorder %s40, 0
      %p88 = por %p86, %p87
      %s90 = sadd.s32 %s89, 1
      %p93 = scmp.eq.s32.totalorder %s34, 1
      %p94 = scmp.ne.s32.totalorder %s89, %s91
      %p95 = scmp.eq.s32.totalorder %s34, 0
      %p96 = por %p94, %p95
      %p97 = scmp.ne.s32.totalorder %s89, %s91
      %p98 = scmp.eq.s32.totalorder %s39, 1
      %p99 = por %p97, %p98
      %p100 = scmp.ne.s32.totalorder %s91, %s92
      %p101 = scmp.eq.s32.totalorder %s39, 0
      %p102 = por %p100, %p101
      %p103 = scmp.ne.s32.totalorder %s91, %s92
      %p104 = scmp.eq.s32.totalorder %s40, 1
      %p105 = por %p103, %p104
      %p107 = scmp.ne.s32.totalorder %s92, %s106
      %p108 = scmp.eq.s32.totalorder %s40, 0
      %p109 = por %p107, %p108
      %s111 = sadd.s32 %s110, 1
      %p114 = scmp.eq.s32.totalorder %s34, 1
      %p115 = scmp.ne.s32.totalorder %s110, %s112
      %p116 = scmp.eq.s32.totalorder %s34, 0
      %p117 = por %p115, %p116
      %p118 = scmp.ne.s32.totalorder %s110, %s112
      %p119 = scmp.eq.s32.totalorder %s39, 1
      %p120 = por %p118, %p119
      %p121 = scmp.ne.s32.totalorder %s112, %s113
      %p122 = scmp.eq.s32.totalorder %s39, 0
      %p123 = por %p121, %p122
      %p124 = scmp.ne.s32.totalorder %s112, %s113
      %p125 = scmp.eq.s32.totalorder %s40, 1
      %p126 = por %p124, %p125
      %p128 = scmp.ne.s32.totalorder %s113, %s127
      %p129 = scmp.eq.s32.totalorder %s40, 0
      %p130 = por %p128, %p129
      %s132 = sadd.s32 %s131, 1
      %p135 = scmp.eq.s32.totalorder %s34, 1
      %p136 = scmp.ne.s32.totalorder %s131, %s133
      %p137 = scmp.eq.s32.totalorder %s34, 0
      %p138 = por %p136, %p137
      %p139 = scmp.ne.s32.totalorder %s131, %s133
      %p140 = scmp.eq.s32.totalorder %s39, 1
      %p141 = por %p139, %p140
      %p142 = scmp.ne.s32.totalorder %s133, %s134
      %p143 = scmp.eq.s32.totalorder %s39, 0
      %p144 = por %p142, %p143
      %p145 = scmp.ne.s32.totalorder %s133, %s134
      %p146 = scmp.eq.s32.totalorder %s40, 1
      %p147 = por %p145, %p146
      %p149 = scmp.ne.s32.totalorder %s134, %s148
      %p150 = scmp.eq.s32.totalorder %s40, 0
      %p151 = por %p149, %p150
      %s153 = sadd.s32 %s152, 1
      %p156 = scmp.eq.s32.totalorder %s34, 1
      %p157 = scmp.ne.s32.totalorder %s152, %s154
      %p158 = scmp.eq.s32.totalorder %s34, 0
      %p159 = por %p157, %p158
      %p160 = scmp.ne.s32.totalorder %s152, %s154
      %p161 = scmp.eq.s32.totalorder %s39, 1
      %p162 = por %p160, %p161
      %p163 = scmp.ne.s32.totalorder %s154, %s155
      %p164 = scmp.eq.s32.totalorder %s39, 0
      %p165 = por %p163, %p164
      %p166 = scmp.ne.s32.totalorder %s154, %s155
      %p167 = scmp.eq.s32.totalorder %s40, 1
      %p168 = por %p166, %p167
      %p170 = scmp.ne.s32.totalorder %s155, %s169
      %p171 = scmp.eq.s32.totalorder %s40, 0
      %p172 = por %p170, %p171
      %s174 = sadd.s32 %s173, 1
      %p177 = scmp.eq.s32.totalorder %s34, 1
      %p178 = scmp.ne.s32.totalorder %s173, %s175
      %p179 = scmp.eq.s32.totalorder %s34, 0
      %p180 = por %p178, %p179
      %p181 = scmp.ne.s32.totalorder %s173, %s175
      %p182 = scmp.eq.s32.totalorder %s39, 1
      %p183 = por %p181, %p182
      %p184 = scmp.ne.s32.totalorder %s175, %s176
      %p185 = scmp.eq.s32.totalorder %s39, 0
      %p186 = por %p184, %p185
      %p187 = scmp.ne.s32.totalorder %s175, %s176
      %p188 = scmp.eq.s32.totalorder %s40, 1
      %p189 = por %p187, %p188
      %p191 = scmp.ne.s32.totalorder %s176, %s190
      %p192 = scmp.eq.s32.totalorder %s40, 0
      %p193 = por %p191, %p192
      %s195 = sadd.s32 %s194, 1
      %p198 = scmp.eq.s32.totalorder %s34, 1
      %p199 = scmp.ne.s32.totalorder %s194, %s196
      %p200 = scmp.eq.s32.totalorder %s34, 0
      %p201 = por %p199, %p200
      %p202 = scmp.ne.s32.totalorder %s194, %s196
      %p203 = scmp.eq.s32.totalorder %s39, 1
      %p204 = por %p202, %p203
      %p205 = scmp.ne.s32.totalorder %s196, %s197
      %p206 = scmp.eq.s32.totalorder %s39, 0
      %p207 = por %p205, %p206
      %p208 = scmp.ne.s32.totalorder %s196, %s197
      %p209 = scmp.eq.s32.totalorder %s40, 1
      %p210 = por %p208, %p209
      %p212 = scmp.ne.s32.totalorder %s197, %s211
      %p213 = scmp.eq.s32.totalorder %s40, 0
      %p214 = por %p212, %p213
      %s216 = sadd.s32 %s215, 1
      %p219 = scmp.eq.s32.totalorder %s34, 1
      %p220 = scmp.ne.s32.totalorder %s215, %s217
      %p221 = scmp.eq.s32.totalorder %s34, 0
      %p222 = por %p220, %p221
      %p223 = scmp.ne.s32.totalorder %s215, %s217
      %p224 = scmp.eq.s32.totalorder %s39, 1
      %p225 = por %p223, %p224
      %p226 = scmp.ne.s32.totalorder %s217, %s218
      %p227 = scmp.eq.s32.totalorder %s39, 0
      %p228 = por %p226, %p227
      %p229 = scmp.ne.s32.totalorder %s217, %s218
      %p230 = scmp.eq.s32.totalorder %s40, 1
      %p231 = por %p229, %p230
      %p233 = scmp.ne.s32.totalorder %s218, %s232
      %p234 = scmp.eq.s32.totalorder %s40, 0
      %p235 = por %p233, %p234
      %s237 = sadd.s32 %s236, 1
      %p240 = scmp.eq.s32.totalorder %s34, 1
      %p241 = scmp.ne.s32.totalorder %s236, %s238
      %p242 = scmp.eq.s32.totalorder %s34, 0
      %p243 = por %p241, %p242
      %p244 = scmp.ne.s32.totalorder %s236, %s238
      %p245 = scmp.eq.s32.totalorder %s39, 1
      %p246 = por %p244, %p245
      %p247 = scmp.ne.s32.totalorder %s238, %s239
      %p248 = scmp.eq.s32.totalorder %s39, 0
      %p249 = por %p247, %p248
      %p250 = scmp.ne.s32.totalorder %s238, %s239
      %p251 = scmp.eq.s32.totalorder %s40, 1
      %p252 = por %p250, %p251
      %p254 = scmp.ne.s32.totalorder %s239, %s253
      %p255 = scmp.eq.s32.totalorder %s40, 0
      %p256 = por %p254, %p255
      %s258 = sadd.s32 %s257, 1
      %p261 = scmp.eq.s32.totalorder %s34, 1
      %p262 = scmp.ne.s32.totalorder %s257, %s259
      %p263 = scmp.eq.s32.totalorder %s34, 0
      %p264 = por %p262, %p263
      %p265 = scmp.ne.s32.totalorder %s257, %s259
      %p266 = scmp.eq.s32.totalorder %s39, 1
      %p267 = por %p265, %p266
      %p268 = scmp.ne.s32.totalorder %s259, %s260
      %p269 = scmp.eq.s32.totalorder %s39, 0
      %p270 = por %p268, %p269
      %p271 = scmp.ne.s32.totalorder %s259, %s260
      %p272 = scmp.eq.s32.totalorder %s40, 1
      %p273 = por %p271, %p272
      %p275 = scmp.ne.s32.totalorder %s260, %s274
      %p276 = scmp.eq.s32.totalorder %s40, 0
      %p277 = por %p275, %p276
      %s279 = sadd.s32 %s278, 1
      %p282 = scmp.eq.s32.totalorder %s34, 1
      %p283 = scmp.ne.s32.totalorder %s278, %s280
      %p284 = scmp.eq.s32.totalorder %s34, 0
      %p285 = por %p283, %p284
      %p286 = scmp.ne.s32.totalorder %s278, %s280
      %p287 = scmp.eq.s32.totalorder %s39, 1
      %p288 = por %p286, %p287
      %p289 = scmp.ne.s32.totalorder %s280, %s281
      %p290 = scmp.eq.s32.totalorder %s39, 0
      %p291 = por %p289, %p290
      %p292 = scmp.ne.s32.totalorder %s280, %s281
      %p293 = scmp.eq.s32.totalorder %s40, 1
      %p294 = por %p292, %p293
      %p296 = scmp.ne.s32.totalorder %s281, %s295
      %p297 = scmp.eq.s32.totalorder %s40, 0
      %p298 = por %p296, %p297
      %s300 = sadd.s32 %s299, 1
      %p303 = scmp.eq.s32.totalorder %s34, 1
      %p304 = scmp.ne.s32.totalorder %s299, %s301
      %p305 = scmp.eq.s32.totalorder %s34, 0
      %p306 = por %p304, %p305
      %p307 = scmp.ne.s32.totalorder %s299, %s301
      %p308 = scmp.eq.s32.totalorder %s39, 1
      %p309 = por %p307, %p308
      %p310 = scmp.ne.s32.totalorder %s301, %s302
      %p311 = scmp.eq.s32.totalorder %s39, 0
      %p312 = por %p310, %p311
      %p313 = scmp.ne.s32.totalorder %s301, %s302
      %p314 = scmp.eq.s32.totalorder %s40, 1
      %p315 = por %p313, %p314
      %p317 = scmp.ne.s32.totalorder %s302, %s316
      %p318 = scmp.eq.s32.totalorder %s40, 0
      %p319 = por %p317, %p318
      %s321 = sadd.s32 %s320, 1
      %p324 = scmp.eq.s32.totalorder %s34, 1
      %p325 = scmp.ne.s32.totalorder %s320, %s322
      %p326 = scmp.eq.s32.totalorder %s34, 0
      %p327 = por %p325, %p326
      %p328 = scmp.ne.s32.totalorder %s320, %s322
      %p329 = scmp.eq.s32.totalorder %s39, 1
      %p330 = por %p328, %p329
      %p331 = scmp.ne.s32.totalorder %s322, %s323
      %p332 = scmp.eq.s32.totalorder %s39, 0
      %p333 = por %p331, %p332
      %p334 = scmp.ne.s32.totalorder %s322, %s323
      %p335 = scmp.eq.s32.totalorder %s40, 1
      %p336 = por %p334, %p335
      %p338 = scmp.ne.s32.totalorder %s323, %s337
      %p339 = scmp.eq.s32.totalorder %s40, 0
      %p340 = por %p338, %p339
      %s342 = sadd.s32 %s341, 1
      %p345 = scmp.eq.s32.totalorder %s34, 1
      %p346 = scmp.ne.s32.totalorder %s341, %s343
      %p347 = scmp.eq.s32.totalorder %s34, 0
      %p348 = por %p346, %p347
      %p349 = scmp.ne.s32.totalorder %s341, %s343
      %p350 = scmp.eq.s32.totalorder %s39, 1
      %p351 = por %p349, %p350
      %p352 = scmp.ne.s32.totalorder %s343, %s344
      %p353 = scmp.eq.s32.totalorder %s39, 0
      %p354 = por %p352, %p353
      %p355 = scmp.ne.s32.totalorder %s343, %s344
      %p356 = scmp.eq.s32.totalorder %s40, 1
      %p357 = por %p355, %p356
      %p359 = scmp.ne.s32.totalorder %s344, %s358
      %p360 = scmp.eq.s32.totalorder %s40, 0
      %p361 = por %p359, %p360
      %s363 = sadd.s32 %s362, 1
      %p366 = scmp.eq.s32.totalorder %s34, 1
      %p367 = scmp.ne.s32.totalorder %s362, %s364
      %p368 = scmp.eq.s32.totalorder %s34, 0
      %p369 = por %p367, %p368
      %p370 = scmp.ne.s32.totalorder %s362, %s364
      %p371 = scmp.eq.s32.totalorder %s39, 1
      %p372 = por %p370, %p371
      %p373 = scmp.ne.s32.totalorder %s364, %s365
      %p374 = scmp.eq.s32.totalorder %s39, 0
      %p375 = por %p373, %p374
      %p376 = scmp.ne.s32.totalorder %s364, %s365
      %p377 = scmp.eq.s32.totalorder %s40, 1
      %p378 = por %p376, %p377
      %p380 = scmp.ne.s32.totalorder %s365, %s379
      %p381 = scmp.eq.s32.totalorder %s40, 0
      %p382 = por %p380, %p381
      %s384 = sadd.s32 %s383, 1
      %p387 = scmp.eq.s32.totalorder %s34, 1
      %p388 = scmp.ne.s32.totalorder %s383, %s385
      %p389 = scmp.eq.s32.totalorder %s34, 0
      %p390 = por %p388, %p389
      %p391 = scmp.ne.s32.totalorder %s383, %s385
      %p392 = scmp.eq.s32.totalorder %s39, 1
      %p393 = por %p391, %p392
      %p394 = scmp.ne.s32.totalorder %s385, %s386
      %p395 = scmp.eq.s32.totalorder %s39, 0
      %p396 = por %p394, %p395
      %p397 = scmp.ne.s32.totalorder %s385, %s386
      %p398 = scmp.eq.s32.totalorder %s40, 1
      %p399 = por %p397, %p398
      %p401 = scmp.ne.s32.totalorder %s386, %s400
      %p402 = scmp.eq.s32.totalorder %s40, 0
      %p403 = por %p401, %p402
      %s405 = sadd.s32 %s404, 1
      %p408 = scmp.eq.s32.totalorder %s34, 1
      %p409 = scmp.ne.s32.totalorder %s404, %s406
      %p410 = scmp.eq.s32.totalorder %s34, 0
      %p411 = por %p409, %p410
      %p412 = scmp.ne.s32.totalorder %s404, %s406
      %p413 = scmp.eq.s32.totalorder %s39, 1
      %p414 = por %p412, %p413
      %p415 = scmp.ne.s32.totalorder %s406, %s407
      %p416 = scmp.eq.s32.totalorder %s39, 0
      %p417 = por %p415, %p416
      %p418 = scmp.ne.s32.totalorder %s406, %s407
      %p419 = scmp.eq.s32.totalorder %s40, 1
      %p420 = por %p418, %p419
      %p422 = scmp.ne.s32.totalorder %s407, %s421
      %p423 = scmp.eq.s32.totalorder %s40, 0
      %p424 = por %p422, %p423
      %s426 = sadd.s32 %s425, 1
      %p429 = scmp.eq.s32.totalorder %s34, 1
      %p430 = scmp.ne.s32.totalorder %s425, %s427
      %p431 = scmp.eq.s32.totalorder %s34, 0
      %p432 = por %p430, %p431
      %p433 = scmp.ne.s32.totalorder %s425, %s427
      %p434 = scmp.eq.s32.totalorder %s39, 1
      %p435 = por %p433, %p434
      %p436 = scmp.ne.s32.totalorder %s427, %s428
      %p437 = scmp.eq.s32.totalorder %s39, 0
      %p438 = por %p436, %p437
      %p439 = scmp.ne.s32.totalorder %s427, %s428
      %p440 = scmp.eq.s32.totalorder %s40, 1
      %p441 = por %p439, %p440
      %p443 = scmp.ne.s32.totalorder %s428, %s442
      %p444 = scmp.eq.s32.totalorder %s40, 0
      %p445 = por %p443, %p444
      %s447 = sadd.s32 %s446, 1
      %p450 = scmp.eq.s32.totalorder %s34, 1
      %p451 = scmp.ne.s32.totalorder %s446, %s448
      %p452 = scmp.eq.s32.totalorder %s34, 0
      %p453 = por %p451, %p452
      %p454 = scmp.ne.s32.totalorder %s446, %s448
      %p455 = scmp.eq.s32.totalorder %s39, 1
      %p456 = por %p454, %p455
      %p457 = scmp.ne.s32.totalorder %s448, %s449
      %p458 = scmp.eq.s32.totalorder %s39, 0
      %p459 = por %p457, %p458
      %p460 = scmp.ne.s32.totalorder %s448, %s449
      %p461 = scmp.eq.s32.totalorder %s40, 1
      %p462 = por %p460, %p461
      %p464 = scmp.ne.s32.totalorder %s449, %s463
      %p465 = scmp.eq.s32.totalorder %s40, 0
      %p466 = por %p464, %p465
      %s468 = sadd.s32 %s467, 1
      %p471 = scmp.eq.s32.totalorder %s34, 1
      %p472 = scmp.ne.s32.totalorder %s467, %s469
      %p473 = scmp.eq.s32.totalorder %s34, 0
      %p474 = por %p472, %p473
      %p475 = scmp.ne.s32.totalorder %s467, %s469
      %p476 = scmp.eq.s32.totalorder %s39, 1
      %p477 = por %p475, %p476
      %p478 = scmp.ne.s32.totalorder %s469, %s470
      %p479 = scmp.eq.s32.totalorder %s39, 0
      %p480 = por %p478, %p479
      %p481 = scmp.ne.s32.totalorder %s469, %s470
      %p482 = scmp.eq.s32.totalorder %s40, 1
      %p483 = por %p481, %p482
      %p485 = scmp.ne.s32.totalorder %s470, %s484
      %p486 = scmp.eq.s32.totalorder %s40, 0
      %p487 = por %p485, %p486
      %s489 = sadd.s32 %s488, 1
      %p492 = scmp.eq.s32.totalorder %s34, 1
      %p493 = scmp.ne.s32.totalorder %s488, %s490
      %p494 = scmp.eq.s32.totalorder %s34, 0
      %p495 = por %p493, %p494
      %p496 = scmp.ne.s32.totalorder %s488, %s490
      %p497 = scmp.eq.s32.totalorder %s39, 1
      %p498 = por %p496, %p497
      %p499 = scmp.ne.s32.totalorder %s490, %s491
      %p500 = scmp.eq.s32.totalorder %s39, 0
      %p501 = por %p499, %p500
      %p502 = scmp.ne.s32.totalorder %s490, %s491
      %p503 = scmp.eq.s32.totalorder %s40, 1
      %p504 = por %p502, %p503
      %p506 = scmp.ne.s32.totalorder %s491, %s505
      %p507 = scmp.eq.s32.totalorder %s40, 0
      %p508 = por %p506, %p507
      %s510 = sadd.s32 %s509, 1
      %p513 = scmp.eq.s32.totalorder %s34, 1
      %p514 = scmp.ne.s32.totalorder %s509, %s511
      %p515 = scmp.eq.s32.totalorder %s34, 0
      %p516 = por %p514, %p515
      %p517 = scmp.ne.s32.totalorder %s509, %s511
      %p518 = scmp.eq.s32.totalorder %s39, 1
      %p519 = por %p517, %p518
      %p520 = scmp.ne.s32.totalorder %s511, %s512
      %p521 = scmp.eq.s32.totalorder %s39, 0
      %p522 = por %p520, %p521
      %p523 = scmp.ne.s32.totalorder %s511, %s512
      %p524 = scmp.eq.s32.totalorder %s40, 1
      %p525 = por %p523, %p524
      %p527 = scmp.ne.s32.totalorder %s512, %s526
      %p528 = scmp.eq.s32.totalorder %s40, 0
      %p529 = por %p527, %p528
      %s531 = sadd.s32 %s530, 1
      %p534 = scmp.eq.s32.totalorder %s34, 1
      %p535 = scmp.ne.s32.totalorder %s530, %s532
      %p536 = scmp.eq.s32.totalorder %s34, 0
      %p537 = por %p535, %p536
      %p538 = scmp.ne.s32.totalorder %s530, %s532
      %p539 = scmp.eq.s32.totalorder %s39, 1
      %p540 = por %p538, %p539
      %p541 = scmp.ne.s32.totalorder %s532, %s533
      %p542 = scmp.eq.s32.totalorder %s39, 0
      %p543 = por %p541, %p542
      %p544 = scmp.ne.s32.totalorder %s532, %s533
      %p545 = scmp.eq.s32.totalorder %s40, 1
      %p546 = por %p544, %p545
      %p548 = scmp.ne.s32.totalorder %s533, %s547
      %p549 = scmp.eq.s32.totalorder %s40, 0
      %p550 = por %p548, %p549
      %s552 = sadd.s32 %s551, 1
      %p555 = scmp.eq.s32.totalorder %s34, 1
      %p556 = scmp.ne.s32.totalorder %s551, %s553
      %p557 = scmp.eq.s32.totalorder %s34, 0
      %p558 = por %p556, %p557
      %p559 = scmp.ne.s32.totalorder %s551, %s553
      %p560 = scmp.eq.s32.totalorder %s39, 1
      %p561 = por %p559, %p560
      %p562 = scmp.ne.s32.totalorder %s553, %s554
      %p563 = scmp.eq.s32.totalorder %s39, 0
      %p564 = por %p562, %p563
      %p565 = scmp.ne.s32.totalorder %s553, %s554
      %p566 = scmp.eq.s32.totalorder %s40, 1
      %p567 = por %p565, %p566
      %p569 = scmp.ne.s32.totalorder %s554, %s568
      %p570 = scmp.eq.s32.totalorder %s40, 0
      %p571 = por %p569, %p570
      %s572 = ssub.s32 %s34, %s41
      %p573 = scmp.eq.s32.totalorder %s572, 0
      %s575 = sadd.s32 %s574, 1
      %s576 = scalar_select %p573, %s574, %s575
      %p579 = pneg %p573
      %p580 = scmp.eq.s32.totalorder %s34, 1
      %p581 = por %p579, %p580
      %p582 = scmp.ne.s32.totalorder %s574, %s577
      %p583 = scmp.eq.s32.totalorder %s34, 0
      %p584 = por %p582, %p583
      %p585 = scmp.ne.s32.totalorder %s574, %s577
      %p586 = scmp.eq.s32.totalorder %s39, 1
      %p587 = por %p585, %p586
      %p588 = scmp.ne.s32.totalorder %s577, %s578
      %p589 = scmp.eq.s32.totalorder %s39, 0
      %p590 = por %p588, %p589
      %p591 = scmp.ne.s32.totalorder %s577, %s578
      %p592 = scmp.eq.s32.totalorder %s40, 1
      %p593 = por %p591, %p592
      %p595 = scmp.ne.s32.totalorder %s578, %s594
      %p596 = scmp.eq.s32.totalorder %s40, 0
      %p597 = por %p595, %p596
      %p598 = scmp.le.s32.totalorder 1, %s34
      %p599 = scmp.lt.s32.totalorder %s34, 3
      %p600 = pnand %p598, %p599
      %p601 = pneg %p600
      // Predicated region
      $region9: #{conformer_ordinal_forward.6} parent=5 // pred_check
        _
      $region10: #{conformer_ordinal_forward.6} parent=5 // pred_check_branch
        %603 = sbr.rel (%p600) target = $region12
      $region11: #{conformer_ordinal_forward.6} parent=5 // pred_region
        %s604 = ssub.s32 %s34, 1
        // Predicated region
        $region13: #{conformer_ordinal_forward.6} parent=11 // pred_check
          %p605 = pneg %p81
        $region14: #{conformer_ordinal_forward.6} parent=11 // pred_check_branch
          %607 = sbr.rel (%p605) target = $region16
        $region15: #{conformer_ordinal_forward.6} parent=11 // pred_region
          _
        $region16: #{conformer_ordinal_forward.6} parent=11 // pred_fallthru
          _
        // Predicated region
        $region17: #{conformer_ordinal_forward.6} parent=11 // pred_check
          %p608 = pneg %p102
        $region18: #{conformer_ordinal_forward.6} parent=11 // pred_check_branch
          %610 = sbr.rel (%p608) target = $region20
        $region19: #{conformer_ordinal_forward.6} parent=11 // pred_region
          _
        $region20: #{conformer_ordinal_forward.6} parent=11 // pred_fallthru
          _
        // Predicated region
        $region21: #{conformer_ordinal_forward.6} parent=11 // pred_check
          %p611 = pneg %p123
        $region22: #{conformer_ordinal_forward.6} parent=11 // pred_check_branch
          %613 = sbr.rel (%p611) target = $region24
        $region23: #{conformer_ordinal_forward.6} parent=11 // pred_region
          _
        $region24: #{conformer_ordinal_forward.6} parent=11 // pred_fallthru
          _
        // Predicated region
        $region25: #{conformer_ordinal_forward.6} parent=11 // pred_check
          %p614 = pneg %p144
        $region26: #{conformer_ordinal_forward.6} parent=11 // pred_check_branch
          %616 = sbr.rel (%p614) target = $region28
        $region27: #{conformer_ordinal_forward.6} parent=11 // pred_region
          _
        $region28: #{conformer_ordinal_forward.6} parent=11 // pred_fallthru
          _
        // Predicated region
        $region29: #{conformer_ordinal_forward.6} parent=11 // pred_check
          %p617 = pneg %p165
        $region30: #{conformer_ordinal_forward.6} parent=11 // pred_check_branch
          %619 = sbr.rel (%p617) target = $region32
        $region31: #{conformer_ordinal_forward.6} parent=11 // pred_region
          _
        $region32: #{conformer_ordinal_forward.6} parent=11 // pred_fallthru
          _
        // Predicated region
        $region33: #{conformer_ordinal_forward.6} parent=11 // pred_check
          %p620 = pneg %p186
        $region34: #{conformer_ordinal_forward.6} parent=11 // pred_check_branch
          %622 = sbr.rel (%p620) target = $region36
        $region35: #{conformer_ordinal_forward.6} parent=11 // pred_region
          _
        $region36: #{conformer_ordinal_forward.6} parent=11 // pred_fallthru
          _
        // Predicated region
        $region37: #{conformer_ordinal_forward.6} parent=11 // pred_check
          %p623 = pneg %p207
        $region38: #{conformer_ordinal_forward.6} parent=11 // pred_check_branch
          %625 = sbr.rel (%p623) target = $region40
        $region39: #{conformer_ordinal_forward.6} parent=11 // pred_region
          _
        $region40: #{conformer_ordinal_forward.6} parent=11 // pred_fallthru
          _
        // Predicated region
        $region41: #{conformer_ordinal_forward.6} parent=11 // pred_check
          %p626 = pneg %p228
        $region42: #{conformer_ordinal_forward.6} parent=11 // pred_check_branch
          %628 = sbr.rel (%p626) target = $region44
        $region43: #{conformer_ordinal_forward.6} parent=11 // pred_region
          _
        $region44: #{conformer_ordinal_forward.6} parent=11 // pred_fallthru
          _
        // Predicated region
        $region45: #{conformer_ordinal_forward.6} parent=11 // pred_check
          %p629 = pneg %p249
        $region46: #{conformer_ordinal_forward.6} parent=11 // pred_check_branch
          %631 = sbr.rel (%p629) target = $region48
        $region47: #{conformer_ordinal_forward.6} parent=11 // pred_region
          _
        $region48: #{conformer_ordinal_forward.6} parent=11 // pred_fallthru
          _
        // Predicated region
        $region49: #{conformer_ordinal_forward.6} parent=11 // pred_check
          %p632 = pneg %p270
        $region50: #{conformer_ordinal_forward.6} parent=11 // pred_check_branch
          %634 = sbr.rel (%p632) target = $region52
        $region51: #{conformer_ordinal_forward.6} parent=11 // pred_region
          _
        $region52: #{conformer_ordinal_forward.6} parent=11 // pred_fallthru
          _
        // Predicated region
        $region53: #{conformer_ordinal_forward.6} parent=11 // pred_check
          %p635 = pneg %p291
        $region54: #{conformer_ordinal_forward.6} parent=11 // pred_check_branch
          %637 = sbr.rel (%p635) target = $region56
        $region55: #{conformer_ordinal_forward.6} parent=11 // pred_region
          _
        $region56: #{conformer_ordinal_forward.6} parent=11 // pred_fallthru
          _
        // Predicated region
        $region57: #{conformer_ordinal_forward.6} parent=11 // pred_check
          %p638 = pneg %p312
        $region58: #{conformer_ordinal_forward.6} parent=11 // pred_check_branch
          %640 = sbr.rel (%p638) target = $region60
        $region59: #{conformer_ordinal_forward.6} parent=11 // pred_region
          _
        $region60: #{conformer_ordinal_forward.6} parent=11 // pred_fallthru
          _
        // Predicated region
        $region61: #{conformer_ordinal_forward.6} parent=11 // pred_check
          %p641 = pneg %p333
        $region62: #{conformer_ordinal_forward.6} parent=11 // pred_check_branch
          %643 = sbr.rel (%p641) target = $region64
        $region63: #{conformer_ordinal_forward.6} parent=11 // pred_region
          _
        $region64: #{conformer_ordinal_forward.6} parent=11 // pred_fallthru
          _
        // Predicated region
        $region65: #{conformer_ordinal_forward.6} parent=11 // pred_check
          %p644 = pneg %p354
        $region66: #{conformer_ordinal_forward.6} parent=11 // pred_check_branch
          %646 = sbr.rel (%p644) target = $region68
        $region67: #{conformer_ordinal_forward.6} parent=11 // pred_region
          %s648 = ssub.s32 16, 16
          %649 = vsyncadd [#allocation3], %s648
          %s651 = sshll.u32 [#allocation2], 4
          %s652 = int_to_ptr.vmem [resolvable:$true] %s651
          %654 = dma.hbm_to_vmem [thread:$0]  %s14, 16, %s652, [#allocation3]
        $region68: #{conformer_ordinal_forward.6} parent=11 // pred_fallthru
          _
        // Predicated region
        $region69: #{conformer_ordinal_forward.6} parent=11 // pred_check
          %p655 = pneg %p375
        $region70: #{conformer_ordinal_forward.6} parent=11 // pred_check_branch
          %657 = sbr.rel (%p655) target = $region72
        $region71: #{conformer_ordinal_forward.6} parent=11 // pred_region
          _
        $region72: #{conformer_ordinal_forward.6} parent=11 // pred_fallthru
          _
        // Predicated region
        $region73: #{conformer_ordinal_forward.6} parent=11 // pred_check
          %p658 = pneg %p396
        $region74: #{conformer_ordinal_forward.6} parent=11 // pred_check_branch
          %660 = sbr.rel (%p658) target = $region76
        $region75: #{conformer_ordinal_forward.6} parent=11 // pred_region
          %s662 = ssub.s32 16, 16
          %663 = vsyncadd [#allocation5], %s662
          %s665 = sshll.u32 [#allocation4], 4
          %s666 = int_to_ptr.vmem [resolvable:$true] %s665
          %668 = dma.hbm_to_vmem [thread:$0]  %s16, 16, %s666, [#allocation5]
        $region76: #{conformer_ordinal_forward.6} parent=11 // pred_fallthru
          _
        // Predicated region
        $region77: #{conformer_ordinal_forward.6} parent=11 // pred_check
          %p669 = pneg %p417
        $region78: #{conformer_ordinal_forward.6} parent=11 // pred_check_branch
          %671 = sbr.rel (%p669) target = $region80
        $region79: #{conformer_ordinal_forward.6} parent=11 // pred_region
          _
        $region80: #{conformer_ordinal_forward.6} parent=11 // pred_fallthru
          _
        // Predicated region
        $region81: #{conformer_ordinal_forward.6} parent=11 // pred_check
          %p672 = pneg %p438
        $region82: #{conformer_ordinal_forward.6} parent=11 // pred_check_branch
          %674 = sbr.rel (%p672) target = $region84
        $region83: #{conformer_ordinal_forward.6} parent=11 // pred_region
          %s676 = ssub.s32 16, 16
          %677 = vsyncadd [#allocation5], %s676
          %s679 = sshll.u32 [#allocation6], 4
          %s680 = int_to_ptr.vmem [resolvable:$true] %s679
          %682 = dma.hbm_to_vmem [thread:$0]  %s18, 16, %s680, [#allocation5]
        $region84: #{conformer_ordinal_forward.6} parent=11 // pred_fallthru
          _
        // Predicated region
        $region85: #{conformer_ordinal_forward.6} parent=11 // pred_check
          %p683 = pneg %p459
        $region86: #{conformer_ordinal_forward.6} parent=11 // pred_check_branch
          %685 = sbr.rel (%p683) target = $region88
        $region87: #{conformer_ordinal_forward.6} parent=11 // pred_region
          _
        $region88: #{conformer_ordinal_forward.6} parent=11 // pred_fallthru
          _
        // Predicated region
        $region89: #{conformer_ordinal_forward.6} parent=11 // pred_check
          %p686 = pneg %p480
        $region90: #{conformer_ordinal_forward.6} parent=11 // pred_check_branch
          %688 = sbr.rel (%p686) target = $region92
        $region91: #{conformer_ordinal_forward.6} parent=11 // pred_region
          %s690 = ssub.s32 16, 16
          %691 = vsyncadd [#allocation8], %s690
          %s693 = sshll.u32 [#allocation7], 4
          %s694 = int_to_ptr.vmem [resolvable:$true] %s693
          %696 = dma.hbm_to_vmem [thread:$0]  %s20, 16, %s694, [#allocation8]
        $region92: #{conformer_ordinal_forward.6} parent=11 // pred_fallthru
          _
        // Predicated region
        $region93: #{conformer_ordinal_forward.6} parent=11 // pred_check
          %p697 = pneg %p501
        $region94: #{conformer_ordinal_forward.6} parent=11 // pred_check_branch
          %699 = sbr.rel (%p697) target = $region96
        $region95: #{conformer_ordinal_forward.6} parent=11 // pred_region
          _
        $region96: #{conformer_ordinal_forward.6} parent=11 // pred_fallthru
          _
        // Predicated region
        $region97: #{conformer_ordinal_forward.6} parent=11 // pred_check
          %p700 = pneg %p522
        $region98: #{conformer_ordinal_forward.6} parent=11 // pred_check_branch
          %702 = sbr.rel (%p700) target = $region100
        $region99: #{conformer_ordinal_forward.6} parent=11 // pred_region
          %s704 = ssub.s32 16, 16
          %705 = vsyncadd [#allocation8], %s704
          %s707 = sshll.u32 [#allocation9], 4
          %s708 = int_to_ptr.vmem [resolvable:$true] %s707
          %710 = dma.hbm_to_vmem [thread:$0]  %s22, 16, %s708, [#allocation8]
        $region100: #{conformer_ordinal_forward.6} parent=11 // pred_fallthru
          _
        // Predicated region
        $region101: #{conformer_ordinal_forward.6} parent=11 // pred_check
          %p711 = pneg %p543
        $region102: #{conformer_ordinal_forward.6} parent=11 // pred_check_branch
          %713 = sbr.rel (%p711) target = $region104
        $region103: #{conformer_ordinal_forward.6} parent=11 // pred_region
          _
        $region104: #{conformer_ordinal_forward.6} parent=11 // pred_fallthru
          _
        // Predicated region
        $region105: #{conformer_ordinal_forward.6} parent=11 // pred_check
          %p714 = pneg %p564
        $region106: #{conformer_ordinal_forward.6} parent=11 // pred_check_branch
          %716 = sbr.rel (%p714) target = $region108
        $region107: #{conformer_ordinal_forward.6} parent=11 // pred_region
          _
        $region108: #{conformer_ordinal_forward.6} parent=11 // pred_fallthru
          _
      $region12: #{conformer_ordinal_forward.6} parent=5 // pred_fallthru
        _
      %p717 = scmp.lt.s32.totalorder %s34, 2
      // Predicated region
      $region109: #{conformer_ordinal_forward.6} parent=5 // pred_check
        %p718 = pneg %p717
      $region110: #{conformer_ordinal_forward.6} parent=5 // pred_check_branch
        %720 = sbr.rel (%p718) target = $region112
      $region111: #{conformer_ordinal_forward.6} parent=5 // pred_region
        // Predicated region
        $region113: #{conformer_ordinal_forward.6} parent=111 // pred_check
          %p721 = pneg %p54
        $region114: #{conformer_ordinal_forward.6} parent=111 // pred_check_branch
          %723 = sbr.rel (%p721) target = $region116
        $region115: #{conformer_ordinal_forward.6} parent=111 // pred_region
          %p724 = scmp.lt.s32.totalorder %s34, 1
          %s725 = scalar_select %p724, %s34, 1
          %s726 = smul.addr %s725, 8
          %s727 = scalar_lea.vmem %s0, %s726
        $region116: #{conformer_ordinal_forward.6} parent=111 // pred_fallthru
          _
      $region112: #{conformer_ordinal_forward.6} parent=5 // pred_fallthru
        _
      %p728 = scmp.le.s32.totalorder 1, %s34
      %p729 = scmp.lt.s32.totalorder %s34, 3
      %p730 = pnand %p728, %p729
      %p731 = pneg %p730
      // Predicated region
      $region117: #{conformer_ordinal_forward.6} parent=5 // pred_check
        _
      $region118: #{conformer_ordinal_forward.6} parent=5 // pred_check_branch
        %733 = sbr.rel (%p730) target = $region120
      $region119: #{conformer_ordinal_forward.6} parent=5 // pred_region
        %s734 = ssub.s32 %s34, 1
        // Predicated region
        $region121: #{conformer_ordinal_forward.6} parent=119 // pred_check
          %p735 = pneg %p354
        $region122: #{conformer_ordinal_forward.6} parent=119 // pred_check_branch
          %737 = sbr.rel (%p735) target = $region124
        $region123: #{conformer_ordinal_forward.6} parent=119 // pred_region
          %738 = dma.done [#allocation3], 16
        $region124: #{conformer_ordinal_forward.6} parent=119 // pred_fallthru
          _
        // Predicated region
        $region125: #{conformer_ordinal_forward.6} parent=119 // pred_check
          %p739 = pneg %p396
        $region126: #{conformer_ordinal_forward.6} parent=119 // pred_check_branch
          %741 = sbr.rel (%p739) target = $region128
        $region127: #{conformer_ordinal_forward.6} parent=119 // pred_region
          %742 = dma.done [#allocation5], 16
        $region128: #{conformer_ordinal_forward.6} parent=119 // pred_fallthru
          _
        // Predicated region
        $region129: #{conformer_ordinal_forward.6} parent=119 // pred_check
          %p743 = pneg %p438
        $region130: #{conformer_ordinal_forward.6} parent=119 // pred_check_branch
          %745 = sbr.rel (%p743) target = $region132
        $region131: #{conformer_ordinal_forward.6} parent=119 // pred_region
          %746 = dma.done [#allocation5], 16
        $region132: #{conformer_ordinal_forward.6} parent=119 // pred_fallthru
          _
        // Predicated region
        $region133: #{conformer_ordinal_forward.6} parent=119 // pred_check
          %p747 = pneg %p480
        $region134: #{conformer_ordinal_forward.6} parent=119 // pred_check_branch
          %749 = sbr.rel (%p747) target = $region136
        $region135: #{conformer_ordinal_forward.6} parent=119 // pred_region
          %750 = dma.done [#allocation8], 16
        $region136: #{conformer_ordinal_forward.6} parent=119 // pred_fallthru
          _
        // Predicated region
        $region137: #{conformer_ordinal_forward.6} parent=119 // pred_check
          %p751 = pneg %p522
        $region138: #{conformer_ordinal_forward.6} parent=119 // pred_check_branch
          %753 = sbr.rel (%p751) target = $region140
        $region139: #{conformer_ordinal_forward.6} parent=119 // pred_region
          %754 = dma.done [#allocation8], 16
        $region140: #{conformer_ordinal_forward.6} parent=119 // pred_fallthru
          _
        %p755 = scmp.lt.s32.totalorder %s39, 1
        %s756 = scalar_select %p755, %s39, 1
        %s757 = smul.addr %s756, 8
        %s758 = scalar_lea.vmem %s0, %s757
        %p759 = pneg %p60
        %p760 = pneg %p57
        %p761 = pneg %p81
        %p762 = pneg %p78
        %p763 = pneg %p102
        %p764 = pneg %p99
        %p765 = pneg %p123
        %p766 = pneg %p120
        %p767 = pneg %p144
        %p768 = pneg %p141
        %p769 = pneg %p165
        %p770 = pneg %p162
        %p771 = pneg %p186
        %p772 = pneg %p183
        %p773 = pneg %p207
        %p774 = pneg %p204
        %p775 = pneg %p228
        %p776 = pneg %p225
        %p777 = pneg %p249
        %p778 = pneg %p246
        %p779 = pneg %p270
        %p780 = pneg %p267
        %p781 = pneg %p291
        %p782 = pneg %p288
        %p783 = pneg %p312
        %p784 = pneg %p309
        %p785 = pneg %p333
        %p786 = pneg %p330
        %p787 = pneg %p354
        %p788 = pneg %p351
        %p789 = pneg %p375
        %p790 = pneg %p372
        %p791 = pneg %p396
        %p792 = pneg %p393
        %p793 = pneg %p417
        %p794 = pneg %p414
        %p795 = pneg %p438
        %p796 = pneg %p435
        %p797 = pneg %p459
        %p798 = pneg %p456
        %p799 = pneg %p480
        %p800 = pneg %p477
        %p801 = pneg %p501
        %p802 = pneg %p498
        %p803 = pneg %p522
        %p804 = pneg %p519
        %p805 = pneg %p543
        %p806 = pneg %p540
        %p807 = pneg %p564
        %p808 = pneg %p561
        %p809 = pneg %p590
        %p810 = pneg %p587
        %p811 = scmp.lt.s32.totalorder %s39, 1
        %s812 = scalar_select %p811, %s39, 1
        %s813 = smul.addr %s812, 8
        %s814 = scalar_lea.vmem %s25, %s813
        %p815 = scmp.lt.s32.totalorder %s39, 1
        %s816 = scalar_select %p815, %s39, 1
        %s817 = smul.addr %s816, 8
        %s818 = scalar_lea.vmem %s0, %s817
        %p819 = scmp.lt.s32.totalorder %s39, 1
        %s820 = scalar_select %p819, %s39, 1
        %s821 = smul.addr %s820, 8
        %s822 = scalar_lea.vmem %s25, %s821
        %v824 = vld [vmem:[%s818] sm:$0xff]
        %v825 = vld [vmem:[%s1] sm:$0x1f]
        %v826 = vld [vmem:[%s2] sm:$0x1f]
        %vm827 = vcmask 261120
        %v828 = vsel %vm827, %v824, 0.0
        %829 = vadd.xlane.f32.xlu0 %v828
        %v830 = vpop.xlane.xlu0 %829
        %v831 = vrcp.pop 32.0
        %v832 = vmul.f32 %v830, %v831
        %v833 = vsub.f32 %v824, %v832
        %v834 = vmul.f32 %v833, %v833
        %v835 = vsel %vm827, %v834, 0.0
        %836 = vadd.xlane.f32.xlu0 %v835
        %v837 = vpop.xlane.xlu0 %836
        %v838 = vmul.f32 %v837, %v831
        %v839 = vadd.f32 %v838, 1e-05
        %v840 = vrsqrt.pop %v839
        %v841 = vmul.f32 %v833, %v840
        %v842 = vlaneseq
        %v843 = vshrl.u32 %v842, 7
        %v844 = vsub.s32 0, %v843
        %v845 = vrot.slane %v825, %v844
        %v846 = vmul.f32 %v841, %v845
        %v847 = vlaneseq
        %v848 = vshrl.u32 %v847, 7
        %v849 = vsub.s32 0, %v848
        %v850 = vrot.slane %v826, %v849
        %v851 = vadd.f32 %v846, %v850
        %v852 = vpack.c.bf16 %v851, %v851
        %v853 = vld [vmem:[%s3] sm:$0xf]
        %v854 = vld [vmem:[%s3 + $0x4] sm:$0xf]
        %v855 = vld [vmem:[%s3 + $0x8] sm:$0xf]
        %v856 = vld [vmem:[%s3 + $0xc] sm:$0xf]
        %v857 = vld [vmem:[%s4] sm:$0x1]
        %v859 = vlaneseq
        %v860 = vshrl.u32 %v859, 7
        %v861 = vsub.s32 0, %v860
        %v862 = vrot.slane %v857, %v861
        %v868 = vunpack.c.l.b16 %v853
        %v869 = vunpack.c.l.b16 %v854
        %v870 = vunpack.c.l.b16 %v855
        %v871 = vunpack.c.l.b16 %v856
        %v872 = vpack.c.b16 %v869, %v868
        %v873 = vpack.c.b16 %v871, %v870
        %v877 = vsel %vm827, %v852, 0
        %879 = vmatprep.subr.bf16.mxu0 0
        %880 = vmatpush1.bf16.msra.mxu0 %v872
        %881 = vmatprep.subr.bf16.mxu0 0
        %882 = vmatpush1.bf16.msra.mxu0 %v873
        %883 = vmatprep.subr.bf16.mxu0 0
        %884 = vmatpush1.bf16.msra.mxu0 0
        %885 = vmatprep.subr.bf16.mxu0 0
        %886 = vmatpush1.bf16.msra.mxu0 0
        %887 = vmatprep.subr.bf16.mxu0 0
        %888 = vmatpush1.bf16.msra.mxu0 0
        %889 = vmatprep.subr.bf16.mxu0 0
        %890 = vmatpush1.bf16.msra.mxu0 0
        %891 = vmatprep.subr.bf16.mxu0 0
        %892 = vmatpush1.bf16.msra.mxu0 0
        %893 = vmatprep.subr.bf16.mxu0 0
        %894 = vmatpush1.bf16.msra.mxu0 0
        %895 = vmatprep.subr.bf16.mxu0 0
        %896 = vmatpush1.bf16.msra.mxu0 0
        %897 = vmatprep.subr.bf16.mxu0 0
        %898 = vmatpush1.bf16.msra.mxu0 0
        %899 = vmatprep.subr.bf16.mxu0 0
        %900 = vmatpush1.bf16.msra.mxu0 0
        %901 = vmatprep.subr.bf16.mxu0 0
        %902 = vmatpush1.bf16.msra.mxu0 0
        %903 = vmatprep.subr.bf16.mxu0 0
        %904 = vmatpush1.bf16.msra.mxu0 0
        %905 = vmatprep.subr.bf16.mxu0 0
        %906 = vmatpush1.bf16.msra.mxu0 0
        %907 = vmatprep.subr.bf16.mxu0 0
        %908 = vmatpush1.bf16.msra.mxu0 0
        %909 = vmatprep.subr.bf16.mxu0 0
        %910 = vmatpush1.bf16.msra.mxu0 0
        %911 = vmatprep.mubr.bf16.mxu0 0
        %912 = vmatmul.mubr.bf16.gmra.mrb[0].mxu0 %v877
        %v913 = vpop.f32.mrb[0].mxu0
        %v914 = vadd.f32 %v862, %v913
        %v915 = vpop.f32.mrb[0].mxu0
        %v916 = vpop.f32.mrb[0].mxu0
        %v917 = vpop.f32.mrb[0].mxu0
        %918 = vdwg.mxu0
        %v919 = vxor.u32 %v914, 2147483648
        %v920 = vmul.f32 %v919, 1.442695
        %v921 = vpow.pop %v920
        %v922 = vadd.f32 %v921, 1.0
        %v923 = vrcp.pop %v922
        %v924 = vmul.f32 1.0, %v923
        %v925 = vmul.f32 %v914, %v924
        %v926 = vpack.c.bf16 %v925, %v925
        %v927 = vld [vmem:[%s5] sm:$0xf]
        %v928 = vld [vmem:[%s5 + $0x4] sm:$0xf]
        %v929 = vld [vmem:[%s5 + $0x8] sm:$0xf]
        %v930 = vld [vmem:[%s5 + $0xc] sm:$0xf]
        %v931 = vld [vmem:[%s5 + $0x10] sm:$0xf]
        %v932 = vld [vmem:[%s5 + $0x14] sm:$0xf]
        %v933 = vld [vmem:[%s5 + $0x18] sm:$0xf]
        %v934 = vld [vmem:[%s5 + $0x1c] sm:$0xf]
        %v935 = vld [vmem:[%s5 + $0x20] sm:$0xf]
        %v936 = vld [vmem:[%s5 + $0x24] sm:$0xf]
        %v937 = vld [vmem:[%s5 + $0x28] sm:$0xf]
        %v938 = vld [vmem:[%s5 + $0x2c] sm:$0xf]
        %v939 = vld [vmem:[%s5 + $0x30] sm:$0xf]
        %v940 = vld [vmem:[%s5 + $0x34] sm:$0xf]
        %v941 = vld [vmem:[%s5 + $0x38] sm:$0xf]
        %v942 = vld [vmem:[%s5 + $0x3c] sm:$0xf]
        %v943 = vld [vmem:[%s6] sm:$0x1]
        %v945 = vlaneseq
        %v946 = vshrl.u32 %v945, 7
        %v947 = vsub.s32 0, %v946
        %v948 = vrot.slane %v943, %v947
        %v966 = vunpack.c.l.b16 %v927
        %v967 = vunpack.c.l.b16 %v928
        %v968 = vunpack.c.l.b16 %v929
        %v969 = vunpack.c.l.b16 %v930
        %v970 = vunpack.c.l.b16 %v931
        %v971 = vunpack.c.l.b16 %v932
        %v972 = vunpack.c.l.b16 %v933
        %v973 = vunpack.c.l.b16 %v934
        %v974 = vunpack.c.l.b16 %v935
        %v975 = vunpack.c.l.b16 %v936
        %v976 = vunpack.c.l.b16 %v937
        %v977 = vunpack.c.l.b16 %v938
        %v978 = vunpack.c.l.b16 %v939
        %v979 = vunpack.c.l.b16 %v940
        %v980 = vunpack.c.l.b16 %v941
        %v981 = vunpack.c.l.b16 %v942
        %v982 = vpack.c.b16 %v967, %v966
        %v983 = vpack.c.b16 %v969, %v968
        %v984 = vpack.c.b16 %v971, %v970
        %v985 = vpack.c.b16 %v973, %v972
        %v986 = vpack.c.b16 %v975, %v974
        %v987 = vpack.c.b16 %v977, %v976
        %v988 = vpack.c.b16 %v979, %v978
        %v989 = vpack.c.b16 %v981, %v980
        %998 = vmatprep.subr.bf16.mxu0 0
        %999 = vmatpush1.bf16.msra.mxu0 %v982
        %1000 = vmatprep.subr.bf16.mxu0 0
        %1001 = vmatpush1.bf16.msra.mxu0 %v983
        %1002 = vmatprep.subr.bf16.mxu0 0
        %1003 = vmatpush1.bf16.msra.mxu0 %v984
        %1004 = vmatprep.subr.bf16.mxu0 0
        %1005 = vmatpush1.bf16.msra.mxu0 %v985
        %1006 = vmatprep.subr.bf16.mxu0 0
        %1007 = vmatpush1.bf16.msra.mxu0 %v986
        %1008 = vmatprep.subr.bf16.mxu0 0
        %1009 = vmatpush1.bf16.msra.mxu0 %v987
        %1010 = vmatprep.subr.bf16.mxu0 0
        %1011 = vmatpush1.bf16.msra.mxu0 %v988
        %1012 = vmatprep.subr.bf16.mxu0 0
        %1013 = vmatpush1.bf16.msra.mxu0 %v989
        %1014 = vmatprep.subr.bf16.mxu0 0
        %1015 = vmatpush1.bf16.msra.mxu0 0
        %1016 = vmatprep.subr.bf16.mxu0 0
        %1017 = vmatpush1.bf16.msra.mxu0 0
        %1018 = vmatprep.subr.bf16.mxu0 0
        %1019 = vmatpush1.bf16.msra.mxu0 0
        %1020 = vmatprep.subr.bf16.mxu0 0
        %1021 = vmatpush1.bf16.msra.mxu0 0
        %1022 = vmatprep.subr.bf16.mxu0 0
        %1023 = vmatpush1.bf16.msra.mxu0 0
        %1024 = vmatprep.subr.bf16.mxu0 0
        %1025 = vmatpush1.bf16.msra.mxu0 0
        %1026 = vmatprep.subr.bf16.mxu0 0
        %1027 = vmatpush1.bf16.msra.mxu0 0
        %1028 = vmatprep.subr.bf16.mxu0 0
        %1029 = vmatpush1.bf16.msra.mxu0 0
        %1030 = vmatprep.mubr.bf16.mxu0 0
        %1031 = vmatmul.mubr.bf16.gmra.mrb[0].mxu0 %v926
        %v1032 = vpop.f32.mrb[0].mxu0
        %v1033 = vadd.f32 %v948, %v1032
        %v1034 = vpop.f32.mrb[0].mxu0
        %v1035 = vpop.f32.mrb[0].mxu0
        %v1036 = vpop.f32.mrb[0].mxu0
        %1037 = vdwg.mxu0
        %v1038 = vmul.f32 %v1033, 0.5
        %v1039 = vadd.f32 %v824, %v1038
        %v1040 = vsel %vm827, %v1039, 0.0
        %1041 = vadd.xlane.f32.xlu0 %v1040
        %v1042 = vpop.xlane.xlu0 %1041
        %v1043 = vmul.f32 %v1042, %v831
        %v1044 = vsub.f32 %v1039, %v1043
        %v1045 = vmul.f32 %v1044, %v1044
        %v1046 = vsel %vm827, %v1045, 0.0
        %1047 = vadd.xlane.f32.xlu0 %v1046
        %v1048 = vpop.xlane.xlu0 %1047
        %v1049 = vmul.f32 %v1048, %v831
        %v1050 = vadd.f32 %v1049, 1e-05
        %v1051 = vrsqrt.pop %v1050
        %v1052 = vmul.f32 %v1044, %v1051
        %v1053 = vlaneseq
        %v1054 = vshrl.u32 %v1053, 7
        %v1055 = vsub.s32 1, %v1054
        %v1056 = vrot.slane %v825, %v1055
        %v1057 = vmul.f32 %v1052, %v1056
        %v1058 = vlaneseq
        %v1059 = vshrl.u32 %v1058, 7
        %v1060 = vsub.s32 1, %v1059
        %v1061 = vrot.slane %v826, %v1060
        %v1062 = vadd.f32 %v1057, %v1061
        %v1063 = vpack.c.bf16 %v1062, %v1062
        %v1064 = vld [vmem:[%s7] sm:$0xf]
        %v1065 = vld [vmem:[%s7 + $0x4] sm:$0xf]
        %v1066 = vld [vmem:[%s7 + $0x8] sm:$0xf]
        %v1067 = vld [vmem:[%s7 + $0xc] sm:$0xf]
        %v1068 = vld [vmem:[%s8] sm:$0x1]
        %v1070 = vlaneseq
        %v1071 = vshrl.u32 %v1070, 7
        %v1072 = vsub.s32 0, %v1071
        %v1073 = vrot.slane %v1068, %v1072
        %v1079 = vunpack.c.l.b16 %v1064
        %v1080 = vunpack.c.l.b16 %v1065
        %v1081 = vunpack.c.l.b16 %v1066
        %v1082 = vunpack.c.l.b16 %v1067
        %v1083 = vpack.c.b16 %v1080, %v1079
        %v1084 = vpack.c.b16 %v1082, %v1081
        %v1088 = vsel %vm827, %v1063, 0
        %1090 = vmatprep.subr.bf16.mxu0 0
        %1091 = vmatpush1.bf16.msra.mxu0 %v1083
        %1092 = vmatprep.subr.bf16.mxu0 0
        %1093 = vmatpush1.bf16.msra.mxu0 %v1084
        %1094 = vmatprep.subr.bf16.mxu0 0
        %1095 = vmatpush1.bf16.msra.mxu0 0
        %1096 = vmatprep.subr.bf16.mxu0 0
        %1097 = vmatpush1.bf16.msra.mxu0 0
        %1098 = vmatprep.subr.bf16.mxu0 0
        %1099 = vmatpush1.bf16.msra.mxu0 0
        %1100 = vmatprep.subr.bf16.mxu0 0
        %1101 = vmatpush1.bf16.msra.mxu0 0
        %1102 = vmatprep.subr.bf16.mxu0 0
        %1103 = vmatpush1.bf16.msra.mxu0 0
        %1104 = vmatprep.subr.bf16.mxu0 0
        %1105 = vmatpush1.bf16.msra.mxu0 0
        %1106 = vmatprep.subr.bf16.mxu0 0
        %1107 = vmatpush1.bf16.msra.mxu0 0
        %1108 = vmatprep.subr.bf16.mxu0 0
        %1109 = vmatpush1.bf16.msra.mxu0 0
        %1110 = vmatprep.subr.bf16.mxu0 0
        %1111 = vmatpush1.bf16.msra.mxu0 0
        %1112 = vmatprep.subr.bf16.mxu0 0
        %1113 = vmatpush1.bf16.msra.mxu0 0
        %1114 = vmatprep.subr.bf16.mxu0 0
        %1115 = vmatpush1.bf16.msra.mxu0 0
        %1116 = vmatprep.subr.bf16.mxu0 0
        %1117 = vmatpush1.bf16.msra.mxu0 0
        %1118 = vmatprep.subr.bf16.mxu0 0
        %1119 = vmatpush1.bf16.msra.mxu0 0
        %1120 = vmatprep.subr.bf16.mxu0 0
        %1121 = vmatpush1.bf16.msra.mxu0 0
        %1122 = vmatprep.mubr.bf16.mxu0 0
        %1123 = vmatmul.mubr.bf16.gmra.mrb[0].mxu0 %v1088
        %v1124 = vpop.f32.mrb[0].mxu0
        %v1125 = vadd.f32 %v1073, %v1124
        %v1126 = vpop.f32.mrb[0].mxu0
        %v1127 = vpop.f32.mrb[0].mxu0
        %v1128 = vpop.f32.mrb[0].mxu0
        %1129 = vdwg.mxu0
        %v1130 = vpack.c.bf16 %v1125, %v1125
        %1132 = vrot.lane.b32.xlu0 %v1130, 96
        %v1133 = vpop.permute.xlu0 %1132
        %vm1134 = vcmask 64512
        %v1136 = vsel %vm1134, %v1130, 0
        %v1139 = vsel %vm1134, %v1133, 0
        %1141 = vmatprep.subr.bf16.mxu0 0
        %1142 = vmatpush1.bf16.xpose.msra.mxu0 %v1139
        %1143 = vmatprep.subr.bf16.mxu0 0
        %1144 = vmatpush1.bf16.xpose.msra.mxu0 0
        %1145 = vmatprep.subr.bf16.mxu0 0
        %1146 = vmatpush1.bf16.xpose.msra.mxu0 0
        %1147 = vmatprep.subr.bf16.mxu0 0
        %1148 = vmatpush1.bf16.xpose.msra.mxu0 0
        %1149 = vmatprep.subr.bf16.mxu0 0
        %1150 = vmatpush1.bf16.xpose.msra.mxu0 0
        %1151 = vmatprep.subr.bf16.mxu0 0
        %1152 = vmatpush1.bf16.xpose.msra.mxu0 0
        %1153 = vmatprep.subr.bf16.mxu0 0
        %1154 = vmatpush1.bf16.xpose.msra.mxu0 0
        %1155 = vmatprep.subr.bf16.mxu0 0
        %1156 = vmatpush1.bf16.xpose.msra.mxu0 0
        %1157 = vmatprep.subr.bf16.mxu0 0
        %1158 = vmatpush1.bf16.xpose.msra.mxu0 0
        %1159 = vmatprep.subr.bf16.mxu0 0
        %1160 = vmatpush1.bf16.xpose.msra.mxu0 0
        %1161 = vmatprep.subr.bf16.mxu0 0
        %1162 = vmatpush1.bf16.xpose.msra.mxu0 0
        %1163 = vmatprep.subr.bf16.mxu0 0
        %1164 = vmatpush1.bf16.xpose.msra.mxu0 0
        %1165 = vmatprep.subr.bf16.mxu0 0
        %1166 = vmatpush1.bf16.xpose.msra.mxu0 0
        %1167 = vmatprep.subr.bf16.mxu0 0
        %1168 = vmatpush1.bf16.xpose.msra.mxu0 0
        %1169 = vmatprep.subr.bf16.mxu0 0
        %1170 = vmatpush1.bf16.xpose.msra.mxu0 0
        %1171 = vmatprep.subr.bf16.mxu0 0
        %1172 = vmatpush1.bf16.xpose.msra.mxu0 0
        %1173 = vmatprep.mubr.bf16.mxu0 0
        %1174 = vmatmul.mubr.bf16.gmra.mrb[0].mxu0 %v1136
        %v1175 = vpop.f32.mrb[0].mxu0
        %v1176 = vadd.f32 0.0, %v1175
        %v1177 = vpop.f32.mrb[0].mxu0
        %v1178 = vpop.f32.mrb[0].mxu0
        %v1179 = vpop.f32.mrb[0].mxu0
        %1180 = vdwg.mxu0
        %v1181 = vmul.f32 %v1176, 0.35355338
        %v1182 = vsel %vm1134, %v1181, -inf
        %1183 = vmax.xlane.f32.xlu0 %v1182
        %v1184 = vpop.xlane.xlu0 %1183
        %v1185 = vsub.f32 %v1181, %v1184
        %v1186 = vmul.f32 %v1185, 1.442695
        %v1187 = vpow.pop %v1186
        %v1188 = vsel %vm1134, %v1187, 0.0
        %1189 = vadd.xlane.f32.xlu0 %v1188
        %v1190 = vpop.xlane.xlu0 %1189
        %v1191 = vrcp.pop %v1190
        %v1192 = vmul.f32 %v1187, %v1191
        %v1193 = vpack.c.bf16 %v1192, %v1192
        %1194 = vrot.lane.b32.xlu0 %v1130, 64
        %v1195 = vpop.permute.xlu0 %1194
        %v1197 = vsel %vm1134, %v1193, 0
        %vm1199 = vcmask 1043456
        %v1201 = vsel %vm1199, %v1195, 0
        %1203 = vmatprep.subr.bf16.mxu0 0
        %1204 = vmatpush1.bf16.msra.mxu0 %v1201
        %1205 = vmatprep.subr.bf16.mxu0 0
        %1206 = vmatpush1.bf16.msra.mxu0 0
        %1207 = vmatprep.subr.bf16.mxu0 0
        %1208 = vmatpush1.bf16.msra.mxu0 0
        %1209 = vmatprep.subr.bf16.mxu0 0
        %1210 = vmatpush1.bf16.msra.mxu0 0
        %1211 = vmatprep.subr.bf16.mxu0 0
        %1212 = vmatpush1.bf16.msra.mxu0 0
        %1213 = vmatprep.subr.bf16.mxu0 0
        %1214 = vmatpush1.bf16.msra.mxu0 0
        %1215 = vmatprep.subr.bf16.mxu0 0
        %1216 = vmatpush1.bf16.msra.mxu0 0
        %1217 = vmatprep.subr.bf16.mxu0 0
        %1218 = vmatpush1.bf16.msra.mxu0 0
        %1219 = vmatprep.subr.bf16.mxu0 0
        %1220 = vmatpush1.bf16.msra.mxu0 0
        %1221 = vmatprep.subr.bf16.mxu0 0
        %1222 = vmatpush1.bf16.msra.mxu0 0
        %1223 = vmatprep.subr.bf16.mxu0 0
        %1224 = vmatpush1.bf16.msra.mxu0 0
        %1225 = vmatprep.subr.bf16.mxu0 0
        %1226 = vmatpush1.bf16.msra.mxu0 0
        %1227 = vmatprep.subr.bf16.mxu0 0
        %1228 = vmatpush1.bf16.msra.mxu0 0
        %1229 = vmatprep.subr.bf16.mxu0 0
        %1230 = vmatpush1.bf16.msra.mxu0 0
        %1231 = vmatprep.subr.bf16.mxu0 0
        %1232 = vmatpush1.bf16.msra.mxu0 0
        %1233 = vmatprep.subr.bf16.mxu0 0
        %1234 = vmatpush1.bf16.msra.mxu0 0
        %1235 = vmatprep.mubr.bf16.mxu0 0
        %1236 = vmatmul.mubr.bf16.gmra.mrb[0].mxu0 %v1197
        %v1237 = vpop.f32.mrb[0].mxu0
        %v1238 = vadd.f32 0.0, %v1237
        %v1239 = vpop.f32.mrb[0].mxu0
        %v1240 = vpop.f32.mrb[0].mxu0
        %v1241 = vpop.f32.mrb[0].mxu0
        %1242 = vdwg.mxu0
        %1243 = vrot.lane.b32.xlu0 %v1130, 120
        %v1244 = vpop.permute.xlu0 %1243
        %1245 = vrot.lane.b32.xlu0 %v1130, 88
        %v1246 = vpop.permute.xlu0 %1245
        %v1248 = vsel %vm1134, %v1244, 0
        %v1251 = vsel %vm1134, %v1246, 0
        %1253 = vmatprep.subr.bf16.mxu0 0
        %1254 = vmatpush1.bf16.xpose.msra.mxu0 %v1251
        %1255 = vmatprep.subr.bf16.mxu0 0
        %1256 = vmatpush1.bf16.xpose.msra.mxu0 0
        %1257 = vmatprep.subr.bf16.mxu0 0
        %1258 = vmatpush1.bf16.xpose.msra.mxu0 0
        %1259 = vmatprep.subr.bf16.mxu0 0
        %1260 = vmatpush1.bf16.xpose.msra.mxu0 0
        %1261 = vmatprep.subr.bf16.mxu0 0
        %1262 = vmatpush1.bf16.xpose.msra.mxu0 0
        %1263 = vmatprep.subr.bf16.mxu0 0
        %1264 = vmatpush1.bf16.xpose.msra.mxu0 0
        %1265 = vmatprep.subr.bf16.mxu0 0
        %1266 = vmatpush1.bf16.xpose.msra.mxu0 0
        %1267 = vmatprep.subr.bf16.mxu0 0
        %1268 = vmatpush1.bf16.xpose.msra.mxu0 0
        %1269 = vmatprep.subr.bf16.mxu0 0
        %1270 = vmatpush1.bf16.xpose.msra.mxu0 0
        %1271 = vmatprep.subr.bf16.mxu0 0
        %1272 = vmatpush1.bf16.xpose.msra.mxu0 0
        %1273 = vmatprep.subr.bf16.mxu0 0
        %1274 = vmatpush1.bf16.xpose.msra.mxu0 0
        %1275 = vmatprep.subr.bf16.mxu0 0
        %1276 = vmatpush1.bf16.xpose.msra.mxu0 0
        %1277 = vmatprep.subr.bf16.mxu0 0
        %1278 = vmatpush1.bf16.xpose.msra.mxu0 0
        %1279 = vmatprep.subr.bf16.mxu0 0
        %1280 = vmatpush1.bf16.xpose.msra.mxu0 0
        %1281 = vmatprep.subr.bf16.mxu0 0
        %1282 = vmatpush1.bf16.xpose.msra.mxu0 0
        %1283 = vmatprep.subr.bf16.mxu0 0
        %1284 = vmatpush1.bf16.xpose.msra.mxu0 0
        %1285 = vmatprep.mubr.bf16.mxu0 0
        %1286 = vmatmul.mubr.bf16.gmra.mrb[0].mxu0 %v1248
        %v1287 = vpop.f32.mrb[0].mxu0
        %v1288 = vadd.f32 0.0, %v1287
        %v1289 = vpop.f32.mrb[0].mxu0
        %v1290 = vpop.f32.mrb[0].mxu0
        %v1291 = vpop.f32.mrb[0].mxu0
        %1292 = vdwg.mxu0
        %v1293 = vmul.f32 %v1288, 0.35355338
        %v1294 = vsel %vm1134, %v1293, -inf
        %1295 = vmax.xlane.f32.xlu0 %v1294
        %v1296 = vpop.xlane.xlu0 %1295
        %v1297 = vsub.f32 %v1293, %v1296
        %v1298 = vmul.f32 %v1297, 1.442695
        %v1299 = vpow.pop %v1298
        %v1300 = vsel %vm1134, %v1299, 0.0
        %1301 = vadd.xlane.f32.xlu0 %v1300
        %v1302 = vpop.xlane.xlu0 %1301
        %v1303 = vrcp.pop %v1302
        %v1304 = vmul.f32 %v1299, %v1303
        %v1305 = vpack.c.bf16 %v1304, %v1304
        %1306 = vrot.lane.b32.xlu0 %v1130, 56
        %v1307 = vpop.permute.xlu0 %1306
        %v1309 = vsel %vm1134, %v1305, 0
        %v1312 = vsel %vm1199, %v1307, 0
        %1314 = vmatprep.subr.bf16.mxu0 0
        %1315 = vmatpush1.bf16.msra.mxu0 %v1312
        %1316 = vmatprep.subr.bf16.mxu0 0
        %1317 = vmatpush1.bf16.msra.mxu0 0
        %1318 = vmatprep.subr.bf16.mxu0 0
        %1319 = vmatpush1.bf16.msra.mxu0 0
        %1320 = vmatprep.subr.bf16.mxu0 0
        %1321 = vmatpush1.bf16.msra.mxu0 0
        %1322 = vmatprep.subr.bf16.mxu0 0
        %1323 = vmatpush1.bf16.msra.mxu0 0
        %1324 = vmatprep.subr.bf16.mxu0 0
        %1325 = vmatpush1.bf16.msra.mxu0 0
        %1326 = vmatprep.subr.bf16.mxu0 0
        %1327 = vmatpush1.bf16.msra.mxu0 0
        %1328 = vmatprep.subr.bf16.mxu0 0
        %1329 = vmatpush1.bf16.msra.mxu0 0
        %1330 = vmatprep.subr.bf16.mxu0 0
        %1331 = vmatpush1.bf16.msra.mxu0 0
        %1332 = vmatprep.subr.bf16.mxu0 0
        %1333 = vmatpush1.bf16.msra.mxu0 0
        %1334 = vmatprep.subr.bf16.mxu0 0
        %1335 = vmatpush1.bf16.msra.mxu0 0
        %1336 = vmatprep.subr.bf16.mxu0 0
        %1337 = vmatpush1.bf16.msra.mxu0 0
        %1338 = vmatprep.subr.bf16.mxu0 0
        %1339 = vmatpush1.bf16.msra.mxu0 0
        %1340 = vmatprep.subr.bf16.mxu0 0
        %1341 = vmatpush1.bf16.msra.mxu0 0
        %1342 = vmatprep.subr.bf16.mxu0 0
        %1343 = vmatpush1.bf16.msra.mxu0 0
        %1344 = vmatprep.subr.bf16.mxu0 0
        %1345 = vmatpush1.bf16.msra.mxu0 0
        %1346 = vmatprep.mubr.bf16.mxu0 0
        %1347 = vmatmul.mubr.bf16.gmra.mrb[0].mxu0 %v1309
        %v1348 = vpop.f32.mrb[0].mxu0
        %v1349 = vadd.f32 0.0, %v1348
        %v1350 = vpop.f32.mrb[0].mxu0
        %v1351 = vpop.f32.mrb[0].mxu0
        %v1352 = vpop.f32.mrb[0].mxu0
        %1353 = vdwg.mxu0
        %1354 = vrot.lane.b32.xlu0 %v1130, 112
        %v1355 = vpop.permute.xlu0 %1354
        %1356 = vrot.lane.b32.xlu0 %v1130, 80
        %v1357 = vpop.permute.xlu0 %1356
        %v1359 = vsel %vm1134, %v1355, 0
        %v1362 = vsel %vm1134, %v1357, 0
        %1364 = vmatprep.subr.bf16.mxu0 0
        %1365 = vmatpush1.bf16.xpose.msra.mxu0 %v1362
        %1366 = vmatprep.subr.bf16.mxu0 0
        %1367 = vmatpush1.bf16.xpose.msra.mxu0 0
        %1368 = vmatprep.subr.bf16.mxu0 0
        %1369 = vmatpush1.bf16.xpose.msra.mxu0 0
        %1370 = vmatprep.subr.bf16.mxu0 0
        %1371 = vmatpush1.bf16.xpose.msra.mxu0 0
        %1372 = vmatprep.subr.bf16.mxu0 0
        %1373 = vmatpush1.bf16.xpose.msra.mxu0 0
        %1374 = vmatprep.subr.bf16.mxu0 0
        %1375 = vmatpush1.bf16.xpose.msra.mxu0 0
        %1376 = vmatprep.subr.bf16.mxu0 0
        %1377 = vmatpush1.bf16.xpose.msra.mxu0 0
        %1378 = vmatprep.subr.bf16.mxu0 0
        %1379 = vmatpush1.bf16.xpose.msra.mxu0 0
        %1380 = vmatprep.subr.bf16.mxu0 0
        %1381 = vmatpush1.bf16.xpose.msra.mxu0 0
        %1382 = vmatprep.subr.bf16.mxu0 0
        %1383 = vmatpush1.bf16.xpose.msra.mxu0 0
        %1384 = vmatprep.subr.bf16.mxu0 0
        %1385 = vmatpush1.bf16.xpose.msra.mxu0 0
        %1386 = vmatprep.subr.bf16.mxu0 0
        %1387 = vmatpush1.bf16.xpose.msra.mxu0 0
        %1388 = vmatprep.subr.bf16.mxu0 0
        %1389 = vmatpush1.bf16.xpose.msra.mxu0 0
        %1390 = vmatprep.subr.bf16.mxu0 0
        %1391 = vmatpush1.bf16.xpose.msra.mxu0 0
        %1392 = vmatprep.subr.bf16.mxu0 0
        %1393 = vmatpush1.bf16.xpose.msra.mxu0 0
        %1394 = vmatprep.subr.bf16.mxu0 0
        %1395 = vmatpush1.bf16.xpose.msra.mxu0 0
        %1396 = vmatprep.mubr.bf16.mxu0 0
        %1397 = vmatmul.mubr.bf16.gmra.mrb[0].mxu0 %v1359
        %v1398 = vpop.f32.mrb[0].mxu0
        %v1399 = vadd.f32 0.0, %v1398
        %v1400 = vpop.f32.mrb[0].mxu0
        %v1401 = vpop.f32.mrb[0].mxu0
        %v1402 = vpop.f32.mrb[0].mxu0
        %1403 = vdwg.mxu0
        %v1404 = vmul.f32 %v1399, 0.35355338
        %v1405 = vsel %vm1134, %v1404, -inf
        %1406 = vmax.xlane.f32.xlu0 %v1405
        %v1407 = vpop.xlane.xlu0 %1406
        %v1408 = vsub.f32 %v1404, %v1407
        %v1409 = vmul.f32 %v1408, 1.442695
        %v1410 = vpow.pop %v1409
        %v1411 = vsel %vm1134, %v1410, 0.0
        %1412 = vadd.xlane.f32.xlu0 %v1411
        %v1413 = vpop.xlane.xlu0 %1412
        %v1414 = vrcp.pop %v1413
        %v1415 = vmul.f32 %v1410, %v1414
        %v1416 = vpack.c.bf16 %v1415, %v1415
        %1417 = vrot.lane.b32.xlu0 %v1130, 48
        %v1418 = vpop.permute.xlu0 %1417
        %v1420 = vsel %vm1134, %v1416, 0
        %v1423 = vsel %vm1199, %v1418, 0
        %1425 = vmatprep.subr.bf16.mxu0 0
        %1426 = vmatpush1.bf16.msra.mxu0 %v1423
        %1427 = vmatprep.subr.bf16.mxu0 0
        %1428 = vmatpush1.bf16.msra.mxu0 0
        %1429 = vmatprep.subr.bf16.mxu0 0
        %1430 = vmatpush1.bf16.msra.mxu0 0
        %1431 = vmatprep.subr.bf16.mxu0 0
        %1432 = vmatpush1.bf16.msra.mxu0 0
        %1433 = vmatprep.subr.bf16.mxu0 0
        %1434 = vmatpush1.bf16.msra.mxu0 0
        %1435 = vmatprep.subr.bf16.mxu0 0
        %1436 = vmatpush1.bf16.msra.mxu0 0
        %1437 = vmatprep.subr.bf16.mxu0 0
        %1438 = vmatpush1.bf16.msra.mxu0 0
        %1439 = vmatprep.subr.bf16.mxu0 0
        %1440 = vmatpush1.bf16.msra.mxu0 0
        %1441 = vmatprep.subr.bf16.mxu0 0
        %1442 = vmatpush1.bf16.msra.mxu0 0
        %1443 = vmatprep.subr.bf16.mxu0 0
        %1444 = vmatpush1.bf16.msra.mxu0 0
        %1445 = vmatprep.subr.bf16.mxu0 0
        %1446 = vmatpush1.bf16.msra.mxu0 0
        %1447 = vmatprep.subr.bf16.mxu0 0
        %1448 = vmatpush1.bf16.msra.mxu0 0
        %1449 = vmatprep.subr.bf16.mxu0 0
        %1450 = vmatpush1.bf16.msra.mxu0 0
        %1451 = vmatprep.subr.bf16.mxu0 0
        %1452 = vmatpush1.bf16.msra.mxu0 0
        %1453 = vmatprep.subr.bf16.mxu0 0
        %1454 = vmatpush1.bf16.msra.mxu0 0
        %1455 = vmatprep.subr.bf16.mxu0 0
        %1456 = vmatpush1.bf16.msra.mxu0 0
        %1457 = vmatprep.mubr.bf16.mxu0 0
        %1458 = vmatmul.mubr.bf16.gmra.mrb[0].mxu0 %v1420
        %v1459 = vpop.f32.mrb[0].mxu0
        %v1460 = vadd.f32 0.0, %v1459
        %v1461 = vpop.f32.mrb[0].mxu0
        %v1462 = vpop.f32.mrb[0].mxu0
        %v1463 = vpop.f32.mrb[0].mxu0
        %1464 = vdwg.mxu0
        %1465 = vrot.lane.b32.xlu0 %v1130, 104
        %v1466 = vpop.permute.xlu0 %1465
        %1467 = vrot.lane.b32.xlu0 %v1130, 72
        %v1468 = vpop.permute.xlu0 %1467
        %v1470 = vsel %vm1134, %v1466, 0
        %v1473 = vsel %vm1134, %v1468, 0
        %1475 = vmatprep.subr.bf16.mxu0 0
        %1476 = vmatpush1.bf16.xpose.msra.mxu0 %v1473
        %1477 = vmatprep.subr.bf16.mxu0 0
        %1478 = vmatpush1.bf16.xpose.msra.mxu0 0
        %1479 = vmatprep.subr.bf16.mxu0 0
        %1480 = vmatpush1.bf16.xpose.msra.mxu0 0
        %1481 = vmatprep.subr.bf16.mxu0 0
        %1482 = vmatpush1.bf16.xpose.msra.mxu0 0
        %1483 = vmatprep.subr.bf16.mxu0 0
        %1484 = vmatpush1.bf16.xpose.msra.mxu0 0
        %1485 = vmatprep.subr.bf16.mxu0 0
        %1486 = vmatpush1.bf16.xpose.msra.mxu0 0
        %1487 = vmatprep.subr.bf16.mxu0 0
        %1488 = vmatpush1.bf16.xpose.msra.mxu0 0
        %1489 = vmatprep.subr.bf16.mxu0 0
        %1490 = vmatpush1.bf16.xpose.msra.mxu0 0
        %1491 = vmatprep.subr.bf16.mxu0 0
        %1492 = vmatpush1.bf16.xpose.msra.mxu0 0
        %1493 = vmatprep.subr.bf16.mxu0 0
        %1494 = vmatpush1.bf16.xpose.msra.mxu0 0
        %1495 = vmatprep.subr.bf16.mxu0 0
        %1496 = vmatpush1.bf16.xpose.msra.mxu0 0
        %1497 = vmatprep.subr.bf16.mxu0 0
        %1498 = vmatpush1.bf16.xpose.msra.mxu0 0
        %1499 = vmatprep.subr.bf16.mxu0 0
        %1500 = vmatpush1.bf16.xpose.msra.mxu0 0
        %1501 = vmatprep.subr.bf16.mxu0 0
        %1502 = vmatpush1.bf16.xpose.msra.mxu0 0
        %1503 = vmatprep.subr.bf16.mxu0 0
        %1504 = vmatpush1.bf16.xpose.msra.mxu0 0
        %1505 = vmatprep.subr.bf16.mxu0 0
        %1506 = vmatpush1.bf16.xpose.msra.mxu0 0
        %1507 = vmatprep.mubr.bf16.mxu0 0
        %1508 = vmatmul.mubr.bf16.gmra.mrb[0].mxu0 %v1470
        %v1509 = vpop.f32.mrb[0].mxu0
        %v1510 = vadd.f32 0.0, %v1509
        %v1511 = vpop.f32.mrb[0].mxu0
        %v1512 = vpop.f32.mrb[0].mxu0
        %v1513 = vpop.f32.mrb[0].mxu0
        %1514 = vdwg.mxu0
        %v1515 = vmul.f32 %v1510, 0.35355338
        %v1516 = vsel %vm1134, %v1515, -inf
        %1517 = vmax.xlane.f32.xlu0 %v1516
        %v1518 = vpop.xlane.xlu0 %1517
        %v1519 = vsub.f32 %v1515, %v1518
        %v1520 = vmul.f32 %v1519, 1.442695
        %v1521 = vpow.pop %v1520
        %v1522 = vsel %vm1134, %v1521, 0.0
        %1523 = vadd.xlane.f32.xlu0 %v1522
        %v1524 = vpop.xlane.xlu0 %1523
        %v1525 = vrcp.pop %v1524
        %v1526 = vmul.f32 %v1521, %v1525
        %v1527 = vpack.c.bf16 %v1526, %v1526
        %1528 = vrot.lane.b32.xlu0 %v1130, 40
        %v1529 = vpop.permute.xlu0 %1528
        %v1531 = vsel %vm1134, %v1527, 0
        %v1534 = vsel %vm1199, %v1529, 0
        %1536 = vmatprep.subr.bf16.mxu0 0
        %1537 = vmatpush1.bf16.msra.mxu0 %v1534
        %1538 = vmatprep.subr.bf16.mxu0 0
        %1539 = vmatpush1.bf16.msra.mxu0 0
        %1540 = vmatprep.subr.bf16.mxu0 0
        %1541 = vmatpush1.bf16.msra.mxu0 0
        %1542 = vmatprep.subr.bf16.mxu0 0
        %1543 = vmatpush1.bf16.msra.mxu0 0
        %1544 = vmatprep.subr.bf16.mxu0 0
        %1545 = vmatpush1.bf16.msra.mxu0 0
        %1546 = vmatprep.subr.bf16.mxu0 0
        %1547 = vmatpush1.bf16.msra.mxu0 0
        %1548 = vmatprep.subr.bf16.mxu0 0
        %1549 = vmatpush1.bf16.msra.mxu0 0
        %1550 = vmatprep.subr.bf16.mxu0 0
        %1551 = vmatpush1.bf16.msra.mxu0 0
        %1552 = vmatprep.subr.bf16.mxu0 0
        %1553 = vmatpush1.bf16.msra.mxu0 0
        %1554 = vmatprep.subr.bf16.mxu0 0
        %1555 = vmatpush1.bf16.msra.mxu0 0
        %1556 = vmatprep.subr.bf16.mxu0 0
        %1557 = vmatpush1.bf16.msra.mxu0 0
        %1558 = vmatprep.subr.bf16.mxu0 0
        %1559 = vmatpush1.bf16.msra.mxu0 0
        %1560 = vmatprep.subr.bf16.mxu0 0
        %1561 = vmatpush1.bf16.msra.mxu0 0
        %1562 = vmatprep.subr.bf16.mxu0 0
        %1563 = vmatpush1.bf16.msra.mxu0 0
        %1564 = vmatprep.subr.bf16.mxu0 0
        %1565 = vmatpush1.bf16.msra.mxu0 0
        %1566 = vmatprep.subr.bf16.mxu0 0
        %1567 = vmatpush1.bf16.msra.mxu0 0
        %1568 = vmatprep.mubr.bf16.mxu0 0
        %1569 = vmatmul.mubr.bf16.gmra.mrb[0].mxu0 %v1531
        %v1570 = vpop.f32.mrb[0].mxu0
        %v1571 = vadd.f32 0.0, %v1570
        %v1572 = vpop.f32.mrb[0].mxu0
        %v1573 = vpop.f32.mrb[0].mxu0
        %v1574 = vpop.f32.mrb[0].mxu0
        %1575 = vdwg.mxu0
        %1577 = vrot.lane.b32.xlu0 %v1349, 8
        %v1578 = vpop.permute.xlu0 %1577
        %1581 = vrot.lane.b32.xlu0 %v1460, 16
        %v1582 = vpop.permute.xlu0 %1581
        %1585 = vrot.lane.b32.xlu0 %v1571, 24
        %v1586 = vpop.permute.xlu0 %1585
        %v1588 = vsel %vm1134, %v1238, %v1578
        %vm1589 = vcmask 130048
        %v1590 = vsel %vm1589, %v1588, %v1582
        %vm1591 = vcmask 195584
        %v1592 = vsel %vm1591, %v1590, %v1586
        %v1593 = vpack.c.bf16 %v1592, %v1592
        %v1594 = vld [vmem:[%s9] sm:$0xf]
        %v1595 = vld [vmem:[%s9 + $0x4] sm:$0xf]
        %v1596 = vld [vmem:[%s9 + $0x8] sm:$0xf]
        %v1597 = vld [vmem:[%s9 + $0xc] sm:$0xf]
        %v1602 = vunpack.c.l.b16 %v1594
        %v1603 = vunpack.c.l.b16 %v1595
        %v1604 = vunpack.c.l.b16 %v1596
        %v1605 = vunpack.c.l.b16 %v1597
        %v1606 = vpack.c.b16 %v1603, %v1602
        %v1607 = vpack.c.b16 %v1605, %v1604
        %v1611 = vsel %vm827, %v1593, 0
        %1613 = vmatprep.subr.bf16.mxu0 0
        %1614 = vmatpush1.bf16.msra.mxu0 %v1606
        %1615 = vmatprep.subr.bf16.mxu0 0
        %1616 = vmatpush1.bf16.msra.mxu0 %v1607
        %1617 = vmatprep.subr.bf16.mxu0 0
        %1618 = vmatpush1.bf16.msra.mxu0 0
        %1619 = vmatprep.subr.bf16.mxu0 0
        %1620 = vmatpush1.bf16.msra.mxu0 0
        %1621 = vmatprep.subr.bf16.mxu0 0
        %1622 = vmatpush1.bf16.msra.mxu0 0
        %1623 = vmatprep.subr.bf16.mxu0 0
        %1624 = vmatpush1.bf16.msra.mxu0 0
        %1625 = vmatprep.subr.bf16.mxu0 0
        %1626 = vmatpush1.bf16.msra.mxu0 0
        %1627 = vmatprep.subr.bf16.mxu0 0
        %1628 = vmatpush1.bf16.msra.mxu0 0
        %1629 = vmatprep.subr.bf16.mxu0 0
        %1630 = vmatpush1.bf16.msra.mxu0 0
        %1631 = vmatprep.subr.bf16.mxu0 0
        %1632 = vmatpush1.bf16.msra.mxu0 0
        %1633 = vmatprep.subr.bf16.mxu0 0
        %1634 = vmatpush1.bf16.msra.mxu0 0
        %1635 = vmatprep.subr.bf16.mxu0 0
        %1636 = vmatpush1.bf16.msra.mxu0 0
        %1637 = vmatprep.subr.bf16.mxu0 0
        %1638 = vmatpush1.bf16.msra.mxu0 0
        %1639 = vmatprep.subr.bf16.mxu0 0
        %1640 = vmatpush1.bf16.msra.mxu0 0
        %1641 = vmatprep.subr.bf16.mxu0 0
        %1642 = vmatpush1.bf16.msra.mxu0 0
        %1643 = vmatprep.subr.bf16.mxu0 0
        %1644 = vmatpush1.bf16.msra.mxu0 0
        %1645 = vmatprep.mubr.bf16.mxu0 0
        %1646 = vmatmul.mubr.bf16.gmra.mrb[0].mxu0 %v1611
        %v1647 = vpop.f32.mrb[0].mxu0
        %v1648 = vadd.f32 0.0, %v1647
        %v1649 = vpop.f32.mrb[0].mxu0
        %v1650 = vpop.f32.mrb[0].mxu0
        %v1651 = vpop.f32.mrb[0].mxu0
        %1652 = vdwg.mxu0
        %v1653 = vadd.f32 %v1039, %v1648
        %v1654 = vld [vmem:[%s10] sm:$0x1]
        %v1656 = vlaneseq
        %v1657 = vshrl.u32 %v1656, 7
        %v1658 = vsub.s32 0, %v1657
        %v1659 = vrot.slane %v1654, %v1658
        %v1661 = vadd.f32 %v1653, %v1659
        %v1662 = vsel %vm827, %v1661, 0.0
        %1663 = vadd.xlane.f32.xlu0 %v1662
        %v1664 = vpop.xlane.xlu0 %1663
        %v1665 = vmul.f32 %v1664, %v831
        %v1666 = vsub.f32 %v1661, %v1665
        %v1667 = vmul.f32 %v1666, %v1666
        %v1668 = vsel %vm827, %v1667, 0.0
        %1669 = vadd.xlane.f32.xlu0 %v1668
        %v1670 = vpop.xlane.xlu0 %1669
        %v1671 = vmul.f32 %v1670, %v831
        %v1672 = vadd.f32 %v1671, 1e-05
        %v1673 = vrsqrt.pop %v1672
        %v1674 = vmul.f32 %v1666, %v1673
        %v1675 = vlaneseq
        %v1676 = vshrl.u32 %v1675, 7
        %v1677 = vsub.s32 2, %v1676
        %v1678 = vrot.slane %v825, %v1677
        %v1679 = vmul.f32 %v1674, %v1678
        %v1680 = vlaneseq
        %v1681 = vshrl.u32 %v1680, 7
        %v1682 = vsub.s32 2, %v1681
        %v1683 = vrot.slane %v826, %v1682
        %v1684 = vadd.f32 %v1679, %v1683
        %v1685 = vpack.c.bf16 %v1684, %v1684
        %v1686 = vld [vmem:[%s11] sm:$0xf]
        %v1687 = vld [vmem:[%s11 + $0x4] sm:$0xf]
        %v1688 = vld [vmem:[%s11 + $0x8] sm:$0xf]
        %v1689 = vld [vmem:[%s11 + $0xc] sm:$0xf]
        %v1690 = vld [vmem:[%s12] sm:$0x1]
        %v1692 = vlaneseq
        %v1693 = vshrl.u32 %v1692, 7
        %v1694 = vsub.s32 0, %v1693
        %v1695 = vrot.slane %v1690, %v1694
        %v1701 = vunpack.c.l.b16 %v1686
        %v1702 = vunpack.c.l.b16 %v1687
        %v1703 = vunpack.c.l.b16 %v1688
        %v1704 = vunpack.c.l.b16 %v1689
        %v1705 = vpack.c.b16 %v1702, %v1701
        %v1706 = vpack.c.b16 %v1704, %v1703
        %v1710 = vsel %vm827, %v1685, 0
        %1712 = vmatprep.subr.bf16.mxu0 0
        %1713 = vmatpush1.bf16.msra.mxu0 %v1705
        %1714 = vmatprep.subr.bf16.mxu0 0
        %1715 = vmatpush1.bf16.msra.mxu0 %v1706
        %1716 = vmatprep.subr.bf16.mxu0 0
        %1717 = vmatpush1.bf16.msra.mxu0 0
        %1718 = vmatprep.subr.bf16.mxu0 0
        %1719 = vmatpush1.bf16.msra.mxu0 0
        %1720 = vmatprep.subr.bf16.mxu0 0
        %1721 = vmatpush1.bf16.msra.mxu0 0
        %1722 = vmatprep.subr.bf16.mxu0 0
        %1723 = vmatpush1.bf16.msra.mxu0 0
        %1724 = vmatprep.subr.bf16.mxu0 0
        %1725 = vmatpush1.bf16.msra.mxu0 0
        %1726 = vmatprep.subr.bf16.mxu0 0
        %1727 = vmatpush1.bf16.msra.mxu0 0
        %1728 = vmatprep.subr.bf16.mxu0 0
        %1729 = vmatpush1.bf16.msra.mxu0 0
        %1730 = vmatprep.subr.bf16.mxu0 0
        %1731 = vmatpush1.bf16.msra.mxu0 0
        %1732 = vmatprep.subr.bf16.mxu0 0
        %1733 = vmatpush1.bf16.msra.mxu0 0
        %1734 = vmatprep.subr.bf16.mxu0 0
        %1735 = vmatpush1.bf16.msra.mxu0 0
        %1736 = vmatprep.subr.bf16.mxu0 0
        %1737 = vmatpush1.bf16.msra.mxu0 0
        %1738 = vmatprep.subr.bf16.mxu0 0
        %1739 = vmatpush1.bf16.msra.mxu0 0
        %1740 = vmatprep.subr.bf16.mxu0 0
        %1741 = vmatpush1.bf16.msra.mxu0 0
        %1742 = vmatprep.subr.bf16.mxu0 0
        %1743 = vmatpush1.bf16.msra.mxu0 0
        %1744 = vmatprep.mubr.bf16.mxu0 0
        %1745 = vmatmul.mubr.bf16.gmra.mrb[0].mxu0 %v1710
        %v1746 = vpop.f32.mrb[0].mxu0
        %v1747 = vadd.f32 %v1695, %v1746
        %v1748 = vpop.f32.mrb[0].mxu0
        %v1749 = vpop.f32.mrb[0].mxu0
        %v1750 = vpop.f32.mrb[0].mxu0
        %1751 = vdwg.mxu0
        %v1752 = vld [vmem:[%s13] sm:$0xf]
        %v1753 = vld [vmem:[%s13 + $0x4] sm:$0xf]
        %v1754 = vld [vmem:[%s13 + $0x8] sm:$0xf]
        %v1755 = vld [vmem:[%s13 + $0xc] sm:$0xf]
        %v1756 = vld [vmem:[#allocation2] sm:$0x1]
        %v1758 = vlaneseq
        %v1759 = vshrl.u32 %v1758, 7
        %v1760 = vsub.s32 0, %v1759
        %v1761 = vrot.slane %v1756, %v1760
        %v1767 = vunpack.c.l.b16 %v1752
        %v1768 = vunpack.c.l.b16 %v1753
        %v1769 = vunpack.c.l.b16 %v1754
        %v1770 = vunpack.c.l.b16 %v1755
        %v1771 = vpack.c.b16 %v1768, %v1767
        %v1772 = vpack.c.b16 %v1770, %v1769
        %1775 = vmatprep.subr.bf16.mxu0 0
        %1776 = vmatpush1.bf16.msra.mxu0 %v1771
        %1777 = vmatprep.subr.bf16.mxu0 0
        %1778 = vmatpush1.bf16.msra.mxu0 %v1772
        %1779 = vmatprep.subr.bf16.mxu0 0
        %1780 = vmatpush1.bf16.msra.mxu0 0
        %1781 = vmatprep.subr.bf16.mxu0 0
        %1782 = vmatpush1.bf16.msra.mxu0 0
        %1783 = vmatprep.subr.bf16.mxu0 0
        %1784 = vmatpush1.bf16.msra.mxu0 0
        %1785 = vmatprep.subr.bf16.mxu0 0
        %1786 = vmatpush1.bf16.msra.mxu0 0
        %1787 = vmatprep.subr.bf16.mxu0 0
        %1788 = vmatpush1.bf16.msra.mxu0 0
        %1789 = vmatprep.subr.bf16.mxu0 0
        %1790 = vmatpush1.bf16.msra.mxu0 0
        %1791 = vmatprep.subr.bf16.mxu0 0
        %1792 = vmatpush1.bf16.msra.mxu0 0
        %1793 = vmatprep.subr.bf16.mxu0 0
        %1794 = vmatpush1.bf16.msra.mxu0 0
        %1795 = vmatprep.subr.bf16.mxu0 0
        %1796 = vmatpush1.bf16.msra.mxu0 0
        %1797 = vmatprep.subr.bf16.mxu0 0
        %1798 = vmatpush1.bf16.msra.mxu0 0
        %1799 = vmatprep.subr.bf16.mxu0 0
        %1800 = vmatpush1.bf16.msra.mxu0 0
        %1801 = vmatprep.subr.bf16.mxu0 0
        %1802 = vmatpush1.bf16.msra.mxu0 0
        %1803 = vmatprep.subr.bf16.mxu0 0
        %1804 = vmatpush1.bf16.msra.mxu0 0
        %1805 = vmatprep.subr.bf16.mxu0 0
        %1806 = vmatpush1.bf16.msra.mxu0 0
        %1807 = vmatprep.mubr.bf16.mxu0 0
        %1808 = vmatmul.mubr.bf16.gmra.mrb[0].mxu0 %v1710
        %v1809 = vpop.f32.mrb[0].mxu0
        %v1810 = vadd.f32 %v1761, %v1809
        %v1811 = vpop.f32.mrb[0].mxu0
        %v1812 = vpop.f32.mrb[0].mxu0
        %v1813 = vpop.f32.mrb[0].mxu0
        %1814 = vdwg.mxu0
        %v1815 = vxor.u32 %v1810, 2147483648
        %v1816 = vmul.f32 %v1815, 1.442695
        %v1817 = vpow.pop %v1816
        %v1818 = vadd.f32 %v1817, 1.0
        %v1819 = vrcp.pop %v1818
        %v1820 = vmul.f32 1.0, %v1819
        %v1821 = vmul.f32 %v1747, %v1820
        %v1822 = vlaneseq
        %v1823 = vshrl.u32 %v1822, 7
        %v1824 = vld [vmem:[%s15] sm:$0x7]
        %v1825 = vrot.slane %v1821, 7
        %v1826 = vadd.s32 %v1823, 4294967295
        %vm1827 = vcmp.ge.s32.totalorder %v1826, 0
        %vm1828 = vcmp.lt.s32.totalorder %v1826, 8
        %vm1829 = vmand %vm1827, %vm1828
        %v1830 = vsel %vm1829, 1, 0
        %vm1831 = vcmp.eq.s32.totalorder %v1830, 1
        %v1832 = vsel %vm1831, %v1825, 0.0
        %v1833 = vlaneseq
        %v1834 = vshrl.u32 %v1833, 7
        %v1835 = vsub.s32 0, %v1834
        %v1836 = vrot.slane %v1824, %v1835
        %v1837 = vmul.f32 %v1832, %v1836
        %v1838 = vadd.f32 %v1837, 0.0
        %v1839 = vlaneseq
        %v1840 = vshrl.u32 %v1839, 7
        %v1841 = vsub.s32 1, %v1840
        %v1842 = vrot.slane %v1824, %v1841
        %v1843 = vmul.f32 %v1821, %v1842
        %v1844 = vadd.f32 %v1838, %v1843
        %v1845 = vrot.slane %v1821, 1
        %v1846 = vadd.s32 %v1823, 1
        %vm1847 = vcmp.ge.s32.totalorder %v1846, 0
        %vm1848 = vcmp.lt.s32.totalorder %v1846, 8
        %vm1849 = vmand %vm1847, %vm1848
        %v1850 = vsel %vm1849, 1, 0
        %vm1851 = vcmp.eq.s32.totalorder %v1850, 1
        %v1852 = vsel %vm1851, %v1845, 0.0
        %v1853 = vlaneseq
        %v1854 = vshrl.u32 %v1853, 7
        %v1855 = vsub.s32 2, %v1854
        %v1856 = vrot.slane %v1824, %v1855
        %v1857 = vmul.f32 %v1852, %v1856
        %v1858 = vadd.f32 %v1844, %v1857
        %v1859 = vld [vmem:[#allocation4] sm:$0x1]
        %v1861 = vlaneseq
        %v1862 = vshrl.u32 %v1861, 7
        %v1863 = vsub.s32 0, %v1862
        %v1864 = vrot.slane %v1859, %v1863
        %v1866 = vadd.f32 %v1858, %v1864
        %v1867 = vxor.u32 %v1866, 2147483648
        %v1868 = vmul.f32 %v1867, 1.442695
        %v1869 = vpow.pop %v1868
        %v1870 = vadd.f32 %v1869, 1.0
        %v1871 = vrcp.pop %v1870
        %v1872 = vmul.f32 1.0, %v1871
        %v1873 = vmul.f32 %v1866, %v1872
        %v1874 = vpack.c.bf16 %v1873, %v1873
        %v1875 = vld [vmem:[%s17] sm:$0xf]
        %v1876 = vld [vmem:[%s17 + $0x4] sm:$0xf]
        %v1877 = vld [vmem:[%s17 + $0x8] sm:$0xf]
        %v1878 = vld [vmem:[%s17 + $0xc] sm:$0xf]
        %v1883 = vunpack.c.l.b16 %v1875
        %v1884 = vunpack.c.l.b16 %v1876
        %v1885 = vunpack.c.l.b16 %v1877
        %v1886 = vunpack.c.l.b16 %v1878
        %v1887 = vpack.c.b16 %v1884, %v1883
        %v1888 = vpack.c.b16 %v1886, %v1885
        %v1892 = vsel %vm827, %v1874, 0
        %1894 = vmatprep.subr.bf16.mxu0 0
        %1895 = vmatpush1.bf16.msra.mxu0 %v1887
        %1896 = vmatprep.subr.bf16.mxu0 0
        %1897 = vmatpush1.bf16.msra.mxu0 %v1888
        %1898 = vmatprep.subr.bf16.mxu0 0
        %1899 = vmatpush1.bf16.msra.mxu0 0
        %1900 = vmatprep.subr.bf16.mxu0 0
        %1901 = vmatpush1.bf16.msra.mxu0 0
        %1902 = vmatprep.subr.bf16.mxu0 0
        %1903 = vmatpush1.bf16.msra.mxu0 0
        %1904 = vmatprep.subr.bf16.mxu0 0
        %1905 = vmatpush1.bf16.msra.mxu0 0
        %1906 = vmatprep.subr.bf16.mxu0 0
        %1907 = vmatpush1.bf16.msra.mxu0 0
        %1908 = vmatprep.subr.bf16.mxu0 0
        %1909 = vmatpush1.bf16.msra.mxu0 0
        %1910 = vmatprep.subr.bf16.mxu0 0
        %1911 = vmatpush1.bf16.msra.mxu0 0
        %1912 = vmatprep.subr.bf16.mxu0 0
        %1913 = vmatpush1.bf16.msra.mxu0 0
        %1914 = vmatprep.subr.bf16.mxu0 0
        %1915 = vmatpush1.bf16.msra.mxu0 0
        %1916 = vmatprep.subr.bf16.mxu0 0
        %1917 = vmatpush1.bf16.msra.mxu0 0
        %1918 = vmatprep.subr.bf16.mxu0 0
        %1919 = vmatpush1.bf16.msra.mxu0 0
        %1920 = vmatprep.subr.bf16.mxu0 0
        %1921 = vmatpush1.bf16.msra.mxu0 0
        %1922 = vmatprep.subr.bf16.mxu0 0
        %1923 = vmatpush1.bf16.msra.mxu0 0
        %1924 = vmatprep.subr.bf16.mxu0 0
        %1925 = vmatpush1.bf16.msra.mxu0 0
        %1926 = vmatprep.mubr.bf16.mxu0 0
        %1927 = vmatmul.mubr.bf16.gmra.mrb[0].mxu0 %v1892
        %v1928 = vpop.f32.mrb[0].mxu0
        %v1929 = vadd.f32 0.0, %v1928
        %v1930 = vpop.f32.mrb[0].mxu0
        %v1931 = vpop.f32.mrb[0].mxu0
        %v1932 = vpop.f32.mrb[0].mxu0
        %1933 = vdwg.mxu0
        %v1934 = vadd.f32 %v1661, %v1929
        %v1935 = vld [vmem:[#allocation6] sm:$0x1]
        %v1937 = vlaneseq
        %v1938 = vshrl.u32 %v1937, 7
        %v1939 = vsub.s32 0, %v1938
        %v1940 = vrot.slane %v1935, %v1939
        %v1942 = vadd.f32 %v1934, %v1940
        %v1943 = vsel %vm827, %v1942, 0.0
        %1944 = vadd.xlane.f32.xlu0 %v1943
        %v1945 = vpop.xlane.xlu0 %1944
        %v1946 = vmul.f32 %v1945, %v831
        %v1947 = vsub.f32 %v1942, %v1946
        %v1948 = vmul.f32 %v1947, %v1947
        %v1949 = vsel %vm827, %v1948, 0.0
        %1950 = vadd.xlane.f32.xlu0 %v1949
        %v1951 = vpop.xlane.xlu0 %1950
        %v1952 = vmul.f32 %v1951, %v831
        %v1953 = vadd.f32 %v1952, 1e-05
        %v1954 = vrsqrt.pop %v1953
        %v1955 = vmul.f32 %v1947, %v1954
        %v1956 = vlaneseq
        %v1957 = vshrl.u32 %v1956, 7
        %v1958 = vsub.s32 3, %v1957
        %v1959 = vrot.slane %v825, %v1958
        %v1960 = vmul.f32 %v1955, %v1959
        %v1961 = vlaneseq
        %v1962 = vshrl.u32 %v1961, 7
        %v1963 = vsub.s32 3, %v1962
        %v1964 = vrot.slane %v826, %v1963
        %v1965 = vadd.f32 %v1960, %v1964
        %v1966 = vpack.c.bf16 %v1965, %v1965
        %v1967 = vld [vmem:[%s19] sm:$0xf]
        %v1968 = vld [vmem:[%s19 + $0x4] sm:$0xf]
        %v1969 = vld [vmem:[%s19 + $0x8] sm:$0xf]
        %v1970 = vld [vmem:[%s19 + $0xc] sm:$0xf]
        %v1971 = vld [vmem:[#allocation7] sm:$0x1]
        %v1973 = vlaneseq
        %v1974 = vshrl.u32 %v1973, 7
        %v1975 = vsub.s32 0, %v1974
        %v1976 = vrot.slane %v1971, %v1975
        %v1982 = vunpack.c.l.b16 %v1967
        %v1983 = vunpack.c.l.b16 %v1968
        %v1984 = vunpack.c.l.b16 %v1969
        %v1985 = vunpack.c.l.b16 %v1970
        %v1986 = vpack.c.b16 %v1983, %v1982
        %v1987 = vpack.c.b16 %v1985, %v1984
        %v1991 = vsel %vm827, %v1966, 0
        %1993 = vmatprep.subr.bf16.mxu0 0
        %1994 = vmatpush1.bf16.msra.mxu0 %v1986
        %1995 = vmatprep.subr.bf16.mxu0 0
        %1996 = vmatpush1.bf16.msra.mxu0 %v1987
        %1997 = vmatprep.subr.bf16.mxu0 0
        %1998 = vmatpush1.bf16.msra.mxu0 0
        %1999 = vmatprep.subr.bf16.mxu0 0
        %2000 = vmatpush1.bf16.msra.mxu0 0
        %2001 = vmatprep.subr.bf16.mxu0 0
        %2002 = vmatpush1.bf16.msra.mxu0 0
        %2003 = vmatprep.subr.bf16.mxu0 0
        %2004 = vmatpush1.bf16.msra.mxu0 0
        %2005 = vmatprep.subr.bf16.mxu0 0
        %2006 = vmatpush1.bf16.msra.mxu0 0
        %2007 = vmatprep.subr.bf16.mxu0 0
        %2008 = vmatpush1.bf16.msra.mxu0 0
        %2009 = vmatprep.subr.bf16.mxu0 0
        %2010 = vmatpush1.bf16.msra.mxu0 0
        %2011 = vmatprep.subr.bf16.mxu0 0
        %2012 = vmatpush1.bf16.msra.mxu0 0
        %2013 = vmatprep.subr.bf16.mxu0 0
        %2014 = vmatpush1.bf16.msra.mxu0 0
        %2015 = vmatprep.subr.bf16.mxu0 0
        %2016 = vmatpush1.bf16.msra.mxu0 0
        %2017 = vmatprep.subr.bf16.mxu0 0
        %2018 = vmatpush1.bf16.msra.mxu0 0
        %2019 = vmatprep.subr.bf16.mxu0 0
        %2020 = vmatpush1.bf16.msra.mxu0 0
        %2021 = vmatprep.subr.bf16.mxu0 0
        %2022 = vmatpush1.bf16.msra.mxu0 0
        %2023 = vmatprep.subr.bf16.mxu0 0
        %2024 = vmatpush1.bf16.msra.mxu0 0
        %2025 = vmatprep.mubr.bf16.mxu0 0
        %2026 = vmatmul.mubr.bf16.gmra.mrb[0].mxu0 %v1991
        %v2027 = vpop.f32.mrb[0].mxu0
        %v2028 = vadd.f32 %v1976, %v2027
        %v2029 = vpop.f32.mrb[0].mxu0
        %v2030 = vpop.f32.mrb[0].mxu0
        %v2031 = vpop.f32.mrb[0].mxu0
        %2032 = vdwg.mxu0
        %v2033 = vxor.u32 %v2028, 2147483648
        %v2034 = vmul.f32 %v2033, 1.442695
        %v2035 = vpow.pop %v2034
        %v2036 = vadd.f32 %v2035, 1.0
        %v2037 = vrcp.pop %v2036
        %v2038 = vmul.f32 1.0, %v2037
        %v2039 = vmul.f32 %v2028, %v2038
        %v2040 = vpack.c.bf16 %v2039, %v2039
        %v2041 = vld [vmem:[%s21] sm:$0xf]
        %v2042 = vld [vmem:[%s21 + $0x4] sm:$0xf]
        %v2043 = vld [vmem:[%s21 + $0x8] sm:$0xf]
        %v2044 = vld [vmem:[%s21 + $0xc] sm:$0xf]
        %v2045 = vld [vmem:[%s21 + $0x10] sm:$0xf]
        %v2046 = vld [vmem:[%s21 + $0x14] sm:$0xf]
        %v2047 = vld [vmem:[%s21 + $0x18] sm:$0xf]
        %v2048 = vld [vmem:[%s21 + $0x1c] sm:$0xf]
        %v2049 = vld [vmem:[%s21 + $0x20] sm:$0xf]
        %v2050 = vld [vmem:[%s21 + $0x24] sm:$0xf]
        %v2051 = vld [vmem:[%s21 + $0x28] sm:$0xf]
        %v2052 = vld [vmem:[%s21 + $0x2c] sm:$0xf]
        %v2053 = vld [vmem:[%s21 + $0x30] sm:$0xf]
        %v2054 = vld [vmem:[%s21 + $0x34] sm:$0xf]
        %v2055 = vld [vmem:[%s21 + $0x38] sm:$0xf]
        %v2056 = vld [vmem:[%s21 + $0x3c] sm:$0xf]
        %v2057 = vld [vmem:[#allocation9] sm:$0x1]
        %v2059 = vlaneseq
        %v2060 = vshrl.u32 %v2059, 7
        %v2061 = vsub.s32 0, %v2060
        %v2062 = vrot.slane %v2057, %v2061
        %v2080 = vunpack.c.l.b16 %v2041
        %v2081 = vunpack.c.l.b16 %v2042
        %v2082 = vunpack.c.l.b16 %v2043
        %v2083 = vunpack.c.l.b16 %v2044
        %v2084 = vunpack.c.l.b16 %v2045
        %v2085 = vunpack.c.l.b16 %v2046
        %v2086 = vunpack.c.l.b16 %v2047
        %v2087 = vunpack.c.l.b16 %v2048
        %v2088 = vunpack.c.l.b16 %v2049
        %v2089 = vunpack.c.l.b16 %v2050
        %v2090 = vunpack.c.l.b16 %v2051
        %v2091 = vunpack.c.l.b16 %v2052
        %v2092 = vunpack.c.l.b16 %v2053
        %v2093 = vunpack.c.l.b16 %v2054
        %v2094 = vunpack.c.l.b16 %v2055
        %v2095 = vunpack.c.l.b16 %v2056
        %v2096 = vpack.c.b16 %v2081, %v2080
        %v2097 = vpack.c.b16 %v2083, %v2082
        %v2098 = vpack.c.b16 %v2085, %v2084
        %v2099 = vpack.c.b16 %v2087, %v2086
        %v2100 = vpack.c.b16 %v2089, %v2088
        %v2101 = vpack.c.b16 %v2091, %v2090
        %v2102 = vpack.c.b16 %v2093, %v2092
        %v2103 = vpack.c.b16 %v2095, %v2094
        %2112 = vmatprep.subr.bf16.mxu0 0
        %2113 = vmatpush1.bf16.msra.mxu0 %v2096
        %2114 = vmatprep.subr.bf16.mxu0 0
        %2115 = vmatpush1.bf16.msra.mxu0 %v2097
        %2116 = vmatprep.subr.bf16.mxu0 0
        %2117 = vmatpush1.bf16.msra.mxu0 %v2098
        %2118 = vmatprep.subr.bf16.mxu0 0
        %2119 = vmatpush1.bf16.msra.mxu0 %v2099
        %2120 = vmatprep.subr.bf16.mxu0 0
        %2121 = vmatpush1.bf16.msra.mxu0 %v2100
        %2122 = vmatprep.subr.bf16.mxu0 0
        %2123 = vmatpush1.bf16.msra.mxu0 %v2101
        %2124 = vmatprep.subr.bf16.mxu0 0
        %2125 = vmatpush1.bf16.msra.mxu0 %v2102
        %2126 = vmatprep.subr.bf16.mxu0 0
        %2127 = vmatpush1.bf16.msra.mxu0 %v2103
        %2128 = vmatprep.subr.bf16.mxu0 0
        %2129 = vmatpush1.bf16.msra.mxu0 0
        %2130 = vmatprep.subr.bf16.mxu0 0
        %2131 = vmatpush1.bf16.msra.mxu0 0
        %2132 = vmatprep.subr.bf16.mxu0 0
        %2133 = vmatpush1.bf16.msra.mxu0 0
        %2134 = vmatprep.subr.bf16.mxu0 0
        %2135 = vmatpush1.bf16.msra.mxu0 0
        %2136 = vmatprep.subr.bf16.mxu0 0
        %2137 = vmatpush1.bf16.msra.mxu0 0
        %2138 = vmatprep.subr.bf16.mxu0 0
        %2139 = vmatpush1.bf16.msra.mxu0 0
        %2140 = vmatprep.subr.bf16.mxu0 0
        %2141 = vmatpush1.bf16.msra.mxu0 0
        %2142 = vmatprep.subr.bf16.mxu0 0
        %2143 = vmatpush1.bf16.msra.mxu0 0
        %2144 = vmatprep.mubr.bf16.mxu0 0
        %2145 = vmatmul.mubr.bf16.gmra.mrb[0].mxu0 %v2040
        %v2146 = vpop.f32.mrb[0].mxu0
        %v2147 = vadd.f32 %v2062, %v2146
        %v2148 = vpop.f32.mrb[0].mxu0
        %v2149 = vpop.f32.mrb[0].mxu0
        %v2150 = vpop.f32.mrb[0].mxu0
        %2151 = vdwg.mxu0
        %v2152 = vmul.f32 %v2147, 0.5
        %v2153 = vadd.f32 %v1942, %v2152
        %v2154 = vsel %vm827, %v2153, 0.0
        %2155 = vadd.xlane.f32.xlu0 %v2154
        %v2156 = vpop.xlane.xlu0 %2155
        %v2157 = vmul.f32 %v2156, %v831
        %v2158 = vsub.f32 %v2153, %v2157
        %v2159 = vmul.f32 %v2158, %v2158
        %v2160 = vsel %vm827, %v2159, 0.0
        %2161 = vadd.xlane.f32.xlu0 %v2160
        %v2162 = vpop.xlane.xlu0 %2161
        %v2163 = vmul.f32 %v2162, %v831
        %v2164 = vadd.f32 %v2163, 1e-05
        %v2165 = vrsqrt.pop %v2164
        %v2166 = vmul.f32 %v2158, %v2165
        %v2167 = vlaneseq
        %v2168 = vshrl.u32 %v2167, 7
        %v2169 = vsub.s32 4, %v2168
        %v2170 = vrot.slane %v825, %v2169
        %v2171 = vmul.f32 %v2166, %v2170
        %v2172 = vlaneseq
        %v2173 = vshrl.u32 %v2172, 7
        %v2174 = vsub.s32 4, %v2173
        %v2175 = vrot.slane %v826, %v2174
        %v2176 = vadd.f32 %v2171, %v2175
        %v2177 = vld [vmem:[%s23] sm:$0x1]
        %v2178 = vld [vmem:[%s24] sm:$0x1]
        %v2179 = vsel %vm827, %v2176, 0.0
        %2180 = vadd.xlane.f32.xlu0 %v2179
        %v2181 = vpop.xlane.xlu0 %2180
        %v2182 = vmul.f32 %v2181, %v831
        %v2183 = vsub.f32 %v2176, %v2182
        %v2184 = vmul.f32 %v2183, %v2183
        %v2185 = vsel %vm827, %v2184, 0.0
        %2186 = vadd.xlane.f32.xlu0 %v2185
        %v2187 = vpop.xlane.xlu0 %2186
        %v2188 = vmul.f32 %v2187, %v831
        %v2189 = vadd.f32 %v2188, 1e-05
        %v2190 = vrsqrt.pop %v2189
        %v2191 = vmul.f32 %v2183, %v2190
        %v2193 = vlaneseq
        %v2194 = vshrl.u32 %v2193, 7
        %v2195 = vsub.s32 0, %v2194
        %v2196 = vrot.slane %v2177, %v2195
        %v2198 = vmul.f32 %v2191, %v2196
        %v2200 = vlaneseq
        %v2201 = vshrl.u32 %v2200, 7
        %v2202 = vsub.s32 0, %v2201
        %v2203 = vrot.slane %v2178, %v2202
        %v2205 = vadd.f32 %v2198, %v2203
        %2206 = vst.msk [vmem:[%s822] sm:$0xff] %vm827, %v2205
        %p2207 = scmp.lt.s32.totalorder %s39, 1
        %s2208 = scalar_select %p2207, %s39, 1
        %s2209 = smul.addr %s2208, 8
        %s2210 = scalar_lea.vmem %s25, %s2209
        // Predicated region
        $region141: #{conformer_ordinal_forward.6} parent=119 // pred_check
          %p2211 = pneg %p587
        $region142: #{conformer_ordinal_forward.6} parent=119 // pred_check_branch
          %2213 = sbr.rel (%p2211) target = $region144
        $region143: #{conformer_ordinal_forward.6} parent=119 // pred_region
          _
        $region144: #{conformer_ordinal_forward.6} parent=119 // pred_fallthru
          _
      $region120: #{conformer_ordinal_forward.6} parent=5 // pred_fallthru
        _
      %p2214 = scmp.le.s32.totalorder 2, %s34
      // Predicated region
      $region145: #{conformer_ordinal_forward.6} parent=5 // pred_check
        %p2215 = pneg %p2214
      $region146: #{conformer_ordinal_forward.6} parent=5 // pred_check_branch
        %2217 = sbr.rel (%p2215) target = $region148
      $region147: #{conformer_ordinal_forward.6} parent=5 // pred_region
        %s2218 = ssub.s32 %s34, 2
        // Predicated region
        $region149: #{conformer_ordinal_forward.6} parent=147 // pred_check
          %p2219 = pneg %p593
        $region150: #{conformer_ordinal_forward.6} parent=147 // pred_check_branch
          %2221 = sbr.rel (%p2219) target = $region152
        $region151: #{conformer_ordinal_forward.6} parent=147 // pred_region
          %p2222 = scmp.lt.s32.totalorder %s40, 1
          %s2223 = scalar_select %p2222, %s40, 1
          %s2224 = smul.addr %s2223, 8
          %s2225 = scalar_lea.vmem %s25, %s2224
        $region152: #{conformer_ordinal_forward.6} parent=147 // pred_fallthru
          _
      $region148: #{conformer_ordinal_forward.6} parent=5 // pred_fallthru
        _
    $region6: #{conformer_ordinal_forward.6} parent=1 // loop_footer
      %s38 = sadd.s32 1, %s34
    $region7: #{conformer_ordinal_forward.6} parent=1 // loop_footer_branch
      %33 = sbr.rel target = $region3
    $region8: #{conformer_ordinal_forward.6} parent=1 // loop_exit
      _
    %2226 = vsyncpa [#allocation3], 1
    %s2227 = scalar_lea.sflag [#allocation3], 1
    %2228 = vsyncpa %s2227, 1
    %2229 = vsyncpa [#allocation5], 1
    %2230 = vsyncpa [#allocation8], 1

// kernel: conformer_ordinal_forward.5
$region0: #{conformer_ordinal_forward.5}
  #allocation0 [shape = 'u32[]', space=smem, size = 0x4, offset = 0x4, fixed_abs, tag = 'smem constant byte address 0x4 - core index']
  #allocation1 [shape = 'u32[144,128]{1,0:T(1,128)}', space=vmem, size = 0x12000, scoped, tag = 'internal scratch']
  %s0 = inlined_call_operand.vmem [shape: f32[2,8,32], index: 0, kind: input, shape index: {}]
  %s1 = inlined_call_operand.vmem [shape: f32[5,32], index: 1, kind: input, shape index: {}]
  %s2 = inlined_call_operand.vmem [shape: f32[5,32], index: 2, kind: input, shape index: {}]
  %s3 = inlined_call_operand.vmem [shape: bf16[32,128], index: 3, kind: input, shape index: {}]
  %s4 = inlined_call_operand.vmem [shape: f32[1,128], index: 4, kind: input, shape index: {}]
  %s5 = inlined_call_operand.vmem [shape: bf16[128,32], index: 5, kind: input, shape index: {}]
  %s6 = inlined_call_operand.vmem [shape: f32[1,32], index: 6, kind: input, shape index: {}]
  %s7 = inlined_call_operand.vmem [shape: bf16[32,96], index: 7, kind: input, shape index: {}]
  %s8 = inlined_call_operand.vmem [shape: f32[1,96], index: 8, kind: input, shape index: {}]
  %s9 = inlined_call_operand.vmem [shape: bf16[32,32], index: 9, kind: input, shape index: {}]
  %s10 = inlined_call_operand.vmem [shape: f32[1,32], index: 10, kind: input, shape index: {}]
  %s11 = inlined_call_operand.vmem [shape: bf16[32,32], index: 11, kind: input, shape index: {}]
  %s12 = inlined_call_operand.vmem [shape: f32[1,32], index: 12, kind: input, shape index: {}]
  %s13 = inlined_call_operand.vmem [shape: bf16[32,32], index: 13, kind: input, shape index: {}]
  %s14 = inlined_call_operand.vmem [shape: f32[1,32], index: 14, kind: input, shape index: {}]
  %s15 = inlined_call_operand.vmem [shape: f32[3,32], index: 15, kind: input, shape index: {}]
  %s16 = inlined_call_operand.vmem [shape: f32[1,32], index: 16, kind: input, shape index: {}]
  %s17 = inlined_call_operand.vmem [shape: bf16[32,32], index: 17, kind: input, shape index: {}]
  %s18 = inlined_call_operand.vmem [shape: f32[1,32], index: 18, kind: input, shape index: {}]
  %s19 = inlined_call_operand.vmem [shape: bf16[32,128], index: 19, kind: input, shape index: {}]
  %s20 = inlined_call_operand.vmem [shape: f32[1,128], index: 20, kind: input, shape index: {}]
  %s21 = inlined_call_operand.vmem [shape: bf16[128,32], index: 21, kind: input, shape index: {}]
  %s22 = inlined_call_operand.vmem [shape: f32[1,32], index: 22, kind: input, shape index: {}]
  %s23 = inlined_call_operand.vmem [shape: f32[1,32], index: 23, kind: input, shape index: {}]
  %s24 = inlined_call_operand.vmem [shape: f32[1,32], index: 24, kind: input, shape index: {}]
  %s25 = inlined_call_operand.vmem [shape: f32[2,8,32], index: 25, kind: output, shape index: {}]
  %s26 = sld [smem:[#allocation0]]
  $region133: #{conformer_ordinal_forward.5} parent=0
    _
  %s28 = ssub.s32 1, %s26
  %s29 = scalar_select 0, %s28, %s26
  loop: start=0, step=1, limit=4
  $region2: #{conformer_ordinal_forward.5} parent=0 // loop_pre_header
    _
  $region3: #{conformer_ordinal_forward.5} parent=0 // loop_header
    %s31 = sphi 0, %s35
    %p32 = scmp.ge.s32.totalorder %s31, 4
    %s41 = sphi 0, %s43
    %s44 = sphi 0, %s41
    %s45 = sphi 0, %s44
    %s61 = sphi 0, %s45
    %s65 = sphi 0, %s65
    %s67 = sphi 0, %s65
    %s68 = sphi 0, %s67
    %s82 = sphi 0, %s68
    %s86 = sphi 0, %s86
    %s88 = sphi 0, %s86
    %s89 = sphi 0, %s88
    %s103 = sphi 0, %s89
    %s107 = sphi 0, %s107
    %s109 = sphi 0, %s107
    %s110 = sphi 0, %s109
    %s124 = sphi 0, %s110
    %s128 = sphi 0, %s128
    %s130 = sphi 0, %s128
    %s131 = sphi 0, %s130
    %s145 = sphi 0, %s131
    %s149 = sphi 0, %s149
    %s151 = sphi 0, %s149
    %s152 = sphi 0, %s151
    %s166 = sphi 0, %s152
    %s170 = sphi 0, %s170
    %s172 = sphi 0, %s170
    %s173 = sphi 0, %s172
    %s187 = sphi 0, %s173
    %s191 = sphi 0, %s191
    %s193 = sphi 0, %s191
    %s194 = sphi 0, %s193
    %s208 = sphi 0, %s194
    %s212 = sphi 0, %s212
    %s214 = sphi 0, %s212
    %s215 = sphi 0, %s214
    %s229 = sphi 0, %s215
    %s233 = sphi 0, %s233
    %s235 = sphi 0, %s233
    %s236 = sphi 0, %s235
    %s250 = sphi 0, %s236
    %s254 = sphi 0, %s254
    %s256 = sphi 0, %s254
    %s257 = sphi 0, %s256
    %s271 = sphi 0, %s257
    %s275 = sphi 0, %s275
    %s277 = sphi 0, %s275
    %s278 = sphi 0, %s277
    %s292 = sphi 0, %s278
    %s296 = sphi 0, %s296
    %s298 = sphi 0, %s296
    %s299 = sphi 0, %s298
    %s313 = sphi 0, %s299
    %s317 = sphi 0, %s317
    %s319 = sphi 0, %s317
    %s320 = sphi 0, %s319
    %s334 = sphi 0, %s320
    %s338 = sphi 0, %s338
    %s340 = sphi 0, %s338
    %s341 = sphi 0, %s340
    %s355 = sphi 0, %s341
    %s359 = sphi 0, %s359
    %s361 = sphi 0, %s359
    %s362 = sphi 0, %s361
    %s376 = sphi 0, %s362
    %s380 = sphi 0, %s380
    %s382 = sphi 0, %s380
    %s383 = sphi 0, %s382
    %s397 = sphi 0, %s383
    %s401 = sphi 0, %s401
    %s403 = sphi 0, %s401
    %s404 = sphi 0, %s403
    %s418 = sphi 0, %s404
    %s422 = sphi 0, %s422
    %s424 = sphi 0, %s422
    %s425 = sphi 0, %s424
    %s439 = sphi 0, %s425
    %s443 = sphi 0, %s443
    %s445 = sphi 0, %s443
    %s446 = sphi 0, %s445
    %s460 = sphi 0, %s446
    %s464 = sphi 0, %s464
    %s466 = sphi 0, %s464
    %s467 = sphi 0, %s466
    %s481 = sphi 0, %s467
    %s485 = sphi 0, %s485
    %s487 = sphi 0, %s485
    %s488 = sphi 0, %s487
    %s502 = sphi 0, %s488
    %s506 = sphi 0, %s506
    %s508 = sphi 0, %s506
    %s509 = sphi 0, %s508
    %s523 = sphi 0, %s509
    %s527 = sphi 0, %s527
    %s529 = sphi 0, %s527
    %s530 = sphi 0, %s529
    %s544 = sphi 0, %s530
    %s548 = sphi 0, %s548
    %s550 = sphi 0, %s548
    %s551 = sphi 0, %s550
    %s565 = sphi 0, %s551
    %s571 = sphi 0, %s573
    %s574 = sphi 0, %s571
    %s575 = sphi 0, %s574
    %s591 = sphi 0, %s575
  $region4: #{conformer_ordinal_forward.5} parent=0 // loop_header_branch
    %34 = sbr.rel (%p32) target = $region8
  $region5: #{conformer_ordinal_forward.5} parent=0 // loop_body
    %s36 = ssub.s32 %s31, 1
    %s37 = ssub.s32 %s31, 2
    %s38 = sadd.s32 %s31, 1
    %s39 = ssub.s32 %s31, %s38
    %p40 = scmp.eq.s32.totalorder %s39, 0
    %s42 = sadd.s32 %s41, 1
    %s43 = scalar_select %p40, %s41, %s42
    %p46 = pneg %p40
    %p47 = scmp.eq.s32.totalorder %s31, 1
    %p48 = por %p46, %p47
    %p49 = scmp.ne.s32.totalorder %s41, %s44
    %p50 = scmp.eq.s32.totalorder %s31, 0
    %p51 = por %p49, %p50
    %p52 = scmp.ne.s32.totalorder %s41, %s44
    %p53 = scmp.eq.s32.totalorder %s36, 1
    %p54 = por %p52, %p53
    %p55 = scmp.ne.s32.totalorder %s44, %s45
    %p56 = scmp.eq.s32.totalorder %s36, 0
    %p57 = por %p55, %p56
    %p58 = scmp.ne.s32.totalorder %s44, %s45
    %p59 = scmp.eq.s32.totalorder %s37, 1
    %p60 = por %p58, %p59
    %p62 = scmp.ne.s32.totalorder %s45, %s61
    %p63 = scmp.eq.s32.totalorder %s37, 0
    %p64 = por %p62, %p63
    %s66 = sadd.s32 %s65, 1
    %p69 = scmp.eq.s32.totalorder %s31, 1
    %p70 = scmp.ne.s32.totalorder %s65, %s67
    %p71 = scmp.eq.s32.totalorder %s31, 0
    %p72 = por %p70, %p71
    %p73 = scmp.ne.s32.totalorder %s65, %s67
    %p74 = scmp.eq.s32.totalorder %s36, 1
    %p75 = por %p73, %p74
    %p76 = scmp.ne.s32.totalorder %s67, %s68
    %p77 = scmp.eq.s32.totalorder %s36, 0
    %p78 = por %p76, %p77
    %p79 = scmp.ne.s32.totalorder %s67, %s68
    %p80 = scmp.eq.s32.totalorder %s37, 1
    %p81 = por %p79, %p80
    %p83 = scmp.ne.s32.totalorder %s68, %s82
    %p84 = scmp.eq.s32.totalorder %s37, 0
    %p85 = por %p83, %p84
    %s87 = sadd.s32 %s86, 1
    %p90 = scmp.eq.s32.totalorder %s31, 1
    %p91 = scmp.ne.s32.totalorder %s86, %s88
    %p92 = scmp.eq.s32.totalorder %s31, 0
    %p93 = por %p91, %p92
    %p94 = scmp.ne.s32.totalorder %s86, %s88
    %p95 = scmp.eq.s32.totalorder %s36, 1
    %p96 = por %p94, %p95
    %p97 = scmp.ne.s32.totalorder %s88, %s89
    %p98 = scmp.eq.s32.totalorder %s36, 0
    %p99 = por %p97, %p98
    %p100 = scmp.ne.s32.totalorder %s88, %s89
    %p101 = scmp.eq.s32.totalorder %s37, 1
    %p102 = por %p100, %p101
    %p104 = scmp.ne.s32.totalorder %s89, %s103
    %p105 = scmp.eq.s32.totalorder %s37, 0
    %p106 = por %p104, %p105
    %s108 = sadd.s32 %s107, 1
    %p111 = scmp.eq.s32.totalorder %s31, 1
    %p112 = scmp.ne.s32.totalorder %s107, %s109
    %p113 = scmp.eq.s32.totalorder %s31, 0
    %p114 = por %p112, %p113
    %p115 = scmp.ne.s32.totalorder %s107, %s109
    %p116 = scmp.eq.s32.totalorder %s36, 1
    %p117 = por %p115, %p116
    %p118 = scmp.ne.s32.totalorder %s109, %s110
    %p119 = scmp.eq.s32.totalorder %s36, 0
    %p120 = por %p118, %p119
    %p121 = scmp.ne.s32.totalorder %s109, %s110
    %p122 = scmp.eq.s32.totalorder %s37, 1
    %p123 = por %p121, %p122
    %p125 = scmp.ne.s32.totalorder %s110, %s124
    %p126 = scmp.eq.s32.totalorder %s37, 0
    %p127 = por %p125, %p126
    %s129 = sadd.s32 %s128, 1
    %p132 = scmp.eq.s32.totalorder %s31, 1
    %p133 = scmp.ne.s32.totalorder %s128, %s130
    %p134 = scmp.eq.s32.totalorder %s31, 0
    %p135 = por %p133, %p134
    %p136 = scmp.ne.s32.totalorder %s128, %s130
    %p137 = scmp.eq.s32.totalorder %s36, 1
    %p138 = por %p136, %p137
    %p139 = scmp.ne.s32.totalorder %s130, %s131
    %p140 = scmp.eq.s32.totalorder %s36, 0
    %p141 = por %p139, %p140
    %p142 = scmp.ne.s32.totalorder %s130, %s131
    %p143 = scmp.eq.s32.totalorder %s37, 1
    %p144 = por %p142, %p143
    %p146 = scmp.ne.s32.totalorder %s131, %s145
    %p147 = scmp.eq.s32.totalorder %s37, 0
    %p148 = por %p146, %p147
    %s150 = sadd.s32 %s149, 1
    %p153 = scmp.eq.s32.totalorder %s31, 1
    %p154 = scmp.ne.s32.totalorder %s149, %s151
    %p155 = scmp.eq.s32.totalorder %s31, 0
    %p156 = por %p154, %p155
    %p157 = scmp.ne.s32.totalorder %s149, %s151
    %p158 = scmp.eq.s32.totalorder %s36, 1
    %p159 = por %p157, %p158
    %p160 = scmp.ne.s32.totalorder %s151, %s152
    %p161 = scmp.eq.s32.totalorder %s36, 0
    %p162 = por %p160, %p161
    %p163 = scmp.ne.s32.totalorder %s151, %s152
    %p164 = scmp.eq.s32.totalorder %s37, 1
    %p165 = por %p163, %p164
    %p167 = scmp.ne.s32.totalorder %s152, %s166
    %p168 = scmp.eq.s32.totalorder %s37, 0
    %p169 = por %p167, %p168
    %s171 = sadd.s32 %s170, 1
    %p174 = scmp.eq.s32.totalorder %s31, 1
    %p175 = scmp.ne.s32.totalorder %s170, %s172
    %p176 = scmp.eq.s32.totalorder %s31, 0
    %p177 = por %p175, %p176
    %p178 = scmp.ne.s32.totalorder %s170, %s172
    %p179 = scmp.eq.s32.totalorder %s36, 1
    %p180 = por %p178, %p179
    %p181 = scmp.ne.s32.totalorder %s172, %s173
    %p182 = scmp.eq.s32.totalorder %s36, 0
    %p183 = por %p181, %p182
    %p184 = scmp.ne.s32.totalorder %s172, %s173
    %p185 = scmp.eq.s32.totalorder %s37, 1
    %p186 = por %p184, %p185
    %p188 = scmp.ne.s32.totalorder %s173, %s187
    %p189 = scmp.eq.s32.totalorder %s37, 0
    %p190 = por %p188, %p189
    %s192 = sadd.s32 %s191, 1
    %p195 = scmp.eq.s32.totalorder %s31, 1
    %p196 = scmp.ne.s32.totalorder %s191, %s193
    %p197 = scmp.eq.s32.totalorder %s31, 0
    %p198 = por %p196, %p197
    %p199 = scmp.ne.s32.totalorder %s191, %s193
    %p200 = scmp.eq.s32.totalorder %s36, 1
    %p201 = por %p199, %p200
    %p202 = scmp.ne.s32.totalorder %s193, %s194
    %p203 = scmp.eq.s32.totalorder %s36, 0
    %p204 = por %p202, %p203
    %p205 = scmp.ne.s32.totalorder %s193, %s194
    %p206 = scmp.eq.s32.totalorder %s37, 1
    %p207 = por %p205, %p206
    %p209 = scmp.ne.s32.totalorder %s194, %s208
    %p210 = scmp.eq.s32.totalorder %s37, 0
    %p211 = por %p209, %p210
    %s213 = sadd.s32 %s212, 1
    %p216 = scmp.eq.s32.totalorder %s31, 1
    %p217 = scmp.ne.s32.totalorder %s212, %s214
    %p218 = scmp.eq.s32.totalorder %s31, 0
    %p219 = por %p217, %p218
    %p220 = scmp.ne.s32.totalorder %s212, %s214
    %p221 = scmp.eq.s32.totalorder %s36, 1
    %p222 = por %p220, %p221
    %p223 = scmp.ne.s32.totalorder %s214, %s215
    %p224 = scmp.eq.s32.totalorder %s36, 0
    %p225 = por %p223, %p224
    %p226 = scmp.ne.s32.totalorder %s214, %s215
    %p227 = scmp.eq.s32.totalorder %s37, 1
    %p228 = por %p226, %p227
    %p230 = scmp.ne.s32.totalorder %s215, %s229
    %p231 = scmp.eq.s32.totalorder %s37, 0
    %p232 = por %p230, %p231
    %s234 = sadd.s32 %s233, 1
    %p237 = scmp.eq.s32.totalorder %s31, 1
    %p238 = scmp.ne.s32.totalorder %s233, %s235
    %p239 = scmp.eq.s32.totalorder %s31, 0
    %p240 = por %p238, %p239
    %p241 = scmp.ne.s32.totalorder %s233, %s235
    %p242 = scmp.eq.s32.totalorder %s36, 1
    %p243 = por %p241, %p242
    %p244 = scmp.ne.s32.totalorder %s235, %s236
    %p245 = scmp.eq.s32.totalorder %s36, 0
    %p246 = por %p244, %p245
    %p247 = scmp.ne.s32.totalorder %s235, %s236
    %p248 = scmp.eq.s32.totalorder %s37, 1
    %p249 = por %p247, %p248
    %p251 = scmp.ne.s32.totalorder %s236, %s250
    %p252 = scmp.eq.s32.totalorder %s37, 0
    %p253 = por %p251, %p252
    %s255 = sadd.s32 %s254, 1
    %p258 = scmp.eq.s32.totalorder %s31, 1
    %p259 = scmp.ne.s32.totalorder %s254, %s256
    %p260 = scmp.eq.s32.totalorder %s31, 0
    %p261 = por %p259, %p260
    %p262 = scmp.ne.s32.totalorder %s254, %s256
    %p263 = scmp.eq.s32.totalorder %s36, 1
    %p264 = por %p262, %p263
    %p265 = scmp.ne.s32.totalorder %s256, %s257
    %p266 = scmp.eq.s32.totalorder %s36, 0
    %p267 = por %p265, %p266
    %p268 = scmp.ne.s32.totalorder %s256, %s257
    %p269 = scmp.eq.s32.totalorder %s37, 1
    %p270 = por %p268, %p269
    %p272 = scmp.ne.s32.totalorder %s257, %s271
    %p273 = scmp.eq.s32.totalorder %s37, 0
    %p274 = por %p272, %p273
    %s276 = sadd.s32 %s275, 1
    %p279 = scmp.eq.s32.totalorder %s31, 1
    %p280 = scmp.ne.s32.totalorder %s275, %s277
    %p281 = scmp.eq.s32.totalorder %s31, 0
    %p282 = por %p280, %p281
    %p283 = scmp.ne.s32.totalorder %s275, %s277
    %p284 = scmp.eq.s32.totalorder %s36, 1
    %p285 = por %p283, %p284
    %p286 = scmp.ne.s32.totalorder %s277, %s278
    %p287 = scmp.eq.s32.totalorder %s36, 0
    %p288 = por %p286, %p287
    %p289 = scmp.ne.s32.totalorder %s277, %s278
    %p290 = scmp.eq.s32.totalorder %s37, 1
    %p291 = por %p289, %p290
    %p293 = scmp.ne.s32.totalorder %s278, %s292
    %p294 = scmp.eq.s32.totalorder %s37, 0
    %p295 = por %p293, %p294
    %s297 = sadd.s32 %s296, 1
    %p300 = scmp.eq.s32.totalorder %s31, 1
    %p301 = scmp.ne.s32.totalorder %s296, %s298
    %p302 = scmp.eq.s32.totalorder %s31, 0
    %p303 = por %p301, %p302
    %p304 = scmp.ne.s32.totalorder %s296, %s298
    %p305 = scmp.eq.s32.totalorder %s36, 1
    %p306 = por %p304, %p305
    %p307 = scmp.ne.s32.totalorder %s298, %s299
    %p308 = scmp.eq.s32.totalorder %s36, 0
    %p309 = por %p307, %p308
    %p310 = scmp.ne.s32.totalorder %s298, %s299
    %p311 = scmp.eq.s32.totalorder %s37, 1
    %p312 = por %p310, %p311
    %p314 = scmp.ne.s32.totalorder %s299, %s313
    %p315 = scmp.eq.s32.totalorder %s37, 0
    %p316 = por %p314, %p315
    %s318 = sadd.s32 %s317, 1
    %p321 = scmp.eq.s32.totalorder %s31, 1
    %p322 = scmp.ne.s32.totalorder %s317, %s319
    %p323 = scmp.eq.s32.totalorder %s31, 0
    %p324 = por %p322, %p323
    %p325 = scmp.ne.s32.totalorder %s317, %s319
    %p326 = scmp.eq.s32.totalorder %s36, 1
    %p327 = por %p325, %p326
    %p328 = scmp.ne.s32.totalorder %s319, %s320
    %p329 = scmp.eq.s32.totalorder %s36, 0
    %p330 = por %p328, %p329
    %p331 = scmp.ne.s32.totalorder %s319, %s320
    %p332 = scmp.eq.s32.totalorder %s37, 1
    %p333 = por %p331, %p332
    %p335 = scmp.ne.s32.totalorder %s320, %s334
    %p336 = scmp.eq.s32.totalorder %s37, 0
    %p337 = por %p335, %p336
    %s339 = sadd.s32 %s338, 1
    %p342 = scmp.eq.s32.totalorder %s31, 1
    %p343 = scmp.ne.s32.totalorder %s338, %s340
    %p344 = scmp.eq.s32.totalorder %s31, 0
    %p345 = por %p343, %p344
    %p346 = scmp.ne.s32.totalorder %s338, %s340
    %p347 = scmp.eq.s32.totalorder %s36, 1
    %p348 = por %p346, %p347
    %p349 = scmp.ne.s32.totalorder %s340, %s341
    %p350 = scmp.eq.s32.totalorder %s36, 0
    %p351 = por %p349, %p350
    %p352 = scmp.ne.s32.totalorder %s340, %s341
    %p353 = scmp.eq.s32.totalorder %s37, 1
    %p354 = por %p352, %p353
    %p356 = scmp.ne.s32.totalorder %s341, %s355
    %p357 = scmp.eq.s32.totalorder %s37, 0
    %p358 = por %p356, %p357
    %s360 = sadd.s32 %s359, 1
    %p363 = scmp.eq.s32.totalorder %s31, 1
    %p364 = scmp.ne.s32.totalorder %s359, %s361
    %p365 = scmp.eq.s32.totalorder %s31, 0
    %p366 = por %p364, %p365
    %p367 = scmp.ne.s32.totalorder %s359, %s361
    %p368 = scmp.eq.s32.totalorder %s36, 1
    %p369 = por %p367, %p368
    %p370 = scmp.ne.s32.totalorder %s361, %s362
    %p371 = scmp.eq.s32.totalorder %s36, 0
    %p372 = por %p370, %p371
    %p373 = scmp.ne.s32.totalorder %s361, %s362
    %p374 = scmp.eq.s32.totalorder %s37, 1
    %p375 = por %p373, %p374
    %p377 = scmp.ne.s32.totalorder %s362, %s376
    %p378 = scmp.eq.s32.totalorder %s37, 0
    %p379 = por %p377, %p378
    %s381 = sadd.s32 %s380, 1
    %p384 = scmp.eq.s32.totalorder %s31, 1
    %p385 = scmp.ne.s32.totalorder %s380, %s382
    %p386 = scmp.eq.s32.totalorder %s31, 0
    %p387 = por %p385, %p386
    %p388 = scmp.ne.s32.totalorder %s380, %s382
    %p389 = scmp.eq.s32.totalorder %s36, 1
    %p390 = por %p388, %p389
    %p391 = scmp.ne.s32.totalorder %s382, %s383
    %p392 = scmp.eq.s32.totalorder %s36, 0
    %p393 = por %p391, %p392
    %p394 = scmp.ne.s32.totalorder %s382, %s383
    %p395 = scmp.eq.s32.totalorder %s37, 1
    %p396 = por %p394, %p395
    %p398 = scmp.ne.s32.totalorder %s383, %s397
    %p399 = scmp.eq.s32.totalorder %s37, 0
    %p400 = por %p398, %p399
    %s402 = sadd.s32 %s401, 1
    %p405 = scmp.eq.s32.totalorder %s31, 1
    %p406 = scmp.ne.s32.totalorder %s401, %s403
    %p407 = scmp.eq.s32.totalorder %s31, 0
    %p408 = por %p406, %p407
    %p409 = scmp.ne.s32.totalorder %s401, %s403
    %p410 = scmp.eq.s32.totalorder %s36, 1
    %p411 = por %p409, %p410
    %p412 = scmp.ne.s32.totalorder %s403, %s404
    %p413 = scmp.eq.s32.totalorder %s36, 0
    %p414 = por %p412, %p413
    %p415 = scmp.ne.s32.totalorder %s403, %s404
    %p416 = scmp.eq.s32.totalorder %s37, 1
    %p417 = por %p415, %p416
    %p419 = scmp.ne.s32.totalorder %s404, %s418
    %p420 = scmp.eq.s32.totalorder %s37, 0
    %p421 = por %p419, %p420
    %s423 = sadd.s32 %s422, 1
    %p426 = scmp.eq.s32.totalorder %s31, 1
    %p427 = scmp.ne.s32.totalorder %s422, %s424
    %p428 = scmp.eq.s32.totalorder %s31, 0
    %p429 = por %p427, %p428
    %p430 = scmp.ne.s32.totalorder %s422, %s424
    %p431 = scmp.eq.s32.totalorder %s36, 1
    %p432 = por %p430, %p431
    %p433 = scmp.ne.s32.totalorder %s424, %s425
    %p434 = scmp.eq.s32.totalorder %s36, 0
    %p435 = por %p433, %p434
    %p436 = scmp.ne.s32.totalorder %s424, %s425
    %p437 = scmp.eq.s32.totalorder %s37, 1
    %p438 = por %p436, %p437
    %p440 = scmp.ne.s32.totalorder %s425, %s439
    %p441 = scmp.eq.s32.totalorder %s37, 0
    %p442 = por %p440, %p441
    %s444 = sadd.s32 %s443, 1
    %p447 = scmp.eq.s32.totalorder %s31, 1
    %p448 = scmp.ne.s32.totalorder %s443, %s445
    %p449 = scmp.eq.s32.totalorder %s31, 0
    %p450 = por %p448, %p449
    %p451 = scmp.ne.s32.totalorder %s443, %s445
    %p452 = scmp.eq.s32.totalorder %s36, 1
    %p453 = por %p451, %p452
    %p454 = scmp.ne.s32.totalorder %s445, %s446
    %p455 = scmp.eq.s32.totalorder %s36, 0
    %p456 = por %p454, %p455
    %p457 = scmp.ne.s32.totalorder %s445, %s446
    %p458 = scmp.eq.s32.totalorder %s37, 1
    %p459 = por %p457, %p458
    %p461 = scmp.ne.s32.totalorder %s446, %s460
    %p462 = scmp.eq.s32.totalorder %s37, 0
    %p463 = por %p461, %p462
    %s465 = sadd.s32 %s464, 1
    %p468 = scmp.eq.s32.totalorder %s31, 1
    %p469 = scmp.ne.s32.totalorder %s464, %s466
    %p470 = scmp.eq.s32.totalorder %s31, 0
    %p471 = por %p469, %p470
    %p472 = scmp.ne.s32.totalorder %s464, %s466
    %p473 = scmp.eq.s32.totalorder %s36, 1
    %p474 = por %p472, %p473
    %p475 = scmp.ne.s32.totalorder %s466, %s467
    %p476 = scmp.eq.s32.totalorder %s36, 0
    %p477 = por %p475, %p476
    %p478 = scmp.ne.s32.totalorder %s466, %s467
    %p479 = scmp.eq.s32.totalorder %s37, 1
    %p480 = por %p478, %p479
    %p482 = scmp.ne.s32.totalorder %s467, %s481
    %p483 = scmp.eq.s32.totalorder %s37, 0
    %p484 = por %p482, %p483
    %s486 = sadd.s32 %s485, 1
    %p489 = scmp.eq.s32.totalorder %s31, 1
    %p490 = scmp.ne.s32.totalorder %s485, %s487
    %p491 = scmp.eq.s32.totalorder %s31, 0
    %p492 = por %p490, %p491
    %p493 = scmp.ne.s32.totalorder %s485, %s487
    %p494 = scmp.eq.s32.totalorder %s36, 1
    %p495 = por %p493, %p494
    %p496 = scmp.ne.s32.totalorder %s487, %s488
    %p497 = scmp.eq.s32.totalorder %s36, 0
    %p498 = por %p496, %p497
    %p499 = scmp.ne.s32.totalorder %s487, %s488
    %p500 = scmp.eq.s32.totalorder %s37, 1
    %p501 = por %p499, %p500
    %p503 = scmp.ne.s32.totalorder %s488, %s502
    %p504 = scmp.eq.s32.totalorder %s37, 0
    %p505 = por %p503, %p504
    %s507 = sadd.s32 %s506, 1
    %p510 = scmp.eq.s32.totalorder %s31, 1
    %p511 = scmp.ne.s32.totalorder %s506, %s508
    %p512 = scmp.eq.s32.totalorder %s31, 0
    %p513 = por %p511, %p512
    %p514 = scmp.ne.s32.totalorder %s506, %s508
    %p515 = scmp.eq.s32.totalorder %s36, 1
    %p516 = por %p514, %p515
    %p517 = scmp.ne.s32.totalorder %s508, %s509
    %p518 = scmp.eq.s32.totalorder %s36, 0
    %p519 = por %p517, %p518
    %p520 = scmp.ne.s32.totalorder %s508, %s509
    %p521 = scmp.eq.s32.totalorder %s37, 1
    %p522 = por %p520, %p521
    %p524 = scmp.ne.s32.totalorder %s509, %s523
    %p525 = scmp.eq.s32.totalorder %s37, 0
    %p526 = por %p524, %p525
    %s528 = sadd.s32 %s527, 1
    %p531 = scmp.eq.s32.totalorder %s31, 1
    %p532 = scmp.ne.s32.totalorder %s527, %s529
    %p533 = scmp.eq.s32.totalorder %s31, 0
    %p534 = por %p532, %p533
    %p535 = scmp.ne.s32.totalorder %s527, %s529
    %p536 = scmp.eq.s32.totalorder %s36, 1
    %p537 = por %p535, %p536
    %p538 = scmp.ne.s32.totalorder %s529, %s530
    %p539 = scmp.eq.s32.totalorder %s36, 0
    %p540 = por %p538, %p539
    %p541 = scmp.ne.s32.totalorder %s529, %s530
    %p542 = scmp.eq.s32.totalorder %s37, 1
    %p543 = por %p541, %p542
    %p545 = scmp.ne.s32.totalorder %s530, %s544
    %p546 = scmp.eq.s32.totalorder %s37, 0
    %p547 = por %p545, %p546
    %s549 = sadd.s32 %s548, 1
    %p552 = scmp.eq.s32.totalorder %s31, 1
    %p553 = scmp.ne.s32.totalorder %s548, %s550
    %p554 = scmp.eq.s32.totalorder %s31, 0
    %p555 = por %p553, %p554
    %p556 = scmp.ne.s32.totalorder %s548, %s550
    %p557 = scmp.eq.s32.totalorder %s36, 1
    %p558 = por %p556, %p557
    %p559 = scmp.ne.s32.totalorder %s550, %s551
    %p560 = scmp.eq.s32.totalorder %s36, 0
    %p561 = por %p559, %p560
    %p562 = scmp.ne.s32.totalorder %s550, %s551
    %p563 = scmp.eq.s32.totalorder %s37, 1
    %p564 = por %p562, %p563
    %p566 = scmp.ne.s32.totalorder %s551, %s565
    %p567 = scmp.eq.s32.totalorder %s37, 0
    %p568 = por %p566, %p567
    %s569 = ssub.s32 %s31, %s38
    %p570 = scmp.eq.s32.totalorder %s569, 0
    %s572 = sadd.s32 %s571, 1
    %s573 = scalar_select %p570, %s571, %s572
    %p576 = pneg %p570
    %p577 = scmp.eq.s32.totalorder %s31, 1
    %p578 = por %p576, %p577
    %p579 = scmp.ne.s32.totalorder %s571, %s574
    %p580 = scmp.eq.s32.totalorder %s31, 0
    %p581 = por %p579, %p580
    %p582 = scmp.ne.s32.totalorder %s571, %s574
    %p583 = scmp.eq.s32.totalorder %s36, 1
    %p584 = por %p582, %p583
    %p585 = scmp.ne.s32.totalorder %s574, %s575
    %p586 = scmp.eq.s32.totalorder %s36, 0
    %p587 = por %p585, %p586
    %p588 = scmp.ne.s32.totalorder %s574, %s575
    %p589 = scmp.eq.s32.totalorder %s37, 1
    %p590 = por %p588, %p589
    %p592 = scmp.ne.s32.totalorder %s575, %s591
    %p593 = scmp.eq.s32.totalorder %s37, 0
    %p594 = por %p592, %p593
    %p595 = scmp.le.s32.totalorder 1, %s31
    %p596 = scmp.lt.s32.totalorder %s31, 3
    %p597 = pnand %p595, %p596
    %p598 = pneg %p597
    // Predicated region
    $region9: #{conformer_ordinal_forward.5} parent=5 // pred_check
      _
    $region10: #{conformer_ordinal_forward.5} parent=5 // pred_check_branch
      %600 = sbr.rel (%p597) target = $region12
    $region11: #{conformer_ordinal_forward.5} parent=5 // pred_region
      %s601 = ssub.s32 %s31, 1
      // Predicated region
      $region13: #{conformer_ordinal_forward.5} parent=11 // pred_check
        %p602 = pneg %p78
      $region14: #{conformer_ordinal_forward.5} parent=11 // pred_check_branch
        %604 = sbr.rel (%p602) target = $region16
      $region15: #{conformer_ordinal_forward.5} parent=11 // pred_region
        _
      $region16: #{conformer_ordinal_forward.5} parent=11 // pred_fallthru
        _
      // Predicated region
      $region17: #{conformer_ordinal_forward.5} parent=11 // pred_check
        %p605 = pneg %p99
      $region18: #{conformer_ordinal_forward.5} parent=11 // pred_check_branch
        %607 = sbr.rel (%p605) target = $region20
      $region19: #{conformer_ordinal_forward.5} parent=11 // pred_region
        _
      $region20: #{conformer_ordinal_forward.5} parent=11 // pred_fallthru
        _
      // Predicated region
      $region21: #{conformer_ordinal_forward.5} parent=11 // pred_check
        %p608 = pneg %p120
      $region22: #{conformer_ordinal_forward.5} parent=11 // pred_check_branch
        %610 = sbr.rel (%p608) target = $region24
      $region23: #{conformer_ordinal_forward.5} parent=11 // pred_region
        _
      $region24: #{conformer_ordinal_forward.5} parent=11 // pred_fallthru
        _
      // Predicated region
      $region25: #{conformer_ordinal_forward.5} parent=11 // pred_check
        %p611 = pneg %p141
      $region26: #{conformer_ordinal_forward.5} parent=11 // pred_check_branch
        %613 = sbr.rel (%p611) target = $region28
      $region27: #{conformer_ordinal_forward.5} parent=11 // pred_region
        _
      $region28: #{conformer_ordinal_forward.5} parent=11 // pred_fallthru
        _
      // Predicated region
      $region29: #{conformer_ordinal_forward.5} parent=11 // pred_check
        %p614 = pneg %p162
      $region30: #{conformer_ordinal_forward.5} parent=11 // pred_check_branch
        %616 = sbr.rel (%p614) target = $region32
      $region31: #{conformer_ordinal_forward.5} parent=11 // pred_region
        _
      $region32: #{conformer_ordinal_forward.5} parent=11 // pred_fallthru
        _
      // Predicated region
      $region33: #{conformer_ordinal_forward.5} parent=11 // pred_check
        %p617 = pneg %p183
      $region34: #{conformer_ordinal_forward.5} parent=11 // pred_check_branch
        %619 = sbr.rel (%p617) target = $region36
      $region35: #{conformer_ordinal_forward.5} parent=11 // pred_region
        _
      $region36: #{conformer_ordinal_forward.5} parent=11 // pred_fallthru
        _
      // Predicated region
      $region37: #{conformer_ordinal_forward.5} parent=11 // pred_check
        %p620 = pneg %p204
      $region38: #{conformer_ordinal_forward.5} parent=11 // pred_check_branch
        %622 = sbr.rel (%p620) target = $region40
      $region39: #{conformer_ordinal_forward.5} parent=11 // pred_region
        _
      $region40: #{conformer_ordinal_forward.5} parent=11 // pred_fallthru
        _
      // Predicated region
      $region41: #{conformer_ordinal_forward.5} parent=11 // pred_check
        %p623 = pneg %p225
      $region42: #{conformer_ordinal_forward.5} parent=11 // pred_check_branch
        %625 = sbr.rel (%p623) target = $region44
      $region43: #{conformer_ordinal_forward.5} parent=11 // pred_region
        _
      $region44: #{conformer_ordinal_forward.5} parent=11 // pred_fallthru
        _
      // Predicated region
      $region45: #{conformer_ordinal_forward.5} parent=11 // pred_check
        %p626 = pneg %p246
      $region46: #{conformer_ordinal_forward.5} parent=11 // pred_check_branch
        %628 = sbr.rel (%p626) target = $region48
      $region47: #{conformer_ordinal_forward.5} parent=11 // pred_region
        _
      $region48: #{conformer_ordinal_forward.5} parent=11 // pred_fallthru
        _
      // Predicated region
      $region49: #{conformer_ordinal_forward.5} parent=11 // pred_check
        %p629 = pneg %p267
      $region50: #{conformer_ordinal_forward.5} parent=11 // pred_check_branch
        %631 = sbr.rel (%p629) target = $region52
      $region51: #{conformer_ordinal_forward.5} parent=11 // pred_region
        _
      $region52: #{conformer_ordinal_forward.5} parent=11 // pred_fallthru
        _
      // Predicated region
      $region53: #{conformer_ordinal_forward.5} parent=11 // pred_check
        %p632 = pneg %p288
      $region54: #{conformer_ordinal_forward.5} parent=11 // pred_check_branch
        %634 = sbr.rel (%p632) target = $region56
      $region55: #{conformer_ordinal_forward.5} parent=11 // pred_region
        _
      $region56: #{conformer_ordinal_forward.5} parent=11 // pred_fallthru
        _
      // Predicated region
      $region57: #{conformer_ordinal_forward.5} parent=11 // pred_check
        %p635 = pneg %p309
      $region58: #{conformer_ordinal_forward.5} parent=11 // pred_check_branch
        %637 = sbr.rel (%p635) target = $region60
      $region59: #{conformer_ordinal_forward.5} parent=11 // pred_region
        _
      $region60: #{conformer_ordinal_forward.5} parent=11 // pred_fallthru
        _
      // Predicated region
      $region61: #{conformer_ordinal_forward.5} parent=11 // pred_check
        %p638 = pneg %p330
      $region62: #{conformer_ordinal_forward.5} parent=11 // pred_check_branch
        %640 = sbr.rel (%p638) target = $region64
      $region63: #{conformer_ordinal_forward.5} parent=11 // pred_region
        _
      $region64: #{conformer_ordinal_forward.5} parent=11 // pred_fallthru
        _
      // Predicated region
      $region65: #{conformer_ordinal_forward.5} parent=11 // pred_check
        %p641 = pneg %p351
      $region66: #{conformer_ordinal_forward.5} parent=11 // pred_check_branch
        %643 = sbr.rel (%p641) target = $region68
      $region67: #{conformer_ordinal_forward.5} parent=11 // pred_region
        _
      $region68: #{conformer_ordinal_forward.5} parent=11 // pred_fallthru
        _
      // Predicated region
      $region69: #{conformer_ordinal_forward.5} parent=11 // pred_check
        %p644 = pneg %p372
      $region70: #{conformer_ordinal_forward.5} parent=11 // pred_check_branch
        %646 = sbr.rel (%p644) target = $region72
      $region71: #{conformer_ordinal_forward.5} parent=11 // pred_region
        _
      $region72: #{conformer_ordinal_forward.5} parent=11 // pred_fallthru
        _
      // Predicated region
      $region73: #{conformer_ordinal_forward.5} parent=11 // pred_check
        %p647 = pneg %p393
      $region74: #{conformer_ordinal_forward.5} parent=11 // pred_check_branch
        %649 = sbr.rel (%p647) target = $region76
      $region75: #{conformer_ordinal_forward.5} parent=11 // pred_region
        _
      $region76: #{conformer_ordinal_forward.5} parent=11 // pred_fallthru
        _
      // Predicated region
      $region77: #{conformer_ordinal_forward.5} parent=11 // pred_check
        %p650 = pneg %p414
      $region78: #{conformer_ordinal_forward.5} parent=11 // pred_check_branch
        %652 = sbr.rel (%p650) target = $region80
      $region79: #{conformer_ordinal_forward.5} parent=11 // pred_region
        _
      $region80: #{conformer_ordinal_forward.5} parent=11 // pred_fallthru
        _
      // Predicated region
      $region81: #{conformer_ordinal_forward.5} parent=11 // pred_check
        %p653 = pneg %p435
      $region82: #{conformer_ordinal_forward.5} parent=11 // pred_check_branch
        %655 = sbr.rel (%p653) target = $region84
      $region83: #{conformer_ordinal_forward.5} parent=11 // pred_region
        _
      $region84: #{conformer_ordinal_forward.5} parent=11 // pred_fallthru
        _
      // Predicated region
      $region85: #{conformer_ordinal_forward.5} parent=11 // pred_check
        %p656 = pneg %p456
      $region86: #{conformer_ordinal_forward.5} parent=11 // pred_check_branch
        %658 = sbr.rel (%p656) target = $region88
      $region87: #{conformer_ordinal_forward.5} parent=11 // pred_region
        _
      $region88: #{conformer_ordinal_forward.5} parent=11 // pred_fallthru
        _
      // Predicated region
      $region89: #{conformer_ordinal_forward.5} parent=11 // pred_check
        %p659 = pneg %p477
      $region90: #{conformer_ordinal_forward.5} parent=11 // pred_check_branch
        %661 = sbr.rel (%p659) target = $region92
      $region91: #{conformer_ordinal_forward.5} parent=11 // pred_region
        _
      $region92: #{conformer_ordinal_forward.5} parent=11 // pred_fallthru
        _
      // Predicated region
      $region93: #{conformer_ordinal_forward.5} parent=11 // pred_check
        %p662 = pneg %p498
      $region94: #{conformer_ordinal_forward.5} parent=11 // pred_check_branch
        %664 = sbr.rel (%p662) target = $region96
      $region95: #{conformer_ordinal_forward.5} parent=11 // pred_region
        _
      $region96: #{conformer_ordinal_forward.5} parent=11 // pred_fallthru
        _
      // Predicated region
      $region97: #{conformer_ordinal_forward.5} parent=11 // pred_check
        %p665 = pneg %p519
      $region98: #{conformer_ordinal_forward.5} parent=11 // pred_check_branch
        %667 = sbr.rel (%p665) target = $region100
      $region99: #{conformer_ordinal_forward.5} parent=11 // pred_region
        _
      $region100: #{conformer_ordinal_forward.5} parent=11 // pred_fallthru
        _
      // Predicated region
      $region101: #{conformer_ordinal_forward.5} parent=11 // pred_check
        %p668 = pneg %p540
      $region102: #{conformer_ordinal_forward.5} parent=11 // pred_check_branch
        %670 = sbr.rel (%p668) target = $region104
      $region103: #{conformer_ordinal_forward.5} parent=11 // pred_region
        _
      $region104: #{conformer_ordinal_forward.5} parent=11 // pred_fallthru
        _
      // Predicated region
      $region105: #{conformer_ordinal_forward.5} parent=11 // pred_check
        %p671 = pneg %p561
      $region106: #{conformer_ordinal_forward.5} parent=11 // pred_check_branch
        %673 = sbr.rel (%p671) target = $region108
      $region107: #{conformer_ordinal_forward.5} parent=11 // pred_region
        _
      $region108: #{conformer_ordinal_forward.5} parent=11 // pred_fallthru
        _
    $region12: #{conformer_ordinal_forward.5} parent=5 // pred_fallthru
      _
    %p674 = scmp.lt.s32.totalorder %s31, 2
    // Predicated region
    $region109: #{conformer_ordinal_forward.5} parent=5 // pred_check
      %p675 = pneg %p674
    $region110: #{conformer_ordinal_forward.5} parent=5 // pred_check_branch
      %677 = sbr.rel (%p675) target = $region112
    $region111: #{conformer_ordinal_forward.5} parent=5 // pred_region
      // Predicated region
      $region113: #{conformer_ordinal_forward.5} parent=111 // pred_check
        %p678 = pneg %p51
      $region114: #{conformer_ordinal_forward.5} parent=111 // pred_check_branch
        %680 = sbr.rel (%p678) target = $region116
      $region115: #{conformer_ordinal_forward.5} parent=111 // pred_region
        %p681 = scmp.lt.s32.totalorder %s31, 1
        %s682 = scalar_select %p681, %s31, 1
        %s683 = smul.addr %s682, 8
        %s684 = scalar_lea.vmem %s0, %s683
      $region116: #{conformer_ordinal_forward.5} parent=111 // pred_fallthru
        _
    $region112: #{conformer_ordinal_forward.5} parent=5 // pred_fallthru
      _
    %p685 = scmp.le.s32.totalorder 1, %s31
    %p686 = scmp.lt.s32.totalorder %s31, 3
    %p687 = pnand %p685, %p686
    %p688 = pneg %p687
    // Predicated region
    $region117: #{conformer_ordinal_forward.5} parent=5 // pred_check
      _
    $region118: #{conformer_ordinal_forward.5} parent=5 // pred_check_branch
      %690 = sbr.rel (%p687) target = $region120
    $region119: #{conformer_ordinal_forward.5} parent=5 // pred_region
      %s691 = ssub.s32 %s31, 1
      %p692 = scmp.lt.s32.totalorder %s36, 1
      %s693 = scalar_select %p692, %s36, 1
      %s694 = smul.addr %s693, 8
      %s695 = scalar_lea.vmem %s0, %s694
      %p696 = pneg %p57
      %p697 = pneg %p54
      %p698 = pneg %p78
      %p699 = pneg %p75
      %p700 = pneg %p99
      %p701 = pneg %p96
      %p702 = pneg %p120
      %p703 = pneg %p117
      %p704 = pneg %p141
      %p705 = pneg %p138
      %p706 = pneg %p162
      %p707 = pneg %p159
      %p708 = pneg %p183
      %p709 = pneg %p180
      %p710 = pneg %p204
      %p711 = pneg %p201
      %p712 = pneg %p225
      %p713 = pneg %p222
      %p714 = pneg %p246
      %p715 = pneg %p243
      %p716 = pneg %p267
      %p717 = pneg %p264
      %p718 = pneg %p288
      %p719 = pneg %p285
      %p720 = pneg %p309
      %p721 = pneg %p306
      %p722 = pneg %p330
      %p723 = pneg %p327
      %p724 = pneg %p351
      %p725 = pneg %p348
      %p726 = pneg %p372
      %p727 = pneg %p369
      %p728 = pneg %p393
      %p729 = pneg %p390
      %p730 = pneg %p414
      %p731 = pneg %p411
      %p732 = pneg %p435
      %p733 = pneg %p432
      %p734 = pneg %p456
      %p735 = pneg %p453
      %p736 = pneg %p477
      %p737 = pneg %p474
      %p738 = pneg %p498
      %p739 = pneg %p495
      %p740 = pneg %p519
      %p741 = pneg %p516
      %p742 = pneg %p540
      %p743 = pneg %p537
      %p744 = pneg %p561
      %p745 = pneg %p558
      %p746 = pneg %p587
      %p747 = pneg %p584
      %p748 = scmp.lt.s32.totalorder %s36, 1
      %s749 = scalar_select %p748, %s36, 1
      %s750 = smul.addr %s749, 8
      %s751 = scalar_lea.vmem %s25, %s750
      %p752 = scmp.lt.s32.totalorder %s36, 1
      %s753 = scalar_select %p752, %s36, 1
      %s754 = smul.addr %s753, 8
      %s755 = scalar_lea.vmem %s0, %s754
      %p756 = scmp.lt.s32.totalorder %s36, 1
      %s757 = scalar_select %p756, %s36, 1
      %s758 = smul.addr %s757, 8
      %s759 = scalar_lea.vmem %s25, %s758
      %v761 = vld [vmem:[%s755] sm:$0xff]
      %v762 = vld [vmem:[%s1] sm:$0x1f]
      %v763 = vld [vmem:[%s2] sm:$0x1f]
      %vm764 = vcmask 261120
      %v765 = vsel %vm764, %v761, 0.0
      %766 = vadd.xlane.f32.xlu0 %v765
      %v767 = vpop.xlane.xlu0 %766
      %v768 = vrcp.pop 32.0
      %v769 = vmul.f32 %v767, %v768
      %v770 = vsub.f32 %v761, %v769
      %v771 = vmul.f32 %v770, %v770
      %v772 = vsel %vm764, %v771, 0.0
      %773 = vadd.xlane.f32.xlu0 %v772
      %v774 = vpop.xlane.xlu0 %773
      %v775 = vmul.f32 %v774, %v768
      %v776 = vadd.f32 %v775, 1e-05
      %v777 = vrsqrt.pop %v776
      %v778 = vmul.f32 %v770, %v777
      %v779 = vlaneseq
      %v780 = vshrl.u32 %v779, 7
      %v781 = vsub.s32 0, %v780
      %v782 = vrot.slane %v762, %v781
      %v783 = vmul.f32 %v778, %v782
      %v784 = vlaneseq
      %v785 = vshrl.u32 %v784, 7
      %v786 = vsub.s32 0, %v785
      %v787 = vrot.slane %v763, %v786
      %v788 = vadd.f32 %v783, %v787
      %v789 = vpack.c.bf16 %v788, %v788
      %v790 = vld [vmem:[%s3] sm:$0xf]
      %v791 = vld [vmem:[%s3 + $0x4] sm:$0xf]
      %v792 = vld [vmem:[%s3 + $0x8] sm:$0xf]
      %v793 = vld [vmem:[%s3 + $0xc] sm:$0xf]
      %v794 = vld [vmem:[%s4] sm:$0x1]
      %v796 = vlaneseq
      %v797 = vshrl.u32 %v796, 7
      %v798 = vsub.s32 0, %v797
      %v799 = vrot.slane %v794, %v798
      %v805 = vunpack.c.l.b16 %v790
      %v806 = vunpack.c.l.b16 %v791
      %v807 = vunpack.c.l.b16 %v792
      %v808 = vunpack.c.l.b16 %v793
      %v809 = vpack.c.b16 %v806, %v805
      %v810 = vpack.c.b16 %v808, %v807
      %v814 = vsel %vm764, %v789, 0
      %816 = vmatprep.subr.bf16.mxu0 0
      %817 = vmatpush1.bf16.msra.mxu0 %v809
      %818 = vmatprep.subr.bf16.mxu0 0
      %819 = vmatpush1.bf16.msra.mxu0 %v810
      %820 = vmatprep.subr.bf16.mxu0 0
      %821 = vmatpush1.bf16.msra.mxu0 0
      %822 = vmatprep.subr.bf16.mxu0 0
      %823 = vmatpush1.bf16.msra.mxu0 0
      %824 = vmatprep.subr.bf16.mxu0 0
      %825 = vmatpush1.bf16.msra.mxu0 0
      %826 = vmatprep.subr.bf16.mxu0 0
      %827 = vmatpush1.bf16.msra.mxu0 0
      %828 = vmatprep.subr.bf16.mxu0 0
      %829 = vmatpush1.bf16.msra.mxu0 0
      %830 = vmatprep.subr.bf16.mxu0 0
      %831 = vmatpush1.bf16.msra.mxu0 0
      %832 = vmatprep.subr.bf16.mxu0 0
      %833 = vmatpush1.bf16.msra.mxu0 0
      %834 = vmatprep.subr.bf16.mxu0 0
      %835 = vmatpush1.bf16.msra.mxu0 0
      %836 = vmatprep.subr.bf16.mxu0 0
      %837 = vmatpush1.bf16.msra.mxu0 0
      %838 = vmatprep.subr.bf16.mxu0 0
      %839 = vmatpush1.bf16.msra.mxu0 0
      %840 = vmatprep.subr.bf16.mxu0 0
      %841 = vmatpush1.bf16.msra.mxu0 0
      %842 = vmatprep.subr.bf16.mxu0 0
      %843 = vmatpush1.bf16.msra.mxu0 0
      %844 = vmatprep.subr.bf16.mxu0 0
      %845 = vmatpush1.bf16.msra.mxu0 0
      %846 = vmatprep.subr.bf16.mxu0 0
      %847 = vmatpush1.bf16.msra.mxu0 0
      %848 = vmatprep.mubr.bf16.mxu0 0
      %849 = vmatmul.mubr.bf16.gmra.mrb[0].mxu0 %v814
      %v850 = vpop.f32.mrb[0].mxu0
      %v851 = vadd.f32 %v799, %v850
      %v852 = vpop.f32.mrb[0].mxu0
      %v853 = vpop.f32.mrb[0].mxu0
      %v854 = vpop.f32.mrb[0].mxu0
      %855 = vdwg.mxu0
      %v856 = vxor.u32 %v851, 2147483648
      %v857 = vmul.f32 %v856, 1.442695
      %v858 = vpow.pop %v857
      %v859 = vadd.f32 %v858, 1.0
      %v860 = vrcp.pop %v859
      %v861 = vmul.f32 1.0, %v860
      %v862 = vmul.f32 %v851, %v861
      %v863 = vpack.c.bf16 %v862, %v862
      %v864 = vld [vmem:[%s5] sm:$0xf]
      %v865 = vld [vmem:[%s5 + $0x4] sm:$0xf]
      %v866 = vld [vmem:[%s5 + $0x8] sm:$0xf]
      %v867 = vld [vmem:[%s5 + $0xc] sm:$0xf]
      %v868 = vld [vmem:[%s5 + $0x10] sm:$0xf]
      %v869 = vld [vmem:[%s5 + $0x14] sm:$0xf]
      %v870 = vld [vmem:[%s5 + $0x18] sm:$0xf]
      %v871 = vld [vmem:[%s5 + $0x1c] sm:$0xf]
      %v872 = vld [vmem:[%s5 + $0x20] sm:$0xf]
      %v873 = vld [vmem:[%s5 + $0x24] sm:$0xf]
      %v874 = vld [vmem:[%s5 + $0x28] sm:$0xf]
      %v875 = vld [vmem:[%s5 + $0x2c] sm:$0xf]
      %v876 = vld [vmem:[%s5 + $0x30] sm:$0xf]
      %v877 = vld [vmem:[%s5 + $0x34] sm:$0xf]
      %v878 = vld [vmem:[%s5 + $0x38] sm:$0xf]
      %v879 = vld [vmem:[%s5 + $0x3c] sm:$0xf]
      %v880 = vld [vmem:[%s6] sm:$0x1]
      %v882 = vlaneseq
      %v883 = vshrl.u32 %v882, 7
      %v884 = vsub.s32 0, %v883
      %v885 = vrot.slane %v880, %v884
      %v903 = vunpack.c.l.b16 %v864
      %v904 = vunpack.c.l.b16 %v865
      %v905 = vunpack.c.l.b16 %v866
      %v906 = vunpack.c.l.b16 %v867
      %v907 = vunpack.c.l.b16 %v868
      %v908 = vunpack.c.l.b16 %v869
      %v909 = vunpack.c.l.b16 %v870
      %v910 = vunpack.c.l.b16 %v871
      %v911 = vunpack.c.l.b16 %v872
      %v912 = vunpack.c.l.b16 %v873
      %v913 = vunpack.c.l.b16 %v874
      %v914 = vunpack.c.l.b16 %v875
      %v915 = vunpack.c.l.b16 %v876
      %v916 = vunpack.c.l.b16 %v877
      %v917 = vunpack.c.l.b16 %v878
      %v918 = vunpack.c.l.b16 %v879
      %v919 = vpack.c.b16 %v904, %v903
      %v920 = vpack.c.b16 %v906, %v905
      %v921 = vpack.c.b16 %v908, %v907
      %v922 = vpack.c.b16 %v910, %v909
      %v923 = vpack.c.b16 %v912, %v911
      %v924 = vpack.c.b16 %v914, %v913
      %v925 = vpack.c.b16 %v916, %v915
      %v926 = vpack.c.b16 %v918, %v917
      %935 = vmatprep.subr.bf16.mxu0 0
      %936 = vmatpush1.bf16.msra.mxu0 %v919
      %937 = vmatprep.subr.bf16.mxu0 0
      %938 = vmatpush1.bf16.msra.mxu0 %v920
      %939 = vmatprep.subr.bf16.mxu0 0
      %940 = vmatpush1.bf16.msra.mxu0 %v921
      %941 = vmatprep.subr.bf16.mxu0 0
      %942 = vmatpush1.bf16.msra.mxu0 %v922
      %943 = vmatprep.subr.bf16.mxu0 0
      %944 = vmatpush1.bf16.msra.mxu0 %v923
      %945 = vmatprep.subr.bf16.mxu0 0
      %946 = vmatpush1.bf16.msra.mxu0 %v924
      %947 = vmatprep.subr.bf16.mxu0 0
      %948 = vmatpush1.bf16.msra.mxu0 %v925
      %949 = vmatprep.subr.bf16.mxu0 0
      %950 = vmatpush1.bf16.msra.mxu0 %v926
      %951 = vmatprep.subr.bf16.mxu0 0
      %952 = vmatpush1.bf16.msra.mxu0 0
      %953 = vmatprep.subr.bf16.mxu0 0
      %954 = vmatpush1.bf16.msra.mxu0 0
      %955 = vmatprep.subr.bf16.mxu0 0
      %956 = vmatpush1.bf16.msra.mxu0 0
      %957 = vmatprep.subr.bf16.mxu0 0
      %958 = vmatpush1.bf16.msra.mxu0 0
      %959 = vmatprep.subr.bf16.mxu0 0
      %960 = vmatpush1.bf16.msra.mxu0 0
      %961 = vmatprep.subr.bf16.mxu0 0
      %962 = vmatpush1.bf16.msra.mxu0 0
      %963 = vmatprep.subr.bf16.mxu0 0
      %964 = vmatpush1.bf16.msra.mxu0 0
      %965 = vmatprep.subr.bf16.mxu0 0
      %966 = vmatpush1.bf16.msra.mxu0 0
      %967 = vmatprep.mubr.bf16.mxu0 0
      %968 = vmatmul.mubr.bf16.gmra.mrb[0].mxu0 %v863
      %v969 = vpop.f32.mrb[0].mxu0
      %v970 = vadd.f32 %v885, %v969
      %v971 = vpop.f32.mrb[0].mxu0
      %v972 = vpop.f32.mrb[0].mxu0
      %v973 = vpop.f32.mrb[0].mxu0
      %974 = vdwg.mxu0
      %v975 = vmul.f32 %v970, 0.5
      %v976 = vadd.f32 %v761, %v975
      %v977 = vsel %vm764, %v976, 0.0
      %978 = vadd.xlane.f32.xlu0 %v977
      %v979 = vpop.xlane.xlu0 %978
      %v980 = vmul.f32 %v979, %v768
      %v981 = vsub.f32 %v976, %v980
      %v982 = vmul.f32 %v981, %v981
      %v983 = vsel %vm764, %v982, 0.0
      %984 = vadd.xlane.f32.xlu0 %v983
      %v985 = vpop.xlane.xlu0 %984
      %v986 = vmul.f32 %v985, %v768
      %v987 = vadd.f32 %v986, 1e-05
      %v988 = vrsqrt.pop %v987
      %v989 = vmul.f32 %v981, %v988
      %v990 = vlaneseq
      %v991 = vshrl.u32 %v990, 7
      %v992 = vsub.s32 1, %v991
      %v993 = vrot.slane %v762, %v992
      %v994 = vmul.f32 %v989, %v993
      %v995 = vlaneseq
      %v996 = vshrl.u32 %v995, 7
      %v997 = vsub.s32 1, %v996
      %v998 = vrot.slane %v763, %v997
      %v999 = vadd.f32 %v994, %v998
      %v1000 = vpack.c.bf16 %v999, %v999
      %v1001 = vld [vmem:[%s7] sm:$0xf]
      %v1002 = vld [vmem:[%s7 + $0x4] sm:$0xf]
      %v1003 = vld [vmem:[%s7 + $0x8] sm:$0xf]
      %v1004 = vld [vmem:[%s7 + $0xc] sm:$0xf]
      %v1005 = vld [vmem:[%s8] sm:$0x1]
      %v1007 = vlaneseq
      %v1008 = vshrl.u32 %v1007, 7
      %v1009 = vsub.s32 0, %v1008
      %v1010 = vrot.slane %v1005, %v1009
      %v1016 = vunpack.c.l.b16 %v1001
      %v1017 = vunpack.c.l.b16 %v1002
      %v1018 = vunpack.c.l.b16 %v1003
      %v1019 = vunpack.c.l.b16 %v1004
      %v1020 = vpack.c.b16 %v1017, %v1016
      %v1021 = vpack.c.b16 %v1019, %v1018
      %v1025 = vsel %vm764, %v1000, 0
      %1027 = vmatprep.subr.bf16.mxu0 0
      %1028 = vmatpush1.bf16.msra.mxu0 %v1020
      %1029 = vmatprep.subr.bf16.mxu0 0
      %1030 = vmatpush1.bf16.msra.mxu0 %v1021
      %1031 = vmatprep.subr.bf16.mxu0 0
      %1032 = vmatpush1.bf16.msra.mxu0 0
      %1033 = vmatprep.subr.bf16.mxu0 0
      %1034 = vmatpush1.bf16.msra.mxu0 0
      %1035 = vmatprep.subr.bf16.mxu0 0
      %1036 = vmatpush1.bf16.msra.mxu0 0
      %1037 = vmatprep.subr.bf16.mxu0 0
      %1038 = vmatpush1.bf16.msra.mxu0 0
      %1039 = vmatprep.subr.bf16.mxu0 0
      %1040 = vmatpush1.bf16.msra.mxu0 0
      %1041 = vmatprep.subr.bf16.mxu0 0
      %1042 = vmatpush1.bf16.msra.mxu0 0
      %1043 = vmatprep.subr.bf16.mxu0 0
      %1044 = vmatpush1.bf16.msra.mxu0 0
      %1045 = vmatprep.subr.bf16.mxu0 0
      %1046 = vmatpush1.bf16.msra.mxu0 0
      %1047 = vmatprep.subr.bf16.mxu0 0
      %1048 = vmatpush1.bf16.msra.mxu0 0
      %1049 = vmatprep.subr.bf16.mxu0 0
      %1050 = vmatpush1.bf16.msra.mxu0 0
      %1051 = vmatprep.subr.bf16.mxu0 0
      %1052 = vmatpush1.bf16.msra.mxu0 0
      %1053 = vmatprep.subr.bf16.mxu0 0
      %1054 = vmatpush1.bf16.msra.mxu0 0
      %1055 = vmatprep.subr.bf16.mxu0 0
      %1056 = vmatpush1.bf16.msra.mxu0 0
      %1057 = vmatprep.subr.bf16.mxu0 0
      %1058 = vmatpush1.bf16.msra.mxu0 0
      %1059 = vmatprep.mubr.bf16.mxu0 0
      %1060 = vmatmul.mubr.bf16.gmra.mrb[0].mxu0 %v1025
      %v1061 = vpop.f32.mrb[0].mxu0
      %v1062 = vadd.f32 %v1010, %v1061
      %v1063 = vpop.f32.mrb[0].mxu0
      %v1064 = vpop.f32.mrb[0].mxu0
      %v1065 = vpop.f32.mrb[0].mxu0
      %1066 = vdwg.mxu0
      %v1067 = vpack.c.bf16 %v1062, %v1062
      %1069 = vrot.lane.b32.xlu0 %v1067, 96
      %v1070 = vpop.permute.xlu0 %1069
      %vm1071 = vcmask 64512
      %v1073 = vsel %vm1071, %v1067, 0
      %v1076 = vsel %vm1071, %v1070, 0
      %1078 = vmatprep.subr.bf16.mxu0 0
      %1079 = vmatpush1.bf16.xpose.msra.mxu0 %v1076
      %1080 = vmatprep.subr.bf16.mxu0 0
      %1081 = vmatpush1.bf16.xpose.msra.mxu0 0
      %1082 = vmatprep.subr.bf16.mxu0 0
      %1083 = vmatpush1.bf16.xpose.msra.mxu0 0
      %1084 = vmatprep.subr.bf16.mxu0 0
      %1085 = vmatpush1.bf16.xpose.msra.mxu0 0
      %1086 = vmatprep.subr.bf16.mxu0 0
      %1087 = vmatpush1.bf16.xpose.msra.mxu0 0
      %1088 = vmatprep.subr.bf16.mxu0 0
      %1089 = vmatpush1.bf16.xpose.msra.mxu0 0
      %1090 = vmatprep.subr.bf16.mxu0 0
      %1091 = vmatpush1.bf16.xpose.msra.mxu0 0
      %1092 = vmatprep.subr.bf16.mxu0 0
      %1093 = vmatpush1.bf16.xpose.msra.mxu0 0
      %1094 = vmatprep.subr.bf16.mxu0 0
      %1095 = vmatpush1.bf16.xpose.msra.mxu0 0
      %1096 = vmatprep.subr.bf16.mxu0 0
      %1097 = vmatpush1.bf16.xpose.msra.mxu0 0
      %1098 = vmatprep.subr.bf16.mxu0 0
      %1099 = vmatpush1.bf16.xpose.msra.mxu0 0
      %1100 = vmatprep.subr.bf16.mxu0 0
      %1101 = vmatpush1.bf16.xpose.msra.mxu0 0
      %1102 = vmatprep.subr.bf16.mxu0 0
      %1103 = vmatpush1.bf16.xpose.msra.mxu0 0
      %1104 = vmatprep.subr.bf16.mxu0 0
      %1105 = vmatpush1.bf16.xpose.msra.mxu0 0
      %1106 = vmatprep.subr.bf16.mxu0 0
      %1107 = vmatpush1.bf16.xpose.msra.mxu0 0
      %1108 = vmatprep.subr.bf16.mxu0 0
      %1109 = vmatpush1.bf16.xpose.msra.mxu0 0
      %1110 = vmatprep.mubr.bf16.mxu0 0
      %1111 = vmatmul.mubr.bf16.gmra.mrb[0].mxu0 %v1073
      %v1112 = vpop.f32.mrb[0].mxu0
      %v1113 = vadd.f32 0.0, %v1112
      %v1114 = vpop.f32.mrb[0].mxu0
      %v1115 = vpop.f32.mrb[0].mxu0
      %v1116 = vpop.f32.mrb[0].mxu0
      %1117 = vdwg.mxu0
      %v1118 = vmul.f32 %v1113, 0.35355338
      %v1119 = vsel %vm1071, %v1118, -inf
      %1120 = vmax.xlane.f32.xlu0 %v1119
      %v1121 = vpop.xlane.xlu0 %1120
      %v1122 = vsub.f32 %v1118, %v1121
      %v1123 = vmul.f32 %v1122, 1.442695
      %v1124 = vpow.pop %v1123
      %v1125 = vsel %vm1071, %v1124, 0.0
      %1126 = vadd.xlane.f32.xlu0 %v1125
      %v1127 = vpop.xlane.xlu0 %1126
      %v1128 = vrcp.pop %v1127
      %v1129 = vmul.f32 %v1124, %v1128
      %v1130 = vpack.c.bf16 %v1129, %v1129
      %1131 = vrot.lane.b32.xlu0 %v1067, 64
      %v1132 = vpop.permute.xlu0 %1131
      %v1134 = vsel %vm1071, %v1130, 0
      %vm1136 = vcmask 1043456
      %v1138 = vsel %vm1136, %v1132, 0
      %1140 = vmatprep.subr.bf16.mxu0 0
      %1141 = vmatpush1.bf16.msra.mxu0 %v1138
      %1142 = vmatprep.subr.bf16.mxu0 0
      %1143 = vmatpush1.bf16.msra.mxu0 0
      %1144 = vmatprep.subr.bf16.mxu0 0
      %1145 = vmatpush1.bf16.msra.mxu0 0
      %1146 = vmatprep.subr.bf16.mxu0 0
      %1147 = vmatpush1.bf16.msra.mxu0 0
      %1148 = vmatprep.subr.bf16.mxu0 0
      %1149 = vmatpush1.bf16.msra.mxu0 0
      %1150 = vmatprep.subr.bf16.mxu0 0
      %1151 = vmatpush1.bf16.msra.mxu0 0
      %1152 = vmatprep.subr.bf16.mxu0 0
      %1153 = vmatpush1.bf16.msra.mxu0 0
      %1154 = vmatprep.subr.bf16.mxu0 0
      %1155 = vmatpush1.bf16.msra.mxu0 0
      %1156 = vmatprep.subr.bf16.mxu0 0
      %1157 = vmatpush1.bf16.msra.mxu0 0
      %1158 = vmatprep.subr.bf16.mxu0 0
      %1159 = vmatpush1.bf16.msra.mxu0 0
      %1160 = vmatprep.subr.bf16.mxu0 0
      %1161 = vmatpush1.bf16.msra.mxu0 0
      %1162 = vmatprep.subr.bf16.mxu0 0
      %1163 = vmatpush1.bf16.msra.mxu0 0
      %1164 = vmatprep.subr.bf16.mxu0 0
      %1165 = vmatpush1.bf16.msra.mxu0 0
      %1166 = vmatprep.subr.bf16.mxu0 0
      %1167 = vmatpush1.bf16.msra.mxu0 0
      %1168 = vmatprep.subr.bf16.mxu0 0
      %1169 = vmatpush1.bf16.msra.mxu0 0
      %1170 = vmatprep.subr.bf16.mxu0 0
      %1171 = vmatpush1.bf16.msra.mxu0 0
      %1172 = vmatprep.mubr.bf16.mxu0 0
      %1173 = vmatmul.mubr.bf16.gmra.mrb[0].mxu0 %v1134
      %v1174 = vpop.f32.mrb[0].mxu0
      %v1175 = vadd.f32 0.0, %v1174
      %v1176 = vpop.f32.mrb[0].mxu0
      %v1177 = vpop.f32.mrb[0].mxu0
      %v1178 = vpop.f32.mrb[0].mxu0
      %1179 = vdwg.mxu0
      %1180 = vrot.lane.b32.xlu0 %v1067, 120
      %v1181 = vpop.permute.xlu0 %1180
      %1182 = vrot.lane.b32.xlu0 %v1067, 88
      %v1183 = vpop.permute.xlu0 %1182
      %v1185 = vsel %vm1071, %v1181, 0
      %v1188 = vsel %vm1071, %v1183, 0
      %1190 = vmatprep.subr.bf16.mxu0 0
      %1191 = vmatpush1.bf16.xpose.msra.mxu0 %v1188
      %1192 = vmatprep.subr.bf16.mxu0 0
      %1193 = vmatpush1.bf16.xpose.msra.mxu0 0
      %1194 = vmatprep.subr.bf16.mxu0 0
      %1195 = vmatpush1.bf16.xpose.msra.mxu0 0
      %1196 = vmatprep.subr.bf16.mxu0 0
      %1197 = vmatpush1.bf16.xpose.msra.mxu0 0
      %1198 = vmatprep.subr.bf16.mxu0 0
      %1199 = vmatpush1.bf16.xpose.msra.mxu0 0
      %1200 = vmatprep.subr.bf16.mxu0 0
      %1201 = vmatpush1.bf16.xpose.msra.mxu0 0
      %1202 = vmatprep.subr.bf16.mxu0 0
      %1203 = vmatpush1.bf16.xpose.msra.mxu0 0
      %1204 = vmatprep.subr.bf16.mxu0 0
      %1205 = vmatpush1.bf16.xpose.msra.mxu0 0
      %1206 = vmatprep.subr.bf16.mxu0 0
      %1207 = vmatpush1.bf16.xpose.msra.mxu0 0
      %1208 = vmatprep.subr.bf16.mxu0 0
      %1209 = vmatpush1.bf16.xpose.msra.mxu0 0
      %1210 = vmatprep.subr.bf16.mxu0 0
      %1211 = vmatpush1.bf16.xpose.msra.mxu0 0
      %1212 = vmatprep.subr.bf16.mxu0 0
      %1213 = vmatpush1.bf16.xpose.msra.mxu0 0
      %1214 = vmatprep.subr.bf16.mxu0 0
      %1215 = vmatpush1.bf16.xpose.msra.mxu0 0
      %1216 = vmatprep.subr.bf16.mxu0 0
      %1217 = vmatpush1.bf16.xpose.msra.mxu0 0
      %1218 = vmatprep.subr.bf16.mxu0 0
      %1219 = vmatpush1.bf16.xpose.msra.mxu0 0
      %1220 = vmatprep.subr.bf16.mxu0 0
      %1221 = vmatpush1.bf16.xpose.msra.mxu0 0
      %1222 = vmatprep.mubr.bf16.mxu0 0
      %1223 = vmatmul.mubr.bf16.gmra.mrb[0].mxu0 %v1185
      %v1224 = vpop.f32.mrb[0].mxu0
      %v1225 = vadd.f32 0.0, %v1224
      %v1226 = vpop.f32.mrb[0].mxu0
      %v1227 = vpop.f32.mrb[0].mxu0
      %v1228 = vpop.f32.mrb[0].mxu0
      %1229 = vdwg.mxu0
      %v1230 = vmul.f32 %v1225, 0.35355338
      %v1231 = vsel %vm1071, %v1230, -inf
      %1232 = vmax.xlane.f32.xlu0 %v1231
      %v1233 = vpop.xlane.xlu0 %1232
      %v1234 = vsub.f32 %v1230, %v1233
      %v1235 = vmul.f32 %v1234, 1.442695
      %v1236 = vpow.pop %v1235
      %v1237 = vsel %vm1071, %v1236, 0.0
      %1238 = vadd.xlane.f32.xlu0 %v1237
      %v1239 = vpop.xlane.xlu0 %1238
      %v1240 = vrcp.pop %v1239
      %v1241 = vmul.f32 %v1236, %v1240
      %v1242 = vpack.c.bf16 %v1241, %v1241
      %1243 = vrot.lane.b32.xlu0 %v1067, 56
      %v1244 = vpop.permute.xlu0 %1243
      %v1246 = vsel %vm1071, %v1242, 0
      %v1249 = vsel %vm1136, %v1244, 0
      %1251 = vmatprep.subr.bf16.mxu0 0
      %1252 = vmatpush1.bf16.msra.mxu0 %v1249
      %1253 = vmatprep.subr.bf16.mxu0 0
      %1254 = vmatpush1.bf16.msra.mxu0 0
      %1255 = vmatprep.subr.bf16.mxu0 0
      %1256 = vmatpush1.bf16.msra.mxu0 0
      %1257 = vmatprep.subr.bf16.mxu0 0
      %1258 = vmatpush1.bf16.msra.mxu0 0
      %1259 = vmatprep.subr.bf16.mxu0 0
      %1260 = vmatpush1.bf16.msra.mxu0 0
      %1261 = vmatprep.subr.bf16.mxu0 0
      %1262 = vmatpush1.bf16.msra.mxu0 0
      %1263 = vmatprep.subr.bf16.mxu0 0
      %1264 = vmatpush1.bf16.msra.mxu0 0
      %1265 = vmatprep.subr.bf16.mxu0 0
      %1266 = vmatpush1.bf16.msra.mxu0 0
      %1267 = vmatprep.subr.bf16.mxu0 0
      %1268 = vmatpush1.bf16.msra.mxu0 0
      %1269 = vmatprep.subr.bf16.mxu0 0
      %1270 = vmatpush1.bf16.msra.mxu0 0
      %1271 = vmatprep.subr.bf16.mxu0 0
      %1272 = vmatpush1.bf16.msra.mxu0 0
      %1273 = vmatprep.subr.bf16.mxu0 0
      %1274 = vmatpush1.bf16.msra.mxu0 0
      %1275 = vmatprep.subr.bf16.mxu0 0
      %1276 = vmatpush1.bf16.msra.mxu0 0
      %1277 = vmatprep.subr.bf16.mxu0 0
      %1278 = vmatpush1.bf16.msra.mxu0 0
      %1279 = vmatprep.subr.bf16.mxu0 0
      %1280 = vmatpush1.bf16.msra.mxu0 0
      %1281 = vmatprep.subr.bf16.mxu0 0
      %1282 = vmatpush1.bf16.msra.mxu0 0
      %1283 = vmatprep.mubr.bf16.mxu0 0
      %1284 = vmatmul.mubr.bf16.gmra.mrb[0].mxu0 %v1246
      %v1285 = vpop.f32.mrb[0].mxu0
      %v1286 = vadd.f32 0.0, %v1285
      %v1287 = vpop.f32.mrb[0].mxu0
      %v1288 = vpop.f32.mrb[0].mxu0
      %v1289 = vpop.f32.mrb[0].mxu0
      %1290 = vdwg.mxu0
      %1291 = vrot.lane.b32.xlu0 %v1067, 112
      %v1292 = vpop.permute.xlu0 %1291
      %1293 = vrot.lane.b32.xlu0 %v1067, 80
      %v1294 = vpop.permute.xlu0 %1293
      %v1296 = vsel %vm1071, %v1292, 0
      %v1299 = vsel %vm1071, %v1294, 0
      %1301 = vmatprep.subr.bf16.mxu0 0
      %1302 = vmatpush1.bf16.xpose.msra.mxu0 %v1299
      %1303 = vmatprep.subr.bf16.mxu0 0
      %1304 = vmatpush1.bf16.xpose.msra.mxu0 0
      %1305 = vmatprep.subr.bf16.mxu0 0
      %1306 = vmatpush1.bf16.xpose.msra.mxu0 0
      %1307 = vmatprep.subr.bf16.mxu0 0
      %1308 = vmatpush1.bf16.xpose.msra.mxu0 0
      %1309 = vmatprep.subr.bf16.mxu0 0
      %1310 = vmatpush1.bf16.xpose.msra.mxu0 0
      %1311 = vmatprep.subr.bf16.mxu0 0
      %1312 = vmatpush1.bf16.xpose.msra.mxu0 0
      %1313 = vmatprep.subr.bf16.mxu0 0
      %1314 = vmatpush1.bf16.xpose.msra.mxu0 0
      %1315 = vmatprep.subr.bf16.mxu0 0
      %1316 = vmatpush1.bf16.xpose.msra.mxu0 0
      %1317 = vmatprep.subr.bf16.mxu0 0
      %1318 = vmatpush1.bf16.xpose.msra.mxu0 0
      %1319 = vmatprep.subr.bf16.mxu0 0
      %1320 = vmatpush1.bf16.xpose.msra.mxu0 0
      %1321 = vmatprep.subr.bf16.mxu0 0
      %1322 = vmatpush1.bf16.xpose.msra.mxu0 0
      %1323 = vmatprep.subr.bf16.mxu0 0
      %1324 = vmatpush1.bf16.xpose.msra.mxu0 0
      %1325 = vmatprep.subr.bf16.mxu0 0
      %1326 = vmatpush1.bf16.xpose.msra.mxu0 0
      %1327 = vmatprep.subr.bf16.mxu0 0
      %1328 = vmatpush1.bf16.xpose.msra.mxu0 0
      %1329 = vmatprep.subr.bf16.mxu0 0
      %1330 = vmatpush1.bf16.xpose.msra.mxu0 0
      %1331 = vmatprep.subr.bf16.mxu0 0
      %1332 = vmatpush1.bf16.xpose.msra.mxu0 0
      %1333 = vmatprep.mubr.bf16.mxu0 0
      %1334 = vmatmul.mubr.bf16.gmra.mrb[0].mxu0 %v1296
      %v1335 = vpop.f32.mrb[0].mxu0
      %v1336 = vadd.f32 0.0, %v1335
      %v1337 = vpop.f32.mrb[0].mxu0
      %v1338 = vpop.f32.mrb[0].mxu0
      %v1339 = vpop.f32.mrb[0].mxu0
      %1340 = vdwg.mxu0
      %v1341 = vmul.f32 %v1336, 0.35355338
      %v1342 = vsel %vm1071, %v1341, -inf
      %1343 = vmax.xlane.f32.xlu0 %v1342
      %v1344 = vpop.xlane.xlu0 %1343
      %v1345 = vsub.f32 %v1341, %v1344
      %v1346 = vmul.f32 %v1345, 1.442695
      %v1347 = vpow.pop %v1346
      %v1348 = vsel %vm1071, %v1347, 0.0
      %1349 = vadd.xlane.f32.xlu0 %v1348
      %v1350 = vpop.xlane.xlu0 %1349
      %v1351 = vrcp.pop %v1350
      %v1352 = vmul.f32 %v1347, %v1351
      %v1353 = vpack.c.bf16 %v1352, %v1352
      %1354 = vrot.lane.b32.xlu0 %v1067, 48
      %v1355 = vpop.permute.xlu0 %1354
      %v1357 = vsel %vm1071, %v1353, 0
      %v1360 = vsel %vm1136, %v1355, 0
      %1362 = vmatprep.subr.bf16.mxu0 0
      %1363 = vmatpush1.bf16.msra.mxu0 %v1360
      %1364 = vmatprep.subr.bf16.mxu0 0
      %1365 = vmatpush1.bf16.msra.mxu0 0
      %1366 = vmatprep.subr.bf16.mxu0 0
      %1367 = vmatpush1.bf16.msra.mxu0 0
      %1368 = vmatprep.subr.bf16.mxu0 0
      %1369 = vmatpush1.bf16.msra.mxu0 0
      %1370 = vmatprep.subr.bf16.mxu0 0
      %1371 = vmatpush1.bf16.msra.mxu0 0
      %1372 = vmatprep.subr.bf16.mxu0 0
      %1373 = vmatpush1.bf16.msra.mxu0 0
      %1374 = vmatprep.subr.bf16.mxu0 0
      %1375 = vmatpush1.bf16.msra.mxu0 0
      %1376 = vmatprep.subr.bf16.mxu0 0
      %1377 = vmatpush1.bf16.msra.mxu0 0
      %1378 = vmatprep.subr.bf16.mxu0 0
      %1379 = vmatpush1.bf16.msra.mxu0 0
      %1380 = vmatprep.subr.bf16.mxu0 0
      %1381 = vmatpush1.bf16.msra.mxu0 0
      %1382 = vmatprep.subr.bf16.mxu0 0
      %1383 = vmatpush1.bf16.msra.mxu0 0
      %1384 = vmatprep.subr.bf16.mxu0 0
      %1385 = vmatpush1.bf16.msra.mxu0 0
      %1386 = vmatprep.subr.bf16.mxu0 0
      %1387 = vmatpush1.bf16.msra.mxu0 0
      %1388 = vmatprep.subr.bf16.mxu0 0
      %1389 = vmatpush1.bf16.msra.mxu0 0
      %1390 = vmatprep.subr.bf16.mxu0 0
      %1391 = vmatpush1.bf16.msra.mxu0 0
      %1392 = vmatprep.subr.bf16.mxu0 0
      %1393 = vmatpush1.bf16.msra.mxu0 0
      %1394 = vmatprep.mubr.bf16.mxu0 0
      %1395 = vmatmul.mubr.bf16.gmra.mrb[0].mxu0 %v1357
      %v1396 = vpop.f32.mrb[0].mxu0
      %v1397 = vadd.f32 0.0, %v1396
      %v1398 = vpop.f32.mrb[0].mxu0
      %v1399 = vpop.f32.mrb[0].mxu0
      %v1400 = vpop.f32.mrb[0].mxu0
      %1401 = vdwg.mxu0
      %1402 = vrot.lane.b32.xlu0 %v1067, 104
      %v1403 = vpop.permute.xlu0 %1402
      %1404 = vrot.lane.b32.xlu0 %v1067, 72
      %v1405 = vpop.permute.xlu0 %1404
      %v1407 = vsel %vm1071, %v1403, 0
      %v1410 = vsel %vm1071, %v1405, 0
      %1412 = vmatprep.subr.bf16.mxu0 0
      %1413 = vmatpush1.bf16.xpose.msra.mxu0 %v1410
      %1414 = vmatprep.subr.bf16.mxu0 0
      %1415 = vmatpush1.bf16.xpose.msra.mxu0 0
      %1416 = vmatprep.subr.bf16.mxu0 0
      %1417 = vmatpush1.bf16.xpose.msra.mxu0 0
      %1418 = vmatprep.subr.bf16.mxu0 0
      %1419 = vmatpush1.bf16.xpose.msra.mxu0 0
      %1420 = vmatprep.subr.bf16.mxu0 0
      %1421 = vmatpush1.bf16.xpose.msra.mxu0 0
      %1422 = vmatprep.subr.bf16.mxu0 0
      %1423 = vmatpush1.bf16.xpose.msra.mxu0 0
      %1424 = vmatprep.subr.bf16.mxu0 0
      %1425 = vmatpush1.bf16.xpose.msra.mxu0 0
      %1426 = vmatprep.subr.bf16.mxu0 0
      %1427 = vmatpush1.bf16.xpose.msra.mxu0 0
      %1428 = vmatprep.subr.bf16.mxu0 0
      %1429 = vmatpush1.bf16.xpose.msra.mxu0 0
      %1430 = vmatprep.subr.bf16.mxu0 0
      %1431 = vmatpush1.bf16.xpose.msra.mxu0 0
      %1432 = vmatprep.subr.bf16.mxu0 0
      %1433 = vmatpush1.bf16.xpose.msra.mxu0 0
      %1434 = vmatprep.subr.bf16.mxu0 0
      %1435 = vmatpush1.bf16.xpose.msra.mxu0 0
      %1436 = vmatprep.subr.bf16.mxu0 0
      %1437 = vmatpush1.bf16.xpose.msra.mxu0 0
      %1438 = vmatprep.subr.bf16.mxu0 0
      %1439 = vmatpush1.bf16.xpose.msra.mxu0 0
      %1440 = vmatprep.subr.bf16.mxu0 0
      %1441 = vmatpush1.bf16.xpose.msra.mxu0 0
      %1442 = vmatprep.subr.bf16.mxu0 0
      %1443 = vmatpush1.bf16.xpose.msra.mxu0 0
      %1444 = vmatprep.mubr.bf16.mxu0 0
      %1445 = vmatmul.mubr.bf16.gmra.mrb[0].mxu0 %v1407
      %v1446 = vpop.f32.mrb[0].mxu0
      %v1447 = vadd.f32 0.0, %v1446
      %v1448 = vpop.f32.mrb[0].mxu0
      %v1449 = vpop.f32.mrb[0].mxu0
      %v1450 = vpop.f32.mrb[0].mxu0
      %1451 = vdwg.mxu0
      %v1452 = vmul.f32 %v1447, 0.35355338
      %v1453 = vsel %vm1071, %v1452, -inf
      %1454 = vmax.xlane.f32.xlu0 %v1453
      %v1455 = vpop.xlane.xlu0 %1454
      %v1456 = vsub.f32 %v1452, %v1455
      %v1457 = vmul.f32 %v1456, 1.442695
      %v1458 = vpow.pop %v1457
      %v1459 = vsel %vm1071, %v1458, 0.0
      %1460 = vadd.xlane.f32.xlu0 %v1459
      %v1461 = vpop.xlane.xlu0 %1460
      %v1462 = vrcp.pop %v1461
      %v1463 = vmul.f32 %v1458, %v1462
      %v1464 = vpack.c.bf16 %v1463, %v1463
      %1465 = vrot.lane.b32.xlu0 %v1067, 40
      %v1466 = vpop.permute.xlu0 %1465
      %v1468 = vsel %vm1071, %v1464, 0
      %v1471 = vsel %vm1136, %v1466, 0
      %1473 = vmatprep.subr.bf16.mxu0 0
      %1474 = vmatpush1.bf16.msra.mxu0 %v1471
      %1475 = vmatprep.subr.bf16.mxu0 0
      %1476 = vmatpush1.bf16.msra.mxu0 0
      %1477 = vmatprep.subr.bf16.mxu0 0
      %1478 = vmatpush1.bf16.msra.mxu0 0
      %1479 = vmatprep.subr.bf16.mxu0 0
      %1480 = vmatpush1.bf16.msra.mxu0 0
      %1481 = vmatprep.subr.bf16.mxu0 0
      %1482 = vmatpush1.bf16.msra.mxu0 0
      %1483 = vmatprep.subr.bf16.mxu0 0
      %1484 = vmatpush1.bf16.msra.mxu0 0
      %1485 = vmatprep.subr.bf16.mxu0 0
      %1486 = vmatpush1.bf16.msra.mxu0 0
      %1487 = vmatprep.subr.bf16.mxu0 0
      %1488 = vmatpush1.bf16.msra.mxu0 0
      %1489 = vmatprep.subr.bf16.mxu0 0
      %1490 = vmatpush1.bf16.msra.mxu0 0
      %1491 = vmatprep.subr.bf16.mxu0 0
      %1492 = vmatpush1.bf16.msra.mxu0 0
      %1493 = vmatprep.subr.bf16.mxu0 0
      %1494 = vmatpush1.bf16.msra.mxu0 0
      %1495 = vmatprep.subr.bf16.mxu0 0
      %1496 = vmatpush1.bf16.msra.mxu0 0
      %1497 = vmatprep.subr.bf16.mxu0 0
      %1498 = vmatpush1.bf16.msra.mxu0 0
      %1499 = vmatprep.subr.bf16.mxu0 0
      %1500 = vmatpush1.bf16.msra.mxu0 0
      %1501 = vmatprep.subr.bf16.mxu0 0
      %1502 = vmatpush1.bf16.msra.mxu0 0
      %1503 = vmatprep.subr.bf16.mxu0 0
      %1504 = vmatpush1.bf16.msra.mxu0 0
      %1505 = vmatprep.mubr.bf16.mxu0 0
      %1506 = vmatmul.mubr.bf16.gmra.mrb[0].mxu0 %v1468
      %v1507 = vpop.f32.mrb[0].mxu0
      %v1508 = vadd.f32 0.0, %v1507
      %v1509 = vpop.f32.mrb[0].mxu0
      %v1510 = vpop.f32.mrb[0].mxu0
      %v1511 = vpop.f32.mrb[0].mxu0
      %1512 = vdwg.mxu0
      %1514 = vrot.lane.b32.xlu0 %v1286, 8
      %v1515 = vpop.permute.xlu0 %1514
      %1518 = vrot.lane.b32.xlu0 %v1397, 16
      %v1519 = vpop.permute.xlu0 %1518
      %1522 = vrot.lane.b32.xlu0 %v1508, 24
      %v1523 = vpop.permute.xlu0 %1522
      %v1525 = vsel %vm1071, %v1175, %v1515
      %vm1526 = vcmask 130048
      %v1527 = vsel %vm1526, %v1525, %v1519
      %vm1528 = vcmask 195584
      %v1529 = vsel %vm1528, %v1527, %v1523
      %v1530 = vpack.c.bf16 %v1529, %v1529
      %v1531 = vld [vmem:[%s9] sm:$0xf]
      %v1532 = vld [vmem:[%s9 + $0x4] sm:$0xf]
      %v1533 = vld [vmem:[%s9 + $0x8] sm:$0xf]
      %v1534 = vld [vmem:[%s9 + $0xc] sm:$0xf]
      %v1539 = vunpack.c.l.b16 %v1531
      %v1540 = vunpack.c.l.b16 %v1532
      %v1541 = vunpack.c.l.b16 %v1533
      %v1542 = vunpack.c.l.b16 %v1534
      %v1543 = vpack.c.b16 %v1540, %v1539
      %v1544 = vpack.c.b16 %v1542, %v1541
      %v1548 = vsel %vm764, %v1530, 0
      %1550 = vmatprep.subr.bf16.mxu0 0
      %1551 = vmatpush1.bf16.msra.mxu0 %v1543
      %1552 = vmatprep.subr.bf16.mxu0 0
      %1553 = vmatpush1.bf16.msra.mxu0 %v1544
      %1554 = vmatprep.subr.bf16.mxu0 0
      %1555 = vmatpush1.bf16.msra.mxu0 0
      %1556 = vmatprep.subr.bf16.mxu0 0
      %1557 = vmatpush1.bf16.msra.mxu0 0
      %1558 = vmatprep.subr.bf16.mxu0 0
      %1559 = vmatpush1.bf16.msra.mxu0 0
      %1560 = vmatprep.subr.bf16.mxu0 0
      %1561 = vmatpush1.bf16.msra.mxu0 0
      %1562 = vmatprep.subr.bf16.mxu0 0
      %1563 = vmatpush1.bf16.msra.mxu0 0
      %1564 = vmatprep.subr.bf16.mxu0 0
      %1565 = vmatpush1.bf16.msra.mxu0 0
      %1566 = vmatprep.subr.bf16.mxu0 0
      %1567 = vmatpush1.bf16.msra.mxu0 0
      %1568 = vmatprep.subr.bf16.mxu0 0
      %1569 = vmatpush1.bf16.msra.mxu0 0
      %1570 = vmatprep.subr.bf16.mxu0 0
      %1571 = vmatpush1.bf16.msra.mxu0 0
      %1572 = vmatprep.subr.bf16.mxu0 0
      %1573 = vmatpush1.bf16.msra.mxu0 0
      %1574 = vmatprep.subr.bf16.mxu0 0
      %1575 = vmatpush1.bf16.msra.mxu0 0
      %1576 = vmatprep.subr.bf16.mxu0 0
      %1577 = vmatpush1.bf16.msra.mxu0 0
      %1578 = vmatprep.subr.bf16.mxu0 0
      %1579 = vmatpush1.bf16.msra.mxu0 0
      %1580 = vmatprep.subr.bf16.mxu0 0
      %1581 = vmatpush1.bf16.msra.mxu0 0
      %1582 = vmatprep.mubr.bf16.mxu0 0
      %1583 = vmatmul.mubr.bf16.gmra.mrb[0].mxu0 %v1548
      %v1584 = vpop.f32.mrb[0].mxu0
      %v1585 = vadd.f32 0.0, %v1584
      %v1586 = vpop.f32.mrb[0].mxu0
      %v1587 = vpop.f32.mrb[0].mxu0
      %v1588 = vpop.f32.mrb[0].mxu0
      %1589 = vdwg.mxu0
      %v1590 = vadd.f32 %v976, %v1585
      %v1591 = vld [vmem:[%s10] sm:$0x1]
      %v1593 = vlaneseq
      %v1594 = vshrl.u32 %v1593, 7
      %v1595 = vsub.s32 0, %v1594
      %v1596 = vrot.slane %v1591, %v1595
      %v1598 = vadd.f32 %v1590, %v1596
      %v1599 = vsel %vm764, %v1598, 0.0
      %1600 = vadd.xlane.f32.xlu0 %v1599
      %v1601 = vpop.xlane.xlu0 %1600
      %v1602 = vmul.f32 %v1601, %v768
      %v1603 = vsub.f32 %v1598, %v1602
      %v1604 = vmul.f32 %v1603, %v1603
      %v1605 = vsel %vm764, %v1604, 0.0
      %1606 = vadd.xlane.f32.xlu0 %v1605
      %v1607 = vpop.xlane.xlu0 %1606
      %v1608 = vmul.f32 %v1607, %v768
      %v1609 = vadd.f32 %v1608, 1e-05
      %v1610 = vrsqrt.pop %v1609
      %v1611 = vmul.f32 %v1603, %v1610
      %v1612 = vlaneseq
      %v1613 = vshrl.u32 %v1612, 7
      %v1614 = vsub.s32 2, %v1613
      %v1615 = vrot.slane %v762, %v1614
      %v1616 = vmul.f32 %v1611, %v1615
      %v1617 = vlaneseq
      %v1618 = vshrl.u32 %v1617, 7
      %v1619 = vsub.s32 2, %v1618
      %v1620 = vrot.slane %v763, %v1619
      %v1621 = vadd.f32 %v1616, %v1620
      %v1622 = vpack.c.bf16 %v1621, %v1621
      %v1623 = vld [vmem:[%s11] sm:$0xf]
      %v1624 = vld [vmem:[%s11 + $0x4] sm:$0xf]
      %v1625 = vld [vmem:[%s11 + $0x8] sm:$0xf]
      %v1626 = vld [vmem:[%s11 + $0xc] sm:$0xf]
      %v1627 = vld [vmem:[%s12] sm:$0x1]
      %v1629 = vlaneseq
      %v1630 = vshrl.u32 %v1629, 7
      %v1631 = vsub.s32 0, %v1630
      %v1632 = vrot.slane %v1627, %v1631
      %v1638 = vunpack.c.l.b16 %v1623
      %v1639 = vunpack.c.l.b16 %v1624
      %v1640 = vunpack.c.l.b16 %v1625
      %v1641 = vunpack.c.l.b16 %v1626
      %v1642 = vpack.c.b16 %v1639, %v1638
      %v1643 = vpack.c.b16 %v1641, %v1640
      %v1647 = vsel %vm764, %v1622, 0
      %1649 = vmatprep.subr.bf16.mxu0 0
      %1650 = vmatpush1.bf16.msra.mxu0 %v1642
      %1651 = vmatprep.subr.bf16.mxu0 0
      %1652 = vmatpush1.bf16.msra.mxu0 %v1643
      %1653 = vmatprep.subr.bf16.mxu0 0
      %1654 = vmatpush1.bf16.msra.mxu0 0
      %1655 = vmatprep.subr.bf16.mxu0 0
      %1656 = vmatpush1.bf16.msra.mxu0 0
      %1657 = vmatprep.subr.bf16.mxu0 0
      %1658 = vmatpush1.bf16.msra.mxu0 0
      %1659 = vmatprep.subr.bf16.mxu0 0
      %1660 = vmatpush1.bf16.msra.mxu0 0
      %1661 = vmatprep.subr.bf16.mxu0 0
      %1662 = vmatpush1.bf16.msra.mxu0 0
      %1663 = vmatprep.subr.bf16.mxu0 0
      %1664 = vmatpush1.bf16.msra.mxu0 0
      %1665 = vmatprep.subr.bf16.mxu0 0
      %1666 = vmatpush1.bf16.msra.mxu0 0
      %1667 = vmatprep.subr.bf16.mxu0 0
      %1668 = vmatpush1.bf16.msra.mxu0 0
      %1669 = vmatprep.subr.bf16.mxu0 0
      %1670 = vmatpush1.bf16.msra.mxu0 0
      %1671 = vmatprep.subr.bf16.mxu0 0
      %1672 = vmatpush1.bf16.msra.mxu0 0
      %1673 = vmatprep.subr.bf16.mxu0 0
      %1674 = vmatpush1.bf16.msra.mxu0 0
      %1675 = vmatprep.subr.bf16.mxu0 0
      %1676 = vmatpush1.bf16.msra.mxu0 0
      %1677 = vmatprep.subr.bf16.mxu0 0
      %1678 = vmatpush1.bf16.msra.mxu0 0
      %1679 = vmatprep.subr.bf16.mxu0 0
      %1680 = vmatpush1.bf16.msra.mxu0 0
      %1681 = vmatprep.mubr.bf16.mxu0 0
      %1682 = vmatmul.mubr.bf16.gmra.mrb[0].mxu0 %v1647
      %v1683 = vpop.f32.mrb[0].mxu0
      %v1684 = vadd.f32 %v1632, %v1683
      %v1685 = vpop.f32.mrb[0].mxu0
      %v1686 = vpop.f32.mrb[0].mxu0
      %v1687 = vpop.f32.mrb[0].mxu0
      %1688 = vdwg.mxu0
      %v1689 = vld [vmem:[%s13] sm:$0xf]
      %v1690 = vld [vmem:[%s13 + $0x4] sm:$0xf]
      %v1691 = vld [vmem:[%s13 + $0x8] sm:$0xf]
      %v1692 = vld [vmem:[%s13 + $0xc] sm:$0xf]
      %v1693 = vld [vmem:[%s14] sm:$0x1]
      %v1695 = vlaneseq
      %v1696 = vshrl.u32 %v1695, 7
      %v1697 = vsub.s32 0, %v1696
      %v1698 = vrot.slane %v1693, %v1697
      %v1704 = vunpack.c.l.b16 %v1689
      %v1705 = vunpack.c.l.b16 %v1690
      %v1706 = vunpack.c.l.b16 %v1691
      %v1707 = vunpack.c.l.b16 %v1692
      %v1708 = vpack.c.b16 %v1705, %v1704
      %v1709 = vpack.c.b16 %v1707, %v1706
      %1712 = vmatprep.subr.bf16.mxu0 0
      %1713 = vmatpush1.bf16.msra.mxu0 %v1708
      %1714 = vmatprep.subr.bf16.mxu0 0
      %1715 = vmatpush1.bf16.msra.mxu0 %v1709
      %1716 = vmatprep.subr.bf16.mxu0 0
      %1717 = vmatpush1.bf16.msra.mxu0 0
      %1718 = vmatprep.subr.bf16.mxu0 0
      %1719 = vmatpush1.bf16.msra.mxu0 0
      %1720 = vmatprep.subr.bf16.mxu0 0
      %1721 = vmatpush1.bf16.msra.mxu0 0
      %1722 = vmatprep.subr.bf16.mxu0 0
      %1723 = vmatpush1.bf16.msra.mxu0 0
      %1724 = vmatprep.subr.bf16.mxu0 0
      %1725 = vmatpush1.bf16.msra.mxu0 0
      %1726 = vmatprep.subr.bf16.mxu0 0
      %1727 = vmatpush1.bf16.msra.mxu0 0
      %1728 = vmatprep.subr.bf16.mxu0 0
      %1729 = vmatpush1.bf16.msra.mxu0 0
      %1730 = vmatprep.subr.bf16.mxu0 0
      %1731 = vmatpush1.bf16.msra.mxu0 0
      %1732 = vmatprep.subr.bf16.mxu0 0
      %1733 = vmatpush1.bf16.msra.mxu0 0
      %1734 = vmatprep.subr.bf16.mxu0 0
      %1735 = vmatpush1.bf16.msra.mxu0 0
      %1736 = vmatprep.subr.bf16.mxu0 0
      %1737 = vmatpush1.bf16.msra.mxu0 0
      %1738 = vmatprep.subr.bf16.mxu0 0
      %1739 = vmatpush1.bf16.msra.mxu0 0
      %1740 = vmatprep.subr.bf16.mxu0 0
      %1741 = vmatpush1.bf16.msra.mxu0 0
      %1742 = vmatprep.subr.bf16.mxu0 0
      %1743 = vmatpush1.bf16.msra.mxu0 0
      %1744 = vmatprep.mubr.bf16.mxu0 0
      %1745 = vmatmul.mubr.bf16.gmra.mrb[0].mxu0 %v1647
      %v1746 = vpop.f32.mrb[0].mxu0
      %v1747 = vadd.f32 %v1698, %v1746
      %v1748 = vpop.f32.mrb[0].mxu0
      %v1749 = vpop.f32.mrb[0].mxu0
      %v1750 = vpop.f32.mrb[0].mxu0
      %1751 = vdwg.mxu0
      %v1752 = vxor.u32 %v1747, 2147483648
      %v1753 = vmul.f32 %v1752, 1.442695
      %v1754 = vpow.pop %v1753
      %v1755 = vadd.f32 %v1754, 1.0
      %v1756 = vrcp.pop %v1755
      %v1757 = vmul.f32 1.0, %v1756
      %v1758 = vmul.f32 %v1684, %v1757
      %v1759 = vlaneseq
      %v1760 = vshrl.u32 %v1759, 7
      %v1761 = vld [vmem:[%s15] sm:$0x7]
      %v1762 = vrot.slane %v1758, 7
      %v1763 = vadd.s32 %v1760, 4294967295
      %vm1764 = vcmp.ge.s32.totalorder %v1763, 0
      %vm1765 = vcmp.lt.s32.totalorder %v1763, 8
      %vm1766 = vmand %vm1764, %vm1765
      %v1767 = vsel %vm1766, 1, 0
      %vm1768 = vcmp.eq.s32.totalorder %v1767, 1
      %v1769 = vsel %vm1768, %v1762, 0.0
      %v1770 = vlaneseq
      %v1771 = vshrl.u32 %v1770, 7
      %v1772 = vsub.s32 0, %v1771
      %v1773 = vrot.slane %v1761, %v1772
      %v1774 = vmul.f32 %v1769, %v1773
      %v1775 = vadd.f32 %v1774, 0.0
      %v1776 = vlaneseq
      %v1777 = vshrl.u32 %v1776, 7
      %v1778 = vsub.s32 1, %v1777
      %v1779 = vrot.slane %v1761, %v1778
      %v1780 = vmul.f32 %v1758, %v1779
      %v1781 = vadd.f32 %v1775, %v1780
      %v1782 = vrot.slane %v1758, 1
      %v1783 = vadd.s32 %v1760, 1
      %vm1784 = vcmp.ge.s32.totalorder %v1783, 0
      %vm1785 = vcmp.lt.s32.totalorder %v1783, 8
      %vm1786 = vmand %vm1784, %vm1785
      %v1787 = vsel %vm1786, 1, 0
      %vm1788 = vcmp.eq.s32.totalorder %v1787, 1
      %v1789 = vsel %vm1788, %v1782, 0.0
      %v1790 = vlaneseq
      %v1791 = vshrl.u32 %v1790, 7
      %v1792 = vsub.s32 2, %v1791
      %v1793 = vrot.slane %v1761, %v1792
      %v1794 = vmul.f32 %v1789, %v1793
      %v1795 = vadd.f32 %v1781, %v1794
      %v1796 = vld [vmem:[%s16] sm:$0x1]
      %v1798 = vlaneseq
      %v1799 = vshrl.u32 %v1798, 7
      %v1800 = vsub.s32 0, %v1799
      %v1801 = vrot.slane %v1796, %v1800
      %v1803 = vadd.f32 %v1795, %v1801
      %v1804 = vxor.u32 %v1803, 2147483648
      %v1805 = vmul.f32 %v1804, 1.442695
      %v1806 = vpow.pop %v1805
      %v1807 = vadd.f32 %v1806, 1.0
      %v1808 = vrcp.pop %v1807
      %v1809 = vmul.f32 1.0, %v1808
      %v1810 = vmul.f32 %v1803, %v1809
      %v1811 = vpack.c.bf16 %v1810, %v1810
      %v1812 = vld [vmem:[%s17] sm:$0xf]
      %v1813 = vld [vmem:[%s17 + $0x4] sm:$0xf]
      %v1814 = vld [vmem:[%s17 + $0x8] sm:$0xf]
      %v1815 = vld [vmem:[%s17 + $0xc] sm:$0xf]
      %v1820 = vunpack.c.l.b16 %v1812
      %v1821 = vunpack.c.l.b16 %v1813
      %v1822 = vunpack.c.l.b16 %v1814
      %v1823 = vunpack.c.l.b16 %v1815
      %v1824 = vpack.c.b16 %v1821, %v1820
      %v1825 = vpack.c.b16 %v1823, %v1822
      %v1829 = vsel %vm764, %v1811, 0
      %1831 = vmatprep.subr.bf16.mxu0 0
      %1832 = vmatpush1.bf16.msra.mxu0 %v1824
      %1833 = vmatprep.subr.bf16.mxu0 0
      %1834 = vmatpush1.bf16.msra.mxu0 %v1825
      %1835 = vmatprep.subr.bf16.mxu0 0
      %1836 = vmatpush1.bf16.msra.mxu0 0
      %1837 = vmatprep.subr.bf16.mxu0 0
      %1838 = vmatpush1.bf16.msra.mxu0 0
      %1839 = vmatprep.subr.bf16.mxu0 0
      %1840 = vmatpush1.bf16.msra.mxu0 0
      %1841 = vmatprep.subr.bf16.mxu0 0
      %1842 = vmatpush1.bf16.msra.mxu0 0
      %1843 = vmatprep.subr.bf16.mxu0 0
      %1844 = vmatpush1.bf16.msra.mxu0 0
      %1845 = vmatprep.subr.bf16.mxu0 0
      %1846 = vmatpush1.bf16.msra.mxu0 0
      %1847 = vmatprep.subr.bf16.mxu0 0
      %1848 = vmatpush1.bf16.msra.mxu0 0
      %1849 = vmatprep.subr.bf16.mxu0 0
      %1850 = vmatpush1.bf16.msra.mxu0 0
      %1851 = vmatprep.subr.bf16.mxu0 0
      %1852 = vmatpush1.bf16.msra.mxu0 0
      %1853 = vmatprep.subr.bf16.mxu0 0
      %1854 = vmatpush1.bf16.msra.mxu0 0
      %1855 = vmatprep.subr.bf16.mxu0 0
      %1856 = vmatpush1.bf16.msra.mxu0 0
      %1857 = vmatprep.subr.bf16.mxu0 0
      %1858 = vmatpush1.bf16.msra.mxu0 0
      %1859 = vmatprep.subr.bf16.mxu0 0
      %1860 = vmatpush1.bf16.msra.mxu0 0
      %1861 = vmatprep.subr.bf16.mxu0 0
      %1862 = vmatpush1.bf16.msra.mxu0 0
      %1863 = vmatprep.mubr.bf16.mxu0 0
      %1864 = vmatmul.mubr.bf16.gmra.mrb[0].mxu0 %v1829
      %v1865 = vpop.f32.mrb[0].mxu0
      %v1866 = vadd.f32 0.0, %v1865
      %v1867 = vpop.f32.mrb[0].mxu0
      %v1868 = vpop.f32.mrb[0].mxu0
      %v1869 = vpop.f32.mrb[0].mxu0
      %1870 = vdwg.mxu0
      %v1871 = vadd.f32 %v1598, %v1866
      %v1872 = vld [vmem:[%s18] sm:$0x1]
      %v1874 = vlaneseq
      %v1875 = vshrl.u32 %v1874, 7
      %v1876 = vsub.s32 0, %v1875
      %v1877 = vrot.slane %v1872, %v1876
      %v1879 = vadd.f32 %v1871, %v1877
      %v1880 = vsel %vm764, %v1879, 0.0
      %1881 = vadd.xlane.f32.xlu0 %v1880
      %v1882 = vpop.xlane.xlu0 %1881
      %v1883 = vmul.f32 %v1882, %v768
      %v1884 = vsub.f32 %v1879, %v1883
      %v1885 = vmul.f32 %v1884, %v1884
      %v1886 = vsel %vm764, %v1885, 0.0
      %1887 = vadd.xlane.f32.xlu0 %v1886
      %v1888 = vpop.xlane.xlu0 %1887
      %v1889 = vmul.f32 %v1888, %v768
      %v1890 = vadd.f32 %v1889, 1e-05
      %v1891 = vrsqrt.pop %v1890
      %v1892 = vmul.f32 %v1884, %v1891
      %v1893 = vlaneseq
      %v1894 = vshrl.u32 %v1893, 7
      %v1895 = vsub.s32 3, %v1894
      %v1896 = vrot.slane %v762, %v1895
      %v1897 = vmul.f32 %v1892, %v1896
      %v1898 = vlaneseq
      %v1899 = vshrl.u32 %v1898, 7
      %v1900 = vsub.s32 3, %v1899
      %v1901 = vrot.slane %v763, %v1900
      %v1902 = vadd.f32 %v1897, %v1901
      %v1903 = vpack.c.bf16 %v1902, %v1902
      %v1904 = vld [vmem:[%s19] sm:$0xf]
      %v1905 = vld [vmem:[%s19 + $0x4] sm:$0xf]
      %v1906 = vld [vmem:[%s19 + $0x8] sm:$0xf]
      %v1907 = vld [vmem:[%s19 + $0xc] sm:$0xf]
      %v1908 = vld [vmem:[%s20] sm:$0x1]
      %v1910 = vlaneseq
      %v1911 = vshrl.u32 %v1910, 7
      %v1912 = vsub.s32 0, %v1911
      %v1913 = vrot.slane %v1908, %v1912
      %v1919 = vunpack.c.l.b16 %v1904
      %v1920 = vunpack.c.l.b16 %v1905
      %v1921 = vunpack.c.l.b16 %v1906
      %v1922 = vunpack.c.l.b16 %v1907
      %v1923 = vpack.c.b16 %v1920, %v1919
      %v1924 = vpack.c.b16 %v1922, %v1921
      %v1928 = vsel %vm764, %v1903, 0
      %1930 = vmatprep.subr.bf16.mxu0 0
      %1931 = vmatpush1.bf16.msra.mxu0 %v1923
      %1932 = vmatprep.subr.bf16.mxu0 0
      %1933 = vmatpush1.bf16.msra.mxu0 %v1924
      %1934 = vmatprep.subr.bf16.mxu0 0
      %1935 = vmatpush1.bf16.msra.mxu0 0
      %1936 = vmatprep.subr.bf16.mxu0 0
      %1937 = vmatpush1.bf16.msra.mxu0 0
      %1938 = vmatprep.subr.bf16.mxu0 0
      %1939 = vmatpush1.bf16.msra.mxu0 0
      %1940 = vmatprep.subr.bf16.mxu0 0
      %1941 = vmatpush1.bf16.msra.mxu0 0
      %1942 = vmatprep.subr.bf16.mxu0 0
      %1943 = vmatpush1.bf16.msra.mxu0 0
      %1944 = vmatprep.subr.bf16.mxu0 0
      %1945 = vmatpush1.bf16.msra.mxu0 0
      %1946 = vmatprep.subr.bf16.mxu0 0
      %1947 = vmatpush1.bf16.msra.mxu0 0
      %1948 = vmatprep.subr.bf16.mxu0 0
      %1949 = vmatpush1.bf16.msra.mxu0 0
      %1950 = vmatprep.subr.bf16.mxu0 0
      %1951 = vmatpush1.bf16.msra.mxu0 0
      %1952 = vmatprep.subr.bf16.mxu0 0
      %1953 = vmatpush1.bf16.msra.mxu0 0
      %1954 = vmatprep.subr.bf16.mxu0 0
      %1955 = vmatpush1.bf16.msra.mxu0 0
      %1956 = vmatprep.subr.bf16.mxu0 0
      %1957 = vmatpush1.bf16.msra.mxu0 0
      %1958 = vmatprep.subr.bf16.mxu0 0
      %1959 = vmatpush1.bf16.msra.mxu0 0
      %1960 = vmatprep.subr.bf16.mxu0 0
      %1961 = vmatpush1.bf16.msra.mxu0 0
      %1962 = vmatprep.mubr.bf16.mxu0 0
      %1963 = vmatmul.mubr.bf16.gmra.mrb[0].mxu0 %v1928
      %v1964 = vpop.f32.mrb[0].mxu0
      %v1965 = vadd.f32 %v1913, %v1964
      %v1966 = vpop.f32.mrb[0].mxu0
      %v1967 = vpop.f32.mrb[0].mxu0
      %v1968 = vpop.f32.mrb[0].mxu0
      %1969 = vdwg.mxu0
      %v1970 = vxor.u32 %v1965, 2147483648
      %v1971 = vmul.f32 %v1970, 1.442695
      %v1972 = vpow.pop %v1971
      %v1973 = vadd.f32 %v1972, 1.0
      %v1974 = vrcp.pop %v1973
      %v1975 = vmul.f32 1.0, %v1974
      %v1976 = vmul.f32 %v1965, %v1975
      %v1977 = vpack.c.bf16 %v1976, %v1976
      %v1978 = vld [vmem:[%s21] sm:$0xf]
      %v1979 = vld [vmem:[%s21 + $0x4] sm:$0xf]
      %v1980 = vld [vmem:[%s21 + $0x8] sm:$0xf]
      %v1981 = vld [vmem:[%s21 + $0xc] sm:$0xf]
      %v1982 = vld [vmem:[%s21 + $0x10] sm:$0xf]
      %v1983 = vld [vmem:[%s21 + $0x14] sm:$0xf]
      %v1984 = vld [vmem:[%s21 + $0x18] sm:$0xf]
      %v1985 = vld [vmem:[%s21 + $0x1c] sm:$0xf]
      %v1986 = vld [vmem:[%s21 + $0x20] sm:$0xf]
      %v1987 = vld [vmem:[%s21 + $0x24] sm:$0xf]
      %v1988 = vld [vmem:[%s21 + $0x28] sm:$0xf]
      %v1989 = vld [vmem:[%s21 + $0x2c] sm:$0xf]
      %v1990 = vld [vmem:[%s21 + $0x30] sm:$0xf]
      %v1991 = vld [vmem:[%s21 + $0x34] sm:$0xf]
      %v1992 = vld [vmem:[%s21 + $0x38] sm:$0xf]
      %v1993 = vld [vmem:[%s21 + $0x3c] sm:$0xf]
      %v1994 = vld [vmem:[%s22] sm:$0x1]
      %v1996 = vlaneseq
      %v1997 = vshrl.u32 %v1996, 7
      %v1998 = vsub.s32 0, %v1997
      %v1999 = vrot.slane %v1994, %v1998
      %v2017 = vunpack.c.l.b16 %v1978
      %v2018 = vunpack.c.l.b16 %v1979
      %v2019 = vunpack.c.l.b16 %v1980
      %v2020 = vunpack.c.l.b16 %v1981
      %v2021 = vunpack.c.l.b16 %v1982
      %v2022 = vunpack.c.l.b16 %v1983
      %v2023 = vunpack.c.l.b16 %v1984
      %v2024 = vunpack.c.l.b16 %v1985
      %v2025 = vunpack.c.l.b16 %v1986
      %v2026 = vunpack.c.l.b16 %v1987
      %v2027 = vunpack.c.l.b16 %v1988
      %v2028 = vunpack.c.l.b16 %v1989
      %v2029 = vunpack.c.l.b16 %v1990
      %v2030 = vunpack.c.l.b16 %v1991
      %v2031 = vunpack.c.l.b16 %v1992
      %v2032 = vunpack.c.l.b16 %v1993
      %v2033 = vpack.c.b16 %v2018, %v2017
      %v2034 = vpack.c.b16 %v2020, %v2019
      %v2035 = vpack.c.b16 %v2022, %v2021
      %v2036 = vpack.c.b16 %v2024, %v2023
      %v2037 = vpack.c.b16 %v2026, %v2025
      %v2038 = vpack.c.b16 %v2028, %v2027
      %v2039 = vpack.c.b16 %v2030, %v2029
      %v2040 = vpack.c.b16 %v2032, %v2031
      %2049 = vmatprep.subr.bf16.mxu0 0
      %2050 = vmatpush1.bf16.msra.mxu0 %v2033
      %2051 = vmatprep.subr.bf16.mxu0 0
      %2052 = vmatpush1.bf16.msra.mxu0 %v2034
      %2053 = vmatprep.subr.bf16.mxu0 0
      %2054 = vmatpush1.bf16.msra.mxu0 %v2035
      %2055 = vmatprep.subr.bf16.mxu0 0
      %2056 = vmatpush1.bf16.msra.mxu0 %v2036
      %2057 = vmatprep.subr.bf16.mxu0 0
      %2058 = vmatpush1.bf16.msra.mxu0 %v2037
      %2059 = vmatprep.subr.bf16.mxu0 0
      %2060 = vmatpush1.bf16.msra.mxu0 %v2038
      %2061 = vmatprep.subr.bf16.mxu0 0
      %2062 = vmatpush1.bf16.msra.mxu0 %v2039
      %2063 = vmatprep.subr.bf16.mxu0 0
      %2064 = vmatpush1.bf16.msra.mxu0 %v2040
      %2065 = vmatprep.subr.bf16.mxu0 0
      %2066 = vmatpush1.bf16.msra.mxu0 0
      %2067 = vmatprep.subr.bf16.mxu0 0
      %2068 = vmatpush1.bf16.msra.mxu0 0
      %2069 = vmatprep.subr.bf16.mxu0 0
      %2070 = vmatpush1.bf16.msra.mxu0 0
      %2071 = vmatprep.subr.bf16.mxu0 0
      %2072 = vmatpush1.bf16.msra.mxu0 0
      %2073 = vmatprep.subr.bf16.mxu0 0
      %2074 = vmatpush1.bf16.msra.mxu0 0
      %2075 = vmatprep.subr.bf16.mxu0 0
      %2076 = vmatpush1.bf16.msra.mxu0 0
      %2077 = vmatprep.subr.bf16.mxu0 0
      %2078 = vmatpush1.bf16.msra.mxu0 0
      %2079 = vmatprep.subr.bf16.mxu0 0
      %2080 = vmatpush1.bf16.msra.mxu0 0
      %2081 = vmatprep.mubr.bf16.mxu0 0
      %2082 = vmatmul.mubr.bf16.gmra.mrb[0].mxu0 %v1977
      %v2083 = vpop.f32.mrb[0].mxu0
      %v2084 = vadd.f32 %v1999, %v2083
      %v2085 = vpop.f32.mrb[0].mxu0
      %v2086 = vpop.f32.mrb[0].mxu0
      %v2087 = vpop.f32.mrb[0].mxu0
      %2088 = vdwg.mxu0
      %v2089 = vmul.f32 %v2084, 0.5
      %v2090 = vadd.f32 %v1879, %v2089
      %v2091 = vsel %vm764, %v2090, 0.0
      %2092 = vadd.xlane.f32.xlu0 %v2091
      %v2093 = vpop.xlane.xlu0 %2092
      %v2094 = vmul.f32 %v2093, %v768
      %v2095 = vsub.f32 %v2090, %v2094
      %v2096 = vmul.f32 %v2095, %v2095
      %v2097 = vsel %vm764, %v2096, 0.0
      %2098 = vadd.xlane.f32.xlu0 %v2097
      %v2099 = vpop.xlane.xlu0 %2098
      %v2100 = vmul.f32 %v2099, %v768
      %v2101 = vadd.f32 %v2100, 1e-05
      %v2102 = vrsqrt.pop %v2101
      %v2103 = vmul.f32 %v2095, %v2102
      %v2104 = vlaneseq
      %v2105 = vshrl.u32 %v2104, 7
      %v2106 = vsub.s32 4, %v2105
      %v2107 = vrot.slane %v762, %v2106
      %v2108 = vmul.f32 %v2103, %v2107
      %v2109 = vlaneseq
      %v2110 = vshrl.u32 %v2109, 7
      %v2111 = vsub.s32 4, %v2110
      %v2112 = vrot.slane %v763, %v2111
      %v2113 = vadd.f32 %v2108, %v2112
      %2114 = vst.msk [vmem:[%s759] sm:$0xff] %vm764, %v2113
      %p2115 = scmp.lt.s32.totalorder %s36, 1
      %s2116 = scalar_select %p2115, %s36, 1
      %s2117 = smul.addr %s2116, 8
      %s2118 = scalar_lea.vmem %s25, %s2117
      // Predicated region
      $region121: #{conformer_ordinal_forward.5} parent=119 // pred_check
        %p2119 = pneg %p584
      $region122: #{conformer_ordinal_forward.5} parent=119 // pred_check_branch
        %2121 = sbr.rel (%p2119) target = $region124
      $region123: #{conformer_ordinal_forward.5} parent=119 // pred_region
        _
      $region124: #{conformer_ordinal_forward.5} parent=119 // pred_fallthru
        _
    $region120: #{conformer_ordinal_forward.5} parent=5 // pred_fallthru
      _
    %p2122 = scmp.le.s32.totalorder 2, %s31
    // Predicated region
    $region125: #{conformer_ordinal_forward.5} parent=5 // pred_check
      %p2123 = pneg %p2122
    $region126: #{conformer_ordinal_forward.5} parent=5 // pred_check_branch
      %2125 = sbr.rel (%p2123) target = $region128
    $region127: #{conformer_ordinal_forward.5} parent=5 // pred_region
      %s2126 = ssub.s32 %s31, 2
      // Predicated region
      $region129: #{conformer_ordinal_forward.5} parent=127 // pred_check
        %p2127 = pneg %p590
      $region130: #{conformer_ordinal_forward.5} parent=127 // pred_check_branch
        %2129 = sbr.rel (%p2127) target = $region132
      $region131: #{conformer_ordinal_forward.5} parent=127 // pred_region
        %p2130 = scmp.lt.s32.totalorder %s37, 1
        %s2131 = scalar_select %p2130, %s37, 1
        %s2132 = smul.addr %s2131, 8
        %s2133 = scalar_lea.vmem %s25, %s2132
      $region132: #{conformer_ordinal_forward.5} parent=127 // pred_fallthru
        _
    $region128: #{conformer_ordinal_forward.5} parent=5 // pred_fallthru
      _
  $region6: #{conformer_ordinal_forward.5} parent=0 // loop_footer
    %s35 = sadd.s32 1, %s31
  $region7: #{conformer_ordinal_forward.5} parent=0 // loop_footer_branch
    %30 = sbr.rel target = $region3
  $region8: #{conformer_ordinal_forward.5} parent=0 // loop_exit
    _

// kernel: conformer_ordinal_forward.7
$region0: #{conformer_ordinal_forward.7}
  #allocation0 [shape = 'u32[]', space=smem, size = 0x4, offset = 0x4, fixed_abs, tag = 'smem constant byte address 0x4 - core index']
  #allocation1 [shape = 'u32[144,128]{1,0:T(1,128)}', space=vmem, size = 0x12000, scoped, tag = 'internal scratch']
  #allocation2 [shape = 'f32[1,1]{1,0:T(1,128)S(1)}', space=vmem, size = 0x200, scoped, tag = 'scoped memory for conformer_ordinal_forward.7']
  %s0 = inlined_call_operand.vmem [shape: f32[2,256], index: 0, kind: input, shape index: {}]
  %s1 = inlined_call_operand.vmem [shape: bf16[256,64], index: 1, kind: input, shape index: {}]
  %s2 = inlined_call_operand.vmem [shape: f32[1,64], index: 2, kind: input, shape index: {}]
  %s3 = inlined_call_operand.vmem [shape: bf16[64,17], index: 3, kind: input, shape index: {}]
  %s4 = inlined_call_operand.vmem [shape: f32[1,17], index: 4, kind: input, shape index: {}]
  %s5 = inlined_call_operand.vmem [shape: bf16[17,1], index: 5, kind: input, shape index: {}]
  %s6 = inlined_call_operand.<no memory space> [shape: f32[1,1], index: 6, kind: input, shape index: {}]
  %s7 = inlined_call_operand.vmem [shape: f32[1,4], index: 7, kind: input, shape index: {}]
  %s8 = inlined_call_operand.hbm [shape: f32[2,5], index: 8, kind: output, shape index: {}]
  %s9 = sld [smem:[#allocation0]]
  $region42: #{conformer_ordinal_forward.7} parent=0
    _
  %s11 = ssub.s32 1, %s9
  %s12 = scalar_select 0, %s11, %s9
  %v13 = vstv %s6
  %14 = vst [vmem:[#allocation2] sm:$0x1] %v13
  $region1: #{conformer_ordinal_forward.7} parent=0
    #allocation3 [shape = 'u8[1024]{0}', space=vmem, size = 0x400, scoped, tag = 'output window, operand 0, single buffered']
    #allocation4 [shape = 's32[1]{0}', space=sflag, size = 0x4, scoped, tag = 'scoped memory for conformer_ordinal_forward.7']
    %15 = vsyncpa [#allocation4], 0
    // Predicated region
    $region2: #{conformer_ordinal_forward.7} parent=1 // pred_check
      _
    $region3: #{conformer_ordinal_forward.7} parent=1 // pred_check_branch
      %17 = sbr.rel (0) target = $region5
    $region4: #{conformer_ordinal_forward.7} parent=1 // pred_region
      _
    $region5: #{conformer_ordinal_forward.7} parent=1 // pred_fallthru
      _
    // Predicated region
    $region6: #{conformer_ordinal_forward.7} parent=1 // pred_check
      _
    $region7: #{conformer_ordinal_forward.7} parent=1 // pred_check_branch
      %19 = sbr.rel (0) target = $region9
    $region8: #{conformer_ordinal_forward.7} parent=1 // pred_region
      _
    $region9: #{conformer_ordinal_forward.7} parent=1 // pred_fallthru
      _
    // Predicated region
    $region10: #{conformer_ordinal_forward.7} parent=1 // pred_check
      _
    $region11: #{conformer_ordinal_forward.7} parent=1 // pred_check_branch
      %21 = sbr.rel (0) target = $region13
    $region12: #{conformer_ordinal_forward.7} parent=1 // pred_region
      _
    $region13: #{conformer_ordinal_forward.7} parent=1 // pred_fallthru
      _
    // Predicated region
    $region14: #{conformer_ordinal_forward.7} parent=1 // pred_check
      _
    $region15: #{conformer_ordinal_forward.7} parent=1 // pred_check_branch
      %23 = sbr.rel (0) target = $region17
    $region16: #{conformer_ordinal_forward.7} parent=1 // pred_region
      _
    $region17: #{conformer_ordinal_forward.7} parent=1 // pred_fallthru
      _
    // Predicated region
    $region18: #{conformer_ordinal_forward.7} parent=1 // pred_check
      _
    $region19: #{conformer_ordinal_forward.7} parent=1 // pred_check_branch
      %25 = sbr.rel (0) target = $region21
    $region20: #{conformer_ordinal_forward.7} parent=1 // pred_region
      _
    $region21: #{conformer_ordinal_forward.7} parent=1 // pred_fallthru
      _
    // Predicated region
    $region22: #{conformer_ordinal_forward.7} parent=1 // pred_check
      _
    $region23: #{conformer_ordinal_forward.7} parent=1 // pred_check_branch
      %27 = sbr.rel (0) target = $region25
    $region24: #{conformer_ordinal_forward.7} parent=1 // pred_region
      _
    $region25: #{conformer_ordinal_forward.7} parent=1 // pred_fallthru
      _
    // Predicated region
    $region26: #{conformer_ordinal_forward.7} parent=1 // pred_check
      _
    $region27: #{conformer_ordinal_forward.7} parent=1 // pred_check_branch
      %29 = sbr.rel (0) target = $region29
    $region28: #{conformer_ordinal_forward.7} parent=1 // pred_region
      _
    $region29: #{conformer_ordinal_forward.7} parent=1 // pred_fallthru
      _
    // Predicated region
    $region30: #{conformer_ordinal_forward.7} parent=1 // pred_check
      _
    $region31: #{conformer_ordinal_forward.7} parent=1 // pred_check_branch
      %31 = sbr.rel (0) target = $region33
    $region32: #{conformer_ordinal_forward.7} parent=1 // pred_region
      _
    $region33: #{conformer_ordinal_forward.7} parent=1 // pred_fallthru
      _
    %v33 = vld [vmem:[%s0] sm:$0xf]
    %v36 = vunpack.c.l.s4 1983009808
    %v37 = vunpack.c.0.s8 %v36
    %v38 = vlaneseq
    %v39 = vshrl.u32 %v38, 7
    %v40 = vsub.s32 %v37, %v39
    %v41 = vrot.slane %v33, %v40
    %v42 = vcombine.high %v41, %v41
    %v45 = vpack.c.bf16 %v41, %v41
    %v46 = vpack.c.bf16 %v42, %v42
    %v47 = vld [vmem:[%s1] sm:$0xf]
    %v48 = vld [vmem:[%s1 + $0x4] sm:$0xf]
    %v49 = vld [vmem:[%s1 + $0x8] sm:$0xf]
    %v50 = vld [vmem:[%s1 + $0xc] sm:$0xf]
    %v51 = vld [vmem:[%s1 + $0x10] sm:$0xf]
    %v52 = vld [vmem:[%s1 + $0x14] sm:$0xf]
    %v53 = vld [vmem:[%s1 + $0x18] sm:$0xf]
    %v54 = vld [vmem:[%s1 + $0x1c] sm:$0xf]
    %v55 = vld [vmem:[%s1 + $0x20] sm:$0xf]
    %v56 = vld [vmem:[%s1 + $0x24] sm:$0xf]
    %v57 = vld [vmem:[%s1 + $0x28] sm:$0xf]
    %v58 = vld [vmem:[%s1 + $0x2c] sm:$0xf]
    %v59 = vld [vmem:[%s1 + $0x30] sm:$0xf]
    %v60 = vld [vmem:[%s1 + $0x34] sm:$0xf]
    %v61 = vld [vmem:[%s1 + $0x38] sm:$0xf]
    %v62 = vld [vmem:[%s1 + $0x3c] sm:$0xf]
    %v63 = vld [vmem:[%s1 + $0x40] sm:$0xf]
    %v64 = vld [vmem:[%s1 + $0x44] sm:$0xf]
    %v65 = vld [vmem:[%s1 + $0x48] sm:$0xf]
    %v66 = vld [vmem:[%s1 + $0x4c] sm:$0xf]
    %v67 = vld [vmem:[%s1 + $0x50] sm:$0xf]
    %v68 = vld [vmem:[%s1 + $0x54] sm:$0xf]
    %v69 = vld [vmem:[%s1 + $0x58] sm:$0xf]
    %v70 = vld [vmem:[%s1 + $0x5c] sm:$0xf]
    %v71 = vld [vmem:[%s1 + $0x60] sm:$0xf]
    %v72 = vld [vmem:[%s1 + $0x64] sm:$0xf]
    %v73 = vld [vmem:[%s1 + $0x68] sm:$0xf]
    %v74 = vld [vmem:[%s1 + $0x6c] sm:$0xf]
    %v75 = vld [vmem:[%s1 + $0x70] sm:$0xf]
    %v76 = vld [vmem:[%s1 + $0x74] sm:$0xf]
    %v77 = vld [vmem:[%s1 + $0x78] sm:$0xf]
    %v78 = vld [vmem:[%s1 + $0x7c] sm:$0xf]
    %v79 = vld [vmem:[%s2] sm:$0x1]
    %v81 = vlaneseq
    %v82 = vshrl.u32 %v81, 7
    %v83 = vsub.s32 0, %v82
    %v84 = vrot.slane %v79, %v83
    %v118 = vunpack.c.l.b16 %v47
    %v119 = vunpack.c.l.b16 %v48
    %v120 = vunpack.c.l.b16 %v49
    %v121 = vunpack.c.l.b16 %v50
    %v122 = vunpack.c.l.b16 %v51
    %v123 = vunpack.c.l.b16 %v52
    %v124 = vunpack.c.l.b16 %v53
    %v125 = vunpack.c.l.b16 %v54
    %v126 = vunpack.c.l.b16 %v55
    %v127 = vunpack.c.l.b16 %v56
    %v128 = vunpack.c.l.b16 %v57
    %v129 = vunpack.c.l.b16 %v58
    %v130 = vunpack.c.l.b16 %v59
    %v131 = vunpack.c.l.b16 %v60
    %v132 = vunpack.c.l.b16 %v61
    %v133 = vunpack.c.l.b16 %v62
    %v134 = vunpack.c.l.b16 %v63
    %v135 = vunpack.c.l.b16 %v64
    %v136 = vunpack.c.l.b16 %v65
    %v137 = vunpack.c.l.b16 %v66
    %v138 = vunpack.c.l.b16 %v67
    %v139 = vunpack.c.l.b16 %v68
    %v140 = vunpack.c.l.b16 %v69
    %v141 = vunpack.c.l.b16 %v70
    %v142 = vunpack.c.l.b16 %v71
    %v143 = vunpack.c.l.b16 %v72
    %v144 = vunpack.c.l.b16 %v73
    %v145 = vunpack.c.l.b16 %v74
    %v146 = vunpack.c.l.b16 %v75
    %v147 = vunpack.c.l.b16 %v76
    %v148 = vunpack.c.l.b16 %v77
    %v149 = vunpack.c.l.b16 %v78
    %v150 = vpack.c.b16 %v119, %v118
    %v151 = vpack.c.b16 %v121, %v120
    %v152 = vpack.c.b16 %v123, %v122
    %v153 = vpack.c.b16 %v125, %v124
    %v154 = vpack.c.b16 %v127, %v126
    %v155 = vpack.c.b16 %v129, %v128
    %v156 = vpack.c.b16 %v131, %v130
    %v157 = vpack.c.b16 %v133, %v132
    %v158 = vpack.c.b16 %v135, %v134
    %v159 = vpack.c.b16 %v137, %v136
    %v160 = vpack.c.b16 %v139, %v138
    %v161 = vpack.c.b16 %v141, %v140
    %v162 = vpack.c.b16 %v143, %v142
    %v163 = vpack.c.b16 %v145, %v144
    %v164 = vpack.c.b16 %v147, %v146
    %v165 = vpack.c.b16 %v149, %v148
    %182 = vmatprep.subr.bf16.mxu0 0
    %183 = vmatpush1.bf16.msra.mxu0 %v150
    %184 = vmatprep.subr.bf16.mxu0 0
    %185 = vmatpush1.bf16.msra.mxu0 %v151
    %186 = vmatprep.subr.bf16.mxu0 0
    %187 = vmatpush1.bf16.msra.mxu0 %v152
    %188 = vmatprep.subr.bf16.mxu0 0
    %189 = vmatpush1.bf16.msra.mxu0 %v153
    %190 = vmatprep.subr.bf16.mxu0 0
    %191 = vmatpush1.bf16.msra.mxu0 %v154
    %192 = vmatprep.subr.bf16.mxu0 0
    %193 = vmatpush1.bf16.msra.mxu0 %v155
    %194 = vmatprep.subr.bf16.mxu0 0
    %195 = vmatpush1.bf16.msra.mxu0 %v156
    %196 = vmatprep.subr.bf16.mxu0 0
    %197 = vmatpush1.bf16.msra.mxu0 %v157
    %198 = vmatprep.subr.bf16.mxu0 0
    %199 = vmatpush1.bf16.msra.mxu0 %v158
    %200 = vmatprep.subr.bf16.mxu0 0
    %201 = vmatpush1.bf16.msra.mxu0 %v159
    %202 = vmatprep.subr.bf16.mxu0 0
    %203 = vmatpush1.bf16.msra.mxu0 %v160
    %204 = vmatprep.subr.bf16.mxu0 0
    %205 = vmatpush1.bf16.msra.mxu0 %v161
    %206 = vmatprep.subr.bf16.mxu0 0
    %207 = vmatpush1.bf16.msra.mxu0 %v162
    %208 = vmatprep.subr.bf16.mxu0 0
    %209 = vmatpush1.bf16.msra.mxu0 %v163
    %210 = vmatprep.subr.bf16.mxu0 0
    %211 = vmatpush1.bf16.msra.mxu0 %v164
    %212 = vmatprep.subr.bf16.mxu0 0
    %213 = vmatpush1.bf16.msra.mxu0 %v165
    %214 = vmatprep.mubr.bf16.mxu0 %v46
    %215 = vmatmul.mubr.bf16.gmra.mrb[0].mxu0 %v45
    %v216 = vpop.f32.mrb[0].mxu0
    %v217 = vadd.f32 %v84, %v216
    %v218 = vpop.f32.mrb[0].mxu0
    %v219 = vpop.f32.mrb[0].mxu0
    %v220 = vpop.f32.mrb[0].mxu0
    %221 = vdwg.mxu0
    %v222 = vmax.f32 %v217, 0.0
    %v223 = vpack.c.bf16 %v222, %v222
    %v224 = vld [vmem:[%s3] sm:$0xf]
    %v225 = vld [vmem:[%s3 + $0x4] sm:$0xf]
    %v226 = vld [vmem:[%s3 + $0x8] sm:$0xf]
    %v227 = vld [vmem:[%s3 + $0xc] sm:$0xf]
    %v228 = vld [vmem:[%s3 + $0x10] sm:$0xf]
    %v229 = vld [vmem:[%s3 + $0x14] sm:$0xf]
    %v230 = vld [vmem:[%s3 + $0x18] sm:$0xf]
    %v231 = vld [vmem:[%s3 + $0x1c] sm:$0xf]
    %v232 = vld [vmem:[%s4] sm:$0x1]
    %v234 = vlaneseq
    %v235 = vshrl.u32 %v234, 7
    %v236 = vsub.s32 0, %v235
    %v237 = vrot.slane %v232, %v236
    %v247 = vunpack.c.l.b16 %v224
    %v248 = vunpack.c.l.b16 %v225
    %v249 = vunpack.c.l.b16 %v226
    %v250 = vunpack.c.l.b16 %v227
    %v251 = vunpack.c.l.b16 %v228
    %v252 = vunpack.c.l.b16 %v229
    %v253 = vunpack.c.l.b16 %v230
    %v254 = vunpack.c.l.b16 %v231
    %v255 = vpack.c.b16 %v248, %v247
    %v256 = vpack.c.b16 %v250, %v249
    %v257 = vpack.c.b16 %v252, %v251
    %v258 = vpack.c.b16 %v254, %v253
    %vm263 = vcmask 523264
    %v265 = vsel %vm263, %v223, 0
    %267 = vmatprep.subr.bf16.mxu0 0
    %268 = vmatpush1.bf16.msra.mxu0 %v255
    %269 = vmatprep.subr.bf16.mxu0 0
    %270 = vmatpush1.bf16.msra.mxu0 %v256
    %271 = vmatprep.subr.bf16.mxu0 0
    %272 = vmatpush1.bf16.msra.mxu0 %v257
    %273 = vmatprep.subr.bf16.mxu0 0
    %274 = vmatpush1.bf16.msra.mxu0 %v258
    %275 = vmatprep.subr.bf16.mxu0 0
    %276 = vmatpush1.bf16.msra.mxu0 0
    %277 = vmatprep.subr.bf16.mxu0 0
    %278 = vmatpush1.bf16.msra.mxu0 0
    %279 = vmatprep.subr.bf16.mxu0 0
    %280 = vmatpush1.bf16.msra.mxu0 0
    %281 = vmatprep.subr.bf16.mxu0 0
    %282 = vmatpush1.bf16.msra.mxu0 0
    %283 = vmatprep.subr.bf16.mxu0 0
    %284 = vmatpush1.bf16.msra.mxu0 0
    %285 = vmatprep.subr.bf16.mxu0 0
    %286 = vmatpush1.bf16.msra.mxu0 0
    %287 = vmatprep.subr.bf16.mxu0 0
    %288 = vmatpush1.bf16.msra.mxu0 0
    %289 = vmatprep.subr.bf16.mxu0 0
    %290 = vmatpush1.bf16.msra.mxu0 0
    %291 = vmatprep.subr.bf16.mxu0 0
    %292 = vmatpush1.bf16.msra.mxu0 0
    %293 = vmatprep.subr.bf16.mxu0 0
    %294 = vmatpush1.bf16.msra.mxu0 0
    %295 = vmatprep.subr.bf16.mxu0 0
    %296 = vmatpush1.bf16.msra.mxu0 0
    %297 = vmatprep.subr.bf16.mxu0 0
    %298 = vmatpush1.bf16.msra.mxu0 0
    %299 = vmatprep.mubr.bf16.mxu0 0
    %300 = vmatmul.mubr.bf16.gmra.mrb[0].mxu0 %v265
    %v301 = vpop.f32.mrb[0].mxu0
    %v302 = vadd.f32 %v237, %v301
    %v303 = vpop.f32.mrb[0].mxu0
    %v304 = vpop.f32.mrb[0].mxu0
    %v305 = vpop.f32.mrb[0].mxu0
    %306 = vdwg.mxu0
    %v307 = vmax.f32 %v302, 0.0
    %v308 = vpack.c.bf16 %v307, %v307
    %v309 = vld [vmem:[%s5] sm:$0xf]
    %v310 = vld [vmem:[%s5 + $0x4] sm:$0xf]
    %v311 = vld [vmem:[%s5 + $0x8] sm:$0x1]
    %v312 = vld [vmem:[#allocation2] sm:$0x1]
    %v314 = vlaneseq
    %v315 = vshrl.u32 %v314, 7
    %v316 = vsub.s32 0, %v315
    %v317 = vrot.slane %v312, %v316
    %v322 = vunpack.c.l.b16 %v309
    %v323 = vunpack.c.l.b16 %v310
    %v324 = vunpack.c.l.b16 %v311
    %v325 = vpack.c.b16 %v323, %v322
    %v326 = vpack.c.b16 %v324, %v324
    %vm328 = vcmask 138240
    %v330 = vsel %vm328, %v308, 0
    %vm332 = vcmask 1040384
    %v333 = vsel 0, 4294967295, 65535
    %v334 = vsel %vm332, %v333, 0
    %v336 = vand.u32 %v326, %v334
    %338 = vmatprep.subr.bf16.mxu0 0
    %339 = vmatpush1.bf16.msra.mxu0 %v325
    %340 = vmatprep.subr.bf16.mxu0 0
    %341 = vmatpush1.bf16.msra.mxu0 %v336
    %342 = vmatprep.subr.bf16.mxu0 0
    %343 = vmatpush1.bf16.msra.mxu0 0
    %344 = vmatprep.subr.bf16.mxu0 0
    %345 = vmatpush1.bf16.msra.mxu0 0
    %346 = vmatprep.subr.bf16.mxu0 0
    %347 = vmatpush1.bf16.msra.mxu0 0
    %348 = vmatprep.subr.bf16.mxu0 0
    %349 = vmatpush1.bf16.msra.mxu0 0
    %350 = vmatprep.subr.bf16.mxu0 0
    %351 = vmatpush1.bf16.msra.mxu0 0
    %352 = vmatprep.subr.bf16.mxu0 0
    %353 = vmatpush1.bf16.msra.mxu0 0
    %354 = vmatprep.subr.bf16.mxu0 0
    %355 = vmatpush1.bf16.msra.mxu0 0
    %356 = vmatprep.subr.bf16.mxu0 0
    %357 = vmatpush1.bf16.msra.mxu0 0
    %358 = vmatprep.subr.bf16.mxu0 0
    %359 = vmatpush1.bf16.msra.mxu0 0
    %360 = vmatprep.subr.bf16.mxu0 0
    %361 = vmatpush1.bf16.msra.mxu0 0
    %362 = vmatprep.subr.bf16.mxu0 0
    %363 = vmatpush1.bf16.msra.mxu0 0
    %364 = vmatprep.subr.bf16.mxu0 0
    %365 = vmatpush1.bf16.msra.mxu0 0
    %366 = vmatprep.subr.bf16.mxu0 0
    %367 = vmatpush1.bf16.msra.mxu0 0
    %368 = vmatprep.subr.bf16.mxu0 0
    %369 = vmatpush1.bf16.msra.mxu0 0
    %370 = vmatprep.mubr.bf16.mxu0 0
    %371 = vmatmul.mubr.bf16.gmra.mrb[0].mxu0 %v330
    %v372 = vpop.f32.mrb[0].mxu0
    %v373 = vadd.f32 %v317, %v372
    %v374 = vpop.f32.mrb[0].mxu0
    %v375 = vpop.f32.mrb[0].mxu0
    %v376 = vpop.f32.mrb[0].mxu0
    %377 = vdwg.mxu0
    %v378 = vld [vmem:[%s7] sm:$0x1]
    %v380 = vlaneseq
    %v381 = vshrl.u32 %v380, 7
    %v382 = vsub.s32 0, %v381
    %v383 = vrot.slane %v378, %v382
    %386 = vset.pattern.permute.xlu0 0
    %387 = vperm.xlu0 %386, %v373
    %v388 = vpop.permute.xlu0 %387
    %v390 = vsub.f32 %v383, %v388
    %v391 = vxor.u32 %v390, 2147483648
    %v392 = vmul.f32 %v391, 1.442695
    %v393 = vpow.pop %v392
    %v394 = vadd.f32 %v393, 1.0
    %v395 = vrcp.pop %v394
    %v396 = vmul.f32 1.0, %v395
    %v397 = vsub.f32 1.0, %v396
    %399 = vrot.lane.b32.xlu0 %v396, 1
    %v400 = vpop.permute.xlu0 %399
    %v402 = vsub.f32 %v396, %v400
    %404 = vrot.lane.b32.xlu0 %v397, 1
    %v405 = vpop.permute.xlu0 %404
    %vm407 = vcmask 7168
    %v408 = vsel %vm407, %v396, %v402
    %vm409 = vcmask 31744
    %v410 = vsel %vm409, %v408, %v405
    %vm411 = vcmask 33792
    %412 = vst.msk [vmem:[#allocation3] sm:$0x3] %vm411, %v410
    // Predicated region
    $region34: #{conformer_ordinal_forward.7} parent=1 // pred_check
      _
    $region35: #{conformer_ordinal_forward.7} parent=1 // pred_check_branch
      %414 = sbr.rel (0) target = $region37
    $region36: #{conformer_ordinal_forward.7} parent=1 // pred_region
      %s416 = ssub.s32 32, 32
      %417 = vsyncadd [#allocation4], %s416
      %s419 = sshll.u32 [#allocation3], 4
      %s420 = int_to_ptr.vmem [resolvable:$true] %s419
      %422 = dma.vmem_to_hbm [thread:$0]  %s420, 32, %s8, [#allocation4]
    $region37: #{conformer_ordinal_forward.7} parent=1 // pred_fallthru
      _
    // Predicated region
    $region38: #{conformer_ordinal_forward.7} parent=1 // pred_check
      _
    $region39: #{conformer_ordinal_forward.7} parent=1 // pred_check_branch
      %424 = sbr.rel (0) target = $region41
    $region40: #{conformer_ordinal_forward.7} parent=1 // pred_region
      %425 = dma.done [#allocation4], 32
    $region41: #{conformer_ordinal_forward.7} parent=1 // pred_fallthru
      _
    %426 = vsyncpa [#allocation4], 1

</llo_original>
